<compile_context>
chip_gen: v6e
topology: v6e:2x2x1
jax: 0.10.0
libtpu: 0.0.40
codegen_flags: <defaults>
</compile_context>

<pallas_src>
import functools

import jax
import jax.numpy as jnp
from jax import lax
from jax.experimental import pallas as pl
from jax.experimental.pallas import tpu as pltpu

_TAPS = ((0, 0), (0, 1), (1, 0), (1, 1))        # (t_h, t_w) folded-block shifts
_VMEM_LIMIT = 32 * 1024 * 1024                  # safe on v5e/v6e/v7x


# ----------------------------------------------------------------------------
# Shared epilogue: per-sample per-channel GroupNorm (one-pass stats) + LeakyReLU
#   y: (blk, npos, C) f32, gamma/beta: (1, 1, C) f32
# ----------------------------------------------------------------------------
def _gn_lrelu_epilogue(y, gamma, beta, *, norm_ch, eps, n):
    cout = y.shape[-1]
    inv_n = 1.0 / float(n)
    mean = jnp.sum(y, axis=1, keepdims=True) * inv_n
    ex2 = jnp.sum(y * y, axis=1, keepdims=True) * inv_n
    var = jnp.maximum(ex2 - mean * mean, 0.0)
    yn = (y - mean) * lax.rsqrt(var + eps) * gamma + beta
    if norm_ch < cout:                                      # layer-1: only conv1_1 half
        ch = lax.broadcasted_iota(jnp.int32, (1, 1, cout), 2)
        y = jnp.where(ch < norm_ch, yn, y)
    else:
        y = yn
    return jnp.maximum(y, 0.2 * y)                          # LeakyReLU(0.2)


# ----------------------------------------------------------------------------
# Kernel A: space-to-depth implicit GEMM conv (stride 2, k=4, pad 1) + GN + lrelu
#   x_ref: (blk, Ho+1, Wo+1, 4*Cin) bf16   w_ref: (4, 4*Cin, Cout) bf16
#   g_ref/b_ref: (1, 1, Cout) f32          o_ref: (blk, Ho, Wo, Cout) bf16
# Requires Wo % 8 == 0 so the (blk,Ho,Wo)->rows merge is tile aligned.
# ----------------------------------------------------------------------------
def _s2d_conv_kernel(x_ref, w_ref, g_ref, b_ref, o_ref, *, ho, wo, norm_ch, eps):
    blk = o_ref.shape[0]
    cout = o_ref.shape[3]
    c4 = x_ref.shape[3]
    m = blk * ho * wo

    acc = jnp.zeros((m, cout), jnp.float32)
    for t, (bh, bw) in enumerate(_TAPS):
        tap = x_ref[:, bh:bh + ho, bw:bw + wo, :].reshape(m, c4)   # bf16 view load
        acc = acc + jnp.dot(tap, w_ref[t], preferred_element_type=jnp.float32)

    y = _gn_lrelu_epilogue(acc.reshape(blk, ho * wo, cout),
                           g_ref[...], b_ref[...],
                           norm_ch=norm_ch, eps=eps, n=ho * wo)
    o_ref[...] = y.reshape(blk, ho, wo, cout).astype(o_ref.dtype)


# ----------------------------------------------------------------------------
# Kernel B: conv3 (im2col single matmul) + GN + lrelu + fused conv4 head
#   x_ref:  (blk, 16, 16*Cin) bf16        w3_ref: (16*Cin, C3) bf16
#   g_ref/b_ref: (1, 1, C3) f32           w4_ref: (16, C3, z_dim) bf16
#   o_ref:  (blk, 1, z_dim) f32
# ----------------------------------------------------------------------------
def _conv3_conv4_kernel(x_ref, w3_ref, g_ref, b_ref, w4_ref, o_ref, *, npos, eps):
    blk = x_ref.shape[0]
    k = x_ref.shape[2]
    c3 = w3_ref.shape[1]
    zd = o_ref.shape[2]

    x = x_ref[...].reshape(blk * npos, k)                   # tile-aligned merge
    y = jnp.dot(x, w3_ref[...], preferred_element_type=jnp.float32)
    y = _gn_lrelu_epilogue(y.reshape(blk, npos, c3), g_ref[...], b_ref[...],
                           norm_ch=c3, eps=eps, n=npos)
    yb = y.astype(jnp.bfloat16)

    # conv4 head: contract over (position, channel) with per-position 2-D dots
    # (avoids an in-kernel minor-dim reshape; work is negligible).
    z = jnp.zeros((blk, zd), jnp.float32)
    for p in range(npos):
        z = z + jnp.dot(yb[:, p, :], w4_ref[p],
                        preferred_element_type=jnp.float32)
    o_ref[:, 0, :] = z


# ----------------------------------------------------------------------------
# Host-side layout helpers (cheap XLA passes on bf16; no im2col blow-up except
# the tiny conv3 layer).
# ----------------------------------------------------------------------------
def _space_to_depth_pad1(x_nhwc):
    """pad=1 then fold 2x2 spatial phases into channels: (B,H,W,C)->(B,H/2+1,W/2+1,4C)."""
    B, H, W, C = x_nhwc.shape
    xp = jnp.pad(x_nhwc, ((0, 0), (1, 1), (1, 1), (0, 0)))
    Hp, Wp = H + 2, W + 2
    xs = xp.reshape(B, Hp // 2, 2, Wp // 2, 2, C)
    xs = xs.transpose(0, 1, 3, 2, 4, 5).reshape(B, Hp // 2, Wp // 2, 4 * C)
    return xs


def _im2col_4x4_s2_p1(x_nhwc):
    """k=4, stride=2, pad=1 im2col: (B,H,W,C) -> (B, Ho*Wo, 16*C). Only used for
    the tiny conv3 input (8x8 map), where the 4x blow-up is ~100 KB/sample."""
    B, H, W, C = x_nhwc.shape
    Ho, Wo = H // 2, W // 2
    xp = jnp.pad(x_nhwc, ((0, 0), (1, 1), (1, 1), (0, 0)))
    patches = []
    for kh in range(4):
        for kw in range(4):
            patches.append(lax.slice(xp, (0, kh, kw, 0),
                                     (B, kh + 2 * Ho - 1, kw + 2 * Wo - 1, C),
                                     (1, 2, 2, 1)))
    cols = jnp.stack(patches, axis=3)                       # (B, Ho, Wo, 16, C)
    return cols.reshape(B, Ho * Wo, 16 * C)


def _conv_weight_to_s2d_taps(w_oihw):
    """OIHW (Cout,Cin,4,4) -> (4 taps, 4*Cin, Cout) bf16 matching S2D channel order."""
    cout, cin, _, _ = w_oihw.shape
    w = jnp.transpose(w_oihw, (2, 3, 1, 0))                 # (kh, kw, ci, co)
    w = w.reshape(2, 2, 2, 2, cin, cout)                    # (th, dh, tw, dw, ci, co)
    w = jnp.transpose(w, (0, 2, 1, 3, 4, 5))                # (th, tw, dh, dw, ci, co)
    return w.reshape(4, 4 * cin, cout).astype(jnp.bfloat16)


def _pick_block(batch, cap):
    """Largest divisor of `batch` that is <= cap and keeps the grid >= 2 steps."""
    if batch <= 1:
        return 1
    cap = max(1, min(cap, batch // 2))
    for d in range(cap, 0, -1):
        if batch % d == 0:
            return d
    return 1


# ----------------------------------------------------------------------------
# pallas_call wrappers
# ----------------------------------------------------------------------------
def conv_s2d_layer(x_nhwc, w_taps, gamma, beta, *, norm_ch, batch_block, eps=1e-5):
    B, H, W, Cin = x_nhwc.shape
    _, C4, Cout = w_taps.shape
    assert C4 == 4 * Cin
    Ho, Wo = H // 2, W // 2
    assert Wo % 8 == 0, "flat S2D path requires Wo % 8 == 0"
    Hs, Ws = Ho + 1, Wo + 1

    xs = _space_to_depth_pad1(x_nhwc)                        # (B, Hs, Ws, 4*Cin) bf16
    blk = batch_block
    grid = (B // blk,)

    kern = functools.partial(_s2d_conv_kernel, ho=Ho, wo=Wo,
                             norm_ch=norm_ch, eps=eps)
    return pl.pallas_call(
        kern,
        out_shape=jax.ShapeDtypeStruct((B, Ho, Wo, Cout), jnp.bfloat16),
        grid=grid,
        in_specs=[
            pl.BlockSpec((blk, Hs, Ws, C4), lambda i: (i, 0, 0, 0)),
            pl.BlockSpec((4, C4, Cout), lambda i: (0, 0, 0)),
            pl.BlockSpec((1, 1, Cout), lambda i: (0, 0, 0)),
            pl.BlockSpec((1, 1, Cout), lambda i: (0, 0, 0)),
        ],
        out_specs=pl.BlockSpec((blk, Ho, Wo, Cout), lambda i: (i, 0, 0, 0)),
        compiler_params=pltpu.CompilerParams(
            dimension_semantics=("parallel",),
            vmem_limit_bytes=_VMEM_LIMIT),
    )(xs, w_taps, gamma, beta)


def conv3_conv4_layer(x_nhwc, w3_col, gamma, beta, w4, *, z_dim, batch_block,
                      eps=1e-5):
    B, H, W, C = x_nhwc.shape
    Ho, Wo = H // 2, W // 2
    npos = Ho * Wo                                           # 16 for the 32x32 encoder
    K = 16 * C
    C3 = w3_col.shape[1]

    cols = _im2col_4x4_s2_p1(x_nhwc)                         # (B, npos, K) bf16
    blk = batch_block
    grid = (B // blk,)

    kern = functools.partial(_conv3_conv4_kernel, npos=npos, eps=eps)
    out = pl.pallas_call(
        kern,
        out_shape=jax.ShapeDtypeStruct((B, 1, z_dim), jnp.float32),
        grid=grid,
        in_specs=[
            pl.BlockSpec((blk, npos, K), lambda i: (i, 0, 0)),
            pl.BlockSpec((K, C3), lambda i: (0, 0)),
            pl.BlockSpec((1, 1, C3), lambda i: (0, 0, 0)),
            pl.BlockSpec((1, 1, C3), lambda i: (0, 0, 0)),
            pl.BlockSpec((npos, C3, z_dim), lambda i: (0, 0, 0)),
        ],
        out_specs=pl.BlockSpec((blk, 1, z_dim), lambda i: (i, 0, 0)),
        compiler_params=pltpu.CompilerParams(
            dimension_semantics=("parallel",),
            vmem_limit_bytes=_VMEM_LIMIT),
    )(cols, w3_col, gamma, beta, w4)
    return out.reshape(B, z_dim)


# ----------------------------------------------------------------------------
# One-time weight preparation (hoisted out of the jitted forward)
# ----------------------------------------------------------------------------
def prepare_params(params, *, nfilter, z_dim):
    nf2 = nfilter // 2
    c2, c3 = 2 * nfilter, 4 * nfilter

    # Fused conv1_1 (3 ch) + conv1_2 (10 ch) as one block-sparse 13-channel conv.
    w1 = jnp.zeros((nfilter, 13, 4, 4), jnp.float32)
    w1 = w1.at[:nf2, :3].set(params["conv1_1"])
    w1 = w1.at[nf2:, 3:].set(params["conv1_2"])
    g1 = jnp.concatenate([params["g1"], jnp.ones((nf2,), jnp.float32)])
    b1 = jnp.concatenate([params["b1"], jnp.zeros((nf2,), jnp.float32)])

    w3_col = jnp.transpose(params["conv3"], (2, 3, 1, 0)).reshape(
        16 * c2, c3).astype(jnp.bfloat16)                    # (kh,kw,ci) -> rows
    w4 = jnp.transpose(params["conv4"], (2, 3, 1, 0)).reshape(
        16, c3, z_dim).astype(jnp.bfloat16)                  # (pos, ci, z)

    return {
        "w1_taps": _conv_weight_to_s2d_taps(w1),
        "g1": g1.reshape(1, 1, nfilter), "b1": b1.reshape(1, 1, nfilter),
        "w2_taps": _conv_weight_to_s2d_taps(params["conv2"]),
        "g2": params["g2"].reshape(1, 1, c2), "b2": params["b2"].reshape(1, 1, c2),
        "w3_col": w3_col,
        "g3": params["g3"].reshape(1, 1, c3), "b3": params["b3"].reshape(1, 1, c3),
        "w4": w4,
    }


# ----------------------------------------------------------------------------
# Encoder forward (Pallas)
# ----------------------------------------------------------------------------
def encoder_forward(prep, x_nchw, label, *, nfilter, z_dim):
    B, _, H, W = x_nchw.shape
    nf2 = nfilter // 2

    # Single layout transpose NCHW->NHWC; label map built channel-last; bf16 in.
    x = jnp.transpose(x_nchw, (0, 2, 3, 1)).astype(jnp.bfloat16)
    one_hot = (jnp.arange(10)[None, :] == label[:, None]).astype(jnp.bfloat16)
    lab = jnp.broadcast_to(one_hot[:, None, None, :], (B, H, W, 10))
    h0 = jnp.concatenate([x, lab], axis=-1)                  # (B, 32, 32, 13)

    # x = lrelu(norm1(conv1_1(input))) ; y = lrelu(conv1_2(label)) ; cat
    h = conv_s2d_layer(h0, prep["w1_taps"], prep["g1"], prep["b1"],
                       norm_ch=nf2, batch_block=_pick_block(B, 4))
    # x = lrelu(norm2(conv2(x)))
    h = conv_s2d_layer(h, prep["w2_taps"], prep["g2"], prep["b2"],
                       norm_ch=2 * nfilter, batch_block=_pick_block(B, 8))
    # x = lrelu(norm3(conv3(x))) ; conv4(x)  — fused in one kernel.
    z = conv3_conv4_layer(h, prep["w3_col"], prep["g3"], prep["b3"], prep["w4"],
                          z_dim=z_dim, batch_block=_pick_block(B, 32))
    return z.reshape(B, z_dim, 1, 1)


# ----------------------------------------------------------------------------
# Pure-JAX reference (lax.conv, f32) for correctness check
# ----------------------------------------------------------------------------
def _conv_ref(x, w, stride, pad):
    return lax.conv_general_dilated(
        x, w, window_strides=(stride, stride),
        padding=[(pad, pad), (pad, pad)],
        dimension_numbers=("NCHW", "OIHW", "NCHW"))


def _gn_ref(x, g, b, eps=1e-5):
    mean = x.mean(axis=(2, 3), keepdims=True)
    var = jnp.square(x - mean).mean(axis=(2, 3), keepdims=True)
    xn = (x - mean) * lax.rsqrt(var + eps)
    return xn * g[None, :, None, None] + b[None, :, None, None]


def encoder_ref(params, x, label, *, nfilter, z_dim):
    B = x.shape[0]
    one_hot = (jnp.arange(10)[None, :] == label[:, None]).astype(jnp.float32)
    lab = jnp.broadcast_to(one_hot[:, :, None, None], (B, 10, 32, 32))
    lrelu = lambda v: jnp.where(v > 0, v, 0.2 * v)
    h1 = lrelu(_gn_ref(_conv_ref(x, params["conv1_1"], 2, 1),
                       params["g1"], params["b1"]))
    h2 = lrelu(_conv_ref(lab, params["conv1_2"], 2, 1))
    h = jnp.concatenate([h1, h2], axis=1)
    h = lrelu(_gn_ref(_conv_ref(h, params["conv2"], 2, 1),
                      params["g2"], params["b2"]))
    h = lrelu(_gn_ref(_conv_ref(h, params["conv3"], 2, 1),
                      params["g3"], params["b3"]))
    return _conv_ref(h, params["conv4"], 1, 0)


# ----------------------------------------------------------------------------
def init_params(key, nfilter, z_dim):
    nf2 = nfilter // 2
    ks = jax.random.split(key, 5)
    return {
        "conv1_1": 0.1 * jax.random.normal(ks[0], (nf2, 3, 4, 4), jnp.float32),
        "conv1_2": 0.1 * jax.random.normal(ks[1], (nf2, 10, 4, 4), jnp.float32),
        "conv2": 0.1 * jax.random.normal(ks[2], (2 * nfilter, nfilter, 4, 4),
                                         jnp.float32),
        "conv3": 0.1 * jax.random.normal(ks[3], (4 * nfilter, 2 * nfilter, 4, 4),
                                         jnp.float32),
        "conv4": 0.1 * jax.random.normal(ks[4], (z_dim, 4 * nfilter, 4, 4),
                                         jnp.float32),
        "g1": jnp.ones((nf2,), jnp.float32), "b1": jnp.zeros((nf2,), jnp.float32),
        "g2": jnp.ones((2 * nfilter,), jnp.float32),
        "b2": jnp.zeros((2 * nfilter,), jnp.float32),
        "g3": jnp.ones((4 * nfilter,), jnp.float32),
        "b3": jnp.zeros((4 * nfilter,), jnp.float32),
    }


if __name__ == "__main__":
    nfilter = 16          # small stand-in for the default 128
    z_dim = 8
    B = 4                 # even batch -> >=2 grid steps on every layer

    key = jax.random.PRNGKey(0)
    k_param, k_x, k_lab = jax.random.split(key, 3)
    params = init_params(k_param, nfilter, z_dim)

    x = jax.random.normal(k_x, (B, 3, 32, 32), jnp.float32)
    label = jax.random.randint(k_lab, (B,), 0, 10, jnp.int32)

    # Weight prep runs once, outside the jitted forward.
    prep = prepare_params(params, nfilter=nfilter, z_dim=z_dim)

    fwd = jax.jit(functools.partial(encoder_forward, nfilter=nfilter,
                                    z_dim=z_dim))
    z = fwd(prep, x, label)
    jax.block_until_ready(z)

    z_ref = encoder_ref(params, x, label, nfilter=nfilter, z_dim=z_dim)
    assert z.shape == (B, z_dim, 1, 1), z.shape
    # bf16 MXU operands + bf16 inter-layer activations (f32 accumulate / f32 GN
    # stats) vs the f32 lax.conv reference -> loosened tolerance.
    rel = float(jnp.max(jnp.abs(z - z_ref)) /
                (jnp.max(jnp.abs(z_ref)) + 1e-6))
    assert rel < 6e-2, rel

    print("KERNEL_OK")
</pallas_src>

<mosaic_0001>
module attributes {stable_mosaic.version = 11 : i64} {
  func.func @_s2d_conv_kernel(%arg0: i32, %arg1: memref<2x17x17x52xbf16, #tpu.memory_space<vmem>>, %arg2: memref<4x52x16xbf16, #tpu.memory_space<vmem>>, %arg3: memref<1x1x16xf32, #tpu.memory_space<vmem>>, %arg4: memref<1x1x16xf32, #tpu.memory_space<vmem>>, %arg5: memref<2x16x16x16xbf16, #tpu.memory_space<vmem>>) attributes {dimension_semantics = [#tpu.dimension_semantics<parallel>], iteration_bounds = array<i64: 2>, scalar_prefetch = 0 : i64, scratch_operands = 0 : i64, tpu.core_type = #tpu.core_type<tc>, window_params = [{transform_indices = @transform_0, window_bounds = array<i64: 2, 17, 17, 52>}, {pipeline_mode = #tpu.pipeline_mode<synchronous>, transform_indices = @transform_1, window_bounds = array<i64: 4, 52, 16>}, {pipeline_mode = #tpu.pipeline_mode<synchronous>, transform_indices = @transform_2, window_bounds = array<i64: 1, 1, 16>}, {pipeline_mode = #tpu.pipeline_mode<synchronous>, transform_indices = @transform_3, window_bounds = array<i64: 1, 1, 16>}, {transform_indices = @transform_4, window_bounds = array<i64: 2, 16, 16, 16>}]} {
    %cst = arith.constant 0.000000e+00 : f32
    %0 = vector.broadcast %cst : f32 to vector<512x16xf32>
    %c0 = arith.constant 0 : index
    %c0_0 = arith.constant 0 : index
    %c0_1 = arith.constant 0 : index
    %c0_2 = arith.constant 0 : index
    %1 = vector.load %arg1[%c0, %c0_0, %c0_1, %c0_2] : memref<2x17x17x52xbf16, #tpu.memory_space<vmem>>, vector<2x16x16x52xbf16>
    %2 = vector.shape_cast %1 : vector<2x16x16x52xbf16> to vector<512x52xbf16>
    %c0_3 = arith.constant 0 : index
    %c0_4 = arith.constant 0 : index
    %c0_5 = arith.constant 0 : index
    %3 = vector.load %arg2[%c0_3, %c0_4, %c0_5] : memref<4x52x16xbf16, #tpu.memory_space<vmem>>, vector<1x52x16xbf16>
    %4 = vector.shape_cast %3 : vector<1x52x16xbf16> to vector<52x16xbf16>
    %cst_6 = arith.constant dense<0.000000e+00> : vector<512x16xf32>
    %5 = tpu.matmul %2, %4, %cst_6 {dimension_numbers = #tpu.dot_dimension_numbers<[1], [0], [0], [1], [0, 0, 1, 1], [], []>} : vector<512x52xbf16>, vector<52x16xbf16>, vector<512x16xf32> -> vector<512x16xf32>
    %6 = arith.addf %0, %5 : vector<512x16xf32>
    %c0_7 = arith.constant 0 : index
    %c0_8 = arith.constant 0 : index
    %c1 = arith.constant 1 : index
    %c0_9 = arith.constant 0 : index
    %7 = vector.load %arg1[%c0_7, %c0_8, %c1, %c0_9] : memref<2x17x17x52xbf16, #tpu.memory_space<vmem>>, vector<2x16x16x52xbf16>
    %8 = vector.shape_cast %7 : vector<2x16x16x52xbf16> to vector<512x52xbf16>
    %c1_10 = arith.constant 1 : index
    %c0_11 = arith.constant 0 : index
    %c0_12 = arith.constant 0 : index
    %9 = vector.load %arg2[%c1_10, %c0_11, %c0_12] : memref<4x52x16xbf16, #tpu.memory_space<vmem>>, vector<1x52x16xbf16>
    %10 = vector.shape_cast %9 : vector<1x52x16xbf16> to vector<52x16xbf16>
    %cst_13 = arith.constant dense<0.000000e+00> : vector<512x16xf32>
    %11 = tpu.matmul %8, %10, %cst_13 {dimension_numbers = #tpu.dot_dimension_numbers<[1], [0], [0], [1], [0, 0, 1, 1], [], []>} : vector<512x52xbf16>, vector<52x16xbf16>, vector<512x16xf32> -> vector<512x16xf32>
    %12 = arith.addf %6, %11 : vector<512x16xf32>
    %c0_14 = arith.constant 0 : index
    %c1_15 = arith.constant 1 : index
    %c0_16 = arith.constant 0 : index
    %c0_17 = arith.constant 0 : index
    %13 = vector.load %arg1[%c0_14, %c1_15, %c0_16, %c0_17] : memref<2x17x17x52xbf16, #tpu.memory_space<vmem>>, vector<2x16x16x52xbf16>
    %14 = vector.shape_cast %13 : vector<2x16x16x52xbf16> to vector<512x52xbf16>
    %c2 = arith.constant 2 : index
    %c0_18 = arith.constant 0 : index
    %c0_19 = arith.constant 0 : index
    %15 = vector.load %arg2[%c2, %c0_18, %c0_19] : memref<4x52x16xbf16, #tpu.memory_space<vmem>>, vector<1x52x16xbf16>
    %16 = vector.shape_cast %15 : vector<1x52x16xbf16> to vector<52x16xbf16>
    %cst_20 = arith.constant dense<0.000000e+00> : vector<512x16xf32>
    %17 = tpu.matmul %14, %16, %cst_20 {dimension_numbers = #tpu.dot_dimension_numbers<[1], [0], [0], [1], [0, 0, 1, 1], [], []>} : vector<512x52xbf16>, vector<52x16xbf16>, vector<512x16xf32> -> vector<512x16xf32>
    %18 = arith.addf %12, %17 : vector<512x16xf32>
    %c0_21 = arith.constant 0 : index
    %c1_22 = arith.constant 1 : index
    %c1_23 = arith.constant 1 : index
    %c0_24 = arith.constant 0 : index
    %19 = vector.load %arg1[%c0_21, %c1_22, %c1_23, %c0_24] : memref<2x17x17x52xbf16, #tpu.memory_space<vmem>>, vector<2x16x16x52xbf16>
    %20 = vector.shape_cast %19 : vector<2x16x16x52xbf16> to vector<512x52xbf16>
    %c3 = arith.constant 3 : index
    %c0_25 = arith.constant 0 : index
    %c0_26 = arith.constant 0 : index
    %21 = vector.load %arg2[%c3, %c0_25, %c0_26] : memref<4x52x16xbf16, #tpu.memory_space<vmem>>, vector<1x52x16xbf16>
    %22 = vector.shape_cast %21 : vector<1x52x16xbf16> to vector<52x16xbf16>
    %cst_27 = arith.constant dense<0.000000e+00> : vector<512x16xf32>
    %23 = tpu.matmul %20, %22, %cst_27 {dimension_numbers = #tpu.dot_dimension_numbers<[1], [0], [0], [1], [0, 0, 1, 1], [], []>} : vector<512x52xbf16>, vector<52x16xbf16>, vector<512x16xf32> -> vector<512x16xf32>
    %24 = arith.addf %18, %23 : vector<512x16xf32>
    %25 = vector.shape_cast %24 : vector<512x16xf32> to vector<2x256x16xf32>
    %c0_28 = arith.constant 0 : index
    %c0_29 = arith.constant 0 : index
    %c0_30 = arith.constant 0 : index
    %26 = vector.load %arg3[%c0_28, %c0_29, %c0_30] : memref<1x1x16xf32, #tpu.memory_space<vmem>>, vector<1x1x16xf32>
    %c0_31 = arith.constant 0 : index
    %c0_32 = arith.constant 0 : index
    %c0_33 = arith.constant 0 : index
    %27 = vector.load %arg4[%c0_31, %c0_32, %c0_33] : memref<1x1x16xf32, #tpu.memory_space<vmem>>, vector<1x1x16xf32>
    %cst_34 = arith.constant dense<0.000000e+00> : vector<2x16xf32>
    %28 = vector.multi_reduction <add>, %25, %cst_34 [1] : vector<2x256x16xf32> to vector<2x16xf32>
    %29 = vector.shape_cast %28 : vector<2x16xf32> to vector<2x1x16xf32>
    %cst_35 = arith.constant 3.906250e-03 : f32
    %30 = vector.broadcast %cst_35 : f32 to vector<2x1x16xf32>
    %31 = arith.mulf %29, %30 : vector<2x1x16xf32>
    %32 = arith.mulf %25, %25 : vector<2x256x16xf32>
    %cst_36 = arith.constant dense<0.000000e+00> : vector<2x16xf32>
    %33 = vector.multi_reduction <add>, %32, %cst_36 [1] : vector<2x256x16xf32> to vector<2x16xf32>
    %34 = vector.shape_cast %33 : vector<2x16xf32> to vector<2x1x16xf32>
    %cst_37 = arith.constant 3.906250e-03 : f32
    %35 = vector.broadcast %cst_37 : f32 to vector<2x1x16xf32>
    %36 = arith.mulf %34, %35 : vector<2x1x16xf32>
    %37 = arith.mulf %31, %31 : vector<2x1x16xf32>
    %38 = arith.subf %36, %37 : vector<2x1x16xf32>
    %cst_38 = arith.constant 0.000000e+00 : f32
    %39 = vector.broadcast %cst_38 : f32 to vector<2x1x16xf32>
    %40 = arith.maximumf %38, %39 : vector<2x1x16xf32>
    %41 = vector.broadcast %31 : vector<2x1x16xf32> to vector<2x256x16xf32>
    %42 = arith.subf %25, %41 : vector<2x256x16xf32>
    %cst_39 = arith.constant 9.99999974E-6 : f32
    %43 = vector.broadcast %cst_39 : f32 to vector<2x1x16xf32>
    %44 = arith.addf %40, %43 : vector<2x1x16xf32>
    %45 = math.rsqrt %44 : vector<2x1x16xf32>
    %46 = vector.broadcast %45 : vector<2x1x16xf32> to vector<2x256x16xf32>
    %47 = arith.mulf %42, %46 : vector<2x256x16xf32>
    %48 = vector.broadcast %26 : vector<1x1x16xf32> to vector<2x256x16xf32>
    %49 = arith.mulf %47, %48 : vector<2x256x16xf32>
    %50 = vector.broadcast %27 : vector<1x1x16xf32> to vector<2x256x16xf32>
    %51 = arith.addf %49, %50 : vector<2x256x16xf32>
    %52 = tpu.iota {dimensions = array<i32: 2>} : vector<1x1x16xi32>
    %c8_i32 = arith.constant 8 : i32
    %53 = vector.broadcast %c8_i32 : i32 to vector<1x1x16xi32>
    %54 = arith.cmpi slt, %52, %53 : vector<1x1x16xi32>
    %55 = vector.shape_cast %54 : vector<1x1x16xi1> to vector<1x1x16xi1>
    %56 = vector.broadcast %55 : vector<1x1x16xi1> to vector<2x256x16xi1>
    %57 = arith.select %56, %51, %25 : vector<2x256x16xi1>, vector<2x256x16xf32>
    %cst_40 = arith.constant 2.000000e-01 : f32
    %58 = vector.broadcast %cst_40 : f32 to vector<2x256x16xf32>
    %59 = arith.mulf %58, %57 : vector<2x256x16xf32>
    %60 = arith.maximumf %57, %59 : vector<2x256x16xf32>
    %61 = vector.shape_cast %60 : vector<2x256x16xf32> to vector<2x16x16x16xf32>
    %62 = arith.truncf %61 : vector<2x16x16x16xf32> to vector<2x16x16x16xbf16>
    %c0_41 = arith.constant 0 : index
    %c0_42 = arith.constant 0 : index
    %c0_43 = arith.constant 0 : index
    %c0_44 = arith.constant 0 : index
    %63 = vector.load %arg5[%c0_41, %c0_42, %c0_43, %c0_44] : memref<2x16x16x16xbf16, #tpu.memory_space<vmem>>, vector<2x16x16x16xbf16>
    tpu.vector_store %arg5[%c0_41, %c0_42, %c0_43, %c0_44], %62 {strides = array<i32>} : memref<2x16x16x16xbf16, #tpu.memory_space<vmem>>, vector<2x16x16x16xbf16>,
    return
  }
  func.func @transform_0(%arg0: i32) -> (i32, i32, i32, i32) {
    %c0_i32 = arith.constant 0 : i32
    %c0_i32_0 = arith.constant 0 : i32
    %c0_i32_1 = arith.constant 0 : i32
    %c0_i32_2 = arith.constant 0 : i32
    return %arg0, %c0_i32, %c0_i32_0, %c0_i32_1 : i32, i32, i32, i32
  }
  func.func @transform_1(%arg0: i32) -> (i32, i32, i32) {
    %c0_i32 = arith.constant 0 : i32
    %c0_i32_0 = arith.constant 0 : i32
    %c0_i32_1 = arith.constant 0 : i32
    %c0_i32_2 = arith.constant 0 : i32
    return %c0_i32, %c0_i32_0, %c0_i32_1 : i32, i32, i32
  }
  func.func @transform_2(%arg0: i32) -> (i32, i32, i32) {
    %c0_i32 = arith.constant 0 : i32
    %c0_i32_0 = arith.constant 0 : i32
    %c0_i32_1 = arith.constant 0 : i32
    %c0_i32_2 = arith.constant 0 : i32
    return %c0_i32, %c0_i32_0, %c0_i32_1 : i32, i32, i32
  }
  func.func @transform_3(%arg0: i32) -> (i32, i32, i32) {
    %c0_i32 = arith.constant 0 : i32
    %c0_i32_0 = arith.constant 0 : i32
    %c0_i32_1 = arith.constant 0 : i32
    %c0_i32_2 = arith.constant 0 : i32
    return %c0_i32, %c0_i32_0, %c0_i32_1 : i32, i32, i32
  }
  func.func @transform_4(%arg0: i32) -> (i32, i32, i32, i32) {
    %c0_i32 = arith.constant 0 : i32
    %c0_i32_0 = arith.constant 0 : i32
    %c0_i32_1 = arith.constant 0 : i32
    %c0_i32_2 = arith.constant 0 : i32
    return %arg0, %c0_i32, %c0_i32_0, %c0_i32_1 : i32, i32, i32, i32
  }
}

module attributes {stable_mosaic.version = 11 : i64} {
  func.func @_s2d_conv_kernel(%arg0: i32, %arg1: memref<2x9x9x64xbf16, #tpu.memory_space<vmem>>, %arg2: memref<4x64x32xbf16, #tpu.memory_space<vmem>>, %arg3: memref<1x1x32xf32, #tpu.memory_space<vmem>>, %arg4: memref<1x1x32xf32, #tpu.memory_space<vmem>>, %arg5: memref<2x8x8x32xbf16, #tpu.memory_space<vmem>>) attributes {dimension_semantics = [#tpu.dimension_semantics<parallel>], iteration_bounds = array<i64: 2>, scalar_prefetch = 0 : i64, scratch_operands = 0 : i64, tpu.core_type = #tpu.core_type<tc>, window_params = [{transform_indices = @transform_0, window_bounds = array<i64: 2, 9, 9, 64>}, {pipeline_mode = #tpu.pipeline_mode<synchronous>, transform_indices = @transform_1, window_bounds = array<i64: 4, 64, 32>}, {pipeline_mode = #tpu.pipeline_mode<synchronous>, transform_indices = @transform_2, window_bounds = array<i64: 1, 1, 32>}, {pipeline_mode = #tpu.pipeline_mode<synchronous>, transform_indices = @transform_3, window_bounds = array<i64: 1, 1, 32>}, {transform_indices = @transform_4, window_bounds = array<i64: 2, 8, 8, 32>}]} {
    %cst = arith.constant 0.000000e+00 : f32
    %0 = vector.broadcast %cst : f32 to vector<128x32xf32>
    %c0 = arith.constant 0 : index
    %c0_0 = arith.constant 0 : index
    %c0_1 = arith.constant 0 : index
    %c0_2 = arith.constant 0 : index
    %1 = vector.load %arg1[%c0, %c0_0, %c0_1, %c0_2] : memref<2x9x9x64xbf16, #tpu.memory_space<vmem>>, vector<2x8x8x64xbf16>
    %2 = vector.shape_cast %1 : vector<2x8x8x64xbf16> to vector<128x64xbf16>
    %c0_3 = arith.constant 0 : index
    %c0_4 = arith.constant 0 : index
    %c0_5 = arith.constant 0 : index
    %3 = vector.load %arg2[%c0_3, %c0_4, %c0_5] : memref<4x64x32xbf16, #tpu.memory_space<vmem>>, vector<1x64x32xbf16>
    %4 = vector.shape_cast %3 : vector<1x64x32xbf16> to vector<64x32xbf16>
    %cst_6 = arith.constant dense<0.000000e+00> : vector<128x32xf32>
    %5 = tpu.matmul %2, %4, %cst_6 {dimension_numbers = #tpu.dot_dimension_numbers<[1], [0], [0], [1], [0, 0, 1, 1], [], []>} : vector<128x64xbf16>, vector<64x32xbf16>, vector<128x32xf32> -> vector<128x32xf32>
    %6 = arith.addf %0, %5 : vector<128x32xf32>
    %c0_7 = arith.constant 0 : index
    %c0_8 = arith.constant 0 : index
    %c1 = arith.constant 1 : index
    %c0_9 = arith.constant 0 : index
    %7 = vector.load %arg1[%c0_7, %c0_8, %c1, %c0_9] : memref<2x9x9x64xbf16, #tpu.memory_space<vmem>>, vector<2x8x8x64xbf16>
    %8 = vector.shape_cast %7 : vector<2x8x8x64xbf16> to vector<128x64xbf16>
    %c1_10 = arith.constant 1 : index
    %c0_11 = arith.constant 0 : index
    %c0_12 = arith.constant 0 : index
    %9 = vector.load %arg2[%c1_10, %c0_11, %c0_12] : memref<4x64x32xbf16, #tpu.memory_space<vmem>>, vector<1x64x32xbf16>
    %10 = vector.shape_cast %9 : vector<1x64x32xbf16> to vector<64x32xbf16>
    %cst_13 = arith.constant dense<0.000000e+00> : vector<128x32xf32>
    %11 = tpu.matmul %8, %10, %cst_13 {dimension_numbers = #tpu.dot_dimension_numbers<[1], [0], [0], [1], [0, 0, 1, 1], [], []>} : vector<128x64xbf16>, vector<64x32xbf16>, vector<128x32xf32> -> vector<128x32xf32>
    %12 = arith.addf %6, %11 : vector<128x32xf32>
    %c0_14 = arith.constant 0 : index
    %c1_15 = arith.constant 1 : index
    %c0_16 = arith.constant 0 : index
    %c0_17 = arith.constant 0 : index
    %13 = vector.load %arg1[%c0_14, %c1_15, %c0_16, %c0_17] : memref<2x9x9x64xbf16, #tpu.memory_space<vmem>>, vector<2x8x8x64xbf16>
    %14 = vector.shape_cast %13 : vector<2x8x8x64xbf16> to vector<128x64xbf16>
    %c2 = arith.constant 2 : index
    %c0_18 = arith.constant 0 : index
    %c0_19 = arith.constant 0 : index
    %15 = vector.load %arg2[%c2, %c0_18, %c0_19] : memref<4x64x32xbf16, #tpu.memory_space<vmem>>, vector<1x64x32xbf16>
    %16 = vector.shape_cast %15 : vector<1x64x32xbf16> to vector<64x32xbf16>
    %cst_20 = arith.constant dense<0.000000e+00> : vector<128x32xf32>
    %17 = tpu.matmul %14, %16, %cst_20 {dimension_numbers = #tpu.dot_dimension_numbers<[1], [0], [0], [1], [0, 0, 1, 1], [], []>} : vector<128x64xbf16>, vector<64x32xbf16>, vector<128x32xf32> -> vector<128x32xf32>
    %18 = arith.addf %12, %17 : vector<128x32xf32>
    %c0_21 = arith.constant 0 : index
    %c1_22 = arith.constant 1 : index
    %c1_23 = arith.constant 1 : index
    %c0_24 = arith.constant 0 : index
    %19 = vector.load %arg1[%c0_21, %c1_22, %c1_23, %c0_24] : memref<2x9x9x64xbf16, #tpu.memory_space<vmem>>, vector<2x8x8x64xbf16>
    %20 = vector.shape_cast %19 : vector<2x8x8x64xbf16> to vector<128x64xbf16>
    %c3 = arith.constant 3 : index
    %c0_25 = arith.constant 0 : index
    %c0_26 = arith.constant 0 : index
    %21 = vector.load %arg2[%c3, %c0_25, %c0_26] : memref<4x64x32xbf16, #tpu.memory_space<vmem>>, vector<1x64x32xbf16>
    %22 = vector.shape_cast %21 : vector<1x64x32xbf16> to vector<64x32xbf16>
    %cst_27 = arith.constant dense<0.000000e+00> : vector<128x32xf32>
    %23 = tpu.matmul %20, %22, %cst_27 {dimension_numbers = #tpu.dot_dimension_numbers<[1], [0], [0], [1], [0, 0, 1, 1], [], []>} : vector<128x64xbf16>, vector<64x32xbf16>, vector<128x32xf32> -> vector<128x32xf32>
    %24 = arith.addf %18, %23 : vector<128x32xf32>
    %25 = vector.shape_cast %24 : vector<128x32xf32> to vector<2x64x32xf32>
    %c0_28 = arith.constant 0 : index
    %c0_29 = arith.constant 0 : index
    %c0_30 = arith.constant 0 : index
    %26 = vector.load %arg3[%c0_28, %c0_29, %c0_30] : memref<1x1x32xf32, #tpu.memory_space<vmem>>, vector<1x1x32xf32>
    %c0_31 = arith.constant 0 : index
    %c0_32 = arith.constant 0 : index
    %c0_33 = arith.constant 0 : index
    %27 = vector.load %arg4[%c0_31, %c0_32, %c0_33] : memref<1x1x32xf32, #tpu.memory_space<vmem>>, vector<1x1x32xf32>
    %cst_34 = arith.constant dense<0.000000e+00> : vector<2x32xf32>
    %28 = vector.multi_reduction <add>, %25, %cst_34 [1] : vector<2x64x32xf32> to vector<2x32xf32>
    %29 = vector.shape_cast %28 : vector<2x32xf32> to vector<2x1x32xf32>
    %cst_35 = arith.constant 1.562500e-02 : f32
    %30 = vector.broadcast %cst_35 : f32 to vector<2x1x32xf32>
    %31 = arith.mulf %29, %30 : vector<2x1x32xf32>
    %32 = arith.mulf %25, %25 : vector<2x64x32xf32>
    %cst_36 = arith.constant dense<0.000000e+00> : vector<2x32xf32>
    %33 = vector.multi_reduction <add>, %32, %cst_36 [1] : vector<2x64x32xf32> to vector<2x32xf32>
    %34 = vector.shape_cast %33 : vector<2x32xf32> to vector<2x1x32xf32>
    %cst_37 = arith.constant 1.562500e-02 : f32
    %35 = vector.broadcast %cst_37 : f32 to vector<2x1x32xf32>
    %36 = arith.mulf %34, %35 : vector<2x1x32xf32>
    %37 = arith.mulf %31, %31 : vector<2x1x32xf32>
    %38 = arith.subf %36, %37 : vector<2x1x32xf32>
    %cst_38 = arith.constant 0.000000e+00 : f32
    %39 = vector.broadcast %cst_38 : f32 to vector<2x1x32xf32>
    %40 = arith.maximumf %38, %39 : vector<2x1x32xf32>
    %41 = vector.broadcast %31 : vector<2x1x32xf32> to vector<2x64x32xf32>
    %42 = arith.subf %25, %41 : vector<2x64x32xf32>
    %cst_39 = arith.constant 9.99999974E-6 : f32
    %43 = vector.broadcast %cst_39 : f32 to vector<2x1x32xf32>
    %44 = arith.addf %40, %43 : vector<2x1x32xf32>
    %45 = math.rsqrt %44 : vector<2x1x32xf32>
    %46 = vector.broadcast %45 : vector<2x1x32xf32> to vector<2x64x32xf32>
    %47 = arith.mulf %42, %46 : vector<2x64x32xf32>
    %48 = vector.broadcast %26 : vector<1x1x32xf32> to vector<2x64x32xf32>
    %49 = arith.mulf %47, %48 : vector<2x64x32xf32>
    %50 = vector.broadcast %27 : vector<1x1x32xf32> to vector<2x64x32xf32>
    %51 = arith.addf %49, %50 : vector<2x64x32xf32>
    %cst_40 = arith.constant 2.000000e-01 : f32
    %52 = vector.broadcast %cst_40 : f32 to vector<2x64x32xf32>
    %53 = arith.mulf %52, %51 : vector<2x64x32xf32>
    %54 = arith.maximumf %51, %53 : vector<2x64x32xf32>
    %55 = vector.shape_cast %54 : vector<2x64x32xf32> to vector<2x8x8x32xf32>
    %56 = arith.truncf %55 : vector<2x8x8x32xf32> to vector<2x8x8x32xbf16>
    %c0_41 = arith.constant 0 : index
    %c0_42 = arith.constant 0 : index
    %c0_43 = arith.constant 0 : index
    %c0_44 = arith.constant 0 : index
    %57 = vector.load %arg5[%c0_41, %c0_42, %c0_43, %c0_44] : memref<2x8x8x32xbf16, #tpu.memory_space<vmem>>, vector<2x8x8x32xbf16>
    tpu.vector_store %arg5[%c0_41, %c0_42, %c0_43, %c0_44], %56 {strides = array<i32>} : memref<2x8x8x32xbf16, #tpu.memory_space<vmem>>, vector<2x8x8x32xbf16>,
    return
  }
  func.func @transform_0(%arg0: i32) -> (i32, i32, i32, i32) {
    %c0_i32 = arith.constant 0 : i32
    %c0_i32_0 = arith.constant 0 : i32
    %c0_i32_1 = arith.constant 0 : i32
    %c0_i32_2 = arith.constant 0 : i32
    return %arg0, %c0_i32, %c0_i32_0, %c0_i32_1 : i32, i32, i32, i32
  }
  func.func @transform_1(%arg0: i32) -> (i32, i32, i32) {
    %c0_i32 = arith.constant 0 : i32
    %c0_i32_0 = arith.constant 0 : i32
    %c0_i32_1 = arith.constant 0 : i32
    %c0_i32_2 = arith.constant 0 : i32
    return %c0_i32, %c0_i32_0, %c0_i32_1 : i32, i32, i32
  }
  func.func @transform_2(%arg0: i32) -> (i32, i32, i32) {
    %c0_i32 = arith.constant 0 : i32
    %c0_i32_0 = arith.constant 0 : i32
    %c0_i32_1 = arith.constant 0 : i32
    %c0_i32_2 = arith.constant 0 : i32
    return %c0_i32, %c0_i32_0, %c0_i32_1 : i32, i32, i32
  }
  func.func @transform_3(%arg0: i32) -> (i32, i32, i32) {
    %c0_i32 = arith.constant 0 : i32
    %c0_i32_0 = arith.constant 0 : i32
    %c0_i32_1 = arith.constant 0 : i32
    %c0_i32_2 = arith.constant 0 : i32
    return %c0_i32, %c0_i32_0, %c0_i32_1 : i32, i32, i32
  }
  func.func @transform_4(%arg0: i32) -> (i32, i32, i32, i32) {
    %c0_i32 = arith.constant 0 : i32
    %c0_i32_0 = arith.constant 0 : i32
    %c0_i32_1 = arith.constant 0 : i32
    %c0_i32_2 = arith.constant 0 : i32
    return %arg0, %c0_i32, %c0_i32_0, %c0_i32_1 : i32, i32, i32, i32
  }
}

module attributes {stable_mosaic.version = 11 : i64} {
  func.func @_conv3_conv4_kernel(%arg0: i32, %arg1: memref<2x16x512xbf16, #tpu.memory_space<vmem>>, %arg2: memref<512x64xbf16, #tpu.memory_space<vmem>>, %arg3: memref<1x1x64xf32, #tpu.memory_space<vmem>>, %arg4: memref<1x1x64xf32, #tpu.memory_space<vmem>>, %arg5: memref<16x64x8xbf16, #tpu.memory_space<vmem>>, %arg6: memref<2x1x8xf32, #tpu.memory_space<vmem>>) attributes {dimension_semantics = [#tpu.dimension_semantics<parallel>], iteration_bounds = array<i64: 2>, scalar_prefetch = 0 : i64, scratch_operands = 0 : i64, tpu.core_type = #tpu.core_type<tc>, window_params = [{transform_indices = @transform_0, window_bounds = array<i64: 2, 16, 512>}, {pipeline_mode = #tpu.pipeline_mode<synchronous>, transform_indices = @transform_1, window_bounds = array<i64: 512, 64>}, {pipeline_mode = #tpu.pipeline_mode<synchronous>, transform_indices = @transform_2, window_bounds = array<i64: 1, 1, 64>}, {pipeline_mode = #tpu.pipeline_mode<synchronous>, transform_indices = @transform_3, window_bounds = array<i64: 1, 1, 64>}, {pipeline_mode = #tpu.pipeline_mode<synchronous>, transform_indices = @transform_4, window_bounds = array<i64: 16, 64, 8>}, {transform_indices = @transform_5, window_bounds = array<i64: 2, 1, 8>}]} {
    %c0 = arith.constant 0 : index
    %c0_0 = arith.constant 0 : index
    %c0_1 = arith.constant 0 : index
    %0 = vector.load %arg1[%c0, %c0_0, %c0_1] : memref<2x16x512xbf16, #tpu.memory_space<vmem>>, vector<2x16x512xbf16>
    %1 = vector.shape_cast %0 : vector<2x16x512xbf16> to vector<32x512xbf16>
    %c0_2 = arith.constant 0 : index
    %c0_3 = arith.constant 0 : index
    %2 = vector.load %arg2[%c0_2, %c0_3] : memref<512x64xbf16, #tpu.memory_space<vmem>>, vector<512x64xbf16>
    %cst = arith.constant dense<0.000000e+00> : vector<32x64xf32>
    %3 = tpu.matmul %1, %2, %cst {dimension_numbers = #tpu.dot_dimension_numbers<[1], [0], [0], [1], [0, 0, 1, 1], [], []>} : vector<32x512xbf16>, vector<512x64xbf16>, vector<32x64xf32> -> vector<32x64xf32>
    %4 = vector.shape_cast %3 : vector<32x64xf32> to vector<2x16x64xf32>
    %c0_4 = arith.constant 0 : index
    %c0_5 = arith.constant 0 : index
    %c0_6 = arith.constant 0 : index
    %5 = vector.load %arg3[%c0_4, %c0_5, %c0_6] : memref<1x1x64xf32, #tpu.memory_space<vmem>>, vector<1x1x64xf32>
    %c0_7 = arith.constant 0 : index
    %c0_8 = arith.constant 0 : index
    %c0_9 = arith.constant 0 : index
    %6 = vector.load %arg4[%c0_7, %c0_8, %c0_9] : memref<1x1x64xf32, #tpu.memory_space<vmem>>, vector<1x1x64xf32>
    %cst_10 = arith.constant dense<0.000000e+00> : vector<2x64xf32>
    %7 = vector.multi_reduction <add>, %4, %cst_10 [1] : vector<2x16x64xf32> to vector<2x64xf32>
    %8 = vector.shape_cast %7 : vector<2x64xf32> to vector<2x1x64xf32>
    %cst_11 = arith.constant 6.250000e-02 : f32
    %9 = vector.broadcast %cst_11 : f32 to vector<2x1x64xf32>
    %10 = arith.mulf %8, %9 : vector<2x1x64xf32>
    %11 = arith.mulf %4, %4 : vector<2x16x64xf32>
    %cst_12 = arith.constant dense<0.000000e+00> : vector<2x64xf32>
    %12 = vector.multi_reduction <add>, %11, %cst_12 [1] : vector<2x16x64xf32> to vector<2x64xf32>
    %13 = vector.shape_cast %12 : vector<2x64xf32> to vector<2x1x64xf32>
    %cst_13 = arith.constant 6.250000e-02 : f32
    %14 = vector.broadcast %cst_13 : f32 to vector<2x1x64xf32>
    %15 = arith.mulf %13, %14 : vector<2x1x64xf32>
    %16 = arith.mulf %10, %10 : vector<2x1x64xf32>
    %17 = arith.subf %15, %16 : vector<2x1x64xf32>
    %cst_14 = arith.constant 0.000000e+00 : f32
    %18 = vector.broadcast %cst_14 : f32 to vector<2x1x64xf32>
    %19 = arith.maximumf %17, %18 : vector<2x1x64xf32>
    %20 = vector.broadcast %10 : vector<2x1x64xf32> to vector<2x16x64xf32>
    %21 = arith.subf %4, %20 : vector<2x16x64xf32>
    %cst_15 = arith.constant 9.99999974E-6 : f32
    %22 = vector.broadcast %cst_15 : f32 to vector<2x1x64xf32>
    %23 = arith.addf %19, %22 : vector<2x1x64xf32>
    %24 = math.rsqrt %23 : vector<2x1x64xf32>
    %25 = vector.broadcast %24 : vector<2x1x64xf32> to vector<2x16x64xf32>
    %26 = arith.mulf %21, %25 : vector<2x16x64xf32>
    %27 = vector.broadcast %5 : vector<1x1x64xf32> to vector<2x16x64xf32>
    %28 = arith.mulf %26, %27 : vector<2x16x64xf32>
    %29 = vector.broadcast %6 : vector<1x1x64xf32> to vector<2x16x64xf32>
    %30 = arith.addf %28, %29 : vector<2x16x64xf32>
    %cst_16 = arith.constant 2.000000e-01 : f32
    %31 = vector.broadcast %cst_16 : f32 to vector<2x16x64xf32>
    %32 = arith.mulf %31, %30 : vector<2x16x64xf32>
    %33 = arith.maximumf %30, %32 : vector<2x16x64xf32>
    %34 = arith.truncf %33 : vector<2x16x64xf32> to vector<2x16x64xbf16>
    %cst_17 = arith.constant 0.000000e+00 : f32
    %35 = vector.broadcast %cst_17 : f32 to vector<2x8xf32>
    %36 = vector.extract_strided_slice %34 {offsets = [0, 0, 0], sizes = [2, 1, 64], strides = [1, 1, 1]} : vector<2x16x64xbf16> to vector<2x1x64xbf16>
    %37 = vector.shape_cast %36 : vector<2x1x64xbf16> to vector<2x64xbf16>
    %c0_18 = arith.constant 0 : index
    %c0_19 = arith.constant 0 : index
    %c0_20 = arith.constant 0 : index
    %38 = vector.load %arg5[%c0_18, %c0_19, %c0_20] : memref<16x64x8xbf16, #tpu.memory_space<vmem>>, vector<1x64x8xbf16>
    %39 = vector.shape_cast %38 : vector<1x64x8xbf16> to vector<64x8xbf16>
    %cst_21 = arith.constant dense<0.000000e+00> : vector<2x8xf32>
    %40 = tpu.matmul %37, %39, %cst_21 {dimension_numbers = #tpu.dot_dimension_numbers<[1], [0], [0], [1], [0, 0, 1, 1], [], []>} : vector<2x64xbf16>, vector<64x8xbf16>, vector<2x8xf32> -> vector<2x8xf32>
    %41 = arith.addf %35, %40 : vector<2x8xf32>
    %42 = vector.extract_strided_slice %34 {offsets = [0, 1, 0], sizes = [2, 1, 64], strides = [1, 1, 1]} : vector<2x16x64xbf16> to vector<2x1x64xbf16>
    %43 = vector.shape_cast %42 : vector<2x1x64xbf16> to vector<2x64xbf16>
    %c1 = arith.constant 1 : index
    %c0_22 = arith.constant 0 : index
    %c0_23 = arith.constant 0 : index
    %44 = vector.load %arg5[%c1, %c0_22, %c0_23] : memref<16x64x8xbf16, #tpu.memory_space<vmem>>, vector<1x64x8xbf16>
    %45 = vector.shape_cast %44 : vector<1x64x8xbf16> to vector<64x8xbf16>
    %cst_24 = arith.constant dense<0.000000e+00> : vector<2x8xf32>
    %46 = tpu.matmul %43, %45, %cst_24 {dimension_numbers = #tpu.dot_dimension_numbers<[1], [0], [0], [1], [0, 0, 1, 1], [], []>} : vector<2x64xbf16>, vector<64x8xbf16>, vector<2x8xf32> -> vector<2x8xf32>
    %47 = arith.addf %41, %46 : vector<2x8xf32>
    %48 = vector.extract_strided_slice %34 {offsets = [0, 2, 0], sizes = [2, 1, 64], strides = [1, 1, 1]} : vector<2x16x64xbf16> to vector<2x1x64xbf16>
    %49 = vector.shape_cast %48 : vector<2x1x64xbf16> to vector<2x64xbf16>
    %c2 = arith.constant 2 : index
    %c0_25 = arith.constant 0 : index
    %c0_26 = arith.constant 0 : index
    %50 = vector.load %arg5[%c2, %c0_25, %c0_26] : memref<16x64x8xbf16, #tpu.memory_space<vmem>>, vector<1x64x8xbf16>
    %51 = vector.shape_cast %50 : vector<1x64x8xbf16> to vector<64x8xbf16>
    %cst_27 = arith.constant dense<0.000000e+00> : vector<2x8xf32>
    %52 = tpu.matmul %49, %51, %cst_27 {dimension_numbers = #tpu.dot_dimension_numbers<[1], [0], [0], [1], [0, 0, 1, 1], [], []>} : vector<2x64xbf16>, vector<64x8xbf16>, vector<2x8xf32> -> vector<2x8xf32>
    %53 = arith.addf %47, %52 : vector<2x8xf32>
    %54 = vector.extract_strided_slice %34 {offsets = [0, 3, 0], sizes = [2, 1, 64], strides = [1, 1, 1]} : vector<2x16x64xbf16> to vector<2x1x64xbf16>
    %55 = vector.shape_cast %54 : vector<2x1x64xbf16> to vector<2x64xbf16>
    %c3 = arith.constant 3 : index
    %c0_28 = arith.constant 0 : index
    %c0_29 = arith.constant 0 : index
    %56 = vector.load %arg5[%c3, %c0_28, %c0_29] : memref<16x64x8xbf16, #tpu.memory_space<vmem>>, vector<1x64x8xbf16>
    %57 = vector.shape_cast %56 : vector<1x64x8xbf16> to vector<64x8xbf16>
    %cst_30 = arith.constant dense<0.000000e+00> : vector<2x8xf32>
    %58 = tpu.matmul %55, %57, %cst_30 {dimension_numbers = #tpu.dot_dimension_numbers<[1], [0], [0], [1], [0, 0, 1, 1], [], []>} : vector<2x64xbf16>, vector<64x8xbf16>, vector<2x8xf32> -> vector<2x8xf32>
    %59 = arith.addf %53, %58 : vector<2x8xf32>
    %60 = vector.extract_strided_slice %34 {offsets = [0, 4, 0], sizes = [2, 1, 64], strides = [1, 1, 1]} : vector<2x16x64xbf16> to vector<2x1x64xbf16>
    %61 = vector.shape_cast %60 : vector<2x1x64xbf16> to vector<2x64xbf16>
    %c4 = arith.constant 4 : index
    %c0_31 = arith.constant 0 : index
    %c0_32 = arith.constant 0 : index
    %62 = vector.load %arg5[%c4, %c0_31, %c0_32] : memref<16x64x8xbf16, #tpu.memory_space<vmem>>, vector<1x64x8xbf16>
    %63 = vector.shape_cast %62 : vector<1x64x8xbf16> to vector<64x8xbf16>
    %cst_33 = arith.constant dense<0.000000e+00> : vector<2x8xf32>
    %64 = tpu.matmul %61, %63, %cst_33 {dimension_numbers = #tpu.dot_dimension_numbers<[1], [0], [0], [1], [0, 0, 1, 1], [], []>} : vector<2x64xbf16>, vector<64x8xbf16>, vector<2x8xf32> -> vector<2x8xf32>
    %65 = arith.addf %59, %64 : vector<2x8xf32>
    %66 = vector.extract_strided_slice %34 {offsets = [0, 5, 0], sizes = [2, 1, 64], strides = [1, 1, 1]} : vector<2x16x64xbf16> to vector<2x1x64xbf16>
    %67 = vector.shape_cast %66 : vector<2x1x64xbf16> to vector<2x64xbf16>
    %c5 = arith.constant 5 : index
    %c0_34 = arith.constant 0 : index
    %c0_35 = arith.constant 0 : index
    %68 = vector.load %arg5[%c5, %c0_34, %c0_35] : memref<16x64x8xbf16, #tpu.memory_space<vmem>>, vector<1x64x8xbf16>
    %69 = vector.shape_cast %68 : vector<1x64x8xbf16> to vector<64x8xbf16>
    %cst_36 = arith.constant dense<0.000000e+00> : vector<2x8xf32>
    %70 = tpu.matmul %67, %69, %cst_36 {dimension_numbers = #tpu.dot_dimension_numbers<[1], [0], [0], [1], [0, 0, 1, 1], [], []>} : vector<2x64xbf16>, vector<64x8xbf16>, vector<2x8xf32> -> vector<2x8xf32>
    %71 = arith.addf %65, %70 : vector<2x8xf32>
    %72 = vector.extract_strided_slice %34 {offsets = [0, 6, 0], sizes = [2, 1, 64], strides = [1, 1, 1]} : vector<2x16x64xbf16> to vector<2x1x64xbf16>
    %73 = vector.shape_cast %72 : vector<2x1x64xbf16> to vector<2x64xbf16>
    %c6 = arith.constant 6 : index
    %c0_37 = arith.constant 0 : index
    %c0_38 = arith.constant 0 : index
    %74 = vector.load %arg5[%c6, %c0_37, %c0_38] : memref<16x64x8xbf16, #tpu.memory_space<vmem>>, vector<1x64x8xbf16>
    %75 = vector.shape_cast %74 : vector<1x64x8xbf16> to vector<64x8xbf16>
    %cst_39 = arith.constant dense<0.000000e+00> : vector<2x8xf32>
    %76 = tpu.matmul %73, %75, %cst_39 {dimension_numbers = #tpu.dot_dimension_numbers<[1], [0], [0], [1], [0, 0, 1, 1], [], []>} : vector<2x64xbf16>, vector<64x8xbf16>, vector<2x8xf32> -> vector<2x8xf32>
    %77 = arith.addf %71, %76 : vector<2x8xf32>
    %78 = vector.extract_strided_slice %34 {offsets = [0, 7, 0], sizes = [2, 1, 64], strides = [1, 1, 1]} : vector<2x16x64xbf16> to vector<2x1x64xbf16>
    %79 = vector.shape_cast %78 : vector<2x1x64xbf16> to vector<2x64xbf16>
    %c7 = arith.constant 7 : index
    %c0_40 = arith.constant 0 : index
    %c0_41 = arith.constant 0 : index
    %80 = vector.load %arg5[%c7, %c0_40, %c0_41] : memref<16x64x8xbf16, #tpu.memory_space<vmem>>, vector<1x64x8xbf16>
    %81 = vector.shape_cast %80 : vector<1x64x8xbf16> to vector<64x8xbf16>
    %cst_42 = arith.constant dense<0.000000e+00> : vector<2x8xf32>
    %82 = tpu.matmul %79, %81, %cst_42 {dimension_numbers = #tpu.dot_dimension_numbers<[1], [0], [0], [1], [0, 0, 1, 1], [], []>} : vector<2x64xbf16>, vector<64x8xbf16>, vector<2x8xf32> -> vector<2x8xf32>
    %83 = arith.addf %77, %82 : vector<2x8xf32>
    %84 = vector.extract_strided_slice %34 {offsets = [0, 8, 0], sizes = [2, 1, 64], strides = [1, 1, 1]} : vector<2x16x64xbf16> to vector<2x1x64xbf16>
    %85 = vector.shape_cast %84 : vector<2x1x64xbf16> to vector<2x64xbf16>
    %c8 = arith.constant 8 : index
    %c0_43 = arith.constant 0 : index
    %c0_44 = arith.constant 0 : index
    %86 = vector.load %arg5[%c8, %c0_43, %c0_44] : memref<16x64x8xbf16, #tpu.memory_space<vmem>>, vector<1x64x8xbf16>
    %87 = vector.shape_cast %86 : vector<1x64x8xbf16> to vector<64x8xbf16>
    %cst_45 = arith.constant dense<0.000000e+00> : vector<2x8xf32>
    %88 = tpu.matmul %85, %87, %cst_45 {dimension_numbers = #tpu.dot_dimension_numbers<[1], [0], [0], [1], [0, 0, 1, 1], [], []>} : vector<2x64xbf16>, vector<64x8xbf16>, vector<2x8xf32> -> vector<2x8xf32>
    %89 = arith.addf %83, %88 : vector<2x8xf32>
    %90 = vector.extract_strided_slice %34 {offsets = [0, 9, 0], sizes = [2, 1, 64], strides = [1, 1, 1]} : vector<2x16x64xbf16> to vector<2x1x64xbf16>
    %91 = vector.shape_cast %90 : vector<2x1x64xbf16> to vector<2x64xbf16>
    %c9 = arith.constant 9 : index
    %c0_46 = arith.constant 0 : index
    %c0_47 = arith.constant 0 : index
    %92 = vector.load %arg5[%c9, %c0_46, %c0_47] : memref<16x64x8xbf16, #tpu.memory_space<vmem>>, vector<1x64x8xbf16>
    %93 = vector.shape_cast %92 : vector<1x64x8xbf16> to vector<64x8xbf16>
    %cst_48 = arith.constant dense<0.000000e+00> : vector<2x8xf32>
    %94 = tpu.matmul %91, %93, %cst_48 {dimension_numbers = #tpu.dot_dimension_numbers<[1], [0], [0], [1], [0, 0, 1, 1], [], []>} : vector<2x64xbf16>, vector<64x8xbf16>, vector<2x8xf32> -> vector<2x8xf32>
    %95 = arith.addf %89, %94 : vector<2x8xf32>
    %96 = vector.extract_strided_slice %34 {offsets = [0, 10, 0], sizes = [2, 1, 64], strides = [1, 1, 1]} : vector<2x16x64xbf16> to vector<2x1x64xbf16>
    %97 = vector.shape_cast %96 : vector<2x1x64xbf16> to vector<2x64xbf16>
    %c10 = arith.constant 10 : index
    %c0_49 = arith.constant 0 : index
    %c0_50 = arith.constant 0 : index
    %98 = vector.load %arg5[%c10, %c0_49, %c0_50] : memref<16x64x8xbf16, #tpu.memory_space<vmem>>, vector<1x64x8xbf16>
    %99 = vector.shape_cast %98 : vector<1x64x8xbf16> to vector<64x8xbf16>
    %cst_51 = arith.constant dense<0.000000e+00> : vector<2x8xf32>
    %100 = tpu.matmul %97, %99, %cst_51 {dimension_numbers = #tpu.dot_dimension_numbers<[1], [0], [0], [1], [0, 0, 1, 1], [], []>} : vector<2x64xbf16>, vector<64x8xbf16>, vector<2x8xf32> -> vector<2x8xf32>
    %101 = arith.addf %95, %100 : vector<2x8xf32>
    %102 = vector.extract_strided_slice %34 {offsets = [0, 11, 0], sizes = [2, 1, 64], strides = [1, 1, 1]} : vector<2x16x64xbf16> to vector<2x1x64xbf16>
    %103 = vector.shape_cast %102 : vector<2x1x64xbf16> to vector<2x64xbf16>
    %c11 = arith.constant 11 : index
    %c0_52 = arith.constant 0 : index
    %c0_53 = arith.constant 0 : index
    %104 = vector.load %arg5[%c11, %c0_52, %c0_53] : memref<16x64x8xbf16, #tpu.memory_space<vmem>>, vector<1x64x8xbf16>
    %105 = vector.shape_cast %104 : vector<1x64x8xbf16> to vector<64x8xbf16>
    %cst_54 = arith.constant dense<0.000000e+00> : vector<2x8xf32>
    %106 = tpu.matmul %103, %105, %cst_54 {dimension_numbers = #tpu.dot_dimension_numbers<[1], [0], [0], [1], [0, 0, 1, 1], [], []>} : vector<2x64xbf16>, vector<64x8xbf16>, vector<2x8xf32> -> vector<2x8xf32>
    %107 = arith.addf %101, %106 : vector<2x8xf32>
    %108 = vector.extract_strided_slice %34 {offsets = [0, 12, 0], sizes = [2, 1, 64], strides = [1, 1, 1]} : vector<2x16x64xbf16> to vector<2x1x64xbf16>
    %109 = vector.shape_cast %108 : vector<2x1x64xbf16> to vector<2x64xbf16>
    %c12 = arith.constant 12 : index
    %c0_55 = arith.constant 0 : index
    %c0_56 = arith.constant 0 : index
    %110 = vector.load %arg5[%c12, %c0_55, %c0_56] : memref<16x64x8xbf16, #tpu.memory_space<vmem>>, vector<1x64x8xbf16>
    %111 = vector.shape_cast %110 : vector<1x64x8xbf16> to vector<64x8xbf16>
    %cst_57 = arith.constant dense<0.000000e+00> : vector<2x8xf32>
    %112 = tpu.matmul %109, %111, %cst_57 {dimension_numbers = #tpu.dot_dimension_numbers<[1], [0], [0], [1], [0, 0, 1, 1], [], []>} : vector<2x64xbf16>, vector<64x8xbf16>, vector<2x8xf32> -> vector<2x8xf32>
    %113 = arith.addf %107, %112 : vector<2x8xf32>
    %114 = vector.extract_strided_slice %34 {offsets = [0, 13, 0], sizes = [2, 1, 64], strides = [1, 1, 1]} : vector<2x16x64xbf16> to vector<2x1x64xbf16>
    %115 = vector.shape_cast %114 : vector<2x1x64xbf16> to vector<2x64xbf16>
    %c13 = arith.constant 13 : index
    %c0_58 = arith.constant 0 : index
    %c0_59 = arith.constant 0 : index
    %116 = vector.load %arg5[%c13, %c0_58, %c0_59] : memref<16x64x8xbf16, #tpu.memory_space<vmem>>, vector<1x64x8xbf16>
    %117 = vector.shape_cast %116 : vector<1x64x8xbf16> to vector<64x8xbf16>
    %cst_60 = arith.constant dense<0.000000e+00> : vector<2x8xf32>
    %118 = tpu.matmul %115, %117, %cst_60 {dimension_numbers = #tpu.dot_dimension_numbers<[1], [0], [0], [1], [0, 0, 1, 1], [], []>} : vector<2x64xbf16>, vector<64x8xbf16>, vector<2x8xf32> -> vector<2x8xf32>
    %119 = arith.addf %113, %118 : vector<2x8xf32>
    %120 = vector.extract_strided_slice %34 {offsets = [0, 14, 0], sizes = [2, 1, 64], strides = [1, 1, 1]} : vector<2x16x64xbf16> to vector<2x1x64xbf16>
    %121 = vector.shape_cast %120 : vector<2x1x64xbf16> to vector<2x64xbf16>
    %c14 = arith.constant 14 : index
    %c0_61 = arith.constant 0 : index
    %c0_62 = arith.constant 0 : index
    %122 = vector.load %arg5[%c14, %c0_61, %c0_62] : memref<16x64x8xbf16, #tpu.memory_space<vmem>>, vector<1x64x8xbf16>
    %123 = vector.shape_cast %122 : vector<1x64x8xbf16> to vector<64x8xbf16>
    %cst_63 = arith.constant dense<0.000000e+00> : vector<2x8xf32>
    %124 = tpu.matmul %121, %123, %cst_63 {dimension_numbers = #tpu.dot_dimension_numbers<[1], [0], [0], [1], [0, 0, 1, 1], [], []>} : vector<2x64xbf16>, vector<64x8xbf16>, vector<2x8xf32> -> vector<2x8xf32>
    %125 = arith.addf %119, %124 : vector<2x8xf32>
    %126 = vector.extract_strided_slice %34 {offsets = [0, 15, 0], sizes = [2, 1, 64], strides = [1, 1, 1]} : vector<2x16x64xbf16> to vector<2x1x64xbf16>
    %127 = vector.shape_cast %126 : vector<2x1x64xbf16> to vector<2x64xbf16>
    %c15 = arith.constant 15 : index
    %c0_64 = arith.constant 0 : index
    %c0_65 = arith.constant 0 : index
    %128 = vector.load %arg5[%c15, %c0_64, %c0_65] : memref<16x64x8xbf16, #tpu.memory_space<vmem>>, vector<1x64x8xbf16>
    %129 = vector.shape_cast %128 : vector<1x64x8xbf16> to vector<64x8xbf16>
    %cst_66 = arith.constant dense<0.000000e+00> : vector<2x8xf32>
    %130 = tpu.matmul %127, %129, %cst_66 {dimension_numbers = #tpu.dot_dimension_numbers<[1], [0], [0], [1], [0, 0, 1, 1], [], []>} : vector<2x64xbf16>, vector<64x8xbf16>, vector<2x8xf32> -> vector<2x8xf32>
    %131 = arith.addf %125, %130 : vector<2x8xf32>
    %c0_67 = arith.constant 0 : index
    %c0_68 = arith.constant 0 : index
    %c0_69 = arith.constant 0 : index
    %132 = vector.load %arg6[%c0_67, %c0_68, %c0_69] : memref<2x1x8xf32, #tpu.memory_space<vmem>>, vector<2x1x8xf32>
    %133 = vector.shape_cast %132 : vector<2x1x8xf32> to vector<2x8xf32>
    %134 = vector.shape_cast %131 : vector<2x8xf32> to vector<2x1x8xf32>
    tpu.vector_store %arg6[%c0_67, %c0_68, %c0_69], %134 {strides = array<i32>} : memref<2x1x8xf32, #tpu.memory_space<vmem>>, vector<2x1x8xf32>,
    return
  }
  func.func @transform_0(%arg0: i32) -> (i32, i32, i32) {
    %c0_i32 = arith.constant 0 : i32
    %c0_i32_0 = arith.constant 0 : i32
    %c0_i32_1 = arith.constant 0 : i32
    return %arg0, %c0_i32, %c0_i32_0 : i32, i32, i32
  }
  func.func @transform_1(%arg0: i32) -> (i32, i32) {
    %c0_i32 = arith.constant 0 : i32
    %c0_i32_0 = arith.constant 0 : i32
    %c0_i32_1 = arith.constant 0 : i32
    return %c0_i32, %c0_i32_0 : i32, i32
  }
  func.func @transform_2(%arg0: i32) -> (i32, i32, i32) {
    %c0_i32 = arith.constant 0 : i32
    %c0_i32_0 = arith.constant 0 : i32
    %c0_i32_1 = arith.constant 0 : i32
    %c0_i32_2 = arith.constant 0 : i32
    return %c0_i32, %c0_i32_0, %c0_i32_1 : i32, i32, i32
  }
  func.func @transform_3(%arg0: i32) -> (i32, i32, i32) {
    %c0_i32 = arith.constant 0 : i32
    %c0_i32_0 = arith.constant 0 : i32
    %c0_i32_1 = arith.constant 0 : i32
    %c0_i32_2 = arith.constant 0 : i32
    return %c0_i32, %c0_i32_0, %c0_i32_1 : i32, i32, i32
  }
  func.func @transform_4(%arg0: i32) -> (i32, i32, i32) {
    %c0_i32 = arith.constant 0 : i32
    %c0_i32_0 = arith.constant 0 : i32
    %c0_i32_1 = arith.constant 0 : i32
    %c0_i32_2 = arith.constant 0 : i32
    return %c0_i32, %c0_i32_0, %c0_i32_1 : i32, i32, i32
  }
  func.func @transform_5(%arg0: i32) -> (i32, i32, i32) {
    %c0_i32 = arith.constant 0 : i32
    %c0_i32_0 = arith.constant 0 : i32
    %c0_i32_1 = arith.constant 0 : i32
    return %arg0, %c0_i32, %c0_i32_0 : i32, i32, i32
  }
}

</mosaic_0001>

<llo_original>
// kernel: encoder_forward.3
$region0: #{encoder_forward.3}
  #allocation0 [shape = 'u32[]', space=smem, size = 0x4, offset = 0x4, fixed_abs, tag = 'smem constant byte address 0x4 - core index']
  #allocation1 [shape = 'u32[144,128]{1,0:T(1,128)}', space=vmem, size = 0x12000, scoped, tag = 'internal scratch']
  %s0 = inlined_call_operand.vmem [shape: bf16[4,17,17,52], index: 0, kind: input, shape index: {}]
  %s1 = inlined_call_operand.vmem [shape: bf16[4,52,16], index: 1, kind: input, shape index: {}]
  %s2 = inlined_call_operand.vmem [shape: f32[1,1,16], index: 2, kind: input, shape index: {}]
  %s3 = inlined_call_operand.vmem [shape: f32[1,1,16], index: 3, kind: input, shape index: {}]
  %s4 = inlined_call_operand.vmem [shape: bf16[4,16,16,16], index: 4, kind: output, shape index: {}]
  %s5 = sld [smem:[#allocation0]]
  $region49: #{encoder_forward.3} parent=0
    _
  %s7 = ssub.s32 1, %s5
  %s8 = scalar_select 0, %s7, %s5
  loop: start=0, step=1, limit=4
  $region2: #{encoder_forward.3} parent=0 // loop_pre_header
    _
  $region3: #{encoder_forward.3} parent=0 // loop_header
    %s10 = sphi 0, %s14
    %p11 = scmp.ge.s32.totalorder %s10, 4
    %s20 = sphi 0, %s22
    %s23 = sphi 0, %s20
    %s24 = sphi 0, %s23
    %s40 = sphi 0, %s24
    %s44 = sphi 0, %s44
    %s46 = sphi 0, %s44
    %s47 = sphi 0, %s46
    %s61 = sphi 0, %s47
    %s65 = sphi 0, %s65
    %s67 = sphi 0, %s65
    %s68 = sphi 0, %s67
    %s82 = sphi 0, %s68
    %s86 = sphi 0, %s86
    %s88 = sphi 0, %s86
    %s89 = sphi 0, %s88
    %s103 = sphi 0, %s89
    %s109 = sphi 0, %s111
    %s112 = sphi 0, %s109
    %s113 = sphi 0, %s112
    %s129 = sphi 0, %s113
  $region4: #{encoder_forward.3} parent=0 // loop_header_branch
    %13 = sbr.rel (%p11) target = $region8
  $region5: #{encoder_forward.3} parent=0 // loop_body
    %s15 = ssub.s32 %s10, 1
    %s16 = ssub.s32 %s10, 2
    %s17 = sadd.s32 %s10, 1
    %s18 = ssub.s32 %s10, %s17
    %p19 = scmp.eq.s32.totalorder %s18, 0
    %s21 = sadd.s32 %s20, 1
    %s22 = scalar_select %p19, %s20, %s21
    %p25 = pneg %p19
    %p26 = scmp.eq.s32.totalorder %s10, 1
    %p27 = por %p25, %p26
    %p28 = scmp.ne.s32.totalorder %s20, %s23
    %p29 = scmp.eq.s32.totalorder %s10, 0
    %p30 = por %p28, %p29
    %p31 = scmp.ne.s32.totalorder %s20, %s23
    %p32 = scmp.eq.s32.totalorder %s15, 1
    %p33 = por %p31, %p32
    %p34 = scmp.ne.s32.totalorder %s23, %s24
    %p35 = scmp.eq.s32.totalorder %s15, 0
    %p36 = por %p34, %p35
    %p37 = scmp.ne.s32.totalorder %s23, %s24
    %p38 = scmp.eq.s32.totalorder %s16, 1
    %p39 = por %p37, %p38
    %p41 = scmp.ne.s32.totalorder %s24, %s40
    %p42 = scmp.eq.s32.totalorder %s16, 0
    %p43 = por %p41, %p42
    %s45 = sadd.s32 %s44, 1
    %p48 = scmp.eq.s32.totalorder %s10, 1
    %p49 = scmp.ne.s32.totalorder %s44, %s46
    %p50 = scmp.eq.s32.totalorder %s10, 0
    %p51 = por %p49, %p50
    %p52 = scmp.ne.s32.totalorder %s44, %s46
    %p53 = scmp.eq.s32.totalorder %s15, 1
    %p54 = por %p52, %p53
    %p55 = scmp.ne.s32.totalorder %s46, %s47
    %p56 = scmp.eq.s32.totalorder %s15, 0
    %p57 = por %p55, %p56
    %p58 = scmp.ne.s32.totalorder %s46, %s47
    %p59 = scmp.eq.s32.totalorder %s16, 1
    %p60 = por %p58, %p59
    %p62 = scmp.ne.s32.totalorder %s47, %s61
    %p63 = scmp.eq.s32.totalorder %s16, 0
    %p64 = por %p62, %p63
    %s66 = sadd.s32 %s65, 1
    %p69 = scmp.eq.s32.totalorder %s10, 1
    %p70 = scmp.ne.s32.totalorder %s65, %s67
    %p71 = scmp.eq.s32.totalorder %s10, 0
    %p72 = por %p70, %p71
    %p73 = scmp.ne.s32.totalorder %s65, %s67
    %p74 = scmp.eq.s32.totalorder %s15, 1
    %p75 = por %p73, %p74
    %p76 = scmp.ne.s32.totalorder %s67, %s68
    %p77 = scmp.eq.s32.totalorder %s15, 0
    %p78 = por %p76, %p77
    %p79 = scmp.ne.s32.totalorder %s67, %s68
    %p80 = scmp.eq.s32.totalorder %s16, 1
    %p81 = por %p79, %p80
    %p83 = scmp.ne.s32.totalorder %s68, %s82
    %p84 = scmp.eq.s32.totalorder %s16, 0
    %p85 = por %p83, %p84
    %s87 = sadd.s32 %s86, 1
    %p90 = scmp.eq.s32.totalorder %s10, 1
    %p91 = scmp.ne.s32.totalorder %s86, %s88
    %p92 = scmp.eq.s32.totalorder %s10, 0
    %p93 = por %p91, %p92
    %p94 = scmp.ne.s32.totalorder %s86, %s88
    %p95 = scmp.eq.s32.totalorder %s15, 1
    %p96 = por %p94, %p95
    %p97 = scmp.ne.s32.totalorder %s88, %s89
    %p98 = scmp.eq.s32.totalorder %s15, 0
    %p99 = por %p97, %p98
    %p100 = scmp.ne.s32.totalorder %s88, %s89
    %p101 = scmp.eq.s32.totalorder %s16, 1
    %p102 = por %p100, %p101
    %p104 = scmp.ne.s32.totalorder %s89, %s103
    %p105 = scmp.eq.s32.totalorder %s16, 0
    %p106 = por %p104, %p105
    %s107 = ssub.s32 %s10, %s17
    %p108 = scmp.eq.s32.totalorder %s107, 0
    %s110 = sadd.s32 %s109, 1
    %s111 = scalar_select %p108, %s109, %s110
    %p114 = pneg %p108
    %p115 = scmp.eq.s32.totalorder %s10, 1
    %p116 = por %p114, %p115
    %p117 = scmp.ne.s32.totalorder %s109, %s112
    %p118 = scmp.eq.s32.totalorder %s10, 0
    %p119 = por %p117, %p118
    %p120 = scmp.ne.s32.totalorder %s109, %s112
    %p121 = scmp.eq.s32.totalorder %s15, 1
    %p122 = por %p120, %p121
    %p123 = scmp.ne.s32.totalorder %s112, %s113
    %p124 = scmp.eq.s32.totalorder %s15, 0
    %p125 = por %p123, %p124
    %p126 = scmp.ne.s32.totalorder %s112, %s113
    %p127 = scmp.eq.s32.totalorder %s16, 1
    %p128 = por %p126, %p127
    %p130 = scmp.ne.s32.totalorder %s113, %s129
    %p131 = scmp.eq.s32.totalorder %s16, 0
    %p132 = por %p130, %p131
    %p133 = scmp.le.s32.totalorder 1, %s10
    %p134 = scmp.lt.s32.totalorder %s10, 3
    %p135 = pnand %p133, %p134
    %p136 = pneg %p135
    // Predicated region
    $region9: #{encoder_forward.3} parent=5 // pred_check
      _
    $region10: #{encoder_forward.3} parent=5 // pred_check_branch
      %138 = sbr.rel (%p135) target = $region12
    $region11: #{encoder_forward.3} parent=5 // pred_region
      %s139 = ssub.s32 %s10, 1
      // Predicated region
      $region13: #{encoder_forward.3} parent=11 // pred_check
        %p140 = pneg %p57
      $region14: #{encoder_forward.3} parent=11 // pred_check_branch
        %142 = sbr.rel (%p140) target = $region16
      $region15: #{encoder_forward.3} parent=11 // pred_region
        _
      $region16: #{encoder_forward.3} parent=11 // pred_fallthru
        _
      // Predicated region
      $region17: #{encoder_forward.3} parent=11 // pred_check
        %p143 = pneg %p78
      $region18: #{encoder_forward.3} parent=11 // pred_check_branch
        %145 = sbr.rel (%p143) target = $region20
      $region19: #{encoder_forward.3} parent=11 // pred_region
        _
      $region20: #{encoder_forward.3} parent=11 // pred_fallthru
        _
      // Predicated region
      $region21: #{encoder_forward.3} parent=11 // pred_check
        %p146 = pneg %p99
      $region22: #{encoder_forward.3} parent=11 // pred_check_branch
        %148 = sbr.rel (%p146) target = $region24
      $region23: #{encoder_forward.3} parent=11 // pred_region
        _
      $region24: #{encoder_forward.3} parent=11 // pred_fallthru
        _
    $region12: #{encoder_forward.3} parent=5 // pred_fallthru
      _
    %p149 = scmp.lt.s32.totalorder %s10, 2
    // Predicated region
    $region25: #{encoder_forward.3} parent=5 // pred_check
      %p150 = pneg %p149
    $region26: #{encoder_forward.3} parent=5 // pred_check_branch
      %152 = sbr.rel (%p150) target = $region28
    $region27: #{encoder_forward.3} parent=5 // pred_region
      // Predicated region
      $region29: #{encoder_forward.3} parent=27 // pred_check
        %p153 = pneg %p30
      $region30: #{encoder_forward.3} parent=27 // pred_check_branch
        %155 = sbr.rel (%p153) target = $region32
      $region31: #{encoder_forward.3} parent=27 // pred_region
        %s156 = smul.u32 2, %s10
        %p157 = scmp.lt.s32.totalorder %s156, 3
        %s158 = scalar_select %p157, %s156, 3
        %s159 = smul.addr %s158, 51
        %s160 = smul.addr %s159, 4
        %s161 = scalar_lea.vmem %s0, %s160
        %s162 = smul.u32 2, %s10
      $region32: #{encoder_forward.3} parent=27 // pred_fallthru
        _
    $region28: #{encoder_forward.3} parent=5 // pred_fallthru
      _
    %p163 = scmp.le.s32.totalorder 1, %s10
    %p164 = scmp.lt.s32.totalorder %s10, 3
    %p165 = pnand %p163, %p164
    %p166 = pneg %p165
    // Predicated region
    $region33: #{encoder_forward.3} parent=5 // pred_check
      _
    $region34: #{encoder_forward.3} parent=5 // pred_check_branch
      %168 = sbr.rel (%p165) target = $region36
    $region35: #{encoder_forward.3} parent=5 // pred_region
      %s169 = ssub.s32 %s10, 1
      %s170 = smul.u32 2, %s15
      %p171 = scmp.lt.s32.totalorder %s170, 3
      %s172 = scalar_select %p171, %s170, 3
      %s173 = smul.addr %s172, 51
      %s174 = smul.addr %s173, 4
      %s175 = scalar_lea.vmem %s0, %s174
      %p176 = pneg %p36
      %p177 = pneg %p33
      %p178 = pneg %p57
      %p179 = pneg %p54
      %p180 = pneg %p78
      %p181 = pneg %p75
      %p182 = pneg %p99
      %p183 = pneg %p96
      %p184 = pneg %p125
      %p185 = pneg %p122
      %s186 = smul.u32 2, %s15
      %p187 = scmp.lt.s32.totalorder %s186, 3
      %s188 = scalar_select %p187, %s186, 3
      %s189 = smul.addr %s188, 32
      %s190 = smul.addr %s189, 4
      %s191 = scalar_lea.vmem %s4, %s190
      %s192 = smul.u32 2, %s15
      %p193 = scmp.lt.s32.totalorder %s192, 3
      %s194 = scalar_select %p193, %s192, 3
      %s195 = smul.addr %s194, 51
      %s196 = smul.addr %s195, 4
      %s197 = scalar_lea.vmem %s0, %s196
      %s198 = smul.u32 2, %s15
      %s199 = smul.u32 2, %s15
      %p200 = scmp.lt.s32.totalorder %s199, 3
      %s201 = scalar_select %p200, %s199, 3
      %s202 = smul.addr %s201, 32
      %s203 = smul.addr %s202, 4
      %s204 = scalar_lea.vmem %s4, %s203
      %s205 = smul.u32 2, %s15
      %v207 = vld [vmem:[%s197] sm:$0xf]
      %v208 = vld [vmem:[%s197 + $0x4] sm:$0xf]
      %v209 = vld [vmem:[%s197 + $0xc] sm:$0xf]
      %v210 = vld [vmem:[%s197 + $0x10] sm:$0xf]
      %v211 = vld [vmem:[%s197 + $0x18] sm:$0xf]
      %v212 = vld [vmem:[%s197 + $0x1c] sm:$0xf]
      %v213 = vld [vmem:[%s197 + $0x24] sm:$0xf]
      %v214 = vld [vmem:[%s197 + $0x28] sm:$0xf]
      %v215 = vld [vmem:[%s197 + $0x30] sm:$0xf]
      %v216 = vld [vmem:[%s197 + $0x34] sm:$0xf]
      %v217 = vld [vmem:[%s197 + $0x3c] sm:$0xf]
      %v218 = vld [vmem:[%s197 + $0x40] sm:$0xf]
      %v219 = vld [vmem:[%s197 + $0x48] sm:$0xf]
      %v220 = vld [vmem:[%s197 + $0x4c] sm:$0xf]
      %v221 = vld [vmem:[%s197 + $0x54] sm:$0xf]
      %v222 = vld [vmem:[%s197 + $0x58] sm:$0xf]
      %v223 = vld [vmem:[%s197 + $0x60] sm:$0xf]
      %v224 = vld [vmem:[%s197 + $0x64] sm:$0xf]
      %v225 = vld [vmem:[%s197 + $0x6c] sm:$0xf]
      %v226 = vld [vmem:[%s197 + $0x70] sm:$0xf]
      %v227 = vld [vmem:[%s197 + $0x78] sm:$0xf]
      %v228 = vld [vmem:[%s197 + $0x7c] sm:$0xf]
      %v229 = vld [vmem:[%s197 + $0x84] sm:$0xf]
      %v230 = vld [vmem:[%s197 + $0x88] sm:$0xf]
      %v231 = vld [vmem:[%s197 + $0x90] sm:$0xf]
      %v232 = vld [vmem:[%s197 + $0x94] sm:$0xf]
      %v233 = vld [vmem:[%s197 + $0x9c] sm:$0xf]
      %v234 = vld [vmem:[%s197 + $0xa0] sm:$0xf]
      %v235 = vld [vmem:[%s197 + $0xa8] sm:$0xf]
      %v236 = vld [vmem:[%s197 + $0xac] sm:$0xf]
      %v237 = vld [vmem:[%s197 + $0xb4] sm:$0xf]
      %v238 = vld [vmem:[%s197 + $0xb8] sm:$0xf]
      %v239 = vld [vmem:[%s197 + $0xcc] sm:$0xf]
      %v240 = vld [vmem:[%s197 + $0xd0] sm:$0xf]
      %v241 = vld [vmem:[%s197 + $0xd8] sm:$0xf]
      %v242 = vld [vmem:[%s197 + $0xdc] sm:$0xf]
      %v243 = vld [vmem:[%s197 + $0xe4] sm:$0xf]
      %v244 = vld [vmem:[%s197 + $0xe8] sm:$0xf]
      %v245 = vld [vmem:[%s197 + $0xf0] sm:$0xf]
      %v246 = vld [vmem:[%s197 + $0xf4] sm:$0xf]
      %v247 = vld [vmem:[%s197 + $0xfc] sm:$0xf]
      %v248 = vld [vmem:[%s197 + $0x100] sm:$0xf]
      %v249 = vld [vmem:[%s197 + $0x108] sm:$0xf]
      %v250 = vld [vmem:[%s197 + $0x10c] sm:$0xf]
      %v251 = vld [vmem:[%s197 + $0x114] sm:$0xf]
      %v252 = vld [vmem:[%s197 + $0x118] sm:$0xf]
      %v253 = vld [vmem:[%s197 + $0x120] sm:$0xf]
      %v254 = vld [vmem:[%s197 + $0x124] sm:$0xf]
      %v255 = vld [vmem:[%s197 + $0x12c] sm:$0xf]
      %v256 = vld [vmem:[%s197 + $0x130] sm:$0xf]
      %v257 = vld [vmem:[%s197 + $0x138] sm:$0xf]
      %v258 = vld [vmem:[%s197 + $0x13c] sm:$0xf]
      %v259 = vld [vmem:[%s197 + $0x144] sm:$0xf]
      %v260 = vld [vmem:[%s197 + $0x148] sm:$0xf]
      %v261 = vld [vmem:[%s197 + $0x150] sm:$0xf]
      %v262 = vld [vmem:[%s197 + $0x154] sm:$0xf]
      %v263 = vld [vmem:[%s197 + $0x15c] sm:$0xf]
      %v264 = vld [vmem:[%s197 + $0x160] sm:$0xf]
      %v265 = vld [vmem:[%s197 + $0x168] sm:$0xf]
      %v266 = vld [vmem:[%s197 + $0x16c] sm:$0xf]
      %v267 = vld [vmem:[%s197 + $0x174] sm:$0xf]
      %v268 = vld [vmem:[%s197 + $0x178] sm:$0xf]
      %v269 = vld [vmem:[%s197 + $0x180] sm:$0xf]
      %v270 = vld [vmem:[%s197 + $0x184] sm:$0xf]
      %v271 = vld [vmem:[%s1] sm:$0xf]
      %v272 = vld [vmem:[%s1 + $0x4] sm:$0xf]
      %v273 = vld [vmem:[%s1 + $0x8] sm:$0xf]
      %v274 = vld [vmem:[%s1 + $0xc] sm:$0xf]
      %v275 = vld [vmem:[%s1 + $0x10] sm:$0xf]
      %v276 = vld [vmem:[%s1 + $0x14] sm:$0xf]
      %v277 = vld [vmem:[%s1 + $0x18] sm:$0x3]
      %v278 = vld [vmem:[%s197 + $0x8] sm:$0x1]
      %v279 = vld [vmem:[%s197 + $0x14] sm:$0x1]
      %v280 = vld [vmem:[%s197 + $0x20] sm:$0x1]
      %v281 = vld [vmem:[%s197 + $0x2c] sm:$0x1]
      %v282 = vld [vmem:[%s197 + $0x38] sm:$0x1]
      %v283 = vld [vmem:[%s197 + $0x44] sm:$0x1]
      %v284 = vld [vmem:[%s197 + $0x50] sm:$0x1]
      %v285 = vld [vmem:[%s197 + $0x5c] sm:$0x1]
      %v286 = vld [vmem:[%s197 + $0x68] sm:$0x1]
      %v287 = vld [vmem:[%s197 + $0x74] sm:$0x1]
      %v288 = vld [vmem:[%s197 + $0x80] sm:$0x1]
      %v289 = vld [vmem:[%s197 + $0x8c] sm:$0x1]
      %v290 = vld [vmem:[%s197 + $0x98] sm:$0x1]
      %v291 = vld [vmem:[%s197 + $0xa4] sm:$0x1]
      %v292 = vld [vmem:[%s197 + $0xb0] sm:$0x1]
      %v293 = vld [vmem:[%s197 + $0xbc] sm:$0x1]
      %v294 = vld [vmem:[%s197 + $0xd4] sm:$0x1]
      %v295 = vld [vmem:[%s197 + $0xe0] sm:$0x1]
      %v296 = vld [vmem:[%s197 + $0xec] sm:$0x1]
      %v297 = vld [vmem:[%s197 + $0xf8] sm:$0x1]
      %v298 = vld [vmem:[%s197 + $0x104] sm:$0x1]
      %v299 = vld [vmem:[%s197 + $0x110] sm:$0x1]
      %v300 = vld [vmem:[%s197 + $0x11c] sm:$0x1]
      %v301 = vld [vmem:[%s197 + $0x128] sm:$0x1]
      %v302 = vld [vmem:[%s197 + $0x134] sm:$0x1]
      %v303 = vld [vmem:[%s197 + $0x140] sm:$0x1]
      %v304 = vld [vmem:[%s197 + $0x14c] sm:$0x1]
      %v305 = vld [vmem:[%s197 + $0x158] sm:$0x1]
      %v306 = vld [vmem:[%s197 + $0x164] sm:$0x1]
      %v307 = vld [vmem:[%s197 + $0x170] sm:$0x1]
      %v308 = vld [vmem:[%s197 + $0x17c] sm:$0x1]
      %v309 = vld [vmem:[%s197 + $0x188] sm:$0x1]
      %vm310 = vsmask.f32 3328
      %vm311 = vsmask.f32 7440
      %vm312 = vmor %vm310, %vm311
      %v314 = vshrl.u32 %v207, 16
      %v316 = vrot.slane %v314, 4
      %v317 = vshll.u32 %v207, 16
      %v319 = vrot.slane %v317, 5
      %v320 = vor.u32 %v316, %v319
      %v321 = vrot.slane %v320, 4
      %v323 = vshll.u32 %v208, 16
      %v325 = vrot.slane %v323, 5
      %v326 = vsel %vm312, %v321, %v325
      %v327 = vshrl.u32 %v208, 16
      %v329 = vrot.slane %v327, 4
      %v330 = vor.u32 %v329, %v325
      %v331 = vrot.slane %v330, 4
      %v333 = vshll.u32 %v278, 16
      %v335 = vrot.slane %v333, 5
      %v336 = vsel %vm312, %v331, %v335
      %v338 = vshrl.u32 %v209, 16
      %v340 = vrot.slane %v338, 4
      %v341 = vshll.u32 %v209, 16
      %v343 = vrot.slane %v341, 5
      %v344 = vor.u32 %v340, %v343
      %v345 = vrot.slane %v344, 4
      %v347 = vshll.u32 %v210, 16
      %v349 = vrot.slane %v347, 5
      %v350 = vsel %vm312, %v345, %v349
      %v351 = vshrl.u32 %v210, 16
      %v353 = vrot.slane %v351, 4
      %v354 = vor.u32 %v353, %v349
      %v355 = vrot.slane %v354, 4
      %v357 = vshll.u32 %v279, 16
      %v359 = vrot.slane %v357, 5
      %v360 = vsel %vm312, %v355, %v359
      %v362 = vshrl.u32 %v211, 16
      %v364 = vrot.slane %v362, 4
      %v365 = vshll.u32 %v211, 16
      %v367 = vrot.slane %v365, 5
      %v368 = vor.u32 %v364, %v367
      %v369 = vrot.slane %v368, 4
      %v371 = vshll.u32 %v212, 16
      %v373 = vrot.slane %v371, 5
      %v374 = vsel %vm312, %v369, %v373
      %v375 = vshrl.u32 %v212, 16
      %v377 = vrot.slane %v375, 4
      %v378 = vor.u32 %v377, %v373
      %v379 = vrot.slane %v378, 4
      %v381 = vshll.u32 %v280, 16
      %v383 = vrot.slane %v381, 5
      %v384 = vsel %vm312, %v379, %v383
      %v386 = vshrl.u32 %v213, 16
      %v388 = vrot.slane %v386, 4
      %v389 = vshll.u32 %v213, 16
      %v391 = vrot.slane %v389, 5
      %v392 = vor.u32 %v388, %v391
      %v393 = vrot.slane %v392, 4
      %v395 = vshll.u32 %v214, 16
      %v397 = vrot.slane %v395, 5
      %v398 = vsel %vm312, %v393, %v397
      %v399 = vshrl.u32 %v214, 16
      %v401 = vrot.slane %v399, 4
      %v402 = vor.u32 %v401, %v397
      %v403 = vrot.slane %v402, 4
      %v405 = vshll.u32 %v281, 16
      %v407 = vrot.slane %v405, 5
      %v408 = vsel %vm312, %v403, %v407
      %v410 = vshrl.u32 %v215, 16
      %v412 = vrot.slane %v410, 4
      %v413 = vshll.u32 %v215, 16
      %v415 = vrot.slane %v413, 5
      %v416 = vor.u32 %v412, %v415
      %v417 = vrot.slane %v416, 4
      %v419 = vshll.u32 %v216, 16
      %v421 = vrot.slane %v419, 5
      %v422 = vsel %vm312, %v417, %v421
      %v423 = vshrl.u32 %v216, 16
      %v425 = vrot.slane %v423, 4
      %v426 = vor.u32 %v425, %v421
      %v427 = vrot.slane %v426, 4
      %v429 = vshll.u32 %v282, 16
      %v431 = vrot.slane %v429, 5
      %v432 = vsel %vm312, %v427, %v431
      %v434 = vshrl.u32 %v217, 16
      %v436 = vrot.slane %v434, 4
      %v437 = vshll.u32 %v217, 16
      %v439 = vrot.slane %v437, 5
      %v440 = vor.u32 %v436, %v439
      %v441 = vrot.slane %v440, 4
      %v443 = vshll.u32 %v218, 16
      %v445 = vrot.slane %v443, 5
      %v446 = vsel %vm312, %v441, %v445
      %v447 = vshrl.u32 %v218, 16
      %v449 = vrot.slane %v447, 4
      %v450 = vor.u32 %v449, %v445
      %v451 = vrot.slane %v450, 4
      %v453 = vshll.u32 %v283, 16
      %v455 = vrot.slane %v453, 5
      %v456 = vsel %vm312, %v451, %v455
      %v458 = vshrl.u32 %v219, 16
      %v460 = vrot.slane %v458, 4
      %v461 = vshll.u32 %v219, 16
      %v463 = vrot.slane %v461, 5
      %v464 = vor.u32 %v460, %v463
      %v465 = vrot.slane %v464, 4
      %v467 = vshll.u32 %v220, 16
      %v469 = vrot.slane %v467, 5
      %v470 = vsel %vm312, %v465, %v469
      %v471 = vshrl.u32 %v220, 16
      %v473 = vrot.slane %v471, 4
      %v474 = vor.u32 %v473, %v469
      %v475 = vrot.slane %v474, 4
      %v477 = vshll.u32 %v284, 16
      %v479 = vrot.slane %v477, 5
      %v480 = vsel %vm312, %v475, %v479
      %v482 = vshrl.u32 %v221, 16
      %v484 = vrot.slane %v482, 4
      %v485 = vshll.u32 %v221, 16
      %v487 = vrot.slane %v485, 5
      %v488 = vor.u32 %v484, %v487
      %v489 = vrot.slane %v488, 4
      %v491 = vshll.u32 %v222, 16
      %v493 = vrot.slane %v491, 5
      %v494 = vsel %vm312, %v489, %v493
      %v495 = vshrl.u32 %v222, 16
      %v497 = vrot.slane %v495, 4
      %v498 = vor.u32 %v497, %v493
      %v499 = vrot.slane %v498, 4
      %v501 = vshll.u32 %v285, 16
      %v503 = vrot.slane %v501, 5
      %v504 = vsel %vm312, %v499, %v503
      %v506 = vshrl.u32 %v223, 16
      %v508 = vrot.slane %v506, 4
      %v509 = vshll.u32 %v223, 16
      %v511 = vrot.slane %v509, 5
      %v512 = vor.u32 %v508, %v511
      %v513 = vrot.slane %v512, 4
      %v515 = vshll.u32 %v224, 16
      %v517 = vrot.slane %v515, 5
      %v518 = vsel %vm312, %v513, %v517
      %v519 = vshrl.u32 %v224, 16
      %v521 = vrot.slane %v519, 4
      %v522 = vor.u32 %v521, %v517
      %v523 = vrot.slane %v522, 4
      %v525 = vshll.u32 %v286, 16
      %v527 = vrot.slane %v525, 5
      %v528 = vsel %vm312, %v523, %v527
      %v530 = vshrl.u32 %v225, 16
      %v532 = vrot.slane %v530, 4
      %v533 = vshll.u32 %v225, 16
      %v535 = vrot.slane %v533, 5
      %v536 = vor.u32 %v532, %v535
      %v537 = vrot.slane %v536, 4
      %v539 = vshll.u32 %v226, 16
      %v541 = vrot.slane %v539, 5
      %v542 = vsel %vm312, %v537, %v541
      %v543 = vshrl.u32 %v226, 16
      %v545 = vrot.slane %v543, 4
      %v546 = vor.u32 %v545, %v541
      %v547 = vrot.slane %v546, 4
      %v549 = vshll.u32 %v287, 16
      %v551 = vrot.slane %v549, 5
      %v552 = vsel %vm312, %v547, %v551
      %v554 = vshrl.u32 %v227, 16
      %v556 = vrot.slane %v554, 4
      %v557 = vshll.u32 %v227, 16
      %v559 = vrot.slane %v557, 5
      %v560 = vor.u32 %v556, %v559
      %v561 = vrot.slane %v560, 4
      %v563 = vshll.u32 %v228, 16
      %v565 = vrot.slane %v563, 5
      %v566 = vsel %vm312, %v561, %v565
      %v567 = vshrl.u32 %v228, 16
      %v569 = vrot.slane %v567, 4
      %v570 = vor.u32 %v569, %v565
      %v571 = vrot.slane %v570, 4
      %v573 = vshll.u32 %v288, 16
      %v575 = vrot.slane %v573, 5
      %v576 = vsel %vm312, %v571, %v575
      %v578 = vshrl.u32 %v229, 16
      %v580 = vrot.slane %v578, 4
      %v581 = vshll.u32 %v229, 16
      %v583 = vrot.slane %v581, 5
      %v584 = vor.u32 %v580, %v583
      %v585 = vrot.slane %v584, 4
      %v587 = vshll.u32 %v230, 16
      %v589 = vrot.slane %v587, 5
      %v590 = vsel %vm312, %v585, %v589
      %v591 = vshrl.u32 %v230, 16
      %v593 = vrot.slane %v591, 4
      %v594 = vor.u32 %v593, %v589
      %v595 = vrot.slane %v594, 4
      %v597 = vshll.u32 %v289, 16
      %v599 = vrot.slane %v597, 5
      %v600 = vsel %vm312, %v595, %v599
      %v602 = vshrl.u32 %v231, 16
      %v604 = vrot.slane %v602, 4
      %v605 = vshll.u32 %v231, 16
      %v607 = vrot.slane %v605, 5
      %v608 = vor.u32 %v604, %v607
      %v609 = vrot.slane %v608, 4
      %v611 = vshll.u32 %v232, 16
      %v613 = vrot.slane %v611, 5
      %v614 = vsel %vm312, %v609, %v613
      %v615 = vshrl.u32 %v232, 16
      %v617 = vrot.slane %v615, 4
      %v618 = vor.u32 %v617, %v613
      %v619 = vrot.slane %v618, 4
      %v621 = vshll.u32 %v290, 16
      %v623 = vrot.slane %v621, 5
      %v624 = vsel %vm312, %v619, %v623
      %v626 = vshrl.u32 %v233, 16
      %v628 = vrot.slane %v626, 4
      %v629 = vshll.u32 %v233, 16
      %v631 = vrot.slane %v629, 5
      %v632 = vor.u32 %v628, %v631
      %v633 = vrot.slane %v632, 4
      %v635 = vshll.u32 %v234, 16
      %v637 = vrot.slane %v635, 5
      %v638 = vsel %vm312, %v633, %v637
      %v639 = vshrl.u32 %v234, 16
      %v641 = vrot.slane %v639, 4
      %v642 = vor.u32 %v641, %v637
      %v643 = vrot.slane %v642, 4
      %v645 = vshll.u32 %v291, 16
      %v647 = vrot.slane %v645, 5
      %v648 = vsel %vm312, %v643, %v647
      %v650 = vshrl.u32 %v235, 16
      %v652 = vrot.slane %v650, 4
      %v653 = vshll.u32 %v235, 16
      %v655 = vrot.slane %v653, 5
      %v656 = vor.u32 %v652, %v655
      %v657 = vrot.slane %v656, 4
      %v659 = vshll.u32 %v236, 16
      %v661 = vrot.slane %v659, 5
      %v662 = vsel %vm312, %v657, %v661
      %v663 = vshrl.u32 %v236, 16
      %v665 = vrot.slane %v663, 4
      %v666 = vor.u32 %v665, %v661
      %v667 = vrot.slane %v666, 4
      %v669 = vshll.u32 %v292, 16
      %v671 = vrot.slane %v669, 5
      %v672 = vsel %vm312, %v667, %v671
      %v674 = vshrl.u32 %v237, 16
      %v676 = vrot.slane %v674, 4
      %v677 = vshll.u32 %v237, 16
      %v679 = vrot.slane %v677, 5
      %v680 = vor.u32 %v676, %v679
      %v681 = vrot.slane %v680, 4
      %v683 = vshll.u32 %v238, 16
      %v685 = vrot.slane %v683, 5
      %v686 = vsel %vm312, %v681, %v685
      %v687 = vshrl.u32 %v238, 16
      %v689 = vrot.slane %v687, 4
      %v690 = vor.u32 %v689, %v685
      %v691 = vrot.slane %v690, 4
      %v693 = vshll.u32 %v293, 16
      %v695 = vrot.slane %v693, 5
      %v696 = vsel %vm312, %v691, %v695
      %v698 = vshrl.u32 %v239, 16
      %v700 = vrot.slane %v698, 4
      %v701 = vshll.u32 %v239, 16
      %v703 = vrot.slane %v701, 5
      %v704 = vor.u32 %v700, %v703
      %v705 = vrot.slane %v704, 4
      %v707 = vshll.u32 %v240, 16
      %v709 = vrot.slane %v707, 5
      %v710 = vsel %vm312, %v705, %v709
      %v711 = vshrl.u32 %v240, 16
      %v713 = vrot.slane %v711, 4
      %v714 = vor.u32 %v713, %v709
      %v715 = vrot.slane %v714, 4
      %v717 = vshll.u32 %v294, 16
      %v719 = vrot.slane %v717, 5
      %v720 = vsel %vm312, %v715, %v719
      %v722 = vshrl.u32 %v241, 16
      %v724 = vrot.slane %v722, 4
      %v725 = vshll.u32 %v241, 16
      %v727 = vrot.slane %v725, 5
      %v728 = vor.u32 %v724, %v727
      %v729 = vrot.slane %v728, 4
      %v731 = vshll.u32 %v242, 16
      %v733 = vrot.slane %v731, 5
      %v734 = vsel %vm312, %v729, %v733
      %v735 = vshrl.u32 %v242, 16
      %v737 = vrot.slane %v735, 4
      %v738 = vor.u32 %v737, %v733
      %v739 = vrot.slane %v738, 4
      %v741 = vshll.u32 %v295, 16
      %v743 = vrot.slane %v741, 5
      %v744 = vsel %vm312, %v739, %v743
      %v746 = vshrl.u32 %v243, 16
      %v748 = vrot.slane %v746, 4
      %v749 = vshll.u32 %v243, 16
      %v751 = vrot.slane %v749, 5
      %v752 = vor.u32 %v748, %v751
      %v753 = vrot.slane %v752, 4
      %v755 = vshll.u32 %v244, 16
      %v757 = vrot.slane %v755, 5
      %v758 = vsel %vm312, %v753, %v757
      %v759 = vshrl.u32 %v244, 16
      %v761 = vrot.slane %v759, 4
      %v762 = vor.u32 %v761, %v757
      %v763 = vrot.slane %v762, 4
      %v765 = vshll.u32 %v296, 16
      %v767 = vrot.slane %v765, 5
      %v768 = vsel %vm312, %v763, %v767
      %v770 = vshrl.u32 %v245, 16
      %v772 = vrot.slane %v770, 4
      %v773 = vshll.u32 %v245, 16
      %v775 = vrot.slane %v773, 5
      %v776 = vor.u32 %v772, %v775
      %v777 = vrot.slane %v776, 4
      %v779 = vshll.u32 %v246, 16
      %v781 = vrot.slane %v779, 5
      %v782 = vsel %vm312, %v777, %v781
      %v783 = vshrl.u32 %v246, 16
      %v785 = vrot.slane %v783, 4
      %v786 = vor.u32 %v785, %v781
      %v787 = vrot.slane %v786, 4
      %v789 = vshll.u32 %v297, 16
      %v791 = vrot.slane %v789, 5
      %v792 = vsel %vm312, %v787, %v791
      %v794 = vshrl.u32 %v247, 16
      %v796 = vrot.slane %v794, 4
      %v797 = vshll.u32 %v247, 16
      %v799 = vrot.slane %v797, 5
      %v800 = vor.u32 %v796, %v799
      %v801 = vrot.slane %v800, 4
      %v803 = vshll.u32 %v248, 16
      %v805 = vrot.slane %v803, 5
      %v806 = vsel %vm312, %v801, %v805
      %v807 = vshrl.u32 %v248, 16
      %v809 = vrot.slane %v807, 4
      %v810 = vor.u32 %v809, %v805
      %v811 = vrot.slane %v810, 4
      %v813 = vshll.u32 %v298, 16
      %v815 = vrot.slane %v813, 5
      %v816 = vsel %vm312, %v811, %v815
      %v818 = vshrl.u32 %v249, 16
      %v820 = vrot.slane %v818, 4
      %v821 = vshll.u32 %v249, 16
      %v823 = vrot.slane %v821, 5
      %v824 = vor.u32 %v820, %v823
      %v825 = vrot.slane %v824, 4
      %v827 = vshll.u32 %v250, 16
      %v829 = vrot.slane %v827, 5
      %v830 = vsel %vm312, %v825, %v829
      %v831 = vshrl.u32 %v250, 16
      %v833 = vrot.slane %v831, 4
      %v834 = vor.u32 %v833, %v829
      %v835 = vrot.slane %v834, 4
      %v837 = vshll.u32 %v299, 16
      %v839 = vrot.slane %v837, 5
      %v840 = vsel %vm312, %v835, %v839
      %v842 = vshrl.u32 %v251, 16
      %v844 = vrot.slane %v842, 4
      %v845 = vshll.u32 %v251, 16
      %v847 = vrot.slane %v845, 5
      %v848 = vor.u32 %v844, %v847
      %v849 = vrot.slane %v848, 4
      %v851 = vshll.u32 %v252, 16
      %v853 = vrot.slane %v851, 5
      %v854 = vsel %vm312, %v849, %v853
      %v855 = vshrl.u32 %v252, 16
      %v857 = vrot.slane %v855, 4
      %v858 = vor.u32 %v857, %v853
      %v859 = vrot.slane %v858, 4
      %v861 = vshll.u32 %v300, 16
      %v863 = vrot.slane %v861, 5
      %v864 = vsel %vm312, %v859, %v863
      %v866 = vshrl.u32 %v253, 16
      %v868 = vrot.slane %v866, 4
      %v869 = vshll.u32 %v253, 16
      %v871 = vrot.slane %v869, 5
      %v872 = vor.u32 %v868, %v871
      %v873 = vrot.slane %v872, 4
      %v875 = vshll.u32 %v254, 16
      %v877 = vrot.slane %v875, 5
      %v878 = vsel %vm312, %v873, %v877
      %v879 = vshrl.u32 %v254, 16
      %v881 = vrot.slane %v879, 4
      %v882 = vor.u32 %v881, %v877
      %v883 = vrot.slane %v882, 4
      %v885 = vshll.u32 %v301, 16
      %v887 = vrot.slane %v885, 5
      %v888 = vsel %vm312, %v883, %v887
      %v890 = vshrl.u32 %v255, 16
      %v892 = vrot.slane %v890, 4
      %v893 = vshll.u32 %v255, 16
      %v895 = vrot.slane %v893, 5
      %v896 = vor.u32 %v892, %v895
      %v897 = vrot.slane %v896, 4
      %v899 = vshll.u32 %v256, 16
      %v901 = vrot.slane %v899, 5
      %v902 = vsel %vm312, %v897, %v901
      %v903 = vshrl.u32 %v256, 16
      %v905 = vrot.slane %v903, 4
      %v906 = vor.u32 %v905, %v901
      %v907 = vrot.slane %v906, 4
      %v909 = vshll.u32 %v302, 16
      %v911 = vrot.slane %v909, 5
      %v912 = vsel %vm312, %v907, %v911
      %v914 = vshrl.u32 %v257, 16
      %v916 = vrot.slane %v914, 4
      %v917 = vshll.u32 %v257, 16
      %v919 = vrot.slane %v917, 5
      %v920 = vor.u32 %v916, %v919
      %v921 = vrot.slane %v920, 4
      %v923 = vshll.u32 %v258, 16
      %v925 = vrot.slane %v923, 5
      %v926 = vsel %vm312, %v921, %v925
      %v927 = vshrl.u32 %v258, 16
      %v929 = vrot.slane %v927, 4
      %v930 = vor.u32 %v929, %v925
      %v931 = vrot.slane %v930, 4
      %v933 = vshll.u32 %v303, 16
      %v935 = vrot.slane %v933, 5
      %v936 = vsel %vm312, %v931, %v935
      %v938 = vshrl.u32 %v259, 16
      %v940 = vrot.slane %v938, 4
      %v941 = vshll.u32 %v259, 16
      %v943 = vrot.slane %v941, 5
      %v944 = vor.u32 %v940, %v943
      %v945 = vrot.slane %v944, 4
      %v947 = vshll.u32 %v260, 16
      %v949 = vrot.slane %v947, 5
      %v950 = vsel %vm312, %v945, %v949
      %v951 = vshrl.u32 %v260, 16
      %v953 = vrot.slane %v951, 4
      %v954 = vor.u32 %v953, %v949
      %v955 = vrot.slane %v954, 4
      %v957 = vshll.u32 %v304, 16
      %v959 = vrot.slane %v957, 5
      %v960 = vsel %vm312, %v955, %v959
      %v962 = vshrl.u32 %v261, 16
      %v964 = vrot.slane %v962, 4
      %v965 = vshll.u32 %v261, 16
      %v967 = vrot.slane %v965, 5
      %v968 = vor.u32 %v964, %v967
      %v969 = vrot.slane %v968, 4
      %v971 = vshll.u32 %v262, 16
      %v973 = vrot.slane %v971, 5
      %v974 = vsel %vm312, %v969, %v973
      %v975 = vshrl.u32 %v262, 16
      %v977 = vrot.slane %v975, 4
      %v978 = vor.u32 %v977, %v973
      %v979 = vrot.slane %v978, 4
      %v981 = vshll.u32 %v305, 16
      %v983 = vrot.slane %v981, 5
      %v984 = vsel %vm312, %v979, %v983
      %v986 = vshrl.u32 %v263, 16
      %v988 = vrot.slane %v986, 4
      %v989 = vshll.u32 %v263, 16
      %v991 = vrot.slane %v989, 5
      %v992 = vor.u32 %v988, %v991
      %v993 = vrot.slane %v992, 4
      %v995 = vshll.u32 %v264, 16
      %v997 = vrot.slane %v995, 5
      %v998 = vsel %vm312, %v993, %v997
      %v999 = vshrl.u32 %v264, 16
      %v1001 = vrot.slane %v999, 4
      %v1002 = vor.u32 %v1001, %v997
      %v1003 = vrot.slane %v1002, 4
      %v1005 = vshll.u32 %v306, 16
      %v1007 = vrot.slane %v1005, 5
      %v1008 = vsel %vm312, %v1003, %v1007
      %v1010 = vshrl.u32 %v265, 16
      %v1012 = vrot.slane %v1010, 4
      %v1013 = vshll.u32 %v265, 16
      %v1015 = vrot.slane %v1013, 5
      %v1016 = vor.u32 %v1012, %v1015
      %v1017 = vrot.slane %v1016, 4
      %v1019 = vshll.u32 %v266, 16
      %v1021 = vrot.slane %v1019, 5
      %v1022 = vsel %vm312, %v1017, %v1021
      %v1023 = vshrl.u32 %v266, 16
      %v1025 = vrot.slane %v1023, 4
      %v1026 = vor.u32 %v1025, %v1021
      %v1027 = vrot.slane %v1026, 4
      %v1029 = vshll.u32 %v307, 16
      %v1031 = vrot.slane %v1029, 5
      %v1032 = vsel %vm312, %v1027, %v1031
      %v1034 = vshrl.u32 %v267, 16
      %v1036 = vrot.slane %v1034, 4
      %v1037 = vshll.u32 %v267, 16
      %v1039 = vrot.slane %v1037, 5
      %v1040 = vor.u32 %v1036, %v1039
      %v1041 = vrot.slane %v1040, 4
      %v1043 = vshll.u32 %v268, 16
      %v1045 = vrot.slane %v1043, 5
      %v1046 = vsel %vm312, %v1041, %v1045
      %v1047 = vshrl.u32 %v268, 16
      %v1049 = vrot.slane %v1047, 4
      %v1050 = vor.u32 %v1049, %v1045
      %v1051 = vrot.slane %v1050, 4
      %v1053 = vshll.u32 %v308, 16
      %v1055 = vrot.slane %v1053, 5
      %v1056 = vsel %vm312, %v1051, %v1055
      %v1058 = vshrl.u32 %v269, 16
      %v1060 = vrot.slane %v1058, 4
      %v1061 = vshll.u32 %v269, 16
      %v1063 = vrot.slane %v1061, 5
      %v1064 = vor.u32 %v1060, %v1063
      %v1065 = vrot.slane %v1064, 4
      %v1067 = vshll.u32 %v270, 16
      %v1069 = vrot.slane %v1067, 5
      %v1070 = vsel %vm312, %v1065, %v1069
      %v1071 = vshrl.u32 %v270, 16
      %v1073 = vrot.slane %v1071, 4
      %v1074 = vor.u32 %v1073, %v1069
      %v1075 = vrot.slane %v1074, 4
      %v1077 = vshll.u32 %v309, 16
      %v1079 = vrot.slane %v1077, 5
      %v1080 = vsel %vm312, %v1075, %v1079
      %s1081 = scalar_lea.vmem %s1, 28
      %v1082 = vld [vmem:[%s1081] sm:$0xf]
      %v1083 = vld [vmem:[%s1081 + $0x4] sm:$0xf]
      %v1084 = vld [vmem:[%s1081 + $0x8] sm:$0xf]
      %v1085 = vld [vmem:[%s1081 + $0xc] sm:$0xf]
      %v1086 = vld [vmem:[%s1081 + $0x10] sm:$0xf]
      %v1087 = vld [vmem:[%s1081 + $0x14] sm:$0xf]
      %v1088 = vld [vmem:[%s1081 + $0x18] sm:$0x3]
      %v1089 = vunpack.c.l.b16 %v326
      %v1090 = vunpack.c.l.b16 %v336
      %v1091 = vunpack.c.l.b16 %v350
      %v1092 = vunpack.c.l.b16 %v360
      %v1093 = vunpack.c.l.b16 %v374
      %v1094 = vunpack.c.l.b16 %v384
      %v1095 = vunpack.c.l.b16 %v398
      %v1096 = vunpack.c.l.b16 %v408
      %v1097 = vunpack.c.l.b16 %v422
      %v1098 = vunpack.c.l.b16 %v432
      %v1099 = vunpack.c.l.b16 %v446
      %v1100 = vunpack.c.l.b16 %v456
      %v1101 = vunpack.c.l.b16 %v470
      %v1102 = vunpack.c.l.b16 %v480
      %v1103 = vunpack.c.l.b16 %v494
      %v1104 = vunpack.c.l.b16 %v504
      %v1105 = vunpack.c.l.b16 %v518
      %v1106 = vunpack.c.l.b16 %v528
      %v1107 = vunpack.c.l.b16 %v542
      %v1108 = vunpack.c.l.b16 %v552
      %v1109 = vunpack.c.l.b16 %v566
      %v1110 = vunpack.c.l.b16 %v576
      %v1111 = vunpack.c.l.b16 %v590
      %v1112 = vunpack.c.l.b16 %v600
      %v1113 = vunpack.c.l.b16 %v614
      %v1114 = vunpack.c.l.b16 %v624
      %v1115 = vunpack.c.l.b16 %v638
      %v1116 = vunpack.c.l.b16 %v648
      %v1117 = vunpack.c.l.b16 %v662
      %v1118 = vunpack.c.l.b16 %v672
      %v1119 = vunpack.c.l.b16 %v686
      %v1120 = vunpack.c.l.b16 %v696
      %v1121 = vunpack.c.l.b16 %v710
      %v1122 = vunpack.c.l.b16 %v720
      %v1123 = vunpack.c.l.b16 %v734
      %v1124 = vunpack.c.l.b16 %v744
      %v1125 = vunpack.c.l.b16 %v758
      %v1126 = vunpack.c.l.b16 %v768
      %v1127 = vunpack.c.l.b16 %v782
      %v1128 = vunpack.c.l.b16 %v792
      %v1129 = vunpack.c.l.b16 %v806
      %v1130 = vunpack.c.l.b16 %v816
      %v1131 = vunpack.c.l.b16 %v830
      %v1132 = vunpack.c.l.b16 %v840
      %v1133 = vunpack.c.l.b16 %v854
      %v1134 = vunpack.c.l.b16 %v864
      %v1135 = vunpack.c.l.b16 %v878
      %v1136 = vunpack.c.l.b16 %v888
      %v1137 = vunpack.c.l.b16 %v902
      %v1138 = vunpack.c.l.b16 %v912
      %v1139 = vunpack.c.l.b16 %v926
      %v1140 = vunpack.c.l.b16 %v936
      %v1141 = vunpack.c.l.b16 %v950
      %v1142 = vunpack.c.l.b16 %v960
      %v1143 = vunpack.c.l.b16 %v974
      %v1144 = vunpack.c.l.b16 %v984
      %v1145 = vunpack.c.l.b16 %v998
      %v1146 = vunpack.c.l.b16 %v1008
      %v1147 = vunpack.c.l.b16 %v1022
      %v1148 = vunpack.c.l.b16 %v1032
      %v1149 = vunpack.c.l.b16 %v1046
      %v1150 = vunpack.c.l.b16 %v1056
      %v1151 = vunpack.c.l.b16 %v1070
      %v1152 = vunpack.c.l.b16 %v1080
      %v1153 = vpack.c.b16 %v1090, %v1089
      %v1154 = vpack.c.b16 %v1092, %v1091
      %v1155 = vpack.c.b16 %v1094, %v1093
      %v1156 = vpack.c.b16 %v1096, %v1095
      %v1157 = vpack.c.b16 %v1098, %v1097
      %v1158 = vpack.c.b16 %v1100, %v1099
      %v1159 = vpack.c.b16 %v1102, %v1101
      %v1160 = vpack.c.b16 %v1104, %v1103
      %v1161 = vpack.c.b16 %v1106, %v1105
      %v1162 = vpack.c.b16 %v1108, %v1107
      %v1163 = vpack.c.b16 %v1110, %v1109
      %v1164 = vpack.c.b16 %v1112, %v1111
      %v1165 = vpack.c.b16 %v1114, %v1113
      %v1166 = vpack.c.b16 %v1116, %v1115
      %v1167 = vpack.c.b16 %v1118, %v1117
      %v1168 = vpack.c.b16 %v1120, %v1119
      %v1169 = vpack.c.b16 %v1122, %v1121
      %v1170 = vpack.c.b16 %v1124, %v1123
      %v1171 = vpack.c.b16 %v1126, %v1125
      %v1172 = vpack.c.b16 %v1128, %v1127
      %v1173 = vpack.c.b16 %v1130, %v1129
      %v1174 = vpack.c.b16 %v1132, %v1131
      %v1175 = vpack.c.b16 %v1134, %v1133
      %v1176 = vpack.c.b16 %v1136, %v1135
      %v1177 = vpack.c.b16 %v1138, %v1137
      %v1178 = vpack.c.b16 %v1140, %v1139
      %v1179 = vpack.c.b16 %v1142, %v1141
      %v1180 = vpack.c.b16 %v1144, %v1143
      %v1181 = vpack.c.b16 %v1146, %v1145
      %v1182 = vpack.c.b16 %v1148, %v1147
      %v1183 = vpack.c.b16 %v1150, %v1149
      %v1184 = vpack.c.b16 %v1152, %v1151
      %v1192 = vunpack.c.l.b16 %v1082
      %v1193 = vunpack.c.l.b16 %v1083
      %v1194 = vunpack.c.l.b16 %v1084
      %v1195 = vunpack.c.l.b16 %v1085
      %v1196 = vunpack.c.l.b16 %v1086
      %v1197 = vunpack.c.l.b16 %v1087
      %v1198 = vunpack.c.l.b16 %v1088
      %v1199 = vpack.c.b16 %v1193, %v1192
      %v1200 = vpack.c.b16 %v1195, %v1194
      %v1201 = vpack.c.b16 %v1197, %v1196
      %v1202 = vpack.c.b16 %v1198, %v1198
      %vm1206 = vcmask 424960
      %v1208 = vsel %vm1206, %v1153, 0
      %v1211 = vsel %vm1206, %v1154, 0
      %v1214 = vsel %vm1206, %v1155, 0
      %v1217 = vsel %vm1206, %v1156, 0
      %v1220 = vsel %vm1206, %v1157, 0
      %v1223 = vsel %vm1206, %v1158, 0
      %v1226 = vsel %vm1206, %v1159, 0
      %v1229 = vsel %vm1206, %v1160, 0
      %v1232 = vsel %vm1206, %v1161, 0
      %v1235 = vsel %vm1206, %v1162, 0
      %v1238 = vsel %vm1206, %v1163, 0
      %v1241 = vsel %vm1206, %v1164, 0
      %v1244 = vsel %vm1206, %v1165, 0
      %v1247 = vsel %vm1206, %v1166, 0
      %v1250 = vsel %vm1206, %v1167, 0
      %v1253 = vsel %vm1206, %v1168, 0
      %v1256 = vsel %vm1206, %v1169, 0
      %v1259 = vsel %vm1206, %v1170, 0
      %v1262 = vsel %vm1206, %v1171, 0
      %v1265 = vsel %vm1206, %v1172, 0
      %v1268 = vsel %vm1206, %v1173, 0
      %v1271 = vsel %vm1206, %v1174, 0
      %v1274 = vsel %vm1206, %v1175, 0
      %v1277 = vsel %vm1206, %v1176, 0
      %v1280 = vsel %vm1206, %v1177, 0
      %v1283 = vsel %vm1206, %v1178, 0
      %v1286 = vsel %vm1206, %v1179, 0
      %v1289 = vsel %vm1206, %v1180, 0
      %v1292 = vsel %vm1206, %v1181, 0
      %v1295 = vsel %vm1206, %v1182, 0
      %v1298 = vsel %vm1206, %v1183, 0
      %v1301 = vsel %vm1206, %v1184, 0
      %vm1303 = vcmask 1041408
      %v1305 = vsel %vm1303, %v1202, 0
      %1307 = vmatprep.subr.bf16.mxu0 0
      %1308 = vmatpush1.bf16.msra.mxu0 0
      %1309 = vmatprep.subr.bf16.mxu0 0
      %1310 = vmatpush1.bf16.msra.mxu0 0
      %1311 = vmatprep.subr.bf16.mxu0 0
      %1312 = vmatpush1.bf16.msra.mxu0 0
      %1313 = vmatprep.subr.bf16.mxu0 0
      %1314 = vmatpush1.bf16.msra.mxu0 0
      %1315 = vmatprep.subr.bf16.mxu0 0
      %1316 = vmatpush1.bf16.msra.mxu0 %v1305
      %1317 = vmatprep.subr.bf16.mxu0 0
      %1318 = vmatpush1.bf16.msra.mxu0 %v1201
      %1319 = vmatprep.subr.bf16.mxu0 0
      %1320 = vmatpush1.bf16.msra.mxu0 %v1200
      %1321 = vmatprep.subr.bf16.mxu0 0
      %1322 = vmatpush1.bf16.msra.mxu0 %v1199
      %1323 = vmatprep.subr.bf16.mxu0 0
      %1324 = vmatpush2.bf16.msra.mxu0 0
      %1325 = vmatprep.subr.bf16.mxu0 0
      %1326 = vmatpush2.bf16.msra.mxu0 0
      %1327 = vmatprep.subr.bf16.mxu0 0
      %1328 = vmatpush2.bf16.msra.mxu0 0
      %1329 = vmatprep.subr.bf16.mxu0 0
      %1330 = vmatpush2.bf16.msra.mxu0 0
      %1331 = vmatprep.subr.bf16.mxu0 0
      %1332 = vmatpush2.bf16.msra.mxu0 0
      %1333 = vmatprep.subr.bf16.mxu0 0
      %1334 = vmatpush2.bf16.msra.mxu0 0
      %1335 = vmatprep.subr.bf16.mxu0 0
      %1336 = vmatpush2.bf16.msra.mxu0 0
      %1337 = vmatprep.subr.bf16.mxu0 0
      %1338 = vmatpush2.bf16.msra.mxu0 0
      %1339 = vmatprep.mubr.bf16.mxu0 0
      %1340 = vmatmul.mubr.bf16.gmra.mxu0 %v1208
      %v1341 = vpop.f32.mrf.mxu0
      %v1342 = vadd.f32 0.0, %v1341
      %v1343 = vpop.f32.mrf.mxu0
      %v1344 = vpop.f32.mrf.mxu0
      %v1345 = vadd.f32 0.0, %v1344
      %v1346 = vpop.f32.mrf.mxu0
      %1347 = vmatprep.mubr.bf16.mxu0 0
      %1348 = vmatmul.mubr.bf16.gmra.mxu0 %v1211
      %v1349 = vpop.f32.mrf.mxu0
      %v1350 = vadd.f32 0.0, %v1349
      %v1351 = vpop.f32.mrf.mxu0
      %v1352 = vpop.f32.mrf.mxu0
      %v1353 = vadd.f32 0.0, %v1352
      %v1354 = vpop.f32.mrf.mxu0
      %1355 = vmatprep.mubr.bf16.mxu0 0
      %1356 = vmatmul.mubr.bf16.gmra.mxu0 %v1214
      %v1357 = vpop.f32.mrf.mxu0
      %v1358 = vadd.f32 0.0, %v1357
      %v1359 = vpop.f32.mrf.mxu0
      %v1360 = vpop.f32.mrf.mxu0
      %v1361 = vadd.f32 0.0, %v1360
      %v1362 = vpop.f32.mrf.mxu0
      %1363 = vmatprep.mubr.bf16.mxu0 0
      %1364 = vmatmul.mubr.bf16.gmra.mxu0 %v1217
      %v1365 = vpop.f32.mrf.mxu0
      %v1366 = vadd.f32 0.0, %v1365
      %v1367 = vpop.f32.mrf.mxu0
      %v1368 = vpop.f32.mrf.mxu0
      %v1369 = vadd.f32 0.0, %v1368
      %v1370 = vpop.f32.mrf.mxu0
      %1371 = vmatprep.mubr.bf16.mxu0 0
      %1372 = vmatmul.mubr.bf16.gmra.mxu0 %v1220
      %v1373 = vpop.f32.mrf.mxu0
      %v1374 = vadd.f32 0.0, %v1373
      %v1375 = vpop.f32.mrf.mxu0
      %v1376 = vpop.f32.mrf.mxu0
      %v1377 = vadd.f32 0.0, %v1376
      %v1378 = vpop.f32.mrf.mxu0
      %1379 = vmatprep.mubr.bf16.mxu0 0
      %1380 = vmatmul.mubr.bf16.gmra.mxu0 %v1223
      %v1381 = vpop.f32.mrf.mxu0
      %v1382 = vadd.f32 0.0, %v1381
      %v1383 = vpop.f32.mrf.mxu0
      %v1384 = vpop.f32.mrf.mxu0
      %v1385 = vadd.f32 0.0, %v1384
      %v1386 = vpop.f32.mrf.mxu0
      %1387 = vmatprep.mubr.bf16.mxu0 0
      %1388 = vmatmul.mubr.bf16.gmra.mxu0 %v1226
      %v1389 = vpop.f32.mrf.mxu0
      %v1390 = vadd.f32 0.0, %v1389
      %v1391 = vpop.f32.mrf.mxu0
      %v1392 = vpop.f32.mrf.mxu0
      %v1393 = vadd.f32 0.0, %v1392
      %v1394 = vpop.f32.mrf.mxu0
      %1395 = vmatprep.mubr.bf16.mxu0 0
      %1396 = vmatmul.mubr.bf16.gmra.mxu0 %v1229
      %v1397 = vpop.f32.mrf.mxu0
      %v1398 = vadd.f32 0.0, %v1397
      %v1399 = vpop.f32.mrf.mxu0
      %v1400 = vpop.f32.mrf.mxu0
      %v1401 = vadd.f32 0.0, %v1400
      %v1402 = vpop.f32.mrf.mxu0
      %1403 = vmatprep.mubr.bf16.mxu0 0
      %1404 = vmatmul.mubr.bf16.gmra.mxu0 %v1232
      %v1405 = vpop.f32.mrf.mxu0
      %v1406 = vadd.f32 0.0, %v1405
      %v1407 = vpop.f32.mrf.mxu0
      %v1408 = vpop.f32.mrf.mxu0
      %v1409 = vadd.f32 0.0, %v1408
      %v1410 = vpop.f32.mrf.mxu0
      %1411 = vmatprep.mubr.bf16.mxu0 0
      %1412 = vmatmul.mubr.bf16.gmra.mxu0 %v1235
      %v1413 = vpop.f32.mrf.mxu0
      %v1414 = vadd.f32 0.0, %v1413
      %v1415 = vpop.f32.mrf.mxu0
      %v1416 = vpop.f32.mrf.mxu0
      %v1417 = vadd.f32 0.0, %v1416
      %v1418 = vpop.f32.mrf.mxu0
      %1419 = vmatprep.mubr.bf16.mxu0 0
      %1420 = vmatmul.mubr.bf16.gmra.mxu0 %v1238
      %v1421 = vpop.f32.mrf.mxu0
      %v1422 = vadd.f32 0.0, %v1421
      %v1423 = vpop.f32.mrf.mxu0
      %v1424 = vpop.f32.mrf.mxu0
      %v1425 = vadd.f32 0.0, %v1424
      %v1426 = vpop.f32.mrf.mxu0
      %1427 = vmatprep.mubr.bf16.mxu0 0
      %1428 = vmatmul.mubr.bf16.gmra.mxu0 %v1241
      %v1429 = vpop.f32.mrf.mxu0
      %v1430 = vadd.f32 0.0, %v1429
      %v1431 = vpop.f32.mrf.mxu0
      %v1432 = vpop.f32.mrf.mxu0
      %v1433 = vadd.f32 0.0, %v1432
      %v1434 = vpop.f32.mrf.mxu0
      %1435 = vmatprep.mubr.bf16.mxu0 0
      %1436 = vmatmul.mubr.bf16.gmra.mxu0 %v1244
      %v1437 = vpop.f32.mrf.mxu0
      %v1438 = vadd.f32 0.0, %v1437
      %v1439 = vpop.f32.mrf.mxu0
      %v1440 = vpop.f32.mrf.mxu0
      %v1441 = vadd.f32 0.0, %v1440
      %v1442 = vpop.f32.mrf.mxu0
      %1443 = vmatprep.mubr.bf16.mxu0 0
      %1444 = vmatmul.mubr.bf16.gmra.mxu0 %v1247
      %v1445 = vpop.f32.mrf.mxu0
      %v1446 = vadd.f32 0.0, %v1445
      %v1447 = vpop.f32.mrf.mxu0
      %v1448 = vpop.f32.mrf.mxu0
      %v1449 = vadd.f32 0.0, %v1448
      %v1450 = vpop.f32.mrf.mxu0
      %1451 = vmatprep.mubr.bf16.mxu0 0
      %1452 = vmatmul.mubr.bf16.gmra.mxu0 %v1250
      %v1453 = vpop.f32.mrf.mxu0
      %v1454 = vadd.f32 0.0, %v1453
      %v1455 = vpop.f32.mrf.mxu0
      %v1456 = vpop.f32.mrf.mxu0
      %v1457 = vadd.f32 0.0, %v1456
      %v1458 = vpop.f32.mrf.mxu0
      %1459 = vmatprep.mubr.bf16.mxu0 0
      %1460 = vmatmul.mubr.bf16.gmra.mxu0 %v1253
      %v1461 = vpop.f32.mrf.mxu0
      %v1462 = vadd.f32 0.0, %v1461
      %v1463 = vpop.f32.mrf.mxu0
      %v1464 = vpop.f32.mrf.mxu0
      %v1465 = vadd.f32 0.0, %v1464
      %v1466 = vpop.f32.mrf.mxu0
      %1467 = vmatprep.mubr.bf16.mxu0 0
      %1468 = vmatmul.mubr.bf16.gmra.mxu0 %v1256
      %v1469 = vpop.f32.mrf.mxu0
      %v1470 = vadd.f32 0.0, %v1469
      %v1471 = vpop.f32.mrf.mxu0
      %v1472 = vpop.f32.mrf.mxu0
      %v1473 = vadd.f32 0.0, %v1472
      %v1474 = vpop.f32.mrf.mxu0
      %1475 = vmatprep.mubr.bf16.mxu0 0
      %1476 = vmatmul.mubr.bf16.gmra.mxu0 %v1259
      %v1477 = vpop.f32.mrf.mxu0
      %v1478 = vadd.f32 0.0, %v1477
      %v1479 = vpop.f32.mrf.mxu0
      %v1480 = vpop.f32.mrf.mxu0
      %v1481 = vadd.f32 0.0, %v1480
      %v1482 = vpop.f32.mrf.mxu0
      %1483 = vmatprep.mubr.bf16.mxu0 0
      %1484 = vmatmul.mubr.bf16.gmra.mxu0 %v1262
      %v1485 = vpop.f32.mrf.mxu0
      %v1486 = vadd.f32 0.0, %v1485
      %v1487 = vpop.f32.mrf.mxu0
      %v1488 = vpop.f32.mrf.mxu0
      %v1489 = vadd.f32 0.0, %v1488
      %v1490 = vpop.f32.mrf.mxu0
      %1491 = vmatprep.mubr.bf16.mxu0 0
      %1492 = vmatmul.mubr.bf16.gmra.mxu0 %v1265
      %v1493 = vpop.f32.mrf.mxu0
      %v1494 = vadd.f32 0.0, %v1493
      %v1495 = vpop.f32.mrf.mxu0
      %v1496 = vpop.f32.mrf.mxu0
      %v1497 = vadd.f32 0.0, %v1496
      %v1498 = vpop.f32.mrf.mxu0
      %1499 = vmatprep.mubr.bf16.mxu0 0
      %1500 = vmatmul.mubr.bf16.gmra.mxu0 %v1268
      %v1501 = vpop.f32.mrf.mxu0
      %v1502 = vadd.f32 0.0, %v1501
      %v1503 = vpop.f32.mrf.mxu0
      %v1504 = vpop.f32.mrf.mxu0
      %v1505 = vadd.f32 0.0, %v1504
      %v1506 = vpop.f32.mrf.mxu0
      %1507 = vmatprep.mubr.bf16.mxu0 0
      %1508 = vmatmul.mubr.bf16.gmra.mxu0 %v1271
      %v1509 = vpop.f32.mrf.mxu0
      %v1510 = vadd.f32 0.0, %v1509
      %v1511 = vpop.f32.mrf.mxu0
      %v1512 = vpop.f32.mrf.mxu0
      %v1513 = vadd.f32 0.0, %v1512
      %v1514 = vpop.f32.mrf.mxu0
      %1515 = vmatprep.mubr.bf16.mxu0 0
      %1516 = vmatmul.mubr.bf16.gmra.mxu0 %v1274
      %v1517 = vpop.f32.mrf.mxu0
      %v1518 = vadd.f32 0.0, %v1517
      %v1519 = vpop.f32.mrf.mxu0
      %v1520 = vpop.f32.mrf.mxu0
      %v1521 = vadd.f32 0.0, %v1520
      %v1522 = vpop.f32.mrf.mxu0
      %1523 = vmatprep.mubr.bf16.mxu0 0
      %1524 = vmatmul.mubr.bf16.gmra.mxu0 %v1277
      %v1525 = vpop.f32.mrf.mxu0
      %v1526 = vadd.f32 0.0, %v1525
      %v1527 = vpop.f32.mrf.mxu0
      %v1528 = vpop.f32.mrf.mxu0
      %v1529 = vadd.f32 0.0, %v1528
      %v1530 = vpop.f32.mrf.mxu0
      %1531 = vmatprep.mubr.bf16.mxu0 0
      %1532 = vmatmul.mubr.bf16.gmra.mxu0 %v1280
      %v1533 = vpop.f32.mrf.mxu0
      %v1534 = vadd.f32 0.0, %v1533
      %v1535 = vpop.f32.mrf.mxu0
      %v1536 = vpop.f32.mrf.mxu0
      %v1537 = vadd.f32 0.0, %v1536
      %v1538 = vpop.f32.mrf.mxu0
      %1539 = vmatprep.mubr.bf16.mxu0 0
      %1540 = vmatmul.mubr.bf16.gmra.mxu0 %v1283
      %v1541 = vpop.f32.mrf.mxu0
      %v1542 = vadd.f32 0.0, %v1541
      %v1543 = vpop.f32.mrf.mxu0
      %v1544 = vpop.f32.mrf.mxu0
      %v1545 = vadd.f32 0.0, %v1544
      %v1546 = vpop.f32.mrf.mxu0
      %1547 = vmatprep.mubr.bf16.mxu0 0
      %1548 = vmatmul.mubr.bf16.gmra.mxu0 %v1286
      %v1549 = vpop.f32.mrf.mxu0
      %v1550 = vadd.f32 0.0, %v1549
      %v1551 = vpop.f32.mrf.mxu0
      %v1552 = vpop.f32.mrf.mxu0
      %v1553 = vadd.f32 0.0, %v1552
      %v1554 = vpop.f32.mrf.mxu0
      %1555 = vmatprep.mubr.bf16.mxu0 0
      %1556 = vmatmul.mubr.bf16.gmra.mxu0 %v1289
      %v1557 = vpop.f32.mrf.mxu0
      %v1558 = vadd.f32 0.0, %v1557
      %v1559 = vpop.f32.mrf.mxu0
      %v1560 = vpop.f32.mrf.mxu0
      %v1561 = vadd.f32 0.0, %v1560
      %v1562 = vpop.f32.mrf.mxu0
      %1563 = vmatprep.mubr.bf16.mxu0 0
      %1564 = vmatmul.mubr.bf16.gmra.mxu0 %v1292
      %v1565 = vpop.f32.mrf.mxu0
      %v1566 = vadd.f32 0.0, %v1565
      %v1567 = vpop.f32.mrf.mxu0
      %v1568 = vpop.f32.mrf.mxu0
      %v1569 = vadd.f32 0.0, %v1568
      %v1570 = vpop.f32.mrf.mxu0
      %1571 = vmatprep.mubr.bf16.mxu0 0
      %1572 = vmatmul.mubr.bf16.gmra.mxu0 %v1295
      %v1573 = vpop.f32.mrf.mxu0
      %v1574 = vadd.f32 0.0, %v1573
      %v1575 = vpop.f32.mrf.mxu0
      %v1576 = vpop.f32.mrf.mxu0
      %v1577 = vadd.f32 0.0, %v1576
      %v1578 = vpop.f32.mrf.mxu0
      %1579 = vmatprep.mubr.bf16.mxu0 0
      %1580 = vmatmul.mubr.bf16.gmra.mxu0 %v1298
      %v1581 = vpop.f32.mrf.mxu0
      %v1582 = vadd.f32 0.0, %v1581
      %v1583 = vpop.f32.mrf.mxu0
      %v1584 = vpop.f32.mrf.mxu0
      %v1585 = vadd.f32 0.0, %v1584
      %v1586 = vpop.f32.mrf.mxu0
      %1587 = vmatprep.mubr.bf16.mxu0 0
      %1588 = vmatmul.mubr.bf16.gmra.mxu0 %v1301
      %v1589 = vpop.f32.mrf.mxu0
      %v1590 = vadd.f32 0.0, %v1589
      %v1591 = vpop.f32.mrf.mxu0
      %v1592 = vpop.f32.mrf.mxu0
      %v1593 = vadd.f32 0.0, %v1592
      %v1594 = vpop.f32.mrf.mxu0
      %1595 = vdwg.mxu0
      %v1660 = vunpack.c.l.b16 %v207
      %v1661 = vunpack.c.l.b16 %v208
      %v1662 = vunpack.c.l.b16 %v209
      %v1663 = vunpack.c.l.b16 %v210
      %v1664 = vunpack.c.l.b16 %v211
      %v1665 = vunpack.c.l.b16 %v212
      %v1666 = vunpack.c.l.b16 %v213
      %v1667 = vunpack.c.l.b16 %v214
      %v1668 = vunpack.c.l.b16 %v215
      %v1669 = vunpack.c.l.b16 %v216
      %v1670 = vunpack.c.l.b16 %v217
      %v1671 = vunpack.c.l.b16 %v218
      %v1672 = vunpack.c.l.b16 %v219
      %v1673 = vunpack.c.l.b16 %v220
      %v1674 = vunpack.c.l.b16 %v221
      %v1675 = vunpack.c.l.b16 %v222
      %v1676 = vunpack.c.l.b16 %v223
      %v1677 = vunpack.c.l.b16 %v224
      %v1678 = vunpack.c.l.b16 %v225
      %v1679 = vunpack.c.l.b16 %v226
      %v1680 = vunpack.c.l.b16 %v227
      %v1681 = vunpack.c.l.b16 %v228
      %v1682 = vunpack.c.l.b16 %v229
      %v1683 = vunpack.c.l.b16 %v230
      %v1684 = vunpack.c.l.b16 %v231
      %v1685 = vunpack.c.l.b16 %v232
      %v1686 = vunpack.c.l.b16 %v233
      %v1687 = vunpack.c.l.b16 %v234
      %v1688 = vunpack.c.l.b16 %v235
      %v1689 = vunpack.c.l.b16 %v236
      %v1690 = vunpack.c.l.b16 %v237
      %v1691 = vunpack.c.l.b16 %v238
      %v1692 = vunpack.c.l.b16 %v239
      %v1693 = vunpack.c.l.b16 %v240
      %v1694 = vunpack.c.l.b16 %v241
      %v1695 = vunpack.c.l.b16 %v242
      %v1696 = vunpack.c.l.b16 %v243
      %v1697 = vunpack.c.l.b16 %v244
      %v1698 = vunpack.c.l.b16 %v245
      %v1699 = vunpack.c.l.b16 %v246
      %v1700 = vunpack.c.l.b16 %v247
      %v1701 = vunpack.c.l.b16 %v248
      %v1702 = vunpack.c.l.b16 %v249
      %v1703 = vunpack.c.l.b16 %v250
      %v1704 = vunpack.c.l.b16 %v251
      %v1705 = vunpack.c.l.b16 %v252
      %v1706 = vunpack.c.l.b16 %v253
      %v1707 = vunpack.c.l.b16 %v254
      %v1708 = vunpack.c.l.b16 %v255
      %v1709 = vunpack.c.l.b16 %v256
      %v1710 = vunpack.c.l.b16 %v257
      %v1711 = vunpack.c.l.b16 %v258
      %v1712 = vunpack.c.l.b16 %v259
      %v1713 = vunpack.c.l.b16 %v260
      %v1714 = vunpack.c.l.b16 %v261
      %v1715 = vunpack.c.l.b16 %v262
      %v1716 = vunpack.c.l.b16 %v263
      %v1717 = vunpack.c.l.b16 %v264
      %v1718 = vunpack.c.l.b16 %v265
      %v1719 = vunpack.c.l.b16 %v266
      %v1720 = vunpack.c.l.b16 %v267
      %v1721 = vunpack.c.l.b16 %v268
      %v1722 = vunpack.c.l.b16 %v269
      %v1723 = vunpack.c.l.b16 %v270
      %v1724 = vpack.c.b16 %v1661, %v1660
      %v1725 = vpack.c.b16 %v1663, %v1662
      %v1726 = vpack.c.b16 %v1665, %v1664
      %v1727 = vpack.c.b16 %v1667, %v1666
      %v1728 = vpack.c.b16 %v1669, %v1668
      %v1729 = vpack.c.b16 %v1671, %v1670
      %v1730 = vpack.c.b16 %v1673, %v1672
      %v1731 = vpack.c.b16 %v1675, %v1674
      %v1732 = vpack.c.b16 %v1677, %v1676
      %v1733 = vpack.c.b16 %v1679, %v1678
      %v1734 = vpack.c.b16 %v1681, %v1680
      %v1735 = vpack.c.b16 %v1683, %v1682
      %v1736 = vpack.c.b16 %v1685, %v1684
      %v1737 = vpack.c.b16 %v1687, %v1686
      %v1738 = vpack.c.b16 %v1689, %v1688
      %v1739 = vpack.c.b16 %v1691, %v1690
      %v1740 = vpack.c.b16 %v1693, %v1692
      %v1741 = vpack.c.b16 %v1695, %v1694
      %v1742 = vpack.c.b16 %v1697, %v1696
      %v1743 = vpack.c.b16 %v1699, %v1698
      %v1744 = vpack.c.b16 %v1701, %v1700
      %v1745 = vpack.c.b16 %v1703, %v1702
      %v1746 = vpack.c.b16 %v1705, %v1704
      %v1747 = vpack.c.b16 %v1707, %v1706
      %v1748 = vpack.c.b16 %v1709, %v1708
      %v1749 = vpack.c.b16 %v1711, %v1710
      %v1750 = vpack.c.b16 %v1713, %v1712
      %v1751 = vpack.c.b16 %v1715, %v1714
      %v1752 = vpack.c.b16 %v1717, %v1716
      %v1753 = vpack.c.b16 %v1719, %v1718
      %v1754 = vpack.c.b16 %v1721, %v1720
      %v1755 = vpack.c.b16 %v1723, %v1722
      %v1763 = vunpack.c.l.b16 %v271
      %v1764 = vunpack.c.l.b16 %v272
      %v1765 = vunpack.c.l.b16 %v273
      %v1766 = vunpack.c.l.b16 %v274
      %v1767 = vunpack.c.l.b16 %v275
      %v1768 = vunpack.c.l.b16 %v276
      %v1769 = vunpack.c.l.b16 %v277
      %v1770 = vpack.c.b16 %v1764, %v1763
      %v1771 = vpack.c.b16 %v1766, %v1765
      %v1772 = vpack.c.b16 %v1768, %v1767
      %v1773 = vpack.c.b16 %v1769, %v1769
      %v1778 = vsel %vm1206, %v1724, 0
      %v1781 = vsel %vm1206, %v1725, 0
      %v1784 = vsel %vm1206, %v1726, 0
      %v1787 = vsel %vm1206, %v1727, 0
      %v1790 = vsel %vm1206, %v1728, 0
      %v1793 = vsel %vm1206, %v1729, 0
      %v1796 = vsel %vm1206, %v1730, 0
      %v1799 = vsel %vm1206, %v1731, 0
      %v1802 = vsel %vm1206, %v1732, 0
      %v1805 = vsel %vm1206, %v1733, 0
      %v1808 = vsel %vm1206, %v1734, 0
      %v1811 = vsel %vm1206, %v1735, 0
      %v1814 = vsel %vm1206, %v1736, 0
      %v1817 = vsel %vm1206, %v1737, 0
      %v1820 = vsel %vm1206, %v1738, 0
      %v1823 = vsel %vm1206, %v1739, 0
      %v1826 = vsel %vm1206, %v1740, 0
      %v1829 = vsel %vm1206, %v1741, 0
      %v1832 = vsel %vm1206, %v1742, 0
      %v1835 = vsel %vm1206, %v1743, 0
      %v1838 = vsel %vm1206, %v1744, 0
      %v1841 = vsel %vm1206, %v1745, 0
      %v1844 = vsel %vm1206, %v1746, 0
      %v1847 = vsel %vm1206, %v1747, 0
      %v1850 = vsel %vm1206, %v1748, 0
      %v1853 = vsel %vm1206, %v1749, 0
      %v1856 = vsel %vm1206, %v1750, 0
      %v1859 = vsel %vm1206, %v1751, 0
      %v1862 = vsel %vm1206, %v1752, 0
      %v1865 = vsel %vm1206, %v1753, 0
      %v1868 = vsel %vm1206, %v1754, 0
      %v1871 = vsel %vm1206, %v1755, 0
      %v1874 = vsel %vm1303, %v1773, 0
      %1876 = vmatprep.subr.bf16.mxu0 0
      %1877 = vmatpush1.bf16.msra.mxu0 0
      %1878 = vmatprep.subr.bf16.mxu0 0
      %1879 = vmatpush1.bf16.msra.mxu0 0
      %1880 = vmatprep.subr.bf16.mxu0 0
      %1881 = vmatpush1.bf16.msra.mxu0 0
      %1882 = vmatprep.subr.bf16.mxu0 0
      %1883 = vmatpush1.bf16.msra.mxu0 0
      %1884 = vmatprep.subr.bf16.mxu0 0
      %1885 = vmatpush1.bf16.msra.mxu0 %v1874
      %1886 = vmatprep.subr.bf16.mxu0 0
      %1887 = vmatpush1.bf16.msra.mxu0 %v1772
      %1888 = vmatprep.subr.bf16.mxu0 0
      %1889 = vmatpush1.bf16.msra.mxu0 %v1771
      %1890 = vmatprep.subr.bf16.mxu0 0
      %1891 = vmatpush1.bf16.msra.mxu0 %v1770
      %1892 = vmatprep.subr.bf16.mxu0 0
      %1893 = vmatpush2.bf16.msra.mxu0 0
      %1894 = vmatprep.subr.bf16.mxu0 0
      %1895 = vmatpush2.bf16.msra.mxu0 0
      %1896 = vmatprep.subr.bf16.mxu0 0
      %1897 = vmatpush2.bf16.msra.mxu0 0
      %1898 = vmatprep.subr.bf16.mxu0 0
      %1899 = vmatpush2.bf16.msra.mxu0 0
      %1900 = vmatprep.subr.bf16.mxu0 0
      %1901 = vmatpush2.bf16.msra.mxu0 0
      %1902 = vmatprep.subr.bf16.mxu0 0
      %1903 = vmatpush2.bf16.msra.mxu0 0
      %1904 = vmatprep.subr.bf16.mxu0 0
      %1905 = vmatpush2.bf16.msra.mxu0 0
      %1906 = vmatprep.subr.bf16.mxu0 0
      %1907 = vmatpush2.bf16.msra.mxu0 0
      %1908 = vmatprep.mubr.bf16.mxu0 0
      %1909 = vmatmul.mubr.bf16.gmra.mxu0 %v1778
      %v1910 = vpop.f32.mrf.mxu0
      %v1911 = vadd.f32 %v1342, %v1910
      %v1912 = vpop.f32.mrf.mxu0
      %v1913 = vpop.f32.mrf.mxu0
      %v1914 = vadd.f32 %v1345, %v1913
      %v1915 = vpop.f32.mrf.mxu0
      %1916 = vmatprep.mubr.bf16.mxu0 0
      %1917 = vmatmul.mubr.bf16.gmra.mxu0 %v1781
      %v1918 = vpop.f32.mrf.mxu0
      %v1919 = vadd.f32 %v1350, %v1918
      %v1920 = vpop.f32.mrf.mxu0
      %v1921 = vpop.f32.mrf.mxu0
      %v1922 = vadd.f32 %v1353, %v1921
      %v1923 = vpop.f32.mrf.mxu0
      %1924 = vmatprep.mubr.bf16.mxu0 0
      %1925 = vmatmul.mubr.bf16.gmra.mxu0 %v1784
      %v1926 = vpop.f32.mrf.mxu0
      %v1927 = vadd.f32 %v1358, %v1926
      %v1928 = vpop.f32.mrf.mxu0
      %v1929 = vpop.f32.mrf.mxu0
      %v1930 = vadd.f32 %v1361, %v1929
      %v1931 = vpop.f32.mrf.mxu0
      %1932 = vmatprep.mubr.bf16.mxu0 0
      %1933 = vmatmul.mubr.bf16.gmra.mxu0 %v1787
      %v1934 = vpop.f32.mrf.mxu0
      %v1935 = vadd.f32 %v1366, %v1934
      %v1936 = vpop.f32.mrf.mxu0
      %v1937 = vpop.f32.mrf.mxu0
      %v1938 = vadd.f32 %v1369, %v1937
      %v1939 = vpop.f32.mrf.mxu0
      %1940 = vmatprep.mubr.bf16.mxu0 0
      %1941 = vmatmul.mubr.bf16.gmra.mxu0 %v1790
      %v1942 = vpop.f32.mrf.mxu0
      %v1943 = vadd.f32 %v1374, %v1942
      %v1944 = vpop.f32.mrf.mxu0
      %v1945 = vpop.f32.mrf.mxu0
      %v1946 = vadd.f32 %v1377, %v1945
      %v1947 = vpop.f32.mrf.mxu0
      %1948 = vmatprep.mubr.bf16.mxu0 0
      %1949 = vmatmul.mubr.bf16.gmra.mxu0 %v1793
      %v1950 = vpop.f32.mrf.mxu0
      %v1951 = vadd.f32 %v1382, %v1950
      %v1952 = vpop.f32.mrf.mxu0
      %v1953 = vpop.f32.mrf.mxu0
      %v1954 = vadd.f32 %v1385, %v1953
      %v1955 = vpop.f32.mrf.mxu0
      %1956 = vmatprep.mubr.bf16.mxu0 0
      %1957 = vmatmul.mubr.bf16.gmra.mxu0 %v1796
      %v1958 = vpop.f32.mrf.mxu0
      %v1959 = vadd.f32 %v1390, %v1958
      %v1960 = vpop.f32.mrf.mxu0
      %v1961 = vpop.f32.mrf.mxu0
      %v1962 = vadd.f32 %v1393, %v1961
      %v1963 = vpop.f32.mrf.mxu0
      %1964 = vmatprep.mubr.bf16.mxu0 0
      %1965 = vmatmul.mubr.bf16.gmra.mxu0 %v1799
      %v1966 = vpop.f32.mrf.mxu0
      %v1967 = vadd.f32 %v1398, %v1966
      %v1968 = vpop.f32.mrf.mxu0
      %v1969 = vpop.f32.mrf.mxu0
      %v1970 = vadd.f32 %v1401, %v1969
      %v1971 = vpop.f32.mrf.mxu0
      %1972 = vmatprep.mubr.bf16.mxu0 0
      %1973 = vmatmul.mubr.bf16.gmra.mxu0 %v1802
      %v1974 = vpop.f32.mrf.mxu0
      %v1975 = vadd.f32 %v1406, %v1974
      %v1976 = vpop.f32.mrf.mxu0
      %v1977 = vpop.f32.mrf.mxu0
      %v1978 = vadd.f32 %v1409, %v1977
      %v1979 = vpop.f32.mrf.mxu0
      %1980 = vmatprep.mubr.bf16.mxu0 0
      %1981 = vmatmul.mubr.bf16.gmra.mxu0 %v1805
      %v1982 = vpop.f32.mrf.mxu0
      %v1983 = vadd.f32 %v1414, %v1982
      %v1984 = vpop.f32.mrf.mxu0
      %v1985 = vpop.f32.mrf.mxu0
      %v1986 = vadd.f32 %v1417, %v1985
      %v1987 = vpop.f32.mrf.mxu0
      %1988 = vmatprep.mubr.bf16.mxu0 0
      %1989 = vmatmul.mubr.bf16.gmra.mxu0 %v1808
      %v1990 = vpop.f32.mrf.mxu0
      %v1991 = vadd.f32 %v1422, %v1990
      %v1992 = vpop.f32.mrf.mxu0
      %v1993 = vpop.f32.mrf.mxu0
      %v1994 = vadd.f32 %v1425, %v1993
      %v1995 = vpop.f32.mrf.mxu0
      %1996 = vmatprep.mubr.bf16.mxu0 0
      %1997 = vmatmul.mubr.bf16.gmra.mxu0 %v1811
      %v1998 = vpop.f32.mrf.mxu0
      %v1999 = vadd.f32 %v1430, %v1998
      %v2000 = vpop.f32.mrf.mxu0
      %v2001 = vpop.f32.mrf.mxu0
      %v2002 = vadd.f32 %v1433, %v2001
      %v2003 = vpop.f32.mrf.mxu0
      %2004 = vmatprep.mubr.bf16.mxu0 0
      %2005 = vmatmul.mubr.bf16.gmra.mxu0 %v1814
      %v2006 = vpop.f32.mrf.mxu0
      %v2007 = vadd.f32 %v1438, %v2006
      %v2008 = vpop.f32.mrf.mxu0
      %v2009 = vpop.f32.mrf.mxu0
      %v2010 = vadd.f32 %v1441, %v2009
      %v2011 = vpop.f32.mrf.mxu0
      %2012 = vmatprep.mubr.bf16.mxu0 0
      %2013 = vmatmul.mubr.bf16.gmra.mxu0 %v1817
      %v2014 = vpop.f32.mrf.mxu0
      %v2015 = vadd.f32 %v1446, %v2014
      %v2016 = vpop.f32.mrf.mxu0
      %v2017 = vpop.f32.mrf.mxu0
      %v2018 = vadd.f32 %v1449, %v2017
      %v2019 = vpop.f32.mrf.mxu0
      %2020 = vmatprep.mubr.bf16.mxu0 0
      %2021 = vmatmul.mubr.bf16.gmra.mxu0 %v1820
      %v2022 = vpop.f32.mrf.mxu0
      %v2023 = vadd.f32 %v1454, %v2022
      %v2024 = vpop.f32.mrf.mxu0
      %v2025 = vpop.f32.mrf.mxu0
      %v2026 = vadd.f32 %v1457, %v2025
      %v2027 = vpop.f32.mrf.mxu0
      %2028 = vmatprep.mubr.bf16.mxu0 0
      %2029 = vmatmul.mubr.bf16.gmra.mxu0 %v1823
      %v2030 = vpop.f32.mrf.mxu0
      %v2031 = vadd.f32 %v1462, %v2030
      %v2032 = vpop.f32.mrf.mxu0
      %v2033 = vpop.f32.mrf.mxu0
      %v2034 = vadd.f32 %v1465, %v2033
      %v2035 = vpop.f32.mrf.mxu0
      %2036 = vmatprep.mubr.bf16.mxu0 0
      %2037 = vmatmul.mubr.bf16.gmra.mxu0 %v1826
      %v2038 = vpop.f32.mrf.mxu0
      %v2039 = vadd.f32 %v1470, %v2038
      %v2040 = vpop.f32.mrf.mxu0
      %v2041 = vpop.f32.mrf.mxu0
      %v2042 = vadd.f32 %v1473, %v2041
      %v2043 = vpop.f32.mrf.mxu0
      %2044 = vmatprep.mubr.bf16.mxu0 0
      %2045 = vmatmul.mubr.bf16.gmra.mxu0 %v1829
      %v2046 = vpop.f32.mrf.mxu0
      %v2047 = vadd.f32 %v1478, %v2046
      %v2048 = vpop.f32.mrf.mxu0
      %v2049 = vpop.f32.mrf.mxu0
      %v2050 = vadd.f32 %v1481, %v2049
      %v2051 = vpop.f32.mrf.mxu0
      %2052 = vmatprep.mubr.bf16.mxu0 0
      %2053 = vmatmul.mubr.bf16.gmra.mxu0 %v1832
      %v2054 = vpop.f32.mrf.mxu0
      %v2055 = vadd.f32 %v1486, %v2054
      %v2056 = vpop.f32.mrf.mxu0
      %v2057 = vpop.f32.mrf.mxu0
      %v2058 = vadd.f32 %v1489, %v2057
      %v2059 = vpop.f32.mrf.mxu0
      %2060 = vmatprep.mubr.bf16.mxu0 0
      %2061 = vmatmul.mubr.bf16.gmra.mxu0 %v1835
      %v2062 = vpop.f32.mrf.mxu0
      %v2063 = vadd.f32 %v1494, %v2062
      %v2064 = vpop.f32.mrf.mxu0
      %v2065 = vpop.f32.mrf.mxu0
      %v2066 = vadd.f32 %v1497, %v2065
      %v2067 = vpop.f32.mrf.mxu0
      %2068 = vmatprep.mubr.bf16.mxu0 0
      %2069 = vmatmul.mubr.bf16.gmra.mxu0 %v1838
      %v2070 = vpop.f32.mrf.mxu0
      %v2071 = vadd.f32 %v1502, %v2070
      %v2072 = vpop.f32.mrf.mxu0
      %v2073 = vpop.f32.mrf.mxu0
      %v2074 = vadd.f32 %v1505, %v2073
      %v2075 = vpop.f32.mrf.mxu0
      %2076 = vmatprep.mubr.bf16.mxu0 0
      %2077 = vmatmul.mubr.bf16.gmra.mxu0 %v1841
      %v2078 = vpop.f32.mrf.mxu0
      %v2079 = vadd.f32 %v1510, %v2078
      %v2080 = vpop.f32.mrf.mxu0
      %v2081 = vpop.f32.mrf.mxu0
      %v2082 = vadd.f32 %v1513, %v2081
      %v2083 = vpop.f32.mrf.mxu0
      %2084 = vmatprep.mubr.bf16.mxu0 0
      %2085 = vmatmul.mubr.bf16.gmra.mxu0 %v1844
      %v2086 = vpop.f32.mrf.mxu0
      %v2087 = vadd.f32 %v1518, %v2086
      %v2088 = vpop.f32.mrf.mxu0
      %v2089 = vpop.f32.mrf.mxu0
      %v2090 = vadd.f32 %v1521, %v2089
      %v2091 = vpop.f32.mrf.mxu0
      %2092 = vmatprep.mubr.bf16.mxu0 0
      %2093 = vmatmul.mubr.bf16.gmra.mxu0 %v1847
      %v2094 = vpop.f32.mrf.mxu0
      %v2095 = vadd.f32 %v1526, %v2094
      %v2096 = vpop.f32.mrf.mxu0
      %v2097 = vpop.f32.mrf.mxu0
      %v2098 = vadd.f32 %v1529, %v2097
      %v2099 = vpop.f32.mrf.mxu0
      %2100 = vmatprep.mubr.bf16.mxu0 0
      %2101 = vmatmul.mubr.bf16.gmra.mxu0 %v1850
      %v2102 = vpop.f32.mrf.mxu0
      %v2103 = vadd.f32 %v1534, %v2102
      %v2104 = vpop.f32.mrf.mxu0
      %v2105 = vpop.f32.mrf.mxu0
      %v2106 = vadd.f32 %v1537, %v2105
      %v2107 = vpop.f32.mrf.mxu0
      %2108 = vmatprep.mubr.bf16.mxu0 0
      %2109 = vmatmul.mubr.bf16.gmra.mxu0 %v1853
      %v2110 = vpop.f32.mrf.mxu0
      %v2111 = vadd.f32 %v1542, %v2110
      %v2112 = vpop.f32.mrf.mxu0
      %v2113 = vpop.f32.mrf.mxu0
      %v2114 = vadd.f32 %v1545, %v2113
      %v2115 = vpop.f32.mrf.mxu0
      %2116 = vmatprep.mubr.bf16.mxu0 0
      %2117 = vmatmul.mubr.bf16.gmra.mxu0 %v1856
      %v2118 = vpop.f32.mrf.mxu0
      %v2119 = vadd.f32 %v1550, %v2118
      %v2120 = vpop.f32.mrf.mxu0
      %v2121 = vpop.f32.mrf.mxu0
      %v2122 = vadd.f32 %v1553, %v2121
      %v2123 = vpop.f32.mrf.mxu0
      %2124 = vmatprep.mubr.bf16.mxu0 0
      %2125 = vmatmul.mubr.bf16.gmra.mxu0 %v1859
      %v2126 = vpop.f32.mrf.mxu0
      %v2127 = vadd.f32 %v1558, %v2126
      %v2128 = vpop.f32.mrf.mxu0
      %v2129 = vpop.f32.mrf.mxu0
      %v2130 = vadd.f32 %v1561, %v2129
      %v2131 = vpop.f32.mrf.mxu0
      %2132 = vmatprep.mubr.bf16.mxu0 0
      %2133 = vmatmul.mubr.bf16.gmra.mxu0 %v1862
      %v2134 = vpop.f32.mrf.mxu0
      %v2135 = vadd.f32 %v1566, %v2134
      %v2136 = vpop.f32.mrf.mxu0
      %v2137 = vpop.f32.mrf.mxu0
      %v2138 = vadd.f32 %v1569, %v2137
      %v2139 = vpop.f32.mrf.mxu0
      %2140 = vmatprep.mubr.bf16.mxu0 0
      %2141 = vmatmul.mubr.bf16.gmra.mxu0 %v1865
      %v2142 = vpop.f32.mrf.mxu0
      %v2143 = vadd.f32 %v1574, %v2142
      %v2144 = vpop.f32.mrf.mxu0
      %v2145 = vpop.f32.mrf.mxu0
      %v2146 = vadd.f32 %v1577, %v2145
      %v2147 = vpop.f32.mrf.mxu0
      %2148 = vmatprep.mubr.bf16.mxu0 0
      %2149 = vmatmul.mubr.bf16.gmra.mxu0 %v1868
      %v2150 = vpop.f32.mrf.mxu0
      %v2151 = vadd.f32 %v1582, %v2150
      %v2152 = vpop.f32.mrf.mxu0
      %v2153 = vpop.f32.mrf.mxu0
      %v2154 = vadd.f32 %v1585, %v2153
      %v2155 = vpop.f32.mrf.mxu0
      %2156 = vmatprep.mubr.bf16.mxu0 0
      %2157 = vmatmul.mubr.bf16.gmra.mxu0 %v1871
      %v2158 = vpop.f32.mrf.mxu0
      %v2159 = vadd.f32 %v1590, %v2158
      %v2160 = vpop.f32.mrf.mxu0
      %v2161 = vpop.f32.mrf.mxu0
      %v2162 = vadd.f32 %v1593, %v2161
      %v2163 = vpop.f32.mrf.mxu0
      %2164 = vdwg.mxu0
      %s2165 = scalar_lea.vmem %s197, 12
      %v2166 = vld [vmem:[%s2165] sm:$0xf]
      %v2167 = vld [vmem:[%s2165 + $0x4] sm:$0xf]
      %v2168 = vld [vmem:[%s2165 + $0xc] sm:$0xf]
      %v2169 = vld [vmem:[%s2165 + $0x10] sm:$0xf]
      %v2170 = vld [vmem:[%s2165 + $0x18] sm:$0xf]
      %v2171 = vld [vmem:[%s2165 + $0x1c] sm:$0xf]
      %v2172 = vld [vmem:[%s2165 + $0x24] sm:$0xf]
      %v2173 = vld [vmem:[%s2165 + $0x28] sm:$0xf]
      %v2174 = vld [vmem:[%s2165 + $0x30] sm:$0xf]
      %v2175 = vld [vmem:[%s2165 + $0x34] sm:$0xf]
      %v2176 = vld [vmem:[%s2165 + $0x3c] sm:$0xf]
      %v2177 = vld [vmem:[%s2165 + $0x40] sm:$0xf]
      %v2178 = vld [vmem:[%s2165 + $0x48] sm:$0xf]
      %v2179 = vld [vmem:[%s2165 + $0x4c] sm:$0xf]
      %v2180 = vld [vmem:[%s2165 + $0x54] sm:$0xf]
      %v2181 = vld [vmem:[%s2165 + $0x58] sm:$0xf]
      %v2182 = vld [vmem:[%s2165 + $0x60] sm:$0xf]
      %v2183 = vld [vmem:[%s2165 + $0x64] sm:$0xf]
      %v2184 = vld [vmem:[%s2165 + $0x6c] sm:$0xf]
      %v2185 = vld [vmem:[%s2165 + $0x70] sm:$0xf]
      %v2186 = vld [vmem:[%s2165 + $0x78] sm:$0xf]
      %v2187 = vld [vmem:[%s2165 + $0x7c] sm:$0xf]
      %v2188 = vld [vmem:[%s2165 + $0x84] sm:$0xf]
      %v2189 = vld [vmem:[%s2165 + $0x88] sm:$0xf]
      %v2190 = vld [vmem:[%s2165 + $0x90] sm:$0xf]
      %v2191 = vld [vmem:[%s2165 + $0x94] sm:$0xf]
      %v2192 = vld [vmem:[%s2165 + $0x9c] sm:$0xf]
      %v2193 = vld [vmem:[%s2165 + $0xa0] sm:$0xf]
      %v2194 = vld [vmem:[%s2165 + $0xa8] sm:$0xf]
      %v2195 = vld [vmem:[%s2165 + $0xac] sm:$0xf]
      %v2196 = vld [vmem:[%s2165 + $0xb4] sm:$0xf]
      %v2197 = vld [vmem:[%s2165 + $0xb8] sm:$0xf]
      %v2198 = vld [vmem:[%s2165 + $0xcc] sm:$0xf]
      %v2199 = vld [vmem:[%s2165 + $0xd0] sm:$0xf]
      %v2200 = vld [vmem:[%s2165 + $0xd8] sm:$0xf]
      %v2201 = vld [vmem:[%s2165 + $0xdc] sm:$0xf]
      %v2202 = vld [vmem:[%s2165 + $0xe4] sm:$0xf]
      %v2203 = vld [vmem:[%s2165 + $0xe8] sm:$0xf]
      %v2204 = vld [vmem:[%s2165 + $0xf0] sm:$0xf]
      %v2205 = vld [vmem:[%s2165 + $0xf4] sm:$0xf]
      %v2206 = vld [vmem:[%s2165 + $0xfc] sm:$0xf]
      %v2207 = vld [vmem:[%s2165 + $0x100] sm:$0xf]
      %v2208 = vld [vmem:[%s2165 + $0x108] sm:$0xf]
      %v2209 = vld [vmem:[%s2165 + $0x10c] sm:$0xf]
      %v2210 = vld [vmem:[%s2165 + $0x114] sm:$0xf]
      %v2211 = vld [vmem:[%s2165 + $0x118] sm:$0xf]
      %v2212 = vld [vmem:[%s2165 + $0x120] sm:$0xf]
      %v2213 = vld [vmem:[%s2165 + $0x124] sm:$0xf]
      %v2214 = vld [vmem:[%s2165 + $0x12c] sm:$0xf]
      %v2215 = vld [vmem:[%s2165 + $0x130] sm:$0xf]
      %v2216 = vld [vmem:[%s2165 + $0x138] sm:$0xf]
      %v2217 = vld [vmem:[%s2165 + $0x13c] sm:$0xf]
      %v2218 = vld [vmem:[%s2165 + $0x144] sm:$0xf]
      %v2219 = vld [vmem:[%s2165 + $0x148] sm:$0xf]
      %v2220 = vld [vmem:[%s2165 + $0x150] sm:$0xf]
      %v2221 = vld [vmem:[%s2165 + $0x154] sm:$0xf]
      %v2222 = vld [vmem:[%s2165 + $0x15c] sm:$0xf]
      %v2223 = vld [vmem:[%s2165 + $0x160] sm:$0xf]
      %v2224 = vld [vmem:[%s2165 + $0x168] sm:$0xf]
      %v2225 = vld [vmem:[%s2165 + $0x16c] sm:$0xf]
      %v2226 = vld [vmem:[%s2165 + $0x174] sm:$0xf]
      %v2227 = vld [vmem:[%s2165 + $0x178] sm:$0xf]
      %v2228 = vld [vmem:[%s2165 + $0x180] sm:$0xf]
      %v2229 = vld [vmem:[%s2165 + $0x184] sm:$0xf]
      %s2230 = scalar_lea.vmem %s1, 56
      %v2231 = vld [vmem:[%s2230] sm:$0xf]
      %v2232 = vld [vmem:[%s2230 + $0x4] sm:$0xf]
      %v2233 = vld [vmem:[%s2230 + $0x8] sm:$0xf]
      %v2234 = vld [vmem:[%s2230 + $0xc] sm:$0xf]
      %v2235 = vld [vmem:[%s2230 + $0x10] sm:$0xf]
      %v2236 = vld [vmem:[%s2230 + $0x14] sm:$0xf]
      %v2237 = vld [vmem:[%s2230 + $0x18] sm:$0x3]
      %v2302 = vunpack.c.l.b16 %v2166
      %v2303 = vunpack.c.l.b16 %v2167
      %v2304 = vunpack.c.l.b16 %v2168
      %v2305 = vunpack.c.l.b16 %v2169
      %v2306 = vunpack.c.l.b16 %v2170
      %v2307 = vunpack.c.l.b16 %v2171
      %v2308 = vunpack.c.l.b16 %v2172
      %v2309 = vunpack.c.l.b16 %v2173
      %v2310 = vunpack.c.l.b16 %v2174
      %v2311 = vunpack.c.l.b16 %v2175
      %v2312 = vunpack.c.l.b16 %v2176
      %v2313 = vunpack.c.l.b16 %v2177
      %v2314 = vunpack.c.l.b16 %v2178
      %v2315 = vunpack.c.l.b16 %v2179
      %v2316 = vunpack.c.l.b16 %v2180
      %v2317 = vunpack.c.l.b16 %v2181
      %v2318 = vunpack.c.l.b16 %v2182
      %v2319 = vunpack.c.l.b16 %v2183
      %v2320 = vunpack.c.l.b16 %v2184
      %v2321 = vunpack.c.l.b16 %v2185
      %v2322 = vunpack.c.l.b16 %v2186
      %v2323 = vunpack.c.l.b16 %v2187
      %v2324 = vunpack.c.l.b16 %v2188
      %v2325 = vunpack.c.l.b16 %v2189
      %v2326 = vunpack.c.l.b16 %v2190
      %v2327 = vunpack.c.l.b16 %v2191
      %v2328 = vunpack.c.l.b16 %v2192
      %v2329 = vunpack.c.l.b16 %v2193
      %v2330 = vunpack.c.l.b16 %v2194
      %v2331 = vunpack.c.l.b16 %v2195
      %v2332 = vunpack.c.l.b16 %v2196
      %v2333 = vunpack.c.l.b16 %v2197
      %v2334 = vunpack.c.l.b16 %v2198
      %v2335 = vunpack.c.l.b16 %v2199
      %v2336 = vunpack.c.l.b16 %v2200
      %v2337 = vunpack.c.l.b16 %v2201
      %v2338 = vunpack.c.l.b16 %v2202
      %v2339 = vunpack.c.l.b16 %v2203
      %v2340 = vunpack.c.l.b16 %v2204
      %v2341 = vunpack.c.l.b16 %v2205
      %v2342 = vunpack.c.l.b16 %v2206
      %v2343 = vunpack.c.l.b16 %v2207
      %v2344 = vunpack.c.l.b16 %v2208
      %v2345 = vunpack.c.l.b16 %v2209
      %v2346 = vunpack.c.l.b16 %v2210
      %v2347 = vunpack.c.l.b16 %v2211
      %v2348 = vunpack.c.l.b16 %v2212
      %v2349 = vunpack.c.l.b16 %v2213
      %v2350 = vunpack.c.l.b16 %v2214
      %v2351 = vunpack.c.l.b16 %v2215
      %v2352 = vunpack.c.l.b16 %v2216
      %v2353 = vunpack.c.l.b16 %v2217
      %v2354 = vunpack.c.l.b16 %v2218
      %v2355 = vunpack.c.l.b16 %v2219
      %v2356 = vunpack.c.l.b16 %v2220
      %v2357 = vunpack.c.l.b16 %v2221
      %v2358 = vunpack.c.l.b16 %v2222
      %v2359 = vunpack.c.l.b16 %v2223
      %v2360 = vunpack.c.l.b16 %v2224
      %v2361 = vunpack.c.l.b16 %v2225
      %v2362 = vunpack.c.l.b16 %v2226
      %v2363 = vunpack.c.l.b16 %v2227
      %v2364 = vunpack.c.l.b16 %v2228
      %v2365 = vunpack.c.l.b16 %v2229
      %v2366 = vpack.c.b16 %v2303, %v2302
      %v2367 = vpack.c.b16 %v2305, %v2304
      %v2368 = vpack.c.b16 %v2307, %v2306
      %v2369 = vpack.c.b16 %v2309, %v2308
      %v2370 = vpack.c.b16 %v2311, %v2310
      %v2371 = vpack.c.b16 %v2313, %v2312
      %v2372 = vpack.c.b16 %v2315, %v2314
      %v2373 = vpack.c.b16 %v2317, %v2316
      %v2374 = vpack.c.b16 %v2319, %v2318
      %v2375 = vpack.c.b16 %v2321, %v2320
      %v2376 = vpack.c.b16 %v2323, %v2322
      %v2377 = vpack.c.b16 %v2325, %v2324
      %v2378 = vpack.c.b16 %v2327, %v2326
      %v2379 = vpack.c.b16 %v2329, %v2328
      %v2380 = vpack.c.b16 %v2331, %v2330
      %v2381 = vpack.c.b16 %v2333, %v2332
      %v2382 = vpack.c.b16 %v2335, %v2334
      %v2383 = vpack.c.b16 %v2337, %v2336
      %v2384 = vpack.c.b16 %v2339, %v2338
      %v2385 = vpack.c.b16 %v2341, %v2340
      %v2386 = vpack.c.b16 %v2343, %v2342
      %v2387 = vpack.c.b16 %v2345, %v2344
      %v2388 = vpack.c.b16 %v2347, %v2346
      %v2389 = vpack.c.b16 %v2349, %v2348
      %v2390 = vpack.c.b16 %v2351, %v2350
      %v2391 = vpack.c.b16 %v2353, %v2352
      %v2392 = vpack.c.b16 %v2355, %v2354
      %v2393 = vpack.c.b16 %v2357, %v2356
      %v2394 = vpack.c.b16 %v2359, %v2358
      %v2395 = vpack.c.b16 %v2361, %v2360
      %v2396 = vpack.c.b16 %v2363, %v2362
      %v2397 = vpack.c.b16 %v2365, %v2364
      %v2405 = vunpack.c.l.b16 %v2231
      %v2406 = vunpack.c.l.b16 %v2232
      %v2407 = vunpack.c.l.b16 %v2233
      %v2408 = vunpack.c.l.b16 %v2234
      %v2409 = vunpack.c.l.b16 %v2235
      %v2410 = vunpack.c.l.b16 %v2236
      %v2411 = vunpack.c.l.b16 %v2237
      %v2412 = vpack.c.b16 %v2406, %v2405
      %v2413 = vpack.c.b16 %v2408, %v2407
      %v2414 = vpack.c.b16 %v2410, %v2409
      %v2415 = vpack.c.b16 %v2411, %v2411
      %v2420 = vsel %vm1206, %v2366, 0
      %v2423 = vsel %vm1206, %v2367, 0
      %v2426 = vsel %vm1206, %v2368, 0
      %v2429 = vsel %vm1206, %v2369, 0
      %v2432 = vsel %vm1206, %v2370, 0
      %v2435 = vsel %vm1206, %v2371, 0
      %v2438 = vsel %vm1206, %v2372, 0
      %v2441 = vsel %vm1206, %v2373, 0
      %v2444 = vsel %vm1206, %v2374, 0
      %v2447 = vsel %vm1206, %v2375, 0
      %v2450 = vsel %vm1206, %v2376, 0
      %v2453 = vsel %vm1206, %v2377, 0
      %v2456 = vsel %vm1206, %v2378, 0
      %v2459 = vsel %vm1206, %v2379, 0
      %v2462 = vsel %vm1206, %v2380, 0
      %v2465 = vsel %vm1206, %v2381, 0
      %v2468 = vsel %vm1206, %v2382, 0
      %v2471 = vsel %vm1206, %v2383, 0
      %v2474 = vsel %vm1206, %v2384, 0
      %v2477 = vsel %vm1206, %v2385, 0
      %v2480 = vsel %vm1206, %v2386, 0
      %v2483 = vsel %vm1206, %v2387, 0
      %v2486 = vsel %vm1206, %v2388, 0
      %v2489 = vsel %vm1206, %v2389, 0
      %v2492 = vsel %vm1206, %v2390, 0
      %v2495 = vsel %vm1206, %v2391, 0
      %v2498 = vsel %vm1206, %v2392, 0
      %v2501 = vsel %vm1206, %v2393, 0
      %v2504 = vsel %vm1206, %v2394, 0
      %v2507 = vsel %vm1206, %v2395, 0
      %v2510 = vsel %vm1206, %v2396, 0
      %v2513 = vsel %vm1206, %v2397, 0
      %v2516 = vsel %vm1303, %v2415, 0
      %2518 = vmatprep.subr.bf16.mxu0 0
      %2519 = vmatpush1.bf16.msra.mxu0 0
      %2520 = vmatprep.subr.bf16.mxu0 0
      %2521 = vmatpush1.bf16.msra.mxu0 0
      %2522 = vmatprep.subr.bf16.mxu0 0
      %2523 = vmatpush1.bf16.msra.mxu0 0
      %2524 = vmatprep.subr.bf16.mxu0 0
      %2525 = vmatpush1.bf16.msra.mxu0 0
      %2526 = vmatprep.subr.bf16.mxu0 0
      %2527 = vmatpush1.bf16.msra.mxu0 %v2516
      %2528 = vmatprep.subr.bf16.mxu0 0
      %2529 = vmatpush1.bf16.msra.mxu0 %v2414
      %2530 = vmatprep.subr.bf16.mxu0 0
      %2531 = vmatpush1.bf16.msra.mxu0 %v2413
      %2532 = vmatprep.subr.bf16.mxu0 0
      %2533 = vmatpush1.bf16.msra.mxu0 %v2412
      %2534 = vmatprep.subr.bf16.mxu0 0
      %2535 = vmatpush2.bf16.msra.mxu0 0
      %2536 = vmatprep.subr.bf16.mxu0 0
      %2537 = vmatpush2.bf16.msra.mxu0 0
      %2538 = vmatprep.subr.bf16.mxu0 0
      %2539 = vmatpush2.bf16.msra.mxu0 0
      %2540 = vmatprep.subr.bf16.mxu0 0
      %2541 = vmatpush2.bf16.msra.mxu0 0
      %2542 = vmatprep.subr.bf16.mxu0 0
      %2543 = vmatpush2.bf16.msra.mxu0 0
      %2544 = vmatprep.subr.bf16.mxu0 0
      %2545 = vmatpush2.bf16.msra.mxu0 0
      %2546 = vmatprep.subr.bf16.mxu0 0
      %2547 = vmatpush2.bf16.msra.mxu0 0
      %2548 = vmatprep.subr.bf16.mxu0 0
      %2549 = vmatpush2.bf16.msra.mxu0 0
      %2550 = vmatprep.mubr.bf16.mxu0 0
      %2551 = vmatmul.mubr.bf16.gmra.mxu0 %v2420
      %v2552 = vpop.f32.mrf.mxu0
      %v2553 = vadd.f32 0.0, %v2552
      %v2554 = vpop.f32.mrf.mxu0
      %v2555 = vpop.f32.mrf.mxu0
      %v2556 = vadd.f32 0.0, %v2555
      %v2557 = vpop.f32.mrf.mxu0
      %2558 = vmatprep.mubr.bf16.mxu0 0
      %2559 = vmatmul.mubr.bf16.gmra.mxu0 %v2423
      %v2560 = vpop.f32.mrf.mxu0
      %v2561 = vadd.f32 0.0, %v2560
      %v2562 = vpop.f32.mrf.mxu0
      %v2563 = vpop.f32.mrf.mxu0
      %v2564 = vadd.f32 0.0, %v2563
      %v2565 = vpop.f32.mrf.mxu0
      %2566 = vmatprep.mubr.bf16.mxu0 0
      %2567 = vmatmul.mubr.bf16.gmra.mxu0 %v2426
      %v2568 = vpop.f32.mrf.mxu0
      %v2569 = vadd.f32 0.0, %v2568
      %v2570 = vpop.f32.mrf.mxu0
      %v2571 = vpop.f32.mrf.mxu0
      %v2572 = vadd.f32 0.0, %v2571
      %v2573 = vpop.f32.mrf.mxu0
      %2574 = vmatprep.mubr.bf16.mxu0 0
      %2575 = vmatmul.mubr.bf16.gmra.mxu0 %v2429
      %v2576 = vpop.f32.mrf.mxu0
      %v2577 = vadd.f32 0.0, %v2576
      %v2578 = vpop.f32.mrf.mxu0
      %v2579 = vpop.f32.mrf.mxu0
      %v2580 = vadd.f32 0.0, %v2579
      %v2581 = vpop.f32.mrf.mxu0
      %2582 = vmatprep.mubr.bf16.mxu0 0
      %2583 = vmatmul.mubr.bf16.gmra.mxu0 %v2432
      %v2584 = vpop.f32.mrf.mxu0
      %v2585 = vadd.f32 0.0, %v2584
      %v2586 = vpop.f32.mrf.mxu0
      %v2587 = vpop.f32.mrf.mxu0
      %v2588 = vadd.f32 0.0, %v2587
      %v2589 = vpop.f32.mrf.mxu0
      %2590 = vmatprep.mubr.bf16.mxu0 0
      %2591 = vmatmul.mubr.bf16.gmra.mxu0 %v2435
      %v2592 = vpop.f32.mrf.mxu0
      %v2593 = vadd.f32 0.0, %v2592
      %v2594 = vpop.f32.mrf.mxu0
      %v2595 = vpop.f32.mrf.mxu0
      %v2596 = vadd.f32 0.0, %v2595
      %v2597 = vpop.f32.mrf.mxu0
      %2598 = vmatprep.mubr.bf16.mxu0 0
      %2599 = vmatmul.mubr.bf16.gmra.mxu0 %v2438
      %v2600 = vpop.f32.mrf.mxu0
      %v2601 = vadd.f32 0.0, %v2600
      %v2602 = vpop.f32.mrf.mxu0
      %v2603 = vpop.f32.mrf.mxu0
      %v2604 = vadd.f32 0.0, %v2603
      %v2605 = vpop.f32.mrf.mxu0
      %2606 = vmatprep.mubr.bf16.mxu0 0
      %2607 = vmatmul.mubr.bf16.gmra.mxu0 %v2441
      %v2608 = vpop.f32.mrf.mxu0
      %v2609 = vadd.f32 0.0, %v2608
      %v2610 = vpop.f32.mrf.mxu0
      %v2611 = vpop.f32.mrf.mxu0
      %v2612 = vadd.f32 0.0, %v2611
      %v2613 = vpop.f32.mrf.mxu0
      %2614 = vmatprep.mubr.bf16.mxu0 0
      %2615 = vmatmul.mubr.bf16.gmra.mxu0 %v2444
      %v2616 = vpop.f32.mrf.mxu0
      %v2617 = vadd.f32 0.0, %v2616
      %v2618 = vpop.f32.mrf.mxu0
      %v2619 = vpop.f32.mrf.mxu0
      %v2620 = vadd.f32 0.0, %v2619
      %v2621 = vpop.f32.mrf.mxu0
      %2622 = vmatprep.mubr.bf16.mxu0 0
      %2623 = vmatmul.mubr.bf16.gmra.mxu0 %v2447
      %v2624 = vpop.f32.mrf.mxu0
      %v2625 = vadd.f32 0.0, %v2624
      %v2626 = vpop.f32.mrf.mxu0
      %v2627 = vpop.f32.mrf.mxu0
      %v2628 = vadd.f32 0.0, %v2627
      %v2629 = vpop.f32.mrf.mxu0
      %2630 = vmatprep.mubr.bf16.mxu0 0
      %2631 = vmatmul.mubr.bf16.gmra.mxu0 %v2450
      %v2632 = vpop.f32.mrf.mxu0
      %v2633 = vadd.f32 0.0, %v2632
      %v2634 = vpop.f32.mrf.mxu0
      %v2635 = vpop.f32.mrf.mxu0
      %v2636 = vadd.f32 0.0, %v2635
      %v2637 = vpop.f32.mrf.mxu0
      %2638 = vmatprep.mubr.bf16.mxu0 0
      %2639 = vmatmul.mubr.bf16.gmra.mxu0 %v2453
      %v2640 = vpop.f32.mrf.mxu0
      %v2641 = vadd.f32 0.0, %v2640
      %v2642 = vpop.f32.mrf.mxu0
      %v2643 = vpop.f32.mrf.mxu0
      %v2644 = vadd.f32 0.0, %v2643
      %v2645 = vpop.f32.mrf.mxu0
      %2646 = vmatprep.mubr.bf16.mxu0 0
      %2647 = vmatmul.mubr.bf16.gmra.mxu0 %v2456
      %v2648 = vpop.f32.mrf.mxu0
      %v2649 = vadd.f32 0.0, %v2648
      %v2650 = vpop.f32.mrf.mxu0
      %v2651 = vpop.f32.mrf.mxu0
      %v2652 = vadd.f32 0.0, %v2651
      %v2653 = vpop.f32.mrf.mxu0
      %2654 = vmatprep.mubr.bf16.mxu0 0
      %2655 = vmatmul.mubr.bf16.gmra.mxu0 %v2459
      %v2656 = vpop.f32.mrf.mxu0
      %v2657 = vadd.f32 0.0, %v2656
      %v2658 = vpop.f32.mrf.mxu0
      %v2659 = vpop.f32.mrf.mxu0
      %v2660 = vadd.f32 0.0, %v2659
      %v2661 = vpop.f32.mrf.mxu0
      %2662 = vmatprep.mubr.bf16.mxu0 0
      %2663 = vmatmul.mubr.bf16.gmra.mxu0 %v2462
      %v2664 = vpop.f32.mrf.mxu0
      %v2665 = vadd.f32 0.0, %v2664
      %v2666 = vpop.f32.mrf.mxu0
      %v2667 = vpop.f32.mrf.mxu0
      %v2668 = vadd.f32 0.0, %v2667
      %v2669 = vpop.f32.mrf.mxu0
      %2670 = vmatprep.mubr.bf16.mxu0 0
      %2671 = vmatmul.mubr.bf16.gmra.mxu0 %v2465
      %v2672 = vpop.f32.mrf.mxu0
      %v2673 = vadd.f32 0.0, %v2672
      %v2674 = vpop.f32.mrf.mxu0
      %v2675 = vpop.f32.mrf.mxu0
      %v2676 = vadd.f32 0.0, %v2675
      %v2677 = vpop.f32.mrf.mxu0
      %2678 = vmatprep.mubr.bf16.mxu0 0
      %2679 = vmatmul.mubr.bf16.gmra.mxu0 %v2468
      %v2680 = vpop.f32.mrf.mxu0
      %v2681 = vadd.f32 0.0, %v2680
      %v2682 = vpop.f32.mrf.mxu0
      %v2683 = vpop.f32.mrf.mxu0
      %v2684 = vadd.f32 0.0, %v2683
      %v2685 = vpop.f32.mrf.mxu0
      %2686 = vmatprep.mubr.bf16.mxu0 0
      %2687 = vmatmul.mubr.bf16.gmra.mxu0 %v2471
      %v2688 = vpop.f32.mrf.mxu0
      %v2689 = vadd.f32 0.0, %v2688
      %v2690 = vpop.f32.mrf.mxu0
      %v2691 = vpop.f32.mrf.mxu0
      %v2692 = vadd.f32 0.0, %v2691
      %v2693 = vpop.f32.mrf.mxu0
      %2694 = vmatprep.mubr.bf16.mxu0 0
      %2695 = vmatmul.mubr.bf16.gmra.mxu0 %v2474
      %v2696 = vpop.f32.mrf.mxu0
      %v2697 = vadd.f32 0.0, %v2696
      %v2698 = vpop.f32.mrf.mxu0
      %v2699 = vpop.f32.mrf.mxu0
      %v2700 = vadd.f32 0.0, %v2699
      %v2701 = vpop.f32.mrf.mxu0
      %2702 = vmatprep.mubr.bf16.mxu0 0
      %2703 = vmatmul.mubr.bf16.gmra.mxu0 %v2477
      %v2704 = vpop.f32.mrf.mxu0
      %v2705 = vadd.f32 0.0, %v2704
      %v2706 = vpop.f32.mrf.mxu0
      %v2707 = vpop.f32.mrf.mxu0
      %v2708 = vadd.f32 0.0, %v2707
      %v2709 = vpop.f32.mrf.mxu0
      %2710 = vmatprep.mubr.bf16.mxu0 0
      %2711 = vmatmul.mubr.bf16.gmra.mxu0 %v2480
      %v2712 = vpop.f32.mrf.mxu0
      %v2713 = vadd.f32 0.0, %v2712
      %v2714 = vpop.f32.mrf.mxu0
      %v2715 = vpop.f32.mrf.mxu0
      %v2716 = vadd.f32 0.0, %v2715
      %v2717 = vpop.f32.mrf.mxu0
      %2718 = vmatprep.mubr.bf16.mxu0 0
      %2719 = vmatmul.mubr.bf16.gmra.mxu0 %v2483
      %v2720 = vpop.f32.mrf.mxu0
      %v2721 = vadd.f32 0.0, %v2720
      %v2722 = vpop.f32.mrf.mxu0
      %v2723 = vpop.f32.mrf.mxu0
      %v2724 = vadd.f32 0.0, %v2723
      %v2725 = vpop.f32.mrf.mxu0
      %2726 = vmatprep.mubr.bf16.mxu0 0
      %2727 = vmatmul.mubr.bf16.gmra.mxu0 %v2486
      %v2728 = vpop.f32.mrf.mxu0
      %v2729 = vadd.f32 0.0, %v2728
      %v2730 = vpop.f32.mrf.mxu0
      %v2731 = vpop.f32.mrf.mxu0
      %v2732 = vadd.f32 0.0, %v2731
      %v2733 = vpop.f32.mrf.mxu0
      %2734 = vmatprep.mubr.bf16.mxu0 0
      %2735 = vmatmul.mubr.bf16.gmra.mxu0 %v2489
      %v2736 = vpop.f32.mrf.mxu0
      %v2737 = vadd.f32 0.0, %v2736
      %v2738 = vpop.f32.mrf.mxu0
      %v2739 = vpop.f32.mrf.mxu0
      %v2740 = vadd.f32 0.0, %v2739
      %v2741 = vpop.f32.mrf.mxu0
      %2742 = vmatprep.mubr.bf16.mxu0 0
      %2743 = vmatmul.mubr.bf16.gmra.mxu0 %v2492
      %v2744 = vpop.f32.mrf.mxu0
      %v2745 = vadd.f32 0.0, %v2744
      %v2746 = vpop.f32.mrf.mxu0
      %v2747 = vpop.f32.mrf.mxu0
      %v2748 = vadd.f32 0.0, %v2747
      %v2749 = vpop.f32.mrf.mxu0
      %2750 = vmatprep.mubr.bf16.mxu0 0
      %2751 = vmatmul.mubr.bf16.gmra.mxu0 %v2495
      %v2752 = vpop.f32.mrf.mxu0
      %v2753 = vadd.f32 0.0, %v2752
      %v2754 = vpop.f32.mrf.mxu0
      %v2755 = vpop.f32.mrf.mxu0
      %v2756 = vadd.f32 0.0, %v2755
      %v2757 = vpop.f32.mrf.mxu0
      %2758 = vmatprep.mubr.bf16.mxu0 0
      %2759 = vmatmul.mubr.bf16.gmra.mxu0 %v2498
      %v2760 = vpop.f32.mrf.mxu0
      %v2761 = vadd.f32 0.0, %v2760
      %v2762 = vpop.f32.mrf.mxu0
      %v2763 = vpop.f32.mrf.mxu0
      %v2764 = vadd.f32 0.0, %v2763
      %v2765 = vpop.f32.mrf.mxu0
      %2766 = vmatprep.mubr.bf16.mxu0 0
      %2767 = vmatmul.mubr.bf16.gmra.mxu0 %v2501
      %v2768 = vpop.f32.mrf.mxu0
      %v2769 = vadd.f32 0.0, %v2768
      %v2770 = vpop.f32.mrf.mxu0
      %v2771 = vpop.f32.mrf.mxu0
      %v2772 = vadd.f32 0.0, %v2771
      %v2773 = vpop.f32.mrf.mxu0
      %2774 = vmatprep.mubr.bf16.mxu0 0
      %2775 = vmatmul.mubr.bf16.gmra.mxu0 %v2504
      %v2776 = vpop.f32.mrf.mxu0
      %v2777 = vadd.f32 0.0, %v2776
      %v2778 = vpop.f32.mrf.mxu0
      %v2779 = vpop.f32.mrf.mxu0
      %v2780 = vadd.f32 0.0, %v2779
      %v2781 = vpop.f32.mrf.mxu0
      %2782 = vmatprep.mubr.bf16.mxu0 0
      %2783 = vmatmul.mubr.bf16.gmra.mxu0 %v2507
      %v2784 = vpop.f32.mrf.mxu0
      %v2785 = vadd.f32 0.0, %v2784
      %v2786 = vpop.f32.mrf.mxu0
      %v2787 = vpop.f32.mrf.mxu0
      %v2788 = vadd.f32 0.0, %v2787
      %v2789 = vpop.f32.mrf.mxu0
      %2790 = vmatprep.mubr.bf16.mxu0 0
      %2791 = vmatmul.mubr.bf16.gmra.mxu0 %v2510
      %v2792 = vpop.f32.mrf.mxu0
      %v2793 = vadd.f32 0.0, %v2792
      %v2794 = vpop.f32.mrf.mxu0
      %v2795 = vpop.f32.mrf.mxu0
      %v2796 = vadd.f32 0.0, %v2795
      %v2797 = vpop.f32.mrf.mxu0
      %2798 = vmatprep.mubr.bf16.mxu0 0
      %2799 = vmatmul.mubr.bf16.gmra.mxu0 %v2513
      %v2800 = vpop.f32.mrf.mxu0
      %v2801 = vadd.f32 0.0, %v2800
      %v2802 = vpop.f32.mrf.mxu0
      %v2803 = vpop.f32.mrf.mxu0
      %v2804 = vadd.f32 0.0, %v2803
      %v2805 = vpop.f32.mrf.mxu0
      %2806 = vdwg.mxu0
      %v2807 = vadd.f32 %v1911, %v2553
      %v2808 = vadd.f32 %v1914, %v2556
      %v2809 = vadd.f32 %v1919, %v2561
      %v2810 = vadd.f32 %v1922, %v2564
      %v2811 = vadd.f32 %v1927, %v2569
      %v2812 = vadd.f32 %v1930, %v2572
      %v2813 = vadd.f32 %v1935, %v2577
      %v2814 = vadd.f32 %v1938, %v2580
      %v2815 = vadd.f32 %v1943, %v2585
      %v2816 = vadd.f32 %v1946, %v2588
      %v2817 = vadd.f32 %v1951, %v2593
      %v2818 = vadd.f32 %v1954, %v2596
      %v2819 = vadd.f32 %v1959, %v2601
      %v2820 = vadd.f32 %v1962, %v2604
      %v2821 = vadd.f32 %v1967, %v2609
      %v2822 = vadd.f32 %v1970, %v2612
      %v2823 = vadd.f32 %v1975, %v2617
      %v2824 = vadd.f32 %v1978, %v2620
      %v2825 = vadd.f32 %v1983, %v2625
      %v2826 = vadd.f32 %v1986, %v2628
      %v2827 = vadd.f32 %v1991, %v2633
      %v2828 = vadd.f32 %v1994, %v2636
      %v2829 = vadd.f32 %v1999, %v2641
      %v2830 = vadd.f32 %v2002, %v2644
      %v2831 = vadd.f32 %v2007, %v2649
      %v2832 = vadd.f32 %v2010, %v2652
      %v2833 = vadd.f32 %v2015, %v2657
      %v2834 = vadd.f32 %v2018, %v2660
      %v2835 = vadd.f32 %v2023, %v2665
      %v2836 = vadd.f32 %v2026, %v2668
      %v2837 = vadd.f32 %v2031, %v2673
      %v2838 = vadd.f32 %v2034, %v2676
      %v2839 = vadd.f32 %v2039, %v2681
      %v2840 = vadd.f32 %v2042, %v2684
      %v2841 = vadd.f32 %v2047, %v2689
      %v2842 = vadd.f32 %v2050, %v2692
      %v2843 = vadd.f32 %v2055, %v2697
      %v2844 = vadd.f32 %v2058, %v2700
      %v2845 = vadd.f32 %v2063, %v2705
      %v2846 = vadd.f32 %v2066, %v2708
      %v2847 = vadd.f32 %v2071, %v2713
      %v2848 = vadd.f32 %v2074, %v2716
      %v2849 = vadd.f32 %v2079, %v2721
      %v2850 = vadd.f32 %v2082, %v2724
      %v2851 = vadd.f32 %v2087, %v2729
      %v2852 = vadd.f32 %v2090, %v2732
      %v2853 = vadd.f32 %v2095, %v2737
      %v2854 = vadd.f32 %v2098, %v2740
      %v2855 = vadd.f32 %v2103, %v2745
      %v2856 = vadd.f32 %v2106, %v2748
      %v2857 = vadd.f32 %v2111, %v2753
      %v2858 = vadd.f32 %v2114, %v2756
      %v2859 = vadd.f32 %v2119, %v2761
      %v2860 = vadd.f32 %v2122, %v2764
      %v2861 = vadd.f32 %v2127, %v2769
      %v2862 = vadd.f32 %v2130, %v2772
      %v2863 = vadd.f32 %v2135, %v2777
      %v2864 = vadd.f32 %v2138, %v2780
      %v2865 = vadd.f32 %v2143, %v2785
      %v2866 = vadd.f32 %v2146, %v2788
      %v2867 = vadd.f32 %v2151, %v2793
      %v2868 = vadd.f32 %v2154, %v2796
      %v2869 = vadd.f32 %v2159, %v2801
      %v2870 = vadd.f32 %v2162, %v2804
      %v2871 = vld [vmem:[%s2165] sm:$0xf]
      %v2872 = vld [vmem:[%s2165 + $0x4] sm:$0xf]
      %v2873 = vld [vmem:[%s2165 + $0x8] sm:$0x1]
      %v2874 = vld [vmem:[%s2165 + $0xc] sm:$0xf]
      %v2875 = vld [vmem:[%s2165 + $0x10] sm:$0xf]
      %v2876 = vld [vmem:[%s2165 + $0x14] sm:$0x1]
      %v2877 = vld [vmem:[%s2165 + $0x18] sm:$0xf]
      %v2878 = vld [vmem:[%s2165 + $0x1c] sm:$0xf]
      %v2879 = vld [vmem:[%s2165 + $0x20] sm:$0x1]
      %v2880 = vld [vmem:[%s2165 + $0x24] sm:$0xf]
      %v2881 = vld [vmem:[%s2165 + $0x28] sm:$0xf]
      %v2882 = vld [vmem:[%s2165 + $0x2c] sm:$0x1]
      %v2883 = vld [vmem:[%s2165 + $0x30] sm:$0xf]
      %v2884 = vld [vmem:[%s2165 + $0x34] sm:$0xf]
      %v2885 = vld [vmem:[%s2165 + $0x38] sm:$0x1]
      %v2886 = vld [vmem:[%s2165 + $0x3c] sm:$0xf]
      %v2887 = vld [vmem:[%s2165 + $0x40] sm:$0xf]
      %v2888 = vld [vmem:[%s2165 + $0x44] sm:$0x1]
      %v2889 = vld [vmem:[%s2165 + $0x48] sm:$0xf]
      %v2890 = vld [vmem:[%s2165 + $0x4c] sm:$0xf]
      %v2891 = vld [vmem:[%s2165 + $0x50] sm:$0x1]
      %v2892 = vld [vmem:[%s2165 + $0x54] sm:$0xf]
      %v2893 = vld [vmem:[%s2165 + $0x58] sm:$0xf]
      %v2894 = vld [vmem:[%s2165 + $0x5c] sm:$0x1]
      %v2895 = vld [vmem:[%s2165 + $0x60] sm:$0xf]
      %v2896 = vld [vmem:[%s2165 + $0x64] sm:$0xf]
      %v2897 = vld [vmem:[%s2165 + $0x68] sm:$0x1]
      %v2898 = vld [vmem:[%s2165 + $0x6c] sm:$0xf]
      %v2899 = vld [vmem:[%s2165 + $0x70] sm:$0xf]
      %v2900 = vld [vmem:[%s2165 + $0x74] sm:$0x1]
      %v2901 = vld [vmem:[%s2165 + $0x78] sm:$0xf]
      %v2902 = vld [vmem:[%s2165 + $0x7c] sm:$0xf]
      %v2903 = vld [vmem:[%s2165 + $0x80] sm:$0x1]
      %v2904 = vld [vmem:[%s2165 + $0x84] sm:$0xf]
      %v2905 = vld [vmem:[%s2165 + $0x88] sm:$0xf]
      %v2906 = vld [vmem:[%s2165 + $0x8c] sm:$0x1]
      %v2907 = vld [vmem:[%s2165 + $0x90] sm:$0xf]
      %v2908 = vld [vmem:[%s2165 + $0x94] sm:$0xf]
      %v2909 = vld [vmem:[%s2165 + $0x98] sm:$0x1]
      %v2910 = vld [vmem:[%s2165 + $0x9c] sm:$0xf]
      %v2911 = vld [vmem:[%s2165 + $0xa0] sm:$0xf]
      %v2912 = vld [vmem:[%s2165 + $0xa4] sm:$0x1]
      %v2913 = vld [vmem:[%s2165 + $0xa8] sm:$0xf]
      %v2914 = vld [vmem:[%s2165 + $0xac] sm:$0xf]
      %v2915 = vld [vmem:[%s2165 + $0xb0] sm:$0x1]
      %v2916 = vld [vmem:[%s2165 + $0xb4] sm:$0xf]
      %v2917 = vld [vmem:[%s2165 + $0xb8] sm:$0xf]
      %v2918 = vld [vmem:[%s2165 + $0xbc] sm:$0x1]
      %v2919 = vld [vmem:[%s2165 + $0xcc] sm:$0xf]
      %v2920 = vld [vmem:[%s2165 + $0xd0] sm:$0xf]
      %v2921 = vld [vmem:[%s2165 + $0xd4] sm:$0x1]
      %v2922 = vld [vmem:[%s2165 + $0xd8] sm:$0xf]
      %v2923 = vld [vmem:[%s2165 + $0xdc] sm:$0xf]
      %v2924 = vld [vmem:[%s2165 + $0xe0] sm:$0x1]
      %v2925 = vld [vmem:[%s2165 + $0xe4] sm:$0xf]
      %v2926 = vld [vmem:[%s2165 + $0xe8] sm:$0xf]
      %v2927 = vld [vmem:[%s2165 + $0xec] sm:$0x1]
      %v2928 = vld [vmem:[%s2165 + $0xf0] sm:$0xf]
      %v2929 = vld [vmem:[%s2165 + $0xf4] sm:$0xf]
      %v2930 = vld [vmem:[%s2165 + $0xf8] sm:$0x1]
      %v2931 = vld [vmem:[%s2165 + $0xfc] sm:$0xf]
      %v2932 = vld [vmem:[%s2165 + $0x100] sm:$0xf]
      %v2933 = vld [vmem:[%s2165 + $0x104] sm:$0x1]
      %v2934 = vld [vmem:[%s2165 + $0x108] sm:$0xf]
      %v2935 = vld [vmem:[%s2165 + $0x10c] sm:$0xf]
      %v2936 = vld [vmem:[%s2165 + $0x110] sm:$0x1]
      %v2937 = vld [vmem:[%s2165 + $0x114] sm:$0xf]
      %v2938 = vld [vmem:[%s2165 + $0x118] sm:$0xf]
      %v2939 = vld [vmem:[%s2165 + $0x11c] sm:$0x1]
      %v2940 = vld [vmem:[%s2165 + $0x120] sm:$0xf]
      %v2941 = vld [vmem:[%s2165 + $0x124] sm:$0xf]
      %v2942 = vld [vmem:[%s2165 + $0x128] sm:$0x1]
      %v2943 = vld [vmem:[%s2165 + $0x12c] sm:$0xf]
      %v2944 = vld [vmem:[%s2165 + $0x130] sm:$0xf]
      %v2945 = vld [vmem:[%s2165 + $0x134] sm:$0x1]
      %v2946 = vld [vmem:[%s2165 + $0x138] sm:$0xf]
      %v2947 = vld [vmem:[%s2165 + $0x13c] sm:$0xf]
      %v2948 = vld [vmem:[%s2165 + $0x140] sm:$0x1]
      %v2949 = vld [vmem:[%s2165 + $0x144] sm:$0xf]
      %v2950 = vld [vmem:[%s2165 + $0x148] sm:$0xf]
      %v2951 = vld [vmem:[%s2165 + $0x14c] sm:$0x1]
      %v2952 = vld [vmem:[%s2165 + $0x150] sm:$0xf]
      %v2953 = vld [vmem:[%s2165 + $0x154] sm:$0xf]
      %v2954 = vld [vmem:[%s2165 + $0x158] sm:$0x1]
      %v2955 = vld [vmem:[%s2165 + $0x15c] sm:$0xf]
      %v2956 = vld [vmem:[%s2165 + $0x160] sm:$0xf]
      %v2957 = vld [vmem:[%s2165 + $0x164] sm:$0x1]
      %v2958 = vld [vmem:[%s2165 + $0x168] sm:$0xf]
      %v2959 = vld [vmem:[%s2165 + $0x16c] sm:$0xf]
      %v2960 = vld [vmem:[%s2165 + $0x170] sm:$0x1]
      %v2961 = vld [vmem:[%s2165 + $0x174] sm:$0xf]
      %v2962 = vld [vmem:[%s2165 + $0x178] sm:$0xf]
      %v2963 = vld [vmem:[%s2165 + $0x17c] sm:$0x1]
      %v2964 = vld [vmem:[%s2165 + $0x180] sm:$0xf]
      %v2965 = vld [vmem:[%s2165 + $0x184] sm:$0xf]
      %v2966 = vld [vmem:[%s2165 + $0x188] sm:$0x1]
      %v2968 = vshrl.u32 %v2871, 16
      %v2970 = vrot.slane %v2968, 4
      %v2971 = vshll.u32 %v2871, 16
      %v2973 = vrot.slane %v2971, 5
      %v2974 = vor.u32 %v2970, %v2973
      %v2975 = vrot.slane %v2974, 4
      %v2977 = vshll.u32 %v2872, 16
      %v2979 = vrot.slane %v2977, 5
      %v2980 = vsel %vm312, %v2975, %v2979
      %v2981 = vshrl.u32 %v2872, 16
      %v2983 = vrot.slane %v2981, 4
      %v2984 = vor.u32 %v2983, %v2979
      %v2985 = vrot.slane %v2984, 4
      %v2987 = vshll.u32 %v2873, 16
      %v2989 = vrot.slane %v2987, 5
      %v2990 = vsel %vm312, %v2985, %v2989
      %v2992 = vshrl.u32 %v2874, 16
      %v2994 = vrot.slane %v2992, 4
      %v2995 = vshll.u32 %v2874, 16
      %v2997 = vrot.slane %v2995, 5
      %v2998 = vor.u32 %v2994, %v2997
      %v2999 = vrot.slane %v2998, 4
      %v3001 = vshll.u32 %v2875, 16
      %v3003 = vrot.slane %v3001, 5
      %v3004 = vsel %vm312, %v2999, %v3003
      %v3005 = vshrl.u32 %v2875, 16
      %v3007 = vrot.slane %v3005, 4
      %v3008 = vor.u32 %v3007, %v3003
      %v3009 = vrot.slane %v3008, 4
      %v3011 = vshll.u32 %v2876, 16
      %v3013 = vrot.slane %v3011, 5
      %v3014 = vsel %vm312, %v3009, %v3013
      %v3016 = vshrl.u32 %v2877, 16
      %v3018 = vrot.slane %v3016, 4
      %v3019 = vshll.u32 %v2877, 16
      %v3021 = vrot.slane %v3019, 5
      %v3022 = vor.u32 %v3018, %v3021
      %v3023 = vrot.slane %v3022, 4
      %v3025 = vshll.u32 %v2878, 16
      %v3027 = vrot.slane %v3025, 5
      %v3028 = vsel %vm312, %v3023, %v3027
      %v3029 = vshrl.u32 %v2878, 16
      %v3031 = vrot.slane %v3029, 4
      %v3032 = vor.u32 %v3031, %v3027
      %v3033 = vrot.slane %v3032, 4
      %v3035 = vshll.u32 %v2879, 16
      %v3037 = vrot.slane %v3035, 5
      %v3038 = vsel %vm312, %v3033, %v3037
      %v3040 = vshrl.u32 %v2880, 16
      %v3042 = vrot.slane %v3040, 4
      %v3043 = vshll.u32 %v2880, 16
      %v3045 = vrot.slane %v3043, 5
      %v3046 = vor.u32 %v3042, %v3045
      %v3047 = vrot.slane %v3046, 4
      %v3049 = vshll.u32 %v2881, 16
      %v3051 = vrot.slane %v3049, 5
      %v3052 = vsel %vm312, %v3047, %v3051
      %v3053 = vshrl.u32 %v2881, 16
      %v3055 = vrot.slane %v3053, 4
      %v3056 = vor.u32 %v3055, %v3051
      %v3057 = vrot.slane %v3056, 4
      %v3059 = vshll.u32 %v2882, 16
      %v3061 = vrot.slane %v3059, 5
      %v3062 = vsel %vm312, %v3057, %v3061
      %v3064 = vshrl.u32 %v2883, 16
      %v3066 = vrot.slane %v3064, 4
      %v3067 = vshll.u32 %v2883, 16
      %v3069 = vrot.slane %v3067, 5
      %v3070 = vor.u32 %v3066, %v3069
      %v3071 = vrot.slane %v3070, 4
      %v3073 = vshll.u32 %v2884, 16
      %v3075 = vrot.slane %v3073, 5
      %v3076 = vsel %vm312, %v3071, %v3075
      %v3077 = vshrl.u32 %v2884, 16
      %v3079 = vrot.slane %v3077, 4
      %v3080 = vor.u32 %v3079, %v3075
      %v3081 = vrot.slane %v3080, 4
      %v3083 = vshll.u32 %v2885, 16
      %v3085 = vrot.slane %v3083, 5
      %v3086 = vsel %vm312, %v3081, %v3085
      %v3088 = vshrl.u32 %v2886, 16
      %v3090 = vrot.slane %v3088, 4
      %v3091 = vshll.u32 %v2886, 16
      %v3093 = vrot.slane %v3091, 5
      %v3094 = vor.u32 %v3090, %v3093
      %v3095 = vrot.slane %v3094, 4
      %v3097 = vshll.u32 %v2887, 16
      %v3099 = vrot.slane %v3097, 5
      %v3100 = vsel %vm312, %v3095, %v3099
      %v3101 = vshrl.u32 %v2887, 16
      %v3103 = vrot.slane %v3101, 4
      %v3104 = vor.u32 %v3103, %v3099
      %v3105 = vrot.slane %v3104, 4
      %v3107 = vshll.u32 %v2888, 16
      %v3109 = vrot.slane %v3107, 5
      %v3110 = vsel %vm312, %v3105, %v3109
      %v3112 = vshrl.u32 %v2889, 16
      %v3114 = vrot.slane %v3112, 4
      %v3115 = vshll.u32 %v2889, 16
      %v3117 = vrot.slane %v3115, 5
      %v3118 = vor.u32 %v3114, %v3117
      %v3119 = vrot.slane %v3118, 4
      %v3121 = vshll.u32 %v2890, 16
      %v3123 = vrot.slane %v3121, 5
      %v3124 = vsel %vm312, %v3119, %v3123
      %v3125 = vshrl.u32 %v2890, 16
      %v3127 = vrot.slane %v3125, 4
      %v3128 = vor.u32 %v3127, %v3123
      %v3129 = vrot.slane %v3128, 4
      %v3131 = vshll.u32 %v2891, 16
      %v3133 = vrot.slane %v3131, 5
      %v3134 = vsel %vm312, %v3129, %v3133
      %v3136 = vshrl.u32 %v2892, 16
      %v3138 = vrot.slane %v3136, 4
      %v3139 = vshll.u32 %v2892, 16
      %v3141 = vrot.slane %v3139, 5
      %v3142 = vor.u32 %v3138, %v3141
      %v3143 = vrot.slane %v3142, 4
      %v3145 = vshll.u32 %v2893, 16
      %v3147 = vrot.slane %v3145, 5
      %v3148 = vsel %vm312, %v3143, %v3147
      %v3149 = vshrl.u32 %v2893, 16
      %v3151 = vrot.slane %v3149, 4
      %v3152 = vor.u32 %v3151, %v3147
      %v3153 = vrot.slane %v3152, 4
      %v3155 = vshll.u32 %v2894, 16
      %v3157 = vrot.slane %v3155, 5
      %v3158 = vsel %vm312, %v3153, %v3157
      %v3160 = vshrl.u32 %v2895, 16
      %v3162 = vrot.slane %v3160, 4
      %v3163 = vshll.u32 %v2895, 16
      %v3165 = vrot.slane %v3163, 5
      %v3166 = vor.u32 %v3162, %v3165
      %v3167 = vrot.slane %v3166, 4
      %v3169 = vshll.u32 %v2896, 16
      %v3171 = vrot.slane %v3169, 5
      %v3172 = vsel %vm312, %v3167, %v3171
      %v3173 = vshrl.u32 %v2896, 16
      %v3175 = vrot.slane %v3173, 4
      %v3176 = vor.u32 %v3175, %v3171
      %v3177 = vrot.slane %v3176, 4
      %v3179 = vshll.u32 %v2897, 16
      %v3181 = vrot.slane %v3179, 5
      %v3182 = vsel %vm312, %v3177, %v3181
      %v3184 = vshrl.u32 %v2898, 16
      %v3186 = vrot.slane %v3184, 4
      %v3187 = vshll.u32 %v2898, 16
      %v3189 = vrot.slane %v3187, 5
      %v3190 = vor.u32 %v3186, %v3189
      %v3191 = vrot.slane %v3190, 4
      %v3193 = vshll.u32 %v2899, 16
      %v3195 = vrot.slane %v3193, 5
      %v3196 = vsel %vm312, %v3191, %v3195
      %v3197 = vshrl.u32 %v2899, 16
      %v3199 = vrot.slane %v3197, 4
      %v3200 = vor.u32 %v3199, %v3195
      %v3201 = vrot.slane %v3200, 4
      %v3203 = vshll.u32 %v2900, 16
      %v3205 = vrot.slane %v3203, 5
      %v3206 = vsel %vm312, %v3201, %v3205
      %v3208 = vshrl.u32 %v2901, 16
      %v3210 = vrot.slane %v3208, 4
      %v3211 = vshll.u32 %v2901, 16
      %v3213 = vrot.slane %v3211, 5
      %v3214 = vor.u32 %v3210, %v3213
      %v3215 = vrot.slane %v3214, 4
      %v3217 = vshll.u32 %v2902, 16
      %v3219 = vrot.slane %v3217, 5
      %v3220 = vsel %vm312, %v3215, %v3219
      %v3221 = vshrl.u32 %v2902, 16
      %v3223 = vrot.slane %v3221, 4
      %v3224 = vor.u32 %v3223, %v3219
      %v3225 = vrot.slane %v3224, 4
      %v3227 = vshll.u32 %v2903, 16
      %v3229 = vrot.slane %v3227, 5
      %v3230 = vsel %vm312, %v3225, %v3229
      %v3232 = vshrl.u32 %v2904, 16
      %v3234 = vrot.slane %v3232, 4
      %v3235 = vshll.u32 %v2904, 16
      %v3237 = vrot.slane %v3235, 5
      %v3238 = vor.u32 %v3234, %v3237
      %v3239 = vrot.slane %v3238, 4
      %v3241 = vshll.u32 %v2905, 16
      %v3243 = vrot.slane %v3241, 5
      %v3244 = vsel %vm312, %v3239, %v3243
      %v3245 = vshrl.u32 %v2905, 16
      %v3247 = vrot.slane %v3245, 4
      %v3248 = vor.u32 %v3247, %v3243
      %v3249 = vrot.slane %v3248, 4
      %v3251 = vshll.u32 %v2906, 16
      %v3253 = vrot.slane %v3251, 5
      %v3254 = vsel %vm312, %v3249, %v3253
      %v3256 = vshrl.u32 %v2907, 16
      %v3258 = vrot.slane %v3256, 4
      %v3259 = vshll.u32 %v2907, 16
      %v3261 = vrot.slane %v3259, 5
      %v3262 = vor.u32 %v3258, %v3261
      %v3263 = vrot.slane %v3262, 4
      %v3265 = vshll.u32 %v2908, 16
      %v3267 = vrot.slane %v3265, 5
      %v3268 = vsel %vm312, %v3263, %v3267
      %v3269 = vshrl.u32 %v2908, 16
      %v3271 = vrot.slane %v3269, 4
      %v3272 = vor.u32 %v3271, %v3267
      %v3273 = vrot.slane %v3272, 4
      %v3275 = vshll.u32 %v2909, 16
      %v3277 = vrot.slane %v3275, 5
      %v3278 = vsel %vm312, %v3273, %v3277
      %v3280 = vshrl.u32 %v2910, 16
      %v3282 = vrot.slane %v3280, 4
      %v3283 = vshll.u32 %v2910, 16
      %v3285 = vrot.slane %v3283, 5
      %v3286 = vor.u32 %v3282, %v3285
      %v3287 = vrot.slane %v3286, 4
      %v3289 = vshll.u32 %v2911, 16
      %v3291 = vrot.slane %v3289, 5
      %v3292 = vsel %vm312, %v3287, %v3291
      %v3293 = vshrl.u32 %v2911, 16
      %v3295 = vrot.slane %v3293, 4
      %v3296 = vor.u32 %v3295, %v3291
      %v3297 = vrot.slane %v3296, 4
      %v3299 = vshll.u32 %v2912, 16
      %v3301 = vrot.slane %v3299, 5
      %v3302 = vsel %vm312, %v3297, %v3301
      %v3304 = vshrl.u32 %v2913, 16
      %v3306 = vrot.slane %v3304, 4
      %v3307 = vshll.u32 %v2913, 16
      %v3309 = vrot.slane %v3307, 5
      %v3310 = vor.u32 %v3306, %v3309
      %v3311 = vrot.slane %v3310, 4
      %v3313 = vshll.u32 %v2914, 16
      %v3315 = vrot.slane %v3313, 5
      %v3316 = vsel %vm312, %v3311, %v3315
      %v3317 = vshrl.u32 %v2914, 16
      %v3319 = vrot.slane %v3317, 4
      %v3320 = vor.u32 %v3319, %v3315
      %v3321 = vrot.slane %v3320, 4
      %v3323 = vshll.u32 %v2915, 16
      %v3325 = vrot.slane %v3323, 5
      %v3326 = vsel %vm312, %v3321, %v3325
      %v3328 = vshrl.u32 %v2916, 16
      %v3330 = vrot.slane %v3328, 4
      %v3331 = vshll.u32 %v2916, 16
      %v3333 = vrot.slane %v3331, 5
      %v3334 = vor.u32 %v3330, %v3333
      %v3335 = vrot.slane %v3334, 4
      %v3337 = vshll.u32 %v2917, 16
      %v3339 = vrot.slane %v3337, 5
      %v3340 = vsel %vm312, %v3335, %v3339
      %v3341 = vshrl.u32 %v2917, 16
      %v3343 = vrot.slane %v3341, 4
      %v3344 = vor.u32 %v3343, %v3339
      %v3345 = vrot.slane %v3344, 4
      %v3347 = vshll.u32 %v2918, 16
      %v3349 = vrot.slane %v3347, 5
      %v3350 = vsel %vm312, %v3345, %v3349
      %v3352 = vshrl.u32 %v2919, 16
      %v3354 = vrot.slane %v3352, 4
      %v3355 = vshll.u32 %v2919, 16
      %v3357 = vrot.slane %v3355, 5
      %v3358 = vor.u32 %v3354, %v3357
      %v3359 = vrot.slane %v3358, 4
      %v3361 = vshll.u32 %v2920, 16
      %v3363 = vrot.slane %v3361, 5
      %v3364 = vsel %vm312, %v3359, %v3363
      %v3365 = vshrl.u32 %v2920, 16
      %v3367 = vrot.slane %v3365, 4
      %v3368 = vor.u32 %v3367, %v3363
      %v3369 = vrot.slane %v3368, 4
      %v3371 = vshll.u32 %v2921, 16
      %v3373 = vrot.slane %v3371, 5
      %v3374 = vsel %vm312, %v3369, %v3373
      %v3376 = vshrl.u32 %v2922, 16
      %v3378 = vrot.slane %v3376, 4
      %v3379 = vshll.u32 %v2922, 16
      %v3381 = vrot.slane %v3379, 5
      %v3382 = vor.u32 %v3378, %v3381
      %v3383 = vrot.slane %v3382, 4
      %v3385 = vshll.u32 %v2923, 16
      %v3387 = vrot.slane %v3385, 5
      %v3388 = vsel %vm312, %v3383, %v3387
      %v3389 = vshrl.u32 %v2923, 16
      %v3391 = vrot.slane %v3389, 4
      %v3392 = vor.u32 %v3391, %v3387
      %v3393 = vrot.slane %v3392, 4
      %v3395 = vshll.u32 %v2924, 16
      %v3397 = vrot.slane %v3395, 5
      %v3398 = vsel %vm312, %v3393, %v3397
      %v3400 = vshrl.u32 %v2925, 16
      %v3402 = vrot.slane %v3400, 4
      %v3403 = vshll.u32 %v2925, 16
      %v3405 = vrot.slane %v3403, 5
      %v3406 = vor.u32 %v3402, %v3405
      %v3407 = vrot.slane %v3406, 4
      %v3409 = vshll.u32 %v2926, 16
      %v3411 = vrot.slane %v3409, 5
      %v3412 = vsel %vm312, %v3407, %v3411
      %v3413 = vshrl.u32 %v2926, 16
      %v3415 = vrot.slane %v3413, 4
      %v3416 = vor.u32 %v3415, %v3411
      %v3417 = vrot.slane %v3416, 4
      %v3419 = vshll.u32 %v2927, 16
      %v3421 = vrot.slane %v3419, 5
      %v3422 = vsel %vm312, %v3417, %v3421
      %v3424 = vshrl.u32 %v2928, 16
      %v3426 = vrot.slane %v3424, 4
      %v3427 = vshll.u32 %v2928, 16
      %v3429 = vrot.slane %v3427, 5
      %v3430 = vor.u32 %v3426, %v3429
      %v3431 = vrot.slane %v3430, 4
      %v3433 = vshll.u32 %v2929, 16
      %v3435 = vrot.slane %v3433, 5
      %v3436 = vsel %vm312, %v3431, %v3435
      %v3437 = vshrl.u32 %v2929, 16
      %v3439 = vrot.slane %v3437, 4
      %v3440 = vor.u32 %v3439, %v3435
      %v3441 = vrot.slane %v3440, 4
      %v3443 = vshll.u32 %v2930, 16
      %v3445 = vrot.slane %v3443, 5
      %v3446 = vsel %vm312, %v3441, %v3445
      %v3448 = vshrl.u32 %v2931, 16
      %v3450 = vrot.slane %v3448, 4
      %v3451 = vshll.u32 %v2931, 16
      %v3453 = vrot.slane %v3451, 5
      %v3454 = vor.u32 %v3450, %v3453
      %v3455 = vrot.slane %v3454, 4
      %v3457 = vshll.u32 %v2932, 16
      %v3459 = vrot.slane %v3457, 5
      %v3460 = vsel %vm312, %v3455, %v3459
      %v3461 = vshrl.u32 %v2932, 16
      %v3463 = vrot.slane %v3461, 4
      %v3464 = vor.u32 %v3463, %v3459
      %v3465 = vrot.slane %v3464, 4
      %v3467 = vshll.u32 %v2933, 16
      %v3469 = vrot.slane %v3467, 5
      %v3470 = vsel %vm312, %v3465, %v3469
      %v3472 = vshrl.u32 %v2934, 16
      %v3474 = vrot.slane %v3472, 4
      %v3475 = vshll.u32 %v2934, 16
      %v3477 = vrot.slane %v3475, 5
      %v3478 = vor.u32 %v3474, %v3477
      %v3479 = vrot.slane %v3478, 4
      %v3481 = vshll.u32 %v2935, 16
      %v3483 = vrot.slane %v3481, 5
      %v3484 = vsel %vm312, %v3479, %v3483
      %v3485 = vshrl.u32 %v2935, 16
      %v3487 = vrot.slane %v3485, 4
      %v3488 = vor.u32 %v3487, %v3483
      %v3489 = vrot.slane %v3488, 4
      %v3491 = vshll.u32 %v2936, 16
      %v3493 = vrot.slane %v3491, 5
      %v3494 = vsel %vm312, %v3489, %v3493
      %v3496 = vshrl.u32 %v2937, 16
      %v3498 = vrot.slane %v3496, 4
      %v3499 = vshll.u32 %v2937, 16
      %v3501 = vrot.slane %v3499, 5
      %v3502 = vor.u32 %v3498, %v3501
      %v3503 = vrot.slane %v3502, 4
      %v3505 = vshll.u32 %v2938, 16
      %v3507 = vrot.slane %v3505, 5
      %v3508 = vsel %vm312, %v3503, %v3507
      %v3509 = vshrl.u32 %v2938, 16
      %v3511 = vrot.slane %v3509, 4
      %v3512 = vor.u32 %v3511, %v3507
      %v3513 = vrot.slane %v3512, 4
      %v3515 = vshll.u32 %v2939, 16
      %v3517 = vrot.slane %v3515, 5
      %v3518 = vsel %vm312, %v3513, %v3517
      %v3520 = vshrl.u32 %v2940, 16
      %v3522 = vrot.slane %v3520, 4
      %v3523 = vshll.u32 %v2940, 16
      %v3525 = vrot.slane %v3523, 5
      %v3526 = vor.u32 %v3522, %v3525
      %v3527 = vrot.slane %v3526, 4
      %v3529 = vshll.u32 %v2941, 16
      %v3531 = vrot.slane %v3529, 5
      %v3532 = vsel %vm312, %v3527, %v3531
      %v3533 = vshrl.u32 %v2941, 16
      %v3535 = vrot.slane %v3533, 4
      %v3536 = vor.u32 %v3535, %v3531
      %v3537 = vrot.slane %v3536, 4
      %v3539 = vshll.u32 %v2942, 16
      %v3541 = vrot.slane %v3539, 5
      %v3542 = vsel %vm312, %v3537, %v3541
      %v3544 = vshrl.u32 %v2943, 16
      %v3546 = vrot.slane %v3544, 4
      %v3547 = vshll.u32 %v2943, 16
      %v3549 = vrot.slane %v3547, 5
      %v3550 = vor.u32 %v3546, %v3549
      %v3551 = vrot.slane %v3550, 4
      %v3553 = vshll.u32 %v2944, 16
      %v3555 = vrot.slane %v3553, 5
      %v3556 = vsel %vm312, %v3551, %v3555
      %v3557 = vshrl.u32 %v2944, 16
      %v3559 = vrot.slane %v3557, 4
      %v3560 = vor.u32 %v3559, %v3555
      %v3561 = vrot.slane %v3560, 4
      %v3563 = vshll.u32 %v2945, 16
      %v3565 = vrot.slane %v3563, 5
      %v3566 = vsel %vm312, %v3561, %v3565
      %v3568 = vshrl.u32 %v2946, 16
      %v3570 = vrot.slane %v3568, 4
      %v3571 = vshll.u32 %v2946, 16
      %v3573 = vrot.slane %v3571, 5
      %v3574 = vor.u32 %v3570, %v3573
      %v3575 = vrot.slane %v3574, 4
      %v3577 = vshll.u32 %v2947, 16
      %v3579 = vrot.slane %v3577, 5
      %v3580 = vsel %vm312, %v3575, %v3579
      %v3581 = vshrl.u32 %v2947, 16
      %v3583 = vrot.slane %v3581, 4
      %v3584 = vor.u32 %v3583, %v3579
      %v3585 = vrot.slane %v3584, 4
      %v3587 = vshll.u32 %v2948, 16
      %v3589 = vrot.slane %v3587, 5
      %v3590 = vsel %vm312, %v3585, %v3589
      %v3592 = vshrl.u32 %v2949, 16
      %v3594 = vrot.slane %v3592, 4
      %v3595 = vshll.u32 %v2949, 16
      %v3597 = vrot.slane %v3595, 5
      %v3598 = vor.u32 %v3594, %v3597
      %v3599 = vrot.slane %v3598, 4
      %v3601 = vshll.u32 %v2950, 16
      %v3603 = vrot.slane %v3601, 5
      %v3604 = vsel %vm312, %v3599, %v3603
      %v3605 = vshrl.u32 %v2950, 16
      %v3607 = vrot.slane %v3605, 4
      %v3608 = vor.u32 %v3607, %v3603
      %v3609 = vrot.slane %v3608, 4
      %v3611 = vshll.u32 %v2951, 16
      %v3613 = vrot.slane %v3611, 5
      %v3614 = vsel %vm312, %v3609, %v3613
      %v3616 = vshrl.u32 %v2952, 16
      %v3618 = vrot.slane %v3616, 4
      %v3619 = vshll.u32 %v2952, 16
      %v3621 = vrot.slane %v3619, 5
      %v3622 = vor.u32 %v3618, %v3621
      %v3623 = vrot.slane %v3622, 4
      %v3625 = vshll.u32 %v2953, 16
      %v3627 = vrot.slane %v3625, 5
      %v3628 = vsel %vm312, %v3623, %v3627
      %v3629 = vshrl.u32 %v2953, 16
      %v3631 = vrot.slane %v3629, 4
      %v3632 = vor.u32 %v3631, %v3627
      %v3633 = vrot.slane %v3632, 4
      %v3635 = vshll.u32 %v2954, 16
      %v3637 = vrot.slane %v3635, 5
      %v3638 = vsel %vm312, %v3633, %v3637
      %v3640 = vshrl.u32 %v2955, 16
      %v3642 = vrot.slane %v3640, 4
      %v3643 = vshll.u32 %v2955, 16
      %v3645 = vrot.slane %v3643, 5
      %v3646 = vor.u32 %v3642, %v3645
      %v3647 = vrot.slane %v3646, 4
      %v3649 = vshll.u32 %v2956, 16
      %v3651 = vrot.slane %v3649, 5
      %v3652 = vsel %vm312, %v3647, %v3651
      %v3653 = vshrl.u32 %v2956, 16
      %v3655 = vrot.slane %v3653, 4
      %v3656 = vor.u32 %v3655, %v3651
      %v3657 = vrot.slane %v3656, 4
      %v3659 = vshll.u32 %v2957, 16
      %v3661 = vrot.slane %v3659, 5
      %v3662 = vsel %vm312, %v3657, %v3661
      %v3664 = vshrl.u32 %v2958, 16
      %v3666 = vrot.slane %v3664, 4
      %v3667 = vshll.u32 %v2958, 16
      %v3669 = vrot.slane %v3667, 5
      %v3670 = vor.u32 %v3666, %v3669
      %v3671 = vrot.slane %v3670, 4
      %v3673 = vshll.u32 %v2959, 16
      %v3675 = vrot.slane %v3673, 5
      %v3676 = vsel %vm312, %v3671, %v3675
      %v3677 = vshrl.u32 %v2959, 16
      %v3679 = vrot.slane %v3677, 4
      %v3680 = vor.u32 %v3679, %v3675
      %v3681 = vrot.slane %v3680, 4
      %v3683 = vshll.u32 %v2960, 16
      %v3685 = vrot.slane %v3683, 5
      %v3686 = vsel %vm312, %v3681, %v3685
      %v3688 = vshrl.u32 %v2961, 16
      %v3690 = vrot.slane %v3688, 4
      %v3691 = vshll.u32 %v2961, 16
      %v3693 = vrot.slane %v3691, 5
      %v3694 = vor.u32 %v3690, %v3693
      %v3695 = vrot.slane %v3694, 4
      %v3697 = vshll.u32 %v2962, 16
      %v3699 = vrot.slane %v3697, 5
      %v3700 = vsel %vm312, %v3695, %v3699
      %v3701 = vshrl.u32 %v2962, 16
      %v3703 = vrot.slane %v3701, 4
      %v3704 = vor.u32 %v3703, %v3699
      %v3705 = vrot.slane %v3704, 4
      %v3707 = vshll.u32 %v2963, 16
      %v3709 = vrot.slane %v3707, 5
      %v3710 = vsel %vm312, %v3705, %v3709
      %v3712 = vshrl.u32 %v2964, 16
      %v3714 = vrot.slane %v3712, 4
      %v3715 = vshll.u32 %v2964, 16
      %v3717 = vrot.slane %v3715, 5
      %v3718 = vor.u32 %v3714, %v3717
      %v3719 = vrot.slane %v3718, 4
      %v3721 = vshll.u32 %v2965, 16
      %v3723 = vrot.slane %v3721, 5
      %v3724 = vsel %vm312, %v3719, %v3723
      %v3725 = vshrl.u32 %v2965, 16
      %v3727 = vrot.slane %v3725, 4
      %v3728 = vor.u32 %v3727, %v3723
      %v3729 = vrot.slane %v3728, 4
      %v3731 = vshll.u32 %v2966, 16
      %v3733 = vrot.slane %v3731, 5
      %v3734 = vsel %vm312, %v3729, %v3733
      %s3735 = scalar_lea.vmem %s1, 84
      %v3736 = vld [vmem:[%s3735] sm:$0xf]
      %v3737 = vld [vmem:[%s3735 + $0x4] sm:$0xf]
      %v3738 = vld [vmem:[%s3735 + $0x8] sm:$0xf]
      %v3739 = vld [vmem:[%s3735 + $0xc] sm:$0xf]
      %v3740 = vld [vmem:[%s3735 + $0x10] sm:$0xf]
      %v3741 = vld [vmem:[%s3735 + $0x14] sm:$0xf]
      %v3742 = vld [vmem:[%s3735 + $0x18] sm:$0x3]
      %v3743 = vunpack.c.l.b16 %v2980
      %v3744 = vunpack.c.l.b16 %v2990
      %v3745 = vunpack.c.l.b16 %v3004
      %v3746 = vunpack.c.l.b16 %v3014
      %v3747 = vunpack.c.l.b16 %v3028
      %v3748 = vunpack.c.l.b16 %v3038
      %v3749 = vunpack.c.l.b16 %v3052
      %v3750 = vunpack.c.l.b16 %v3062
      %v3751 = vunpack.c.l.b16 %v3076
      %v3752 = vunpack.c.l.b16 %v3086
      %v3753 = vunpack.c.l.b16 %v3100
      %v3754 = vunpack.c.l.b16 %v3110
      %v3755 = vunpack.c.l.b16 %v3124
      %v3756 = vunpack.c.l.b16 %v3134
      %v3757 = vunpack.c.l.b16 %v3148
      %v3758 = vunpack.c.l.b16 %v3158
      %v3759 = vunpack.c.l.b16 %v3172
      %v3760 = vunpack.c.l.b16 %v3182
      %v3761 = vunpack.c.l.b16 %v3196
      %v3762 = vunpack.c.l.b16 %v3206
      %v3763 = vunpack.c.l.b16 %v3220
      %v3764 = vunpack.c.l.b16 %v3230
      %v3765 = vunpack.c.l.b16 %v3244
      %v3766 = vunpack.c.l.b16 %v3254
      %v3767 = vunpack.c.l.b16 %v3268
      %v3768 = vunpack.c.l.b16 %v3278
      %v3769 = vunpack.c.l.b16 %v3292
      %v3770 = vunpack.c.l.b16 %v3302
      %v3771 = vunpack.c.l.b16 %v3316
      %v3772 = vunpack.c.l.b16 %v3326
      %v3773 = vunpack.c.l.b16 %v3340
      %v3774 = vunpack.c.l.b16 %v3350
      %v3775 = vunpack.c.l.b16 %v3364
      %v3776 = vunpack.c.l.b16 %v3374
      %v3777 = vunpack.c.l.b16 %v3388
      %v3778 = vunpack.c.l.b16 %v3398
      %v3779 = vunpack.c.l.b16 %v3412
      %v3780 = vunpack.c.l.b16 %v3422
      %v3781 = vunpack.c.l.b16 %v3436
      %v3782 = vunpack.c.l.b16 %v3446
      %v3783 = vunpack.c.l.b16 %v3460
      %v3784 = vunpack.c.l.b16 %v3470
      %v3785 = vunpack.c.l.b16 %v3484
      %v3786 = vunpack.c.l.b16 %v3494
      %v3787 = vunpack.c.l.b16 %v3508
      %v3788 = vunpack.c.l.b16 %v3518
      %v3789 = vunpack.c.l.b16 %v3532
      %v3790 = vunpack.c.l.b16 %v3542
      %v3791 = vunpack.c.l.b16 %v3556
      %v3792 = vunpack.c.l.b16 %v3566
      %v3793 = vunpack.c.l.b16 %v3580
      %v3794 = vunpack.c.l.b16 %v3590
      %v3795 = vunpack.c.l.b16 %v3604
      %v3796 = vunpack.c.l.b16 %v3614
      %v3797 = vunpack.c.l.b16 %v3628
      %v3798 = vunpack.c.l.b16 %v3638
      %v3799 = vunpack.c.l.b16 %v3652
      %v3800 = vunpack.c.l.b16 %v3662
      %v3801 = vunpack.c.l.b16 %v3676
      %v3802 = vunpack.c.l.b16 %v3686
      %v3803 = vunpack.c.l.b16 %v3700
      %v3804 = vunpack.c.l.b16 %v3710
      %v3805 = vunpack.c.l.b16 %v3724
      %v3806 = vunpack.c.l.b16 %v3734
      %v3807 = vpack.c.b16 %v3744, %v3743
      %v3808 = vpack.c.b16 %v3746, %v3745
      %v3809 = vpack.c.b16 %v3748, %v3747
      %v3810 = vpack.c.b16 %v3750, %v3749
      %v3811 = vpack.c.b16 %v3752, %v3751
      %v3812 = vpack.c.b16 %v3754, %v3753
      %v3813 = vpack.c.b16 %v3756, %v3755
      %v3814 = vpack.c.b16 %v3758, %v3757
      %v3815 = vpack.c.b16 %v3760, %v3759
      %v3816 = vpack.c.b16 %v3762, %v3761
      %v3817 = vpack.c.b16 %v3764, %v3763
      %v3818 = vpack.c.b16 %v3766, %v3765
      %v3819 = vpack.c.b16 %v3768, %v3767
      %v3820 = vpack.c.b16 %v3770, %v3769
      %v3821 = vpack.c.b16 %v3772, %v3771
      %v3822 = vpack.c.b16 %v3774, %v3773
      %v3823 = vpack.c.b16 %v3776, %v3775
      %v3824 = vpack.c.b16 %v3778, %v3777
      %v3825 = vpack.c.b16 %v3780, %v3779
      %v3826 = vpack.c.b16 %v3782, %v3781
      %v3827 = vpack.c.b16 %v3784, %v3783
      %v3828 = vpack.c.b16 %v3786, %v3785
      %v3829 = vpack.c.b16 %v3788, %v3787
      %v3830 = vpack.c.b16 %v3790, %v3789
      %v3831 = vpack.c.b16 %v3792, %v3791
      %v3832 = vpack.c.b16 %v3794, %v3793
      %v3833 = vpack.c.b16 %v3796, %v3795
      %v3834 = vpack.c.b16 %v3798, %v3797
      %v3835 = vpack.c.b16 %v3800, %v3799
      %v3836 = vpack.c.b16 %v3802, %v3801
      %v3837 = vpack.c.b16 %v3804, %v3803
      %v3838 = vpack.c.b16 %v3806, %v3805
      %v3846 = vunpack.c.l.b16 %v3736
      %v3847 = vunpack.c.l.b16 %v3737
      %v3848 = vunpack.c.l.b16 %v3738
      %v3849 = vunpack.c.l.b16 %v3739
      %v3850 = vunpack.c.l.b16 %v3740
      %v3851 = vunpack.c.l.b16 %v3741
      %v3852 = vunpack.c.l.b16 %v3742
      %v3853 = vpack.c.b16 %v3847, %v3846
      %v3854 = vpack.c.b16 %v3849, %v3848
      %v3855 = vpack.c.b16 %v3851, %v3850
      %v3856 = vpack.c.b16 %v3852, %v3852
      %v3861 = vsel %vm1206, %v3807, 0
      %v3864 = vsel %vm1206, %v3808, 0
      %v3867 = vsel %vm1206, %v3809, 0
      %v3870 = vsel %vm1206, %v3810, 0
      %v3873 = vsel %vm1206, %v3811, 0
      %v3876 = vsel %vm1206, %v3812, 0
      %v3879 = vsel %vm1206, %v3813, 0
      %v3882 = vsel %vm1206, %v3814, 0
      %v3885 = vsel %vm1206, %v3815, 0
      %v3888 = vsel %vm1206, %v3816, 0
      %v3891 = vsel %vm1206, %v3817, 0
      %v3894 = vsel %vm1206, %v3818, 0
      %v3897 = vsel %vm1206, %v3819, 0
      %v3900 = vsel %vm1206, %v3820, 0
      %v3903 = vsel %vm1206, %v3821, 0
      %v3906 = vsel %vm1206, %v3822, 0
      %v3909 = vsel %vm1206, %v3823, 0
      %v3912 = vsel %vm1206, %v3824, 0
      %v3915 = vsel %vm1206, %v3825, 0
      %v3918 = vsel %vm1206, %v3826, 0
      %v3921 = vsel %vm1206, %v3827, 0
      %v3924 = vsel %vm1206, %v3828, 0
      %v3927 = vsel %vm1206, %v3829, 0
      %v3930 = vsel %vm1206, %v3830, 0
      %v3933 = vsel %vm1206, %v3831, 0
      %v3936 = vsel %vm1206, %v3832, 0
      %v3939 = vsel %vm1206, %v3833, 0
      %v3942 = vsel %vm1206, %v3834, 0
      %v3945 = vsel %vm1206, %v3835, 0
      %v3948 = vsel %vm1206, %v3836, 0
      %v3951 = vsel %vm1206, %v3837, 0
      %v3954 = vsel %vm1206, %v3838, 0
      %v3957 = vsel %vm1303, %v3856, 0
      %3959 = vmatprep.subr.bf16.mxu0 0
      %3960 = vmatpush1.bf16.msra.mxu0 0
      %3961 = vmatprep.subr.bf16.mxu0 0
      %3962 = vmatpush1.bf16.msra.mxu0 0
      %3963 = vmatprep.subr.bf16.mxu0 0
      %3964 = vmatpush1.bf16.msra.mxu0 0
      %3965 = vmatprep.subr.bf16.mxu0 0
      %3966 = vmatpush1.bf16.msra.mxu0 0
      %3967 = vmatprep.subr.bf16.mxu0 0
      %3968 = vmatpush1.bf16.msra.mxu0 %v3957
      %3969 = vmatprep.subr.bf16.mxu0 0
      %3970 = vmatpush1.bf16.msra.mxu0 %v3855
      %3971 = vmatprep.subr.bf16.mxu0 0
      %3972 = vmatpush1.bf16.msra.mxu0 %v3854
      %3973 = vmatprep.subr.bf16.mxu0 0
      %3974 = vmatpush1.bf16.msra.mxu0 %v3853
      %3975 = vmatprep.subr.bf16.mxu0 0
      %3976 = vmatpush2.bf16.msra.mxu0 0
      %3977 = vmatprep.subr.bf16.mxu0 0
      %3978 = vmatpush2.bf16.msra.mxu0 0
      %3979 = vmatprep.subr.bf16.mxu0 0
      %3980 = vmatpush2.bf16.msra.mxu0 0
      %3981 = vmatprep.subr.bf16.mxu0 0
      %3982 = vmatpush2.bf16.msra.mxu0 0
      %3983 = vmatprep.subr.bf16.mxu0 0
      %3984 = vmatpush2.bf16.msra.mxu0 0
      %3985 = vmatprep.subr.bf16.mxu0 0
      %3986 = vmatpush2.bf16.msra.mxu0 0
      %3987 = vmatprep.subr.bf16.mxu0 0
      %3988 = vmatpush2.bf16.msra.mxu0 0
      %3989 = vmatprep.subr.bf16.mxu0 0
      %3990 = vmatpush2.bf16.msra.mxu0 0
      %3991 = vmatprep.mubr.bf16.mxu0 0
      %3992 = vmatmul.mubr.bf16.gmra.mxu0 %v3861
      %v3993 = vpop.f32.mrf.mxu0
      %v3994 = vadd.f32 0.0, %v3993
      %v3995 = vpop.f32.mrf.mxu0
      %v3996 = vpop.f32.mrf.mxu0
      %v3997 = vadd.f32 0.0, %v3996
      %v3998 = vpop.f32.mrf.mxu0
      %3999 = vmatprep.mubr.bf16.mxu0 0
      %4000 = vmatmul.mubr.bf16.gmra.mxu0 %v3864
      %v4001 = vpop.f32.mrf.mxu0
      %v4002 = vadd.f32 0.0, %v4001
      %v4003 = vpop.f32.mrf.mxu0
      %v4004 = vpop.f32.mrf.mxu0
      %v4005 = vadd.f32 0.0, %v4004
      %v4006 = vpop.f32.mrf.mxu0
      %4007 = vmatprep.mubr.bf16.mxu0 0
      %4008 = vmatmul.mubr.bf16.gmra.mxu0 %v3867
      %v4009 = vpop.f32.mrf.mxu0
      %v4010 = vadd.f32 0.0, %v4009
      %v4011 = vpop.f32.mrf.mxu0
      %v4012 = vpop.f32.mrf.mxu0
      %v4013 = vadd.f32 0.0, %v4012
      %v4014 = vpop.f32.mrf.mxu0
      %4015 = vmatprep.mubr.bf16.mxu0 0
      %4016 = vmatmul.mubr.bf16.gmra.mxu0 %v3870
      %v4017 = vpop.f32.mrf.mxu0
      %v4018 = vadd.f32 0.0, %v4017
      %v4019 = vpop.f32.mrf.mxu0
      %v4020 = vpop.f32.mrf.mxu0
      %v4021 = vadd.f32 0.0, %v4020
      %v4022 = vpop.f32.mrf.mxu0
      %4023 = vmatprep.mubr.bf16.mxu0 0
      %4024 = vmatmul.mubr.bf16.gmra.mxu0 %v3873
      %v4025 = vpop.f32.mrf.mxu0
      %v4026 = vadd.f32 0.0, %v4025
      %v4027 = vpop.f32.mrf.mxu0
      %v4028 = vpop.f32.mrf.mxu0
      %v4029 = vadd.f32 0.0, %v4028
      %v4030 = vpop.f32.mrf.mxu0
      %4031 = vmatprep.mubr.bf16.mxu0 0
      %4032 = vmatmul.mubr.bf16.gmra.mxu0 %v3876
      %v4033 = vpop.f32.mrf.mxu0
      %v4034 = vadd.f32 0.0, %v4033
      %v4035 = vpop.f32.mrf.mxu0
      %v4036 = vpop.f32.mrf.mxu0
      %v4037 = vadd.f32 0.0, %v4036
      %v4038 = vpop.f32.mrf.mxu0
      %4039 = vmatprep.mubr.bf16.mxu0 0
      %4040 = vmatmul.mubr.bf16.gmra.mxu0 %v3879
      %v4041 = vpop.f32.mrf.mxu0
      %v4042 = vadd.f32 0.0, %v4041
      %v4043 = vpop.f32.mrf.mxu0
      %v4044 = vpop.f32.mrf.mxu0
      %v4045 = vadd.f32 0.0, %v4044
      %v4046 = vpop.f32.mrf.mxu0
      %4047 = vmatprep.mubr.bf16.mxu0 0
      %4048 = vmatmul.mubr.bf16.gmra.mxu0 %v3882
      %v4049 = vpop.f32.mrf.mxu0
      %v4050 = vadd.f32 0.0, %v4049
      %v4051 = vpop.f32.mrf.mxu0
      %v4052 = vpop.f32.mrf.mxu0
      %v4053 = vadd.f32 0.0, %v4052
      %v4054 = vpop.f32.mrf.mxu0
      %4055 = vmatprep.mubr.bf16.mxu0 0
      %4056 = vmatmul.mubr.bf16.gmra.mxu0 %v3885
      %v4057 = vpop.f32.mrf.mxu0
      %v4058 = vadd.f32 0.0, %v4057
      %v4059 = vpop.f32.mrf.mxu0
      %v4060 = vpop.f32.mrf.mxu0
      %v4061 = vadd.f32 0.0, %v4060
      %v4062 = vpop.f32.mrf.mxu0
      %4063 = vmatprep.mubr.bf16.mxu0 0
      %4064 = vmatmul.mubr.bf16.gmra.mxu0 %v3888
      %v4065 = vpop.f32.mrf.mxu0
      %v4066 = vadd.f32 0.0, %v4065
      %v4067 = vpop.f32.mrf.mxu0
      %v4068 = vpop.f32.mrf.mxu0
      %v4069 = vadd.f32 0.0, %v4068
      %v4070 = vpop.f32.mrf.mxu0
      %4071 = vmatprep.mubr.bf16.mxu0 0
      %4072 = vmatmul.mubr.bf16.gmra.mxu0 %v3891
      %v4073 = vpop.f32.mrf.mxu0
      %v4074 = vadd.f32 0.0, %v4073
      %v4075 = vpop.f32.mrf.mxu0
      %v4076 = vpop.f32.mrf.mxu0
      %v4077 = vadd.f32 0.0, %v4076
      %v4078 = vpop.f32.mrf.mxu0
      %4079 = vmatprep.mubr.bf16.mxu0 0
      %4080 = vmatmul.mubr.bf16.gmra.mxu0 %v3894
      %v4081 = vpop.f32.mrf.mxu0
      %v4082 = vadd.f32 0.0, %v4081
      %v4083 = vpop.f32.mrf.mxu0
      %v4084 = vpop.f32.mrf.mxu0
      %v4085 = vadd.f32 0.0, %v4084
      %v4086 = vpop.f32.mrf.mxu0
      %4087 = vmatprep.mubr.bf16.mxu0 0
      %4088 = vmatmul.mubr.bf16.gmra.mxu0 %v3897
      %v4089 = vpop.f32.mrf.mxu0
      %v4090 = vadd.f32 0.0, %v4089
      %v4091 = vpop.f32.mrf.mxu0
      %v4092 = vpop.f32.mrf.mxu0
      %v4093 = vadd.f32 0.0, %v4092
      %v4094 = vpop.f32.mrf.mxu0
      %4095 = vmatprep.mubr.bf16.mxu0 0
      %4096 = vmatmul.mubr.bf16.gmra.mxu0 %v3900
      %v4097 = vpop.f32.mrf.mxu0
      %v4098 = vadd.f32 0.0, %v4097
      %v4099 = vpop.f32.mrf.mxu0
      %v4100 = vpop.f32.mrf.mxu0
      %v4101 = vadd.f32 0.0, %v4100
      %v4102 = vpop.f32.mrf.mxu0
      %4103 = vmatprep.mubr.bf16.mxu0 0
      %4104 = vmatmul.mubr.bf16.gmra.mxu0 %v3903
      %v4105 = vpop.f32.mrf.mxu0
      %v4106 = vadd.f32 0.0, %v4105
      %v4107 = vpop.f32.mrf.mxu0
      %v4108 = vpop.f32.mrf.mxu0
      %v4109 = vadd.f32 0.0, %v4108
      %v4110 = vpop.f32.mrf.mxu0
      %4111 = vmatprep.mubr.bf16.mxu0 0
      %4112 = vmatmul.mubr.bf16.gmra.mxu0 %v3906
      %v4113 = vpop.f32.mrf.mxu0
      %v4114 = vadd.f32 0.0, %v4113
      %v4115 = vpop.f32.mrf.mxu0
      %v4116 = vpop.f32.mrf.mxu0
      %v4117 = vadd.f32 0.0, %v4116
      %v4118 = vpop.f32.mrf.mxu0
      %4119 = vmatprep.mubr.bf16.mxu0 0
      %4120 = vmatmul.mubr.bf16.gmra.mxu0 %v3909
      %v4121 = vpop.f32.mrf.mxu0
      %v4122 = vadd.f32 0.0, %v4121
      %v4123 = vpop.f32.mrf.mxu0
      %v4124 = vpop.f32.mrf.mxu0
      %v4125 = vadd.f32 0.0, %v4124
      %v4126 = vpop.f32.mrf.mxu0
      %4127 = vmatprep.mubr.bf16.mxu0 0
      %4128 = vmatmul.mubr.bf16.gmra.mxu0 %v3912
      %v4129 = vpop.f32.mrf.mxu0
      %v4130 = vadd.f32 0.0, %v4129
      %v4131 = vpop.f32.mrf.mxu0
      %v4132 = vpop.f32.mrf.mxu0
      %v4133 = vadd.f32 0.0, %v4132
      %v4134 = vpop.f32.mrf.mxu0
      %4135 = vmatprep.mubr.bf16.mxu0 0
      %4136 = vmatmul.mubr.bf16.gmra.mxu0 %v3915
      %v4137 = vpop.f32.mrf.mxu0
      %v4138 = vadd.f32 0.0, %v4137
      %v4139 = vpop.f32.mrf.mxu0
      %v4140 = vpop.f32.mrf.mxu0
      %v4141 = vadd.f32 0.0, %v4140
      %v4142 = vpop.f32.mrf.mxu0
      %4143 = vmatprep.mubr.bf16.mxu0 0
      %4144 = vmatmul.mubr.bf16.gmra.mxu0 %v3918
      %v4145 = vpop.f32.mrf.mxu0
      %v4146 = vadd.f32 0.0, %v4145
      %v4147 = vpop.f32.mrf.mxu0
      %v4148 = vpop.f32.mrf.mxu0
      %v4149 = vadd.f32 0.0, %v4148
      %v4150 = vpop.f32.mrf.mxu0
      %4151 = vmatprep.mubr.bf16.mxu0 0
      %4152 = vmatmul.mubr.bf16.gmra.mxu0 %v3921
      %v4153 = vpop.f32.mrf.mxu0
      %v4154 = vadd.f32 0.0, %v4153
      %v4155 = vpop.f32.mrf.mxu0
      %v4156 = vpop.f32.mrf.mxu0
      %v4157 = vadd.f32 0.0, %v4156
      %v4158 = vpop.f32.mrf.mxu0
      %4159 = vmatprep.mubr.bf16.mxu0 0
      %4160 = vmatmul.mubr.bf16.gmra.mxu0 %v3924
      %v4161 = vpop.f32.mrf.mxu0
      %v4162 = vadd.f32 0.0, %v4161
      %v4163 = vpop.f32.mrf.mxu0
      %v4164 = vpop.f32.mrf.mxu0
      %v4165 = vadd.f32 0.0, %v4164
      %v4166 = vpop.f32.mrf.mxu0
      %4167 = vmatprep.mubr.bf16.mxu0 0
      %4168 = vmatmul.mubr.bf16.gmra.mxu0 %v3927
      %v4169 = vpop.f32.mrf.mxu0
      %v4170 = vadd.f32 0.0, %v4169
      %v4171 = vpop.f32.mrf.mxu0
      %v4172 = vpop.f32.mrf.mxu0
      %v4173 = vadd.f32 0.0, %v4172
      %v4174 = vpop.f32.mrf.mxu0
      %4175 = vmatprep.mubr.bf16.mxu0 0
      %4176 = vmatmul.mubr.bf16.gmra.mxu0 %v3930
      %v4177 = vpop.f32.mrf.mxu0
      %v4178 = vadd.f32 0.0, %v4177
      %v4179 = vpop.f32.mrf.mxu0
      %v4180 = vpop.f32.mrf.mxu0
      %v4181 = vadd.f32 0.0, %v4180
      %v4182 = vpop.f32.mrf.mxu0
      %4183 = vmatprep.mubr.bf16.mxu0 0
      %4184 = vmatmul.mubr.bf16.gmra.mxu0 %v3933
      %v4185 = vpop.f32.mrf.mxu0
      %v4186 = vadd.f32 0.0, %v4185
      %v4187 = vpop.f32.mrf.mxu0
      %v4188 = vpop.f32.mrf.mxu0
      %v4189 = vadd.f32 0.0, %v4188
      %v4190 = vpop.f32.mrf.mxu0
      %4191 = vmatprep.mubr.bf16.mxu0 0
      %4192 = vmatmul.mubr.bf16.gmra.mxu0 %v3936
      %v4193 = vpop.f32.mrf.mxu0
      %v4194 = vadd.f32 0.0, %v4193
      %v4195 = vpop.f32.mrf.mxu0
      %v4196 = vpop.f32.mrf.mxu0
      %v4197 = vadd.f32 0.0, %v4196
      %v4198 = vpop.f32.mrf.mxu0
      %4199 = vmatprep.mubr.bf16.mxu0 0
      %4200 = vmatmul.mubr.bf16.gmra.mxu0 %v3939
      %v4201 = vpop.f32.mrf.mxu0
      %v4202 = vadd.f32 0.0, %v4201
      %v4203 = vpop.f32.mrf.mxu0
      %v4204 = vpop.f32.mrf.mxu0
      %v4205 = vadd.f32 0.0, %v4204
      %v4206 = vpop.f32.mrf.mxu0
      %4207 = vmatprep.mubr.bf16.mxu0 0
      %4208 = vmatmul.mubr.bf16.gmra.mxu0 %v3942
      %v4209 = vpop.f32.mrf.mxu0
      %v4210 = vadd.f32 0.0, %v4209
      %v4211 = vpop.f32.mrf.mxu0
      %v4212 = vpop.f32.mrf.mxu0
      %v4213 = vadd.f32 0.0, %v4212
      %v4214 = vpop.f32.mrf.mxu0
      %4215 = vmatprep.mubr.bf16.mxu0 0
      %4216 = vmatmul.mubr.bf16.gmra.mxu0 %v3945
      %v4217 = vpop.f32.mrf.mxu0
      %v4218 = vadd.f32 0.0, %v4217
      %v4219 = vpop.f32.mrf.mxu0
      %v4220 = vpop.f32.mrf.mxu0
      %v4221 = vadd.f32 0.0, %v4220
      %v4222 = vpop.f32.mrf.mxu0
      %4223 = vmatprep.mubr.bf16.mxu0 0
      %4224 = vmatmul.mubr.bf16.gmra.mxu0 %v3948
      %v4225 = vpop.f32.mrf.mxu0
      %v4226 = vadd.f32 0.0, %v4225
      %v4227 = vpop.f32.mrf.mxu0
      %v4228 = vpop.f32.mrf.mxu0
      %v4229 = vadd.f32 0.0, %v4228
      %v4230 = vpop.f32.mrf.mxu0
      %4231 = vmatprep.mubr.bf16.mxu0 0
      %4232 = vmatmul.mubr.bf16.gmra.mxu0 %v3951
      %v4233 = vpop.f32.mrf.mxu0
      %v4234 = vadd.f32 0.0, %v4233
      %v4235 = vpop.f32.mrf.mxu0
      %v4236 = vpop.f32.mrf.mxu0
      %v4237 = vadd.f32 0.0, %v4236
      %v4238 = vpop.f32.mrf.mxu0
      %4239 = vmatprep.mubr.bf16.mxu0 0
      %4240 = vmatmul.mubr.bf16.gmra.mxu0 %v3954
      %v4241 = vpop.f32.mrf.mxu0
      %v4242 = vadd.f32 0.0, %v4241
      %v4243 = vpop.f32.mrf.mxu0
      %v4244 = vpop.f32.mrf.mxu0
      %v4245 = vadd.f32 0.0, %v4244
      %v4246 = vpop.f32.mrf.mxu0
      %4247 = vdwg.mxu0
      %v4248 = vadd.f32 %v2807, %v3994
      %v4249 = vadd.f32 %v2808, %v3997
      %v4250 = vadd.f32 %v2809, %v4002
      %v4251 = vadd.f32 %v2810, %v4005
      %v4252 = vadd.f32 %v2811, %v4010
      %v4253 = vadd.f32 %v2812, %v4013
      %v4254 = vadd.f32 %v2813, %v4018
      %v4255 = vadd.f32 %v2814, %v4021
      %v4256 = vadd.f32 %v2815, %v4026
      %v4257 = vadd.f32 %v2816, %v4029
      %v4258 = vadd.f32 %v2817, %v4034
      %v4259 = vadd.f32 %v2818, %v4037
      %v4260 = vadd.f32 %v2819, %v4042
      %v4261 = vadd.f32 %v2820, %v4045
      %v4262 = vadd.f32 %v2821, %v4050
      %v4263 = vadd.f32 %v2822, %v4053
      %v4264 = vadd.f32 %v2823, %v4058
      %v4265 = vadd.f32 %v2824, %v4061
      %v4266 = vadd.f32 %v2825, %v4066
      %v4267 = vadd.f32 %v2826, %v4069
      %v4268 = vadd.f32 %v2827, %v4074
      %v4269 = vadd.f32 %v2828, %v4077
      %v4270 = vadd.f32 %v2829, %v4082
      %v4271 = vadd.f32 %v2830, %v4085
      %v4272 = vadd.f32 %v2831, %v4090
      %v4273 = vadd.f32 %v2832, %v4093
      %v4274 = vadd.f32 %v2833, %v4098
      %v4275 = vadd.f32 %v2834, %v4101
      %v4276 = vadd.f32 %v2835, %v4106
      %v4277 = vadd.f32 %v2836, %v4109
      %v4278 = vadd.f32 %v2837, %v4114
      %v4279 = vadd.f32 %v2838, %v4117
      %v4280 = vadd.f32 %v2839, %v4122
      %v4281 = vadd.f32 %v2840, %v4125
      %v4282 = vadd.f32 %v2841, %v4130
      %v4283 = vadd.f32 %v2842, %v4133
      %v4284 = vadd.f32 %v2843, %v4138
      %v4285 = vadd.f32 %v2844, %v4141
      %v4286 = vadd.f32 %v2845, %v4146
      %v4287 = vadd.f32 %v2846, %v4149
      %v4288 = vadd.f32 %v2847, %v4154
      %v4289 = vadd.f32 %v2848, %v4157
      %v4290 = vadd.f32 %v2849, %v4162
      %v4291 = vadd.f32 %v2850, %v4165
      %v4292 = vadd.f32 %v2851, %v4170
      %v4293 = vadd.f32 %v2852, %v4173
      %v4294 = vadd.f32 %v2853, %v4178
      %v4295 = vadd.f32 %v2854, %v4181
      %v4296 = vadd.f32 %v2855, %v4186
      %v4297 = vadd.f32 %v2856, %v4189
      %v4298 = vadd.f32 %v2857, %v4194
      %v4299 = vadd.f32 %v2858, %v4197
      %v4300 = vadd.f32 %v2859, %v4202
      %v4301 = vadd.f32 %v2860, %v4205
      %v4302 = vadd.f32 %v2861, %v4210
      %v4303 = vadd.f32 %v2862, %v4213
      %v4304 = vadd.f32 %v2863, %v4218
      %v4305 = vadd.f32 %v2864, %v4221
      %v4306 = vadd.f32 %v2865, %v4226
      %v4307 = vadd.f32 %v2866, %v4229
      %v4308 = vadd.f32 %v2867, %v4234
      %v4309 = vadd.f32 %v2868, %v4237
      %v4310 = vadd.f32 %v2869, %v4242
      %v4311 = vadd.f32 %v2870, %v4245
      %v4312 = vld [vmem:[%s2] sm:$0x1]
      %v4313 = vld [vmem:[%s3] sm:$0x1]
      %vm4314 = vcmask 130048
      %v4315 = vsel %vm4314, %v4248, 0.0
      %v4316 = vsel %vm4314, %v4249, 0.0
      %v4317 = vadd.f32 %v4315, %v4316
      %v4318 = vsel %vm4314, %v4250, 0.0
      %v4319 = vadd.f32 %v4317, %v4318
      %v4320 = vsel %vm4314, %v4251, 0.0
      %v4321 = vadd.f32 %v4319, %v4320
      %v4322 = vsel %vm4314, %v4252, 0.0
      %v4323 = vadd.f32 %v4321, %v4322
      %v4324 = vsel %vm4314, %v4253, 0.0
      %v4325 = vadd.f32 %v4323, %v4324
      %v4326 = vsel %vm4314, %v4254, 0.0
      %v4327 = vadd.f32 %v4325, %v4326
      %v4328 = vsel %vm4314, %v4255, 0.0
      %v4329 = vadd.f32 %v4327, %v4328
      %v4330 = vsel %vm4314, %v4256, 0.0
      %v4331 = vadd.f32 %v4329, %v4330
      %v4332 = vsel %vm4314, %v4257, 0.0
      %v4333 = vadd.f32 %v4331, %v4332
      %v4334 = vsel %vm4314, %v4258, 0.0
      %v4335 = vadd.f32 %v4333, %v4334
      %v4336 = vsel %vm4314, %v4259, 0.0
      %v4337 = vadd.f32 %v4335, %v4336
      %v4338 = vsel %vm4314, %v4260, 0.0
      %v4339 = vadd.f32 %v4337, %v4338
      %v4340 = vsel %vm4314, %v4261, 0.0
      %v4341 = vadd.f32 %v4339, %v4340
      %v4342 = vsel %vm4314, %v4262, 0.0
      %v4343 = vadd.f32 %v4341, %v4342
      %v4344 = vsel %vm4314, %v4263, 0.0
      %v4345 = vadd.f32 %v4343, %v4344
      %v4346 = vsel %vm4314, %v4264, 0.0
      %v4347 = vadd.f32 %v4345, %v4346
      %v4348 = vsel %vm4314, %v4265, 0.0
      %v4349 = vadd.f32 %v4347, %v4348
      %v4350 = vsel %vm4314, %v4266, 0.0
      %v4351 = vadd.f32 %v4349, %v4350
      %v4352 = vsel %vm4314, %v4267, 0.0
      %v4353 = vadd.f32 %v4351, %v4352
      %v4354 = vsel %vm4314, %v4268, 0.0
      %v4355 = vadd.f32 %v4353, %v4354
      %v4356 = vsel %vm4314, %v4269, 0.0
      %v4357 = vadd.f32 %v4355, %v4356
      %v4358 = vsel %vm4314, %v4270, 0.0
      %v4359 = vadd.f32 %v4357, %v4358
      %v4360 = vsel %vm4314, %v4271, 0.0
      %v4361 = vadd.f32 %v4359, %v4360
      %v4362 = vsel %vm4314, %v4272, 0.0
      %v4363 = vadd.f32 %v4361, %v4362
      %v4364 = vsel %vm4314, %v4273, 0.0
      %v4365 = vadd.f32 %v4363, %v4364
      %v4366 = vsel %vm4314, %v4274, 0.0
      %v4367 = vadd.f32 %v4365, %v4366
      %v4368 = vsel %vm4314, %v4275, 0.0
      %v4369 = vadd.f32 %v4367, %v4368
      %v4370 = vsel %vm4314, %v4276, 0.0
      %v4371 = vadd.f32 %v4369, %v4370
      %v4372 = vsel %vm4314, %v4277, 0.0
      %v4373 = vadd.f32 %v4371, %v4372
      %v4374 = vsel %vm4314, %v4278, 0.0
      %v4375 = vadd.f32 %v4373, %v4374
      %v4376 = vsel %vm4314, %v4279, 0.0
      %v4377 = vadd.f32 %v4375, %v4376
      %v4378 = vrot.slane %v4377, 4
      %v4379 = vadd.f32 %v4377, %v4378
      %v4380 = vrot.slane %v4379, 2
      %v4381 = vadd.f32 %v4379, %v4380
      %v4382 = vrot.slane %v4381, 1
      %v4383 = vadd.f32 %v4381, %v4382
      %v4384 = vsel %vm4314, %v4280, 0.0
      %v4385 = vsel %vm4314, %v4281, 0.0
      %v4386 = vadd.f32 %v4384, %v4385
      %v4387 = vsel %vm4314, %v4282, 0.0
      %v4388 = vadd.f32 %v4386, %v4387
      %v4389 = vsel %vm4314, %v4283, 0.0
      %v4390 = vadd.f32 %v4388, %v4389
      %v4391 = vsel %vm4314, %v4284, 0.0
      %v4392 = vadd.f32 %v4390, %v4391
      %v4393 = vsel %vm4314, %v4285, 0.0
      %v4394 = vadd.f32 %v4392, %v4393
      %v4395 = vsel %vm4314, %v4286, 0.0
      %v4396 = vadd.f32 %v4394, %v4395
      %v4397 = vsel %vm4314, %v4287, 0.0
      %v4398 = vadd.f32 %v4396, %v4397
      %v4399 = vsel %vm4314, %v4288, 0.0
      %v4400 = vadd.f32 %v4398, %v4399
      %v4401 = vsel %vm4314, %v4289, 0.0
      %v4402 = vadd.f32 %v4400, %v4401
      %v4403 = vsel %vm4314, %v4290, 0.0
      %v4404 = vadd.f32 %v4402, %v4403
      %v4405 = vsel %vm4314, %v4291, 0.0
      %v4406 = vadd.f32 %v4404, %v4405
      %v4407 = vsel %vm4314, %v4292, 0.0
      %v4408 = vadd.f32 %v4406, %v4407
      %v4409 = vsel %vm4314, %v4293, 0.0
      %v4410 = vadd.f32 %v4408, %v4409
      %v4411 = vsel %vm4314, %v4294, 0.0
      %v4412 = vadd.f32 %v4410, %v4411
      %v4413 = vsel %vm4314, %v4295, 0.0
      %v4414 = vadd.f32 %v4412, %v4413
      %v4415 = vsel %vm4314, %v4296, 0.0
      %v4416 = vadd.f32 %v4414, %v4415
      %v4417 = vsel %vm4314, %v4297, 0.0
      %v4418 = vadd.f32 %v4416, %v4417
      %v4419 = vsel %vm4314, %v4298, 0.0
      %v4420 = vadd.f32 %v4418, %v4419
      %v4421 = vsel %vm4314, %v4299, 0.0
      %v4422 = vadd.f32 %v4420, %v4421
      %v4423 = vsel %vm4314, %v4300, 0.0
      %v4424 = vadd.f32 %v4422, %v4423
      %v4425 = vsel %vm4314, %v4301, 0.0
      %v4426 = vadd.f32 %v4424, %v4425
      %v4427 = vsel %vm4314, %v4302, 0.0
      %v4428 = vadd.f32 %v4426, %v4427
      %v4429 = vsel %vm4314, %v4303, 0.0
      %v4430 = vadd.f32 %v4428, %v4429
      %v4431 = vsel %vm4314, %v4304, 0.0
      %v4432 = vadd.f32 %v4430, %v4431
      %v4433 = vsel %vm4314, %v4305, 0.0
      %v4434 = vadd.f32 %v4432, %v4433
      %v4435 = vsel %vm4314, %v4306, 0.0
      %v4436 = vadd.f32 %v4434, %v4435
      %v4437 = vsel %vm4314, %v4307, 0.0
      %v4438 = vadd.f32 %v4436, %v4437
      %v4439 = vsel %vm4314, %v4308, 0.0
      %v4440 = vadd.f32 %v4438, %v4439
      %v4441 = vsel %vm4314, %v4309, 0.0
      %v4442 = vadd.f32 %v4440, %v4441
      %v4443 = vsel %vm4314, %v4310, 0.0
      %v4444 = vadd.f32 %v4442, %v4443
      %v4445 = vsel %vm4314, %v4311, 0.0
      %v4446 = vadd.f32 %v4444, %v4445
      %v4447 = vrot.slane %v4446, 4
      %v4448 = vadd.f32 %v4446, %v4447
      %v4449 = vrot.slane %v4448, 2
      %v4450 = vadd.f32 %v4448, %v4449
      %v4451 = vrot.slane %v4450, 1
      %v4452 = vadd.f32 %v4450, %v4451
      %v4453 = vmul.f32 %v4383, 0.00390625
      %v4454 = vmul.f32 %v4452, 0.00390625
      %v4455 = vmul.f32 %v4248, %v4248
      %v4456 = vmul.f32 %v4249, %v4249
      %v4457 = vmul.f32 %v4250, %v4250
      %v4458 = vmul.f32 %v4251, %v4251
      %v4459 = vmul.f32 %v4252, %v4252
      %v4460 = vmul.f32 %v4253, %v4253
      %v4461 = vmul.f32 %v4254, %v4254
      %v4462 = vmul.f32 %v4255, %v4255
      %v4463 = vmul.f32 %v4256, %v4256
      %v4464 = vmul.f32 %v4257, %v4257
      %v4465 = vmul.f32 %v4258, %v4258
      %v4466 = vmul.f32 %v4259, %v4259
      %v4467 = vmul.f32 %v4260, %v4260
      %v4468 = vmul.f32 %v4261, %v4261
      %v4469 = vmul.f32 %v4262, %v4262
      %v4470 = vmul.f32 %v4263, %v4263
      %v4471 = vmul.f32 %v4264, %v4264
      %v4472 = vmul.f32 %v4265, %v4265
      %v4473 = vmul.f32 %v4266, %v4266
      %v4474 = vmul.f32 %v4267, %v4267
      %v4475 = vmul.f32 %v4268, %v4268
      %v4476 = vmul.f32 %v4269, %v4269
      %v4477 = vmul.f32 %v4270, %v4270
      %v4478 = vmul.f32 %v4271, %v4271
      %v4479 = vmul.f32 %v4272, %v4272
      %v4480 = vmul.f32 %v4273, %v4273
      %v4481 = vmul.f32 %v4274, %v4274
      %v4482 = vmul.f32 %v4275, %v4275
      %v4483 = vmul.f32 %v4276, %v4276
      %v4484 = vmul.f32 %v4277, %v4277
      %v4485 = vmul.f32 %v4278, %v4278
      %v4486 = vmul.f32 %v4279, %v4279
      %v4487 = vmul.f32 %v4280, %v4280
      %v4488 = vmul.f32 %v4281, %v4281
      %v4489 = vmul.f32 %v4282, %v4282
      %v4490 = vmul.f32 %v4283, %v4283
      %v4491 = vmul.f32 %v4284, %v4284
      %v4492 = vmul.f32 %v4285, %v4285
      %v4493 = vmul.f32 %v4286, %v4286
      %v4494 = vmul.f32 %v4287, %v4287
      %v4495 = vmul.f32 %v4288, %v4288
      %v4496 = vmul.f32 %v4289, %v4289
      %v4497 = vmul.f32 %v4290, %v4290
      %v4498 = vmul.f32 %v4291, %v4291
      %v4499 = vmul.f32 %v4292, %v4292
      %v4500 = vmul.f32 %v4293, %v4293
      %v4501 = vmul.f32 %v4294, %v4294
      %v4502 = vmul.f32 %v4295, %v4295
      %v4503 = vmul.f32 %v4296, %v4296
      %v4504 = vmul.f32 %v4297, %v4297
      %v4505 = vmul.f32 %v4298, %v4298
      %v4506 = vmul.f32 %v4299, %v4299
      %v4507 = vmul.f32 %v4300, %v4300
      %v4508 = vmul.f32 %v4301, %v4301
      %v4509 = vmul.f32 %v4302, %v4302
      %v4510 = vmul.f32 %v4303, %v4303
      %v4511 = vmul.f32 %v4304, %v4304
      %v4512 = vmul.f32 %v4305, %v4305
      %v4513 = vmul.f32 %v4306, %v4306
      %v4514 = vmul.f32 %v4307, %v4307
      %v4515 = vmul.f32 %v4308, %v4308
      %v4516 = vmul.f32 %v4309, %v4309
      %v4517 = vmul.f32 %v4310, %v4310
      %v4518 = vmul.f32 %v4311, %v4311
      %v4519 = vsel %vm4314, %v4455, 0.0
      %v4520 = vsel %vm4314, %v4456, 0.0
      %v4521 = vadd.f32 %v4519, %v4520
      %v4522 = vsel %vm4314, %v4457, 0.0
      %v4523 = vadd.f32 %v4521, %v4522
      %v4524 = vsel %vm4314, %v4458, 0.0
      %v4525 = vadd.f32 %v4523, %v4524
      %v4526 = vsel %vm4314, %v4459, 0.0
      %v4527 = vadd.f32 %v4525, %v4526
      %v4528 = vsel %vm4314, %v4460, 0.0
      %v4529 = vadd.f32 %v4527, %v4528
      %v4530 = vsel %vm4314, %v4461, 0.0
      %v4531 = vadd.f32 %v4529, %v4530
      %v4532 = vsel %vm4314, %v4462, 0.0
      %v4533 = vadd.f32 %v4531, %v4532
      %v4534 = vsel %vm4314, %v4463, 0.0
      %v4535 = vadd.f32 %v4533, %v4534
      %v4536 = vsel %vm4314, %v4464, 0.0
      %v4537 = vadd.f32 %v4535, %v4536
      %v4538 = vsel %vm4314, %v4465, 0.0
      %v4539 = vadd.f32 %v4537, %v4538
      %v4540 = vsel %vm4314, %v4466, 0.0
      %v4541 = vadd.f32 %v4539, %v4540
      %v4542 = vsel %vm4314, %v4467, 0.0
      %v4543 = vadd.f32 %v4541, %v4542
      %v4544 = vsel %vm4314, %v4468, 0.0
      %v4545 = vadd.f32 %v4543, %v4544
      %v4546 = vsel %vm4314, %v4469, 0.0
      %v4547 = vadd.f32 %v4545, %v4546
      %v4548 = vsel %vm4314, %v4470, 0.0
      %v4549 = vadd.f32 %v4547, %v4548
      %v4550 = vsel %vm4314, %v4471, 0.0
      %v4551 = vadd.f32 %v4549, %v4550
      %v4552 = vsel %vm4314, %v4472, 0.0
      %v4553 = vadd.f32 %v4551, %v4552
      %v4554 = vsel %vm4314, %v4473, 0.0
      %v4555 = vadd.f32 %v4553, %v4554
      %v4556 = vsel %vm4314, %v4474, 0.0
      %v4557 = vadd.f32 %v4555, %v4556
      %v4558 = vsel %vm4314, %v4475, 0.0
      %v4559 = vadd.f32 %v4557, %v4558
      %v4560 = vsel %vm4314, %v4476, 0.0
      %v4561 = vadd.f32 %v4559, %v4560
      %v4562 = vsel %vm4314, %v4477, 0.0
      %v4563 = vadd.f32 %v4561, %v4562
      %v4564 = vsel %vm4314, %v4478, 0.0
      %v4565 = vadd.f32 %v4563, %v4564
      %v4566 = vsel %vm4314, %v4479, 0.0
      %v4567 = vadd.f32 %v4565, %v4566
      %v4568 = vsel %vm4314, %v4480, 0.0
      %v4569 = vadd.f32 %v4567, %v4568
      %v4570 = vsel %vm4314, %v4481, 0.0
      %v4571 = vadd.f32 %v4569, %v4570
      %v4572 = vsel %vm4314, %v4482, 0.0
      %v4573 = vadd.f32 %v4571, %v4572
      %v4574 = vsel %vm4314, %v4483, 0.0
      %v4575 = vadd.f32 %v4573, %v4574
      %v4576 = vsel %vm4314, %v4484, 0.0
      %v4577 = vadd.f32 %v4575, %v4576
      %v4578 = vsel %vm4314, %v4485, 0.0
      %v4579 = vadd.f32 %v4577, %v4578
      %v4580 = vsel %vm4314, %v4486, 0.0
      %v4581 = vadd.f32 %v4579, %v4580
      %v4582 = vrot.slane %v4581, 4
      %v4583 = vadd.f32 %v4581, %v4582
      %v4584 = vrot.slane %v4583, 2
      %v4585 = vadd.f32 %v4583, %v4584
      %v4586 = vrot.slane %v4585, 1
      %v4587 = vadd.f32 %v4585, %v4586
      %v4588 = vsel %vm4314, %v4487, 0.0
      %v4589 = vsel %vm4314, %v4488, 0.0
      %v4590 = vadd.f32 %v4588, %v4589
      %v4591 = vsel %vm4314, %v4489, 0.0
      %v4592 = vadd.f32 %v4590, %v4591
      %v4593 = vsel %vm4314, %v4490, 0.0
      %v4594 = vadd.f32 %v4592, %v4593
      %v4595 = vsel %vm4314, %v4491, 0.0
      %v4596 = vadd.f32 %v4594, %v4595
      %v4597 = vsel %vm4314, %v4492, 0.0
      %v4598 = vadd.f32 %v4596, %v4597
      %v4599 = vsel %vm4314, %v4493, 0.0
      %v4600 = vadd.f32 %v4598, %v4599
      %v4601 = vsel %vm4314, %v4494, 0.0
      %v4602 = vadd.f32 %v4600, %v4601
      %v4603 = vsel %vm4314, %v4495, 0.0
      %v4604 = vadd.f32 %v4602, %v4603
      %v4605 = vsel %vm4314, %v4496, 0.0
      %v4606 = vadd.f32 %v4604, %v4605
      %v4607 = vsel %vm4314, %v4497, 0.0
      %v4608 = vadd.f32 %v4606, %v4607
      %v4609 = vsel %vm4314, %v4498, 0.0
      %v4610 = vadd.f32 %v4608, %v4609
      %v4611 = vsel %vm4314, %v4499, 0.0
      %v4612 = vadd.f32 %v4610, %v4611
      %v4613 = vsel %vm4314, %v4500, 0.0
      %v4614 = vadd.f32 %v4612, %v4613
      %v4615 = vsel %vm4314, %v4501, 0.0
      %v4616 = vadd.f32 %v4614, %v4615
      %v4617 = vsel %vm4314, %v4502, 0.0
      %v4618 = vadd.f32 %v4616, %v4617
      %v4619 = vsel %vm4314, %v4503, 0.0
      %v4620 = vadd.f32 %v4618, %v4619
      %v4621 = vsel %vm4314, %v4504, 0.0
      %v4622 = vadd.f32 %v4620, %v4621
      %v4623 = vsel %vm4314, %v4505, 0.0
      %v4624 = vadd.f32 %v4622, %v4623
      %v4625 = vsel %vm4314, %v4506, 0.0
      %v4626 = vadd.f32 %v4624, %v4625
      %v4627 = vsel %vm4314, %v4507, 0.0
      %v4628 = vadd.f32 %v4626, %v4627
      %v4629 = vsel %vm4314, %v4508, 0.0
      %v4630 = vadd.f32 %v4628, %v4629
      %v4631 = vsel %vm4314, %v4509, 0.0
      %v4632 = vadd.f32 %v4630, %v4631
      %v4633 = vsel %vm4314, %v4510, 0.0
      %v4634 = vadd.f32 %v4632, %v4633
      %v4635 = vsel %vm4314, %v4511, 0.0
      %v4636 = vadd.f32 %v4634, %v4635
      %v4637 = vsel %vm4314, %v4512, 0.0
      %v4638 = vadd.f32 %v4636, %v4637
      %v4639 = vsel %vm4314, %v4513, 0.0
      %v4640 = vadd.f32 %v4638, %v4639
      %v4641 = vsel %vm4314, %v4514, 0.0
      %v4642 = vadd.f32 %v4640, %v4641
      %v4643 = vsel %vm4314, %v4515, 0.0
      %v4644 = vadd.f32 %v4642, %v4643
      %v4645 = vsel %vm4314, %v4516, 0.0
      %v4646 = vadd.f32 %v4644, %v4645
      %v4647 = vsel %vm4314, %v4517, 0.0
      %v4648 = vadd.f32 %v4646, %v4647
      %v4649 = vsel %vm4314, %v4518, 0.0
      %v4650 = vadd.f32 %v4648, %v4649
      %v4651 = vrot.slane %v4650, 4
      %v4652 = vadd.f32 %v4650, %v4651
      %v4653 = vrot.slane %v4652, 2
      %v4654 = vadd.f32 %v4652, %v4653
      %v4655 = vrot.slane %v4654, 1
      %v4656 = vadd.f32 %v4654, %v4655
      %v4657 = vmul.f32 %v4587, 0.00390625
      %v4658 = vmul.f32 %v4656, 0.00390625
      %v4659 = vmul.f32 %v4453, %v4453
      %v4660 = vmul.f32 %v4454, %v4454
      %v4661 = vsub.f32 %v4657, %v4659
      %v4662 = vsub.f32 %v4658, %v4660
      %v4663 = vmax.f32 %v4661, 0.0
      %v4664 = vmax.f32 %v4662, 0.0
      %v4665 = vsub.f32 %v4248, %v4453
      %v4666 = vsub.f32 %v4249, %v4453
      %v4667 = vsub.f32 %v4250, %v4453
      %v4668 = vsub.f32 %v4251, %v4453
      %v4669 = vsub.f32 %v4252, %v4453
      %v4670 = vsub.f32 %v4253, %v4453
      %v4671 = vsub.f32 %v4254, %v4453
      %v4672 = vsub.f32 %v4255, %v4453
      %v4673 = vsub.f32 %v4256, %v4453
      %v4674 = vsub.f32 %v4257, %v4453
      %v4675 = vsub.f32 %v4258, %v4453
      %v4676 = vsub.f32 %v4259, %v4453
      %v4677 = vsub.f32 %v4260, %v4453
      %v4678 = vsub.f32 %v4261, %v4453
      %v4679 = vsub.f32 %v4262, %v4453
      %v4680 = vsub.f32 %v4263, %v4453
      %v4681 = vsub.f32 %v4264, %v4453
      %v4682 = vsub.f32 %v4265, %v4453
      %v4683 = vsub.f32 %v4266, %v4453
      %v4684 = vsub.f32 %v4267, %v4453
      %v4685 = vsub.f32 %v4268, %v4453
      %v4686 = vsub.f32 %v4269, %v4453
      %v4687 = vsub.f32 %v4270, %v4453
      %v4688 = vsub.f32 %v4271, %v4453
      %v4689 = vsub.f32 %v4272, %v4453
      %v4690 = vsub.f32 %v4273, %v4453
      %v4691 = vsub.f32 %v4274, %v4453
      %v4692 = vsub.f32 %v4275, %v4453
      %v4693 = vsub.f32 %v4276, %v4453
      %v4694 = vsub.f32 %v4277, %v4453
      %v4695 = vsub.f32 %v4278, %v4453
      %v4696 = vsub.f32 %v4279, %v4453
      %v4697 = vsub.f32 %v4280, %v4454
      %v4698 = vsub.f32 %v4281, %v4454
      %v4699 = vsub.f32 %v4282, %v4454
      %v4700 = vsub.f32 %v4283, %v4454
      %v4701 = vsub.f32 %v4284, %v4454
      %v4702 = vsub.f32 %v4285, %v4454
      %v4703 = vsub.f32 %v4286, %v4454
      %v4704 = vsub.f32 %v4287, %v4454
      %v4705 = vsub.f32 %v4288, %v4454
      %v4706 = vsub.f32 %v4289, %v4454
      %v4707 = vsub.f32 %v4290, %v4454
      %v4708 = vsub.f32 %v4291, %v4454
      %v4709 = vsub.f32 %v4292, %v4454
      %v4710 = vsub.f32 %v4293, %v4454
      %v4711 = vsub.f32 %v4294, %v4454
      %v4712 = vsub.f32 %v4295, %v4454
      %v4713 = vsub.f32 %v4296, %v4454
      %v4714 = vsub.f32 %v4297, %v4454
      %v4715 = vsub.f32 %v4298, %v4454
      %v4716 = vsub.f32 %v4299, %v4454
      %v4717 = vsub.f32 %v4300, %v4454
      %v4718 = vsub.f32 %v4301, %v4454
      %v4719 = vsub.f32 %v4302, %v4454
      %v4720 = vsub.f32 %v4303, %v4454
      %v4721 = vsub.f32 %v4304, %v4454
      %v4722 = vsub.f32 %v4305, %v4454
      %v4723 = vsub.f32 %v4306, %v4454
      %v4724 = vsub.f32 %v4307, %v4454
      %v4725 = vsub.f32 %v4308, %v4454
      %v4726 = vsub.f32 %v4309, %v4454
      %v4727 = vsub.f32 %v4310, %v4454
      %v4728 = vsub.f32 %v4311, %v4454
      %v4729 = vadd.f32 %v4663, 1e-05
      %v4730 = vadd.f32 %v4664, 1e-05
      %v4731 = vrsqrt.pop %v4729
      %v4732 = vrsqrt.pop %v4730
      %v4733 = vmul.f32 %v4665, %v4731
      %v4734 = vmul.f32 %v4666, %v4731
      %v4735 = vmul.f32 %v4667, %v4731
      %v4736 = vmul.f32 %v4668, %v4731
      %v4737 = vmul.f32 %v4669, %v4731
      %v4738 = vmul.f32 %v4670, %v4731
      %v4739 = vmul.f32 %v4671, %v4731
      %v4740 = vmul.f32 %v4672, %v4731
      %v4741 = vmul.f32 %v4673, %v4731
      %v4742 = vmul.f32 %v4674, %v4731
      %v4743 = vmul.f32 %v4675, %v4731
      %v4744 = vmul.f32 %v4676, %v4731
      %v4745 = vmul.f32 %v4677, %v4731
      %v4746 = vmul.f32 %v4678, %v4731
      %v4747 = vmul.f32 %v4679, %v4731
      %v4748 = vmul.f32 %v4680, %v4731
      %v4749 = vmul.f32 %v4681, %v4731
      %v4750 = vmul.f32 %v4682, %v4731
      %v4751 = vmul.f32 %v4683, %v4731
      %v4752 = vmul.f32 %v4684, %v4731
      %v4753 = vmul.f32 %v4685, %v4731
      %v4754 = vmul.f32 %v4686, %v4731
      %v4755 = vmul.f32 %v4687, %v4731
      %v4756 = vmul.f32 %v4688, %v4731
      %v4757 = vmul.f32 %v4689, %v4731
      %v4758 = vmul.f32 %v4690, %v4731
      %v4759 = vmul.f32 %v4691, %v4731
      %v4760 = vmul.f32 %v4692, %v4731
      %v4761 = vmul.f32 %v4693, %v4731
      %v4762 = vmul.f32 %v4694, %v4731
      %v4763 = vmul.f32 %v4695, %v4731
      %v4764 = vmul.f32 %v4696, %v4731
      %v4765 = vmul.f32 %v4697, %v4732
      %v4766 = vmul.f32 %v4698, %v4732
      %v4767 = vmul.f32 %v4699, %v4732
      %v4768 = vmul.f32 %v4700, %v4732
      %v4769 = vmul.f32 %v4701, %v4732
      %v4770 = vmul.f32 %v4702, %v4732
      %v4771 = vmul.f32 %v4703, %v4732
      %v4772 = vmul.f32 %v4704, %v4732
      %v4773 = vmul.f32 %v4705, %v4732
      %v4774 = vmul.f32 %v4706, %v4732
      %v4775 = vmul.f32 %v4707, %v4732
      %v4776 = vmul.f32 %v4708, %v4732
      %v4777 = vmul.f32 %v4709, %v4732
      %v4778 = vmul.f32 %v4710, %v4732
      %v4779 = vmul.f32 %v4711, %v4732
      %v4780 = vmul.f32 %v4712, %v4732
      %v4781 = vmul.f32 %v4713, %v4732
      %v4782 = vmul.f32 %v4714, %v4732
      %v4783 = vmul.f32 %v4715, %v4732
      %v4784 = vmul.f32 %v4716, %v4732
      %v4785 = vmul.f32 %v4717, %v4732
      %v4786 = vmul.f32 %v4718, %v4732
      %v4787 = vmul.f32 %v4719, %v4732
      %v4788 = vmul.f32 %v4720, %v4732
      %v4789 = vmul.f32 %v4721, %v4732
      %v4790 = vmul.f32 %v4722, %v4732
      %v4791 = vmul.f32 %v4723, %v4732
      %v4792 = vmul.f32 %v4724, %v4732
      %v4793 = vmul.f32 %v4725, %v4732
      %v4794 = vmul.f32 %v4726, %v4732
      %v4795 = vmul.f32 %v4727, %v4732
      %v4796 = vmul.f32 %v4728, %v4732
      %v4798 = vlaneseq
      %v4799 = vshrl.u32 %v4798, 7
      %v4800 = vsub.s32 0, %v4799
      %v4801 = vrot.slane %v4312, %v4800
      %v4803 = vmul.f32 %v4733, %v4801
      %v4804 = vmul.f32 %v4734, %v4801
      %v4805 = vmul.f32 %v4735, %v4801
      %v4806 = vmul.f32 %v4736, %v4801
      %v4807 = vmul.f32 %v4737, %v4801
      %v4808 = vmul.f32 %v4738, %v4801
      %v4809 = vmul.f32 %v4739, %v4801
      %v4810 = vmul.f32 %v4740, %v4801
      %v4811 = vmul.f32 %v4741, %v4801
      %v4812 = vmul.f32 %v4742, %v4801
      %v4813 = vmul.f32 %v4743, %v4801
      %v4814 = vmul.f32 %v4744, %v4801
      %v4815 = vmul.f32 %v4745, %v4801
      %v4816 = vmul.f32 %v4746, %v4801
      %v4817 = vmul.f32 %v4747, %v4801
      %v4818 = vmul.f32 %v4748, %v4801
      %v4819 = vmul.f32 %v4749, %v4801
      %v4820 = vmul.f32 %v4750, %v4801
      %v4821 = vmul.f32 %v4751, %v4801
      %v4822 = vmul.f32 %v4752, %v4801
      %v4823 = vmul.f32 %v4753, %v4801
      %v4824 = vmul.f32 %v4754, %v4801
      %v4825 = vmul.f32 %v4755, %v4801
      %v4826 = vmul.f32 %v4756, %v4801
      %v4827 = vmul.f32 %v4757, %v4801
      %v4828 = vmul.f32 %v4758, %v4801
      %v4829 = vmul.f32 %v4759, %v4801
      %v4830 = vmul.f32 %v4760, %v4801
      %v4831 = vmul.f32 %v4761, %v4801
      %v4832 = vmul.f32 %v4762, %v4801
      %v4833 = vmul.f32 %v4763, %v4801
      %v4834 = vmul.f32 %v4764, %v4801
      %v4835 = vmul.f32 %v4765, %v4801
      %v4836 = vmul.f32 %v4766, %v4801
      %v4837 = vmul.f32 %v4767, %v4801
      %v4838 = vmul.f32 %v4768, %v4801
      %v4839 = vmul.f32 %v4769, %v4801
      %v4840 = vmul.f32 %v4770, %v4801
      %v4841 = vmul.f32 %v4771, %v4801
      %v4842 = vmul.f32 %v4772, %v4801
      %v4843 = vmul.f32 %v4773, %v4801
      %v4844 = vmul.f32 %v4774, %v4801
      %v4845 = vmul.f32 %v4775, %v4801
      %v4846 = vmul.f32 %v4776, %v4801
      %v4847 = vmul.f32 %v4777, %v4801
      %v4848 = vmul.f32 %v4778, %v4801
      %v4849 = vmul.f32 %v4779, %v4801
      %v4850 = vmul.f32 %v4780, %v4801
      %v4851 = vmul.f32 %v4781, %v4801
      %v4852 = vmul.f32 %v4782, %v4801
      %v4853 = vmul.f32 %v4783, %v4801
      %v4854 = vmul.f32 %v4784, %v4801
      %v4855 = vmul.f32 %v4785, %v4801
      %v4856 = vmul.f32 %v4786, %v4801
      %v4857 = vmul.f32 %v4787, %v4801
      %v4858 = vmul.f32 %v4788, %v4801
      %v4859 = vmul.f32 %v4789, %v4801
      %v4860 = vmul.f32 %v4790, %v4801
      %v4861 = vmul.f32 %v4791, %v4801
      %v4862 = vmul.f32 %v4792, %v4801
      %v4863 = vmul.f32 %v4793, %v4801
      %v4864 = vmul.f32 %v4794, %v4801
      %v4865 = vmul.f32 %v4795, %v4801
      %v4866 = vmul.f32 %v4796, %v4801
      %v4868 = vlaneseq
      %v4869 = vshrl.u32 %v4868, 7
      %v4870 = vsub.s32 0, %v4869
      %v4871 = vrot.slane %v4313, %v4870
      %v4873 = vadd.f32 %v4803, %v4871
      %v4874 = vadd.f32 %v4804, %v4871
      %v4875 = vadd.f32 %v4805, %v4871
      %v4876 = vadd.f32 %v4806, %v4871
      %v4877 = vadd.f32 %v4807, %v4871
      %v4878 = vadd.f32 %v4808, %v4871
      %v4879 = vadd.f32 %v4809, %v4871
      %v4880 = vadd.f32 %v4810, %v4871
      %v4881 = vadd.f32 %v4811, %v4871
      %v4882 = vadd.f32 %v4812, %v4871
      %v4883 = vadd.f32 %v4813, %v4871
      %v4884 = vadd.f32 %v4814, %v4871
      %v4885 = vadd.f32 %v4815, %v4871
      %v4886 = vadd.f32 %v4816, %v4871
      %v4887 = vadd.f32 %v4817, %v4871
      %v4888 = vadd.f32 %v4818, %v4871
      %v4889 = vadd.f32 %v4819, %v4871
      %v4890 = vadd.f32 %v4820, %v4871
      %v4891 = vadd.f32 %v4821, %v4871
      %v4892 = vadd.f32 %v4822, %v4871
      %v4893 = vadd.f32 %v4823, %v4871
      %v4894 = vadd.f32 %v4824, %v4871
      %v4895 = vadd.f32 %v4825, %v4871
      %v4896 = vadd.f32 %v4826, %v4871
      %v4897 = vadd.f32 %v4827, %v4871
      %v4898 = vadd.f32 %v4828, %v4871
      %v4899 = vadd.f32 %v4829, %v4871
      %v4900 = vadd.f32 %v4830, %v4871
      %v4901 = vadd.f32 %v4831, %v4871
      %v4902 = vadd.f32 %v4832, %v4871
      %v4903 = vadd.f32 %v4833, %v4871
      %v4904 = vadd.f32 %v4834, %v4871
      %v4905 = vadd.f32 %v4835, %v4871
      %v4906 = vadd.f32 %v4836, %v4871
      %v4907 = vadd.f32 %v4837, %v4871
      %v4908 = vadd.f32 %v4838, %v4871
      %v4909 = vadd.f32 %v4839, %v4871
      %v4910 = vadd.f32 %v4840, %v4871
      %v4911 = vadd.f32 %v4841, %v4871
      %v4912 = vadd.f32 %v4842, %v4871
      %v4913 = vadd.f32 %v4843, %v4871
      %v4914 = vadd.f32 %v4844, %v4871
      %v4915 = vadd.f32 %v4845, %v4871
      %v4916 = vadd.f32 %v4846, %v4871
      %v4917 = vadd.f32 %v4847, %v4871
      %v4918 = vadd.f32 %v4848, %v4871
      %v4919 = vadd.f32 %v4849, %v4871
      %v4920 = vadd.f32 %v4850, %v4871
      %v4921 = vadd.f32 %v4851, %v4871
      %v4922 = vadd.f32 %v4852, %v4871
      %v4923 = vadd.f32 %v4853, %v4871
      %v4924 = vadd.f32 %v4854, %v4871
      %v4925 = vadd.f32 %v4855, %v4871
      %v4926 = vadd.f32 %v4856, %v4871
      %v4927 = vadd.f32 %v4857, %v4871
      %v4928 = vadd.f32 %v4858, %v4871
      %v4929 = vadd.f32 %v4859, %v4871
      %v4930 = vadd.f32 %v4860, %v4871
      %v4931 = vadd.f32 %v4861, %v4871
      %v4932 = vadd.f32 %v4862, %v4871
      %v4933 = vadd.f32 %v4863, %v4871
      %v4934 = vadd.f32 %v4864, %v4871
      %v4935 = vadd.f32 %v4865, %v4871
      %v4936 = vadd.f32 %v4866, %v4871
      %v4937 = vlaneseq
      %v4938 = vand.u32 %v4937, 127
      %vm4939 = vcmp.lt.s32.totalorder %v4938, 8
      %v4940 = vsel %vm4939, 1, 0
      %vm4941 = vcmp.eq.s32.totalorder %v4940, 1
      %v4942 = vsel %vm4941, %v4873, %v4248
      %v4943 = vsel %vm4941, %v4874, %v4249
      %v4944 = vsel %vm4941, %v4875, %v4250
      %v4945 = vsel %vm4941, %v4876, %v4251
      %v4946 = vsel %vm4941, %v4877, %v4252
      %v4947 = vsel %vm4941, %v4878, %v4253
      %v4948 = vsel %vm4941, %v4879, %v4254
      %v4949 = vsel %vm4941, %v4880, %v4255
      %v4950 = vsel %vm4941, %v4881, %v4256
      %v4951 = vsel %vm4941, %v4882, %v4257
      %v4952 = vsel %vm4941, %v4883, %v4258
      %v4953 = vsel %vm4941, %v4884, %v4259
      %v4954 = vsel %vm4941, %v4885, %v4260
      %v4955 = vsel %vm4941, %v4886, %v4261
      %v4956 = vsel %vm4941, %v4887, %v4262
      %v4957 = vsel %vm4941, %v4888, %v4263
      %v4958 = vsel %vm4941, %v4889, %v4264
      %v4959 = vsel %vm4941, %v4890, %v4265
      %v4960 = vsel %vm4941, %v4891, %v4266
      %v4961 = vsel %vm4941, %v4892, %v4267
      %v4962 = vsel %vm4941, %v4893, %v4268
      %v4963 = vsel %vm4941, %v4894, %v4269
      %v4964 = vsel %vm4941, %v4895, %v4270
      %v4965 = vsel %vm4941, %v4896, %v4271
      %v4966 = vsel %vm4941, %v4897, %v4272
      %v4967 = vsel %vm4941, %v4898, %v4273
      %v4968 = vsel %vm4941, %v4899, %v4274
      %v4969 = vsel %vm4941, %v4900, %v4275
      %v4970 = vsel %vm4941, %v4901, %v4276
      %v4971 = vsel %vm4941, %v4902, %v4277
      %v4972 = vsel %vm4941, %v4903, %v4278
      %v4973 = vsel %vm4941, %v4904, %v4279
      %v4974 = vsel %vm4941, %v4905, %v4280
      %v4975 = vsel %vm4941, %v4906, %v4281
      %v4976 = vsel %vm4941, %v4907, %v4282
      %v4977 = vsel %vm4941, %v4908, %v4283
      %v4978 = vsel %vm4941, %v4909, %v4284
      %v4979 = vsel %vm4941, %v4910, %v4285
      %v4980 = vsel %vm4941, %v4911, %v4286
      %v4981 = vsel %vm4941, %v4912, %v4287
      %v4982 = vsel %vm4941, %v4913, %v4288
      %v4983 = vsel %vm4941, %v4914, %v4289
      %v4984 = vsel %vm4941, %v4915, %v4290
      %v4985 = vsel %vm4941, %v4916, %v4291
      %v4986 = vsel %vm4941, %v4917, %v4292
      %v4987 = vsel %vm4941, %v4918, %v4293
      %v4988 = vsel %vm4941, %v4919, %v4294
      %v4989 = vsel %vm4941, %v4920, %v4295
      %v4990 = vsel %vm4941, %v4921, %v4296
      %v4991 = vsel %vm4941, %v4922, %v4297
      %v4992 = vsel %vm4941, %v4923, %v4298
      %v4993 = vsel %vm4941, %v4924, %v4299
      %v4994 = vsel %vm4941, %v4925, %v4300
      %v4995 = vsel %vm4941, %v4926, %v4301
      %v4996 = vsel %vm4941, %v4927, %v4302
      %v4997 = vsel %vm4941, %v4928, %v4303
      %v4998 = vsel %vm4941, %v4929, %v4304
      %v4999 = vsel %vm4941, %v4930, %v4305
      %v5000 = vsel %vm4941, %v4931, %v4306
      %v5001 = vsel %vm4941, %v4932, %v4307
      %v5002 = vsel %vm4941, %v4933, %v4308
      %v5003 = vsel %vm4941, %v4934, %v4309
      %v5004 = vsel %vm4941, %v4935, %v4310
      %v5005 = vsel %vm4941, %v4936, %v4311
      %v5006 = vmul.f32 %v4942, 0.2
      %v5007 = vmul.f32 %v4943, 0.2
      %v5008 = vmul.f32 %v4944, 0.2
      %v5009 = vmul.f32 %v4945, 0.2
      %v5010 = vmul.f32 %v4946, 0.2
      %v5011 = vmul.f32 %v4947, 0.2
      %v5012 = vmul.f32 %v4948, 0.2
      %v5013 = vmul.f32 %v4949, 0.2
      %v5014 = vmul.f32 %v4950, 0.2
      %v5015 = vmul.f32 %v4951, 0.2
      %v5016 = vmul.f32 %v4952, 0.2
      %v5017 = vmul.f32 %v4953, 0.2
      %v5018 = vmul.f32 %v4954, 0.2
      %v5019 = vmul.f32 %v4955, 0.2
      %v5020 = vmul.f32 %v4956, 0.2
      %v5021 = vmul.f32 %v4957, 0.2
      %v5022 = vmul.f32 %v4958, 0.2
      %v5023 = vmul.f32 %v4959, 0.2
      %v5024 = vmul.f32 %v4960, 0.2
      %v5025 = vmul.f32 %v4961, 0.2
      %v5026 = vmul.f32 %v4962, 0.2
      %v5027 = vmul.f32 %v4963, 0.2
      %v5028 = vmul.f32 %v4964, 0.2
      %v5029 = vmul.f32 %v4965, 0.2
      %v5030 = vmul.f32 %v4966, 0.2
      %v5031 = vmul.f32 %v4967, 0.2
      %v5032 = vmul.f32 %v4968, 0.2
      %v5033 = vmul.f32 %v4969, 0.2
      %v5034 = vmul.f32 %v4970, 0.2
      %v5035 = vmul.f32 %v4971, 0.2
      %v5036 = vmul.f32 %v4972, 0.2
      %v5037 = vmul.f32 %v4973, 0.2
      %v5038 = vmul.f32 %v4974, 0.2
      %v5039 = vmul.f32 %v4975, 0.2
      %v5040 = vmul.f32 %v4976, 0.2
      %v5041 = vmul.f32 %v4977, 0.2
      %v5042 = vmul.f32 %v4978, 0.2
      %v5043 = vmul.f32 %v4979, 0.2
      %v5044 = vmul.f32 %v4980, 0.2
      %v5045 = vmul.f32 %v4981, 0.2
      %v5046 = vmul.f32 %v4982, 0.2
      %v5047 = vmul.f32 %v4983, 0.2
      %v5048 = vmul.f32 %v4984, 0.2
      %v5049 = vmul.f32 %v4985, 0.2
      %v5050 = vmul.f32 %v4986, 0.2
      %v5051 = vmul.f32 %v4987, 0.2
      %v5052 = vmul.f32 %v4988, 0.2
      %v5053 = vmul.f32 %v4989, 0.2
      %v5054 = vmul.f32 %v4990, 0.2
      %v5055 = vmul.f32 %v4991, 0.2
      %v5056 = vmul.f32 %v4992, 0.2
      %v5057 = vmul.f32 %v4993, 0.2
      %v5058 = vmul.f32 %v4994, 0.2
      %v5059 = vmul.f32 %v4995, 0.2
      %v5060 = vmul.f32 %v4996, 0.2
      %v5061 = vmul.f32 %v4997, 0.2
      %v5062 = vmul.f32 %v4998, 0.2
      %v5063 = vmul.f32 %v4999, 0.2
      %v5064 = vmul.f32 %v5000, 0.2
      %v5065 = vmul.f32 %v5001, 0.2
      %v5066 = vmul.f32 %v5002, 0.2
      %v5067 = vmul.f32 %v5003, 0.2
      %v5068 = vmul.f32 %v5004, 0.2
      %v5069 = vmul.f32 %v5005, 0.2
      %v5070 = vmax.f32 %v4942, %v5006
      %v5071 = vmax.f32 %v4943, %v5007
      %v5072 = vmax.f32 %v4944, %v5008
      %v5073 = vmax.f32 %v4945, %v5009
      %v5074 = vmax.f32 %v4946, %v5010
      %v5075 = vmax.f32 %v4947, %v5011
      %v5076 = vmax.f32 %v4948, %v5012
      %v5077 = vmax.f32 %v4949, %v5013
      %v5078 = vmax.f32 %v4950, %v5014
      %v5079 = vmax.f32 %v4951, %v5015
      %v5080 = vmax.f32 %v4952, %v5016
      %v5081 = vmax.f32 %v4953, %v5017
      %v5082 = vmax.f32 %v4954, %v5018
      %v5083 = vmax.f32 %v4955, %v5019
      %v5084 = vmax.f32 %v4956, %v5020
      %v5085 = vmax.f32 %v4957, %v5021
      %v5086 = vmax.f32 %v4958, %v5022
      %v5087 = vmax.f32 %v4959, %v5023
      %v5088 = vmax.f32 %v4960, %v5024
      %v5089 = vmax.f32 %v4961, %v5025
      %v5090 = vmax.f32 %v4962, %v5026
      %v5091 = vmax.f32 %v4963, %v5027
      %v5092 = vmax.f32 %v4964, %v5028
      %v5093 = vmax.f32 %v4965, %v5029
      %v5094 = vmax.f32 %v4966, %v5030
      %v5095 = vmax.f32 %v4967, %v5031
      %v5096 = vmax.f32 %v4968, %v5032
      %v5097 = vmax.f32 %v4969, %v5033
      %v5098 = vmax.f32 %v4970, %v5034
      %v5099 = vmax.f32 %v4971, %v5035
      %v5100 = vmax.f32 %v4972, %v5036
      %v5101 = vmax.f32 %v4973, %v5037
      %v5102 = vmax.f32 %v4974, %v5038
      %v5103 = vmax.f32 %v4975, %v5039
      %v5104 = vmax.f32 %v4976, %v5040
      %v5105 = vmax.f32 %v4977, %v5041
      %v5106 = vmax.f32 %v4978, %v5042
      %v5107 = vmax.f32 %v4979, %v5043
      %v5108 = vmax.f32 %v4980, %v5044
      %v5109 = vmax.f32 %v4981, %v5045
      %v5110 = vmax.f32 %v4982, %v5046
      %v5111 = vmax.f32 %v4983, %v5047
      %v5112 = vmax.f32 %v4984, %v5048
      %v5113 = vmax.f32 %v4985, %v5049
      %v5114 = vmax.f32 %v4986, %v5050
      %v5115 = vmax.f32 %v4987, %v5051
      %v5116 = vmax.f32 %v4988, %v5052
      %v5117 = vmax.f32 %v4989, %v5053
      %v5118 = vmax.f32 %v4990, %v5054
      %v5119 = vmax.f32 %v4991, %v5055
      %v5120 = vmax.f32 %v4992, %v5056
      %v5121 = vmax.f32 %v4993, %v5057
      %v5122 = vmax.f32 %v4994, %v5058
      %v5123 = vmax.f32 %v4995, %v5059
      %v5124 = vmax.f32 %v4996, %v5060
      %v5125 = vmax.f32 %v4997, %v5061
      %v5126 = vmax.f32 %v4998, %v5062
      %v5127 = vmax.f32 %v4999, %v5063
      %v5128 = vmax.f32 %v5000, %v5064
      %v5129 = vmax.f32 %v5001, %v5065
      %v5130 = vmax.f32 %v5002, %v5066
      %v5131 = vmax.f32 %v5003, %v5067
      %v5132 = vmax.f32 %v5004, %v5068
      %v5133 = vmax.f32 %v5005, %v5069
      %v5134 = vpack.c.bf16 %v5071, %v5070
      %v5135 = vpack.c.bf16 %v5073, %v5072
      %v5136 = vpack.c.bf16 %v5075, %v5074
      %v5137 = vpack.c.bf16 %v5077, %v5076
      %v5138 = vpack.c.bf16 %v5079, %v5078
      %v5139 = vpack.c.bf16 %v5081, %v5080
      %v5140 = vpack.c.bf16 %v5083, %v5082
      %v5141 = vpack.c.bf16 %v5085, %v5084
      %v5142 = vpack.c.bf16 %v5087, %v5086
      %v5143 = vpack.c.bf16 %v5089, %v5088
      %v5144 = vpack.c.bf16 %v5091, %v5090
      %v5145 = vpack.c.bf16 %v5093, %v5092
      %v5146 = vpack.c.bf16 %v5095, %v5094
      %v5147 = vpack.c.bf16 %v5097, %v5096
      %v5148 = vpack.c.bf16 %v5099, %v5098
      %v5149 = vpack.c.bf16 %v5101, %v5100
      %v5150 = vpack.c.bf16 %v5103, %v5102
      %v5151 = vpack.c.bf16 %v5105, %v5104
      %v5152 = vpack.c.bf16 %v5107, %v5106
      %v5153 = vpack.c.bf16 %v5109, %v5108
      %v5154 = vpack.c.bf16 %v5111, %v5110
      %v5155 = vpack.c.bf16 %v5113, %v5112
      %v5156 = vpack.c.bf16 %v5115, %v5114
      %v5157 = vpack.c.bf16 %v5117, %v5116
      %v5158 = vpack.c.bf16 %v5119, %v5118
      %v5159 = vpack.c.bf16 %v5121, %v5120
      %v5160 = vpack.c.bf16 %v5123, %v5122
      %v5161 = vpack.c.bf16 %v5125, %v5124
      %v5162 = vpack.c.bf16 %v5127, %v5126
      %v5163 = vpack.c.bf16 %v5129, %v5128
      %v5164 = vpack.c.bf16 %v5131, %v5130
      %v5165 = vpack.c.bf16 %v5133, %v5132
      %v5198 = vunpack.c.l.b16 %v5134
      %v5199 = vunpack.c.h.b16 %v5134
      %v5200 = vunpack.c.l.b16 %v5135
      %v5201 = vunpack.c.h.b16 %v5135
      %v5202 = vunpack.c.l.b16 %v5136
      %v5203 = vunpack.c.h.b16 %v5136
      %v5204 = vunpack.c.l.b16 %v5137
      %v5205 = vunpack.c.h.b16 %v5137
      %v5206 = vunpack.c.l.b16 %v5138
      %v5207 = vunpack.c.h.b16 %v5138
      %v5208 = vunpack.c.l.b16 %v5139
      %v5209 = vunpack.c.h.b16 %v5139
      %v5210 = vunpack.c.l.b16 %v5140
      %v5211 = vunpack.c.h.b16 %v5140
      %v5212 = vunpack.c.l.b16 %v5141
      %v5213 = vunpack.c.h.b16 %v5141
      %v5214 = vunpack.c.l.b16 %v5142
      %v5215 = vunpack.c.h.b16 %v5142
      %v5216 = vunpack.c.l.b16 %v5143
      %v5217 = vunpack.c.h.b16 %v5143
      %v5218 = vunpack.c.l.b16 %v5144
      %v5219 = vunpack.c.h.b16 %v5144
      %v5220 = vunpack.c.l.b16 %v5145
      %v5221 = vunpack.c.h.b16 %v5145
      %v5222 = vunpack.c.l.b16 %v5146
      %v5223 = vunpack.c.h.b16 %v5146
      %v5224 = vunpack.c.l.b16 %v5147
      %v5225 = vunpack.c.h.b16 %v5147
      %v5226 = vunpack.c.l.b16 %v5148
      %v5227 = vunpack.c.h.b16 %v5148
      %v5228 = vunpack.c.l.b16 %v5149
      %v5229 = vunpack.c.h.b16 %v5149
      %v5230 = vunpack.c.l.b16 %v5150
      %v5231 = vunpack.c.h.b16 %v5150
      %v5232 = vunpack.c.l.b16 %v5151
      %v5233 = vunpack.c.h.b16 %v5151
      %v5234 = vunpack.c.l.b16 %v5152
      %v5235 = vunpack.c.h.b16 %v5152
      %v5236 = vunpack.c.l.b16 %v5153
      %v5237 = vunpack.c.h.b16 %v5153
      %v5238 = vunpack.c.l.b16 %v5154
      %v5239 = vunpack.c.h.b16 %v5154
      %v5240 = vunpack.c.l.b16 %v5155
      %v5241 = vunpack.c.h.b16 %v5155
      %v5242 = vunpack.c.l.b16 %v5156
      %v5243 = vunpack.c.h.b16 %v5156
      %v5244 = vunpack.c.l.b16 %v5157
      %v5245 = vunpack.c.h.b16 %v5157
      %v5246 = vunpack.c.l.b16 %v5158
      %v5247 = vunpack.c.h.b16 %v5158
      %v5248 = vunpack.c.l.b16 %v5159
      %v5249 = vunpack.c.h.b16 %v5159
      %v5250 = vunpack.c.l.b16 %v5160
      %v5251 = vunpack.c.h.b16 %v5160
      %v5252 = vunpack.c.l.b16 %v5161
      %v5253 = vunpack.c.h.b16 %v5161
      %v5254 = vunpack.c.l.b16 %v5162
      %v5255 = vunpack.c.h.b16 %v5162
      %v5256 = vunpack.c.l.b16 %v5163
      %v5257 = vunpack.c.h.b16 %v5163
      %v5258 = vunpack.c.l.b16 %v5164
      %v5259 = vunpack.c.h.b16 %v5164
      %v5260 = vunpack.c.l.b16 %v5165
      %v5261 = vunpack.c.h.b16 %v5165
      %v5262 = vpack.c.b16 %v5198, %v5198
      %v5263 = vpack.c.b16 %v5199, %v5199
      %v5264 = vpack.c.b16 %v5200, %v5200
      %v5265 = vpack.c.b16 %v5201, %v5201
      %v5266 = vpack.c.b16 %v5202, %v5202
      %v5267 = vpack.c.b16 %v5203, %v5203
      %v5268 = vpack.c.b16 %v5204, %v5204
      %v5269 = vpack.c.b16 %v5205, %v5205
      %v5270 = vpack.c.b16 %v5206, %v5206
      %v5271 = vpack.c.b16 %v5207, %v5207
      %v5272 = vpack.c.b16 %v5208, %v5208
      %v5273 = vpack.c.b16 %v5209, %v5209
      %v5274 = vpack.c.b16 %v5210, %v5210
      %v5275 = vpack.c.b16 %v5211, %v5211
      %v5276 = vpack.c.b16 %v5212, %v5212
      %v5277 = vpack.c.b16 %v5213, %v5213
      %v5278 = vpack.c.b16 %v5214, %v5214
      %v5279 = vpack.c.b16 %v5215, %v5215
      %v5280 = vpack.c.b16 %v5216, %v5216
      %v5281 = vpack.c.b16 %v5217, %v5217
      %v5282 = vpack.c.b16 %v5218, %v5218
      %v5283 = vpack.c.b16 %v5219, %v5219
      %v5284 = vpack.c.b16 %v5220, %v5220
      %v5285 = vpack.c.b16 %v5221, %v5221
      %v5286 = vpack.c.b16 %v5222, %v5222
      %v5287 = vpack.c.b16 %v5223, %v5223
      %v5288 = vpack.c.b16 %v5224, %v5224
      %v5289 = vpack.c.b16 %v5225, %v5225
      %v5290 = vpack.c.b16 %v5226, %v5226
      %v5291 = vpack.c.b16 %v5227, %v5227
      %v5292 = vpack.c.b16 %v5228, %v5228
      %v5293 = vpack.c.b16 %v5229, %v5229
      %v5294 = vpack.c.b16 %v5230, %v5230
      %v5295 = vpack.c.b16 %v5231, %v5231
      %v5296 = vpack.c.b16 %v5232, %v5232
      %v5297 = vpack.c.b16 %v5233, %v5233
      %v5298 = vpack.c.b16 %v5234, %v5234
      %v5299 = vpack.c.b16 %v5235, %v5235
      %v5300 = vpack.c.b16 %v5236, %v5236
      %v5301 = vpack.c.b16 %v5237, %v5237
      %v5302 = vpack.c.b16 %v5238, %v5238
      %v5303 = vpack.c.b16 %v5239, %v5239
      %v5304 = vpack.c.b16 %v5240, %v5240
      %v5305 = vpack.c.b16 %v5241, %v5241
      %v5306 = vpack.c.b16 %v5242, %v5242
      %v5307 = vpack.c.b16 %v5243, %v5243
      %v5308 = vpack.c.b16 %v5244, %v5244
      %v5309 = vpack.c.b16 %v5245, %v5245
      %v5310 = vpack.c.b16 %v5246, %v5246
      %v5311 = vpack.c.b16 %v5247, %v5247
      %v5312 = vpack.c.b16 %v5248, %v5248
      %v5313 = vpack.c.b16 %v5249, %v5249
      %v5314 = vpack.c.b16 %v5250, %v5250
      %v5315 = vpack.c.b16 %v5251, %v5251
      %v5316 = vpack.c.b16 %v5252, %v5252
      %v5317 = vpack.c.b16 %v5253, %v5253
      %v5318 = vpack.c.b16 %v5254, %v5254
      %v5319 = vpack.c.b16 %v5255, %v5255
      %v5320 = vpack.c.b16 %v5256, %v5256
      %v5321 = vpack.c.b16 %v5257, %v5257
      %v5322 = vpack.c.b16 %v5258, %v5258
      %v5323 = vpack.c.b16 %v5259, %v5259
      %v5324 = vpack.c.b16 %v5260, %v5260
      %v5325 = vpack.c.b16 %v5261, %v5261
      %vm5390 = vcmask 125952
      %5391 = vst.msk [vmem:[%s204] sm:$0xf] %vm5390, %v5262
      %5392 = vst.msk [vmem:[%s204 + $0x4] sm:$0xf] %vm5390, %v5263
      %5393 = vst.msk [vmem:[%s204 + $0x8] sm:$0xf] %vm5390, %v5264
      %5394 = vst.msk [vmem:[%s204 + $0xc] sm:$0xf] %vm5390, %v5265
      %5395 = vst.msk [vmem:[%s204 + $0x10] sm:$0xf] %vm5390, %v5266
      %5396 = vst.msk [vmem:[%s204 + $0x14] sm:$0xf] %vm5390, %v5267
      %5397 = vst.msk [vmem:[%s204 + $0x18] sm:$0xf] %vm5390, %v5268
      %5398 = vst.msk [vmem:[%s204 + $0x1c] sm:$0xf] %vm5390, %v5269
      %5399 = vst.msk [vmem:[%s204 + $0x20] sm:$0xf] %vm5390, %v5270
      %5400 = vst.msk [vmem:[%s204 + $0x24] sm:$0xf] %vm5390, %v5271
      %5401 = vst.msk [vmem:[%s204 + $0x28] sm:$0xf] %vm5390, %v5272
      %5402 = vst.msk [vmem:[%s204 + $0x2c] sm:$0xf] %vm5390, %v5273
      %5403 = vst.msk [vmem:[%s204 + $0x30] sm:$0xf] %vm5390, %v5274
      %5404 = vst.msk [vmem:[%s204 + $0x34] sm:$0xf] %vm5390, %v5275
      %5405 = vst.msk [vmem:[%s204 + $0x38] sm:$0xf] %vm5390, %v5276
      %5406 = vst.msk [vmem:[%s204 + $0x3c] sm:$0xf] %vm5390, %v5277
      %5407 = vst.msk [vmem:[%s204 + $0x40] sm:$0xf] %vm5390, %v5278
      %5408 = vst.msk [vmem:[%s204 + $0x44] sm:$0xf] %vm5390, %v5279
      %5409 = vst.msk [vmem:[%s204 + $0x48] sm:$0xf] %vm5390, %v5280
      %5410 = vst.msk [vmem:[%s204 + $0x4c] sm:$0xf] %vm5390, %v5281
      %5411 = vst.msk [vmem:[%s204 + $0x50] sm:$0xf] %vm5390, %v5282
      %5412 = vst.msk [vmem:[%s204 + $0x54] sm:$0xf] %vm5390, %v5283
      %5413 = vst.msk [vmem:[%s204 + $0x58] sm:$0xf] %vm5390, %v5284
      %5414 = vst.msk [vmem:[%s204 + $0x5c] sm:$0xf] %vm5390, %v5285
      %5415 = vst.msk [vmem:[%s204 + $0x60] sm:$0xf] %vm5390, %v5286
      %5416 = vst.msk [vmem:[%s204 + $0x64] sm:$0xf] %vm5390, %v5287
      %5417 = vst.msk [vmem:[%s204 + $0x68] sm:$0xf] %vm5390, %v5288
      %5418 = vst.msk [vmem:[%s204 + $0x6c] sm:$0xf] %vm5390, %v5289
      %5419 = vst.msk [vmem:[%s204 + $0x70] sm:$0xf] %vm5390, %v5290
      %5420 = vst.msk [vmem:[%s204 + $0x74] sm:$0xf] %vm5390, %v5291
      %5421 = vst.msk [vmem:[%s204 + $0x78] sm:$0xf] %vm5390, %v5292
      %5422 = vst.msk [vmem:[%s204 + $0x7c] sm:$0xf] %vm5390, %v5293
      %5423 = vst.msk [vmem:[%s204 + $0x80] sm:$0xf] %vm5390, %v5294
      %5424 = vst.msk [vmem:[%s204 + $0x84] sm:$0xf] %vm5390, %v5295
      %5425 = vst.msk [vmem:[%s204 + $0x88] sm:$0xf] %vm5390, %v5296
      %5426 = vst.msk [vmem:[%s204 + $0x8c] sm:$0xf] %vm5390, %v5297
      %5427 = vst.msk [vmem:[%s204 + $0x90] sm:$0xf] %vm5390, %v5298
      %5428 = vst.msk [vmem:[%s204 + $0x94] sm:$0xf] %vm5390, %v5299
      %5429 = vst.msk [vmem:[%s204 + $0x98] sm:$0xf] %vm5390, %v5300
      %5430 = vst.msk [vmem:[%s204 + $0x9c] sm:$0xf] %vm5390, %v5301
      %5431 = vst.msk [vmem:[%s204 + $0xa0] sm:$0xf] %vm5390, %v5302
      %5432 = vst.msk [vmem:[%s204 + $0xa4] sm:$0xf] %vm5390, %v5303
      %5433 = vst.msk [vmem:[%s204 + $0xa8] sm:$0xf] %vm5390, %v5304
      %5434 = vst.msk [vmem:[%s204 + $0xac] sm:$0xf] %vm5390, %v5305
      %5435 = vst.msk [vmem:[%s204 + $0xb0] sm:$0xf] %vm5390, %v5306
      %5436 = vst.msk [vmem:[%s204 + $0xb4] sm:$0xf] %vm5390, %v5307
      %5437 = vst.msk [vmem:[%s204 + $0xb8] sm:$0xf] %vm5390, %v5308
      %5438 = vst.msk [vmem:[%s204 + $0xbc] sm:$0xf] %vm5390, %v5309
      %5439 = vst.msk [vmem:[%s204 + $0xc0] sm:$0xf] %vm5390, %v5310
      %5440 = vst.msk [vmem:[%s204 + $0xc4] sm:$0xf] %vm5390, %v5311
      %5441 = vst.msk [vmem:[%s204 + $0xc8] sm:$0xf] %vm5390, %v5312
      %5442 = vst.msk [vmem:[%s204 + $0xcc] sm:$0xf] %vm5390, %v5313
      %5443 = vst.msk [vmem:[%s204 + $0xd0] sm:$0xf] %vm5390, %v5314
      %5444 = vst.msk [vmem:[%s204 + $0xd4] sm:$0xf] %vm5390, %v5315
      %5445 = vst.msk [vmem:[%s204 + $0xd8] sm:$0xf] %vm5390, %v5316
      %5446 = vst.msk [vmem:[%s204 + $0xdc] sm:$0xf] %vm5390, %v5317
      %5447 = vst.msk [vmem:[%s204 + $0xe0] sm:$0xf] %vm5390, %v5318
      %5448 = vst.msk [vmem:[%s204 + $0xe4] sm:$0xf] %vm5390, %v5319
      %5449 = vst.msk [vmem:[%s204 + $0xe8] sm:$0xf] %vm5390, %v5320
      %5450 = vst.msk [vmem:[%s204 + $0xec] sm:$0xf] %vm5390, %v5321
      %5451 = vst.msk [vmem:[%s204 + $0xf0] sm:$0xf] %vm5390, %v5322
      %5452 = vst.msk [vmem:[%s204 + $0xf4] sm:$0xf] %vm5390, %v5323
      %5453 = vst.msk [vmem:[%s204 + $0xf8] sm:$0xf] %vm5390, %v5324
      %5454 = vst.msk [vmem:[%s204 + $0xfc] sm:$0xf] %vm5390, %v5325
      %s5455 = smul.u32 2, %s15
      %p5456 = scmp.lt.s32.totalorder %s5455, 3
      %s5457 = scalar_select %p5456, %s5455, 3
      %s5458 = smul.addr %s5457, 32
      %s5459 = smul.addr %s5458, 4
      %s5460 = scalar_lea.vmem %s4, %s5459
      // Predicated region
      $region37: #{encoder_forward.3} parent=35 // pred_check
        %p5461 = pneg %p122
      $region38: #{encoder_forward.3} parent=35 // pred_check_branch
        %5463 = sbr.rel (%p5461) target = $region40
      $region39: #{encoder_forward.3} parent=35 // pred_region
        %s5464 = smul.u32 2, %s15
      $region40: #{encoder_forward.3} parent=35 // pred_fallthru
        _
    $region36: #{encoder_forward.3} parent=5 // pred_fallthru
      _
    %p5465 = scmp.le.s32.totalorder 2, %s10
    // Predicated region
    $region41: #{encoder_forward.3} parent=5 // pred_check
      %p5466 = pneg %p5465
    $region42: #{encoder_forward.3} parent=5 // pred_check_branch
      %5468 = sbr.rel (%p5466) target = $region44
    $region43: #{encoder_forward.3} parent=5 // pred_region
      %s5469 = ssub.s32 %s10, 2
      // Predicated region
      $region45: #{encoder_forward.3} parent=43 // pred_check
        %p5470 = pneg %p128
      $region46: #{encoder_forward.3} parent=43 // pred_check_branch
        %5472 = sbr.rel (%p5470) target = $region48
      $region47: #{encoder_forward.3} parent=43 // pred_region
        %s5473 = smul.u32 2, %s16
        %p5474 = scmp.lt.s32.totalorder %s5473, 3
        %s5475 = scalar_select %p5474, %s5473, 3
        %s5476 = smul.addr %s5475, 32
        %s5477 = smul.addr %s5476, 4
        %s5478 = scalar_lea.vmem %s4, %s5477
      $region48: #{encoder_forward.3} parent=43 // pred_fallthru
        _
    $region44: #{encoder_forward.3} parent=5 // pred_fallthru
      _
  $region6: #{encoder_forward.3} parent=0 // loop_footer
    %s14 = sadd.s32 1, %s10
  $region7: #{encoder_forward.3} parent=0 // loop_footer_branch
    %9 = sbr.rel target = $region3
  $region8: #{encoder_forward.3} parent=0 // loop_exit
    _

// kernel: encoder_forward.4
$region0: #{encoder_forward.4}
  #allocation0 [shape = 'u32[]', space=smem, size = 0x4, offset = 0x4, fixed_abs, tag = 'smem constant byte address 0x4 - core index']
  #allocation1 [shape = 'u32[144,128]{1,0:T(1,128)}', space=vmem, size = 0x12000, scoped, tag = 'internal scratch']
  %s0 = inlined_call_operand.vmem [shape: bf16[4,9,9,64], index: 0, kind: input, shape index: {}]
  %s1 = inlined_call_operand.vmem [shape: bf16[4,64,32], index: 1, kind: input, shape index: {}]
  %s2 = inlined_call_operand.vmem [shape: f32[1,1,32], index: 2, kind: input, shape index: {}]
  %s3 = inlined_call_operand.vmem [shape: f32[1,1,32], index: 3, kind: input, shape index: {}]
  %s4 = inlined_call_operand.vmem [shape: bf16[4,8,8,32], index: 4, kind: output, shape index: {}]
  %s5 = sld [smem:[#allocation0]]
  $region49: #{encoder_forward.4} parent=0
    _
  %s7 = ssub.s32 1, %s5
  %s8 = scalar_select 0, %s7, %s5
  loop: start=0, step=1, limit=4
  $region2: #{encoder_forward.4} parent=0 // loop_pre_header
    _
  $region3: #{encoder_forward.4} parent=0 // loop_header
    %s10 = sphi 0, %s14
    %p11 = scmp.ge.s32.totalorder %s10, 4
    %s20 = sphi 0, %s22
    %s23 = sphi 0, %s20
    %s24 = sphi 0, %s23
    %s40 = sphi 0, %s24
    %s44 = sphi 0, %s44
    %s46 = sphi 0, %s44
    %s47 = sphi 0, %s46
    %s61 = sphi 0, %s47
    %s65 = sphi 0, %s65
    %s67 = sphi 0, %s65
    %s68 = sphi 0, %s67
    %s82 = sphi 0, %s68
    %s86 = sphi 0, %s86
    %s88 = sphi 0, %s86
    %s89 = sphi 0, %s88
    %s103 = sphi 0, %s89
    %s109 = sphi 0, %s111
    %s112 = sphi 0, %s109
    %s113 = sphi 0, %s112
    %s129 = sphi 0, %s113
  $region4: #{encoder_forward.4} parent=0 // loop_header_branch
    %13 = sbr.rel (%p11) target = $region8
  $region5: #{encoder_forward.4} parent=0 // loop_body
    %s15 = ssub.s32 %s10, 1
    %s16 = ssub.s32 %s10, 2
    %s17 = sadd.s32 %s10, 1
    %s18 = ssub.s32 %s10, %s17
    %p19 = scmp.eq.s32.totalorder %s18, 0
    %s21 = sadd.s32 %s20, 1
    %s22 = scalar_select %p19, %s20, %s21
    %p25 = pneg %p19
    %p26 = scmp.eq.s32.totalorder %s10, 1
    %p27 = por %p25, %p26
    %p28 = scmp.ne.s32.totalorder %s20, %s23
    %p29 = scmp.eq.s32.totalorder %s10, 0
    %p30 = por %p28, %p29
    %p31 = scmp.ne.s32.totalorder %s20, %s23
    %p32 = scmp.eq.s32.totalorder %s15, 1
    %p33 = por %p31, %p32
    %p34 = scmp.ne.s32.totalorder %s23, %s24
    %p35 = scmp.eq.s32.totalorder %s15, 0
    %p36 = por %p34, %p35
    %p37 = scmp.ne.s32.totalorder %s23, %s24
    %p38 = scmp.eq.s32.totalorder %s16, 1
    %p39 = por %p37, %p38
    %p41 = scmp.ne.s32.totalorder %s24, %s40
    %p42 = scmp.eq.s32.totalorder %s16, 0
    %p43 = por %p41, %p42
    %s45 = sadd.s32 %s44, 1
    %p48 = scmp.eq.s32.totalorder %s10, 1
    %p49 = scmp.ne.s32.totalorder %s44, %s46
    %p50 = scmp.eq.s32.totalorder %s10, 0
    %p51 = por %p49, %p50
    %p52 = scmp.ne.s32.totalorder %s44, %s46
    %p53 = scmp.eq.s32.totalorder %s15, 1
    %p54 = por %p52, %p53
    %p55 = scmp.ne.s32.totalorder %s46, %s47
    %p56 = scmp.eq.s32.totalorder %s15, 0
    %p57 = por %p55, %p56
    %p58 = scmp.ne.s32.totalorder %s46, %s47
    %p59 = scmp.eq.s32.totalorder %s16, 1
    %p60 = por %p58, %p59
    %p62 = scmp.ne.s32.totalorder %s47, %s61
    %p63 = scmp.eq.s32.totalorder %s16, 0
    %p64 = por %p62, %p63
    %s66 = sadd.s32 %s65, 1
    %p69 = scmp.eq.s32.totalorder %s10, 1
    %p70 = scmp.ne.s32.totalorder %s65, %s67
    %p71 = scmp.eq.s32.totalorder %s10, 0
    %p72 = por %p70, %p71
    %p73 = scmp.ne.s32.totalorder %s65, %s67
    %p74 = scmp.eq.s32.totalorder %s15, 1
    %p75 = por %p73, %p74
    %p76 = scmp.ne.s32.totalorder %s67, %s68
    %p77 = scmp.eq.s32.totalorder %s15, 0
    %p78 = por %p76, %p77
    %p79 = scmp.ne.s32.totalorder %s67, %s68
    %p80 = scmp.eq.s32.totalorder %s16, 1
    %p81 = por %p79, %p80
    %p83 = scmp.ne.s32.totalorder %s68, %s82
    %p84 = scmp.eq.s32.totalorder %s16, 0
    %p85 = por %p83, %p84
    %s87 = sadd.s32 %s86, 1
    %p90 = scmp.eq.s32.totalorder %s10, 1
    %p91 = scmp.ne.s32.totalorder %s86, %s88
    %p92 = scmp.eq.s32.totalorder %s10, 0
    %p93 = por %p91, %p92
    %p94 = scmp.ne.s32.totalorder %s86, %s88
    %p95 = scmp.eq.s32.totalorder %s15, 1
    %p96 = por %p94, %p95
    %p97 = scmp.ne.s32.totalorder %s88, %s89
    %p98 = scmp.eq.s32.totalorder %s15, 0
    %p99 = por %p97, %p98
    %p100 = scmp.ne.s32.totalorder %s88, %s89
    %p101 = scmp.eq.s32.totalorder %s16, 1
    %p102 = por %p100, %p101
    %p104 = scmp.ne.s32.totalorder %s89, %s103
    %p105 = scmp.eq.s32.totalorder %s16, 0
    %p106 = por %p104, %p105
    %s107 = ssub.s32 %s10, %s17
    %p108 = scmp.eq.s32.totalorder %s107, 0
    %s110 = sadd.s32 %s109, 1
    %s111 = scalar_select %p108, %s109, %s110
    %p114 = pneg %p108
    %p115 = scmp.eq.s32.totalorder %s10, 1
    %p116 = por %p114, %p115
    %p117 = scmp.ne.s32.totalorder %s109, %s112
    %p118 = scmp.eq.s32.totalorder %s10, 0
    %p119 = por %p117, %p118
    %p120 = scmp.ne.s32.totalorder %s109, %s112
    %p121 = scmp.eq.s32.totalorder %s15, 1
    %p122 = por %p120, %p121
    %p123 = scmp.ne.s32.totalorder %s112, %s113
    %p124 = scmp.eq.s32.totalorder %s15, 0
    %p125 = por %p123, %p124
    %p126 = scmp.ne.s32.totalorder %s112, %s113
    %p127 = scmp.eq.s32.totalorder %s16, 1
    %p128 = por %p126, %p127
    %p130 = scmp.ne.s32.totalorder %s113, %s129
    %p131 = scmp.eq.s32.totalorder %s16, 0
    %p132 = por %p130, %p131
    %p133 = scmp.le.s32.totalorder 1, %s10
    %p134 = scmp.lt.s32.totalorder %s10, 3
    %p135 = pnand %p133, %p134
    %p136 = pneg %p135
    // Predicated region
    $region9: #{encoder_forward.4} parent=5 // pred_check
      _
    $region10: #{encoder_forward.4} parent=5 // pred_check_branch
      %138 = sbr.rel (%p135) target = $region12
    $region11: #{encoder_forward.4} parent=5 // pred_region
      %s139 = ssub.s32 %s10, 1
      // Predicated region
      $region13: #{encoder_forward.4} parent=11 // pred_check
        %p140 = pneg %p57
      $region14: #{encoder_forward.4} parent=11 // pred_check_branch
        %142 = sbr.rel (%p140) target = $region16
      $region15: #{encoder_forward.4} parent=11 // pred_region
        _
      $region16: #{encoder_forward.4} parent=11 // pred_fallthru
        _
      // Predicated region
      $region17: #{encoder_forward.4} parent=11 // pred_check
        %p143 = pneg %p78
      $region18: #{encoder_forward.4} parent=11 // pred_check_branch
        %145 = sbr.rel (%p143) target = $region20
      $region19: #{encoder_forward.4} parent=11 // pred_region
        _
      $region20: #{encoder_forward.4} parent=11 // pred_fallthru
        _
      // Predicated region
      $region21: #{encoder_forward.4} parent=11 // pred_check
        %p146 = pneg %p99
      $region22: #{encoder_forward.4} parent=11 // pred_check_branch
        %148 = sbr.rel (%p146) target = $region24
      $region23: #{encoder_forward.4} parent=11 // pred_region
        _
      $region24: #{encoder_forward.4} parent=11 // pred_fallthru
        _
    $region12: #{encoder_forward.4} parent=5 // pred_fallthru
      _
    %p149 = scmp.lt.s32.totalorder %s10, 2
    // Predicated region
    $region25: #{encoder_forward.4} parent=5 // pred_check
      %p150 = pneg %p149
    $region26: #{encoder_forward.4} parent=5 // pred_check_branch
      %152 = sbr.rel (%p150) target = $region28
    $region27: #{encoder_forward.4} parent=5 // pred_region
      // Predicated region
      $region29: #{encoder_forward.4} parent=27 // pred_check
        %p153 = pneg %p30
      $region30: #{encoder_forward.4} parent=27 // pred_check_branch
        %155 = sbr.rel (%p153) target = $region32
      $region31: #{encoder_forward.4} parent=27 // pred_region
        %s156 = smul.u32 2, %s10
        %p157 = scmp.lt.s32.totalorder %s156, 3
        %s158 = scalar_select %p157, %s156, 3
        %s159 = smul.addr %s158, 18
        %s160 = smul.addr %s159, 4
        %s161 = scalar_lea.vmem %s0, %s160
        %s162 = smul.u32 2, %s10
      $region32: #{encoder_forward.4} parent=27 // pred_fallthru
        _
    $region28: #{encoder_forward.4} parent=5 // pred_fallthru
      _
    %p163 = scmp.le.s32.totalorder 1, %s10
    %p164 = scmp.lt.s32.totalorder %s10, 3
    %p165 = pnand %p163, %p164
    %p166 = pneg %p165
    // Predicated region
    $region33: #{encoder_forward.4} parent=5 // pred_check
      _
    $region34: #{encoder_forward.4} parent=5 // pred_check_branch
      %168 = sbr.rel (%p165) target = $region36
    $region35: #{encoder_forward.4} parent=5 // pred_region
      %s169 = ssub.s32 %s10, 1
      %s170 = smul.u32 2, %s15
      %p171 = scmp.lt.s32.totalorder %s170, 3
      %s172 = scalar_select %p171, %s170, 3
      %s173 = smul.addr %s172, 18
      %s174 = smul.addr %s173, 4
      %s175 = scalar_lea.vmem %s0, %s174
      %p176 = pneg %p36
      %p177 = pneg %p33
      %p178 = pneg %p57
      %p179 = pneg %p54
      %p180 = pneg %p78
      %p181 = pneg %p75
      %p182 = pneg %p99
      %p183 = pneg %p96
      %p184 = pneg %p125
      %p185 = pneg %p122
      %s186 = smul.u32 2, %s15
      %p187 = scmp.lt.s32.totalorder %s186, 3
      %s188 = scalar_select %p187, %s186, 3
      %s189 = smul.addr %s188, 8
      %s190 = smul.addr %s189, 4
      %s191 = scalar_lea.vmem %s4, %s190
      %s192 = smul.u32 2, %s15
      %p193 = scmp.lt.s32.totalorder %s192, 3
      %s194 = scalar_select %p193, %s192, 3
      %s195 = smul.addr %s194, 18
      %s196 = smul.addr %s195, 4
      %s197 = scalar_lea.vmem %s0, %s196
      %s198 = smul.u32 2, %s15
      %s199 = smul.u32 2, %s15
      %p200 = scmp.lt.s32.totalorder %s199, 3
      %s201 = scalar_select %p200, %s199, 3
      %s202 = smul.addr %s201, 8
      %s203 = smul.addr %s202, 4
      %s204 = scalar_lea.vmem %s4, %s203
      %s205 = smul.u32 2, %s15
      %v207 = vld [vmem:[%s197] sm:$0xf]
      %v208 = vld [vmem:[%s197 + $0x8] sm:$0xf]
      %v209 = vld [vmem:[%s197 + $0x10] sm:$0xf]
      %v210 = vld [vmem:[%s197 + $0x18] sm:$0xf]
      %v211 = vld [vmem:[%s197 + $0x20] sm:$0xf]
      %v212 = vld [vmem:[%s197 + $0x28] sm:$0xf]
      %v213 = vld [vmem:[%s197 + $0x30] sm:$0xf]
      %v214 = vld [vmem:[%s197 + $0x38] sm:$0xf]
      %v215 = vld [vmem:[%s197 + $0x48] sm:$0xf]
      %v216 = vld [vmem:[%s197 + $0x50] sm:$0xf]
      %v217 = vld [vmem:[%s197 + $0x58] sm:$0xf]
      %v218 = vld [vmem:[%s197 + $0x60] sm:$0xf]
      %v219 = vld [vmem:[%s197 + $0x68] sm:$0xf]
      %v220 = vld [vmem:[%s197 + $0x70] sm:$0xf]
      %v221 = vld [vmem:[%s197 + $0x78] sm:$0xf]
      %v222 = vld [vmem:[%s197 + $0x80] sm:$0xf]
      %v223 = vld [vmem:[%s1] sm:$0xf]
      %v224 = vld [vmem:[%s1 + $0x4] sm:$0xf]
      %v225 = vld [vmem:[%s1 + $0x8] sm:$0xf]
      %v226 = vld [vmem:[%s1 + $0xc] sm:$0xf]
      %v227 = vld [vmem:[%s1 + $0x10] sm:$0xf]
      %v228 = vld [vmem:[%s1 + $0x14] sm:$0xf]
      %v229 = vld [vmem:[%s1 + $0x18] sm:$0xf]
      %v230 = vld [vmem:[%s1 + $0x1c] sm:$0xf]
      %v231 = vld [vmem:[%s197 + $0x4] sm:$0x1]
      %v232 = vld [vmem:[%s197 + $0xc] sm:$0x1]
      %v233 = vld [vmem:[%s197 + $0x14] sm:$0x1]
      %v234 = vld [vmem:[%s197 + $0x1c] sm:$0x1]
      %v235 = vld [vmem:[%s197 + $0x24] sm:$0x1]
      %v236 = vld [vmem:[%s197 + $0x2c] sm:$0x1]
      %v237 = vld [vmem:[%s197 + $0x34] sm:$0x1]
      %v238 = vld [vmem:[%s197 + $0x3c] sm:$0x1]
      %v239 = vld [vmem:[%s197 + $0x4c] sm:$0x1]
      %v240 = vld [vmem:[%s197 + $0x54] sm:$0x1]
      %v241 = vld [vmem:[%s197 + $0x5c] sm:$0x1]
      %v242 = vld [vmem:[%s197 + $0x64] sm:$0x1]
      %v243 = vld [vmem:[%s197 + $0x6c] sm:$0x1]
      %v244 = vld [vmem:[%s197 + $0x74] sm:$0x1]
      %v245 = vld [vmem:[%s197 + $0x7c] sm:$0x1]
      %v246 = vld [vmem:[%s197 + $0x84] sm:$0x1]
      %vm247 = vsmask.f32 3328
      %vm248 = vsmask.f32 7440
      %vm249 = vmor %vm247, %vm248
      %v251 = vshrl.u32 %v207, 16
      %v253 = vrot.slane %v251, 4
      %v254 = vshll.u32 %v207, 16
      %v256 = vrot.slane %v254, 5
      %v257 = vor.u32 %v253, %v256
      %v258 = vrot.slane %v257, 4
      %v260 = vshll.u32 %v231, 16
      %v262 = vrot.slane %v260, 5
      %v263 = vsel %vm249, %v258, %v262
      %v265 = vshrl.u32 %v208, 16
      %v267 = vrot.slane %v265, 4
      %v268 = vshll.u32 %v208, 16
      %v270 = vrot.slane %v268, 5
      %v271 = vor.u32 %v267, %v270
      %v272 = vrot.slane %v271, 4
      %v274 = vshll.u32 %v232, 16
      %v276 = vrot.slane %v274, 5
      %v277 = vsel %vm249, %v272, %v276
      %v279 = vshrl.u32 %v209, 16
      %v281 = vrot.slane %v279, 4
      %v282 = vshll.u32 %v209, 16
      %v284 = vrot.slane %v282, 5
      %v285 = vor.u32 %v281, %v284
      %v286 = vrot.slane %v285, 4
      %v288 = vshll.u32 %v233, 16
      %v290 = vrot.slane %v288, 5
      %v291 = vsel %vm249, %v286, %v290
      %v293 = vshrl.u32 %v210, 16
      %v295 = vrot.slane %v293, 4
      %v296 = vshll.u32 %v210, 16
      %v298 = vrot.slane %v296, 5
      %v299 = vor.u32 %v295, %v298
      %v300 = vrot.slane %v299, 4
      %v302 = vshll.u32 %v234, 16
      %v304 = vrot.slane %v302, 5
      %v305 = vsel %vm249, %v300, %v304
      %v307 = vshrl.u32 %v211, 16
      %v309 = vrot.slane %v307, 4
      %v310 = vshll.u32 %v211, 16
      %v312 = vrot.slane %v310, 5
      %v313 = vor.u32 %v309, %v312
      %v314 = vrot.slane %v313, 4
      %v316 = vshll.u32 %v235, 16
      %v318 = vrot.slane %v316, 5
      %v319 = vsel %vm249, %v314, %v318
      %v321 = vshrl.u32 %v212, 16
      %v323 = vrot.slane %v321, 4
      %v324 = vshll.u32 %v212, 16
      %v326 = vrot.slane %v324, 5
      %v327 = vor.u32 %v323, %v326
      %v328 = vrot.slane %v327, 4
      %v330 = vshll.u32 %v236, 16
      %v332 = vrot.slane %v330, 5
      %v333 = vsel %vm249, %v328, %v332
      %v335 = vshrl.u32 %v213, 16
      %v337 = vrot.slane %v335, 4
      %v338 = vshll.u32 %v213, 16
      %v340 = vrot.slane %v338, 5
      %v341 = vor.u32 %v337, %v340
      %v342 = vrot.slane %v341, 4
      %v344 = vshll.u32 %v237, 16
      %v346 = vrot.slane %v344, 5
      %v347 = vsel %vm249, %v342, %v346
      %v349 = vshrl.u32 %v214, 16
      %v351 = vrot.slane %v349, 4
      %v352 = vshll.u32 %v214, 16
      %v354 = vrot.slane %v352, 5
      %v355 = vor.u32 %v351, %v354
      %v356 = vrot.slane %v355, 4
      %v358 = vshll.u32 %v238, 16
      %v360 = vrot.slane %v358, 5
      %v361 = vsel %vm249, %v356, %v360
      %v363 = vshrl.u32 %v215, 16
      %v365 = vrot.slane %v363, 4
      %v366 = vshll.u32 %v215, 16
      %v368 = vrot.slane %v366, 5
      %v369 = vor.u32 %v365, %v368
      %v370 = vrot.slane %v369, 4
      %v372 = vshll.u32 %v239, 16
      %v374 = vrot.slane %v372, 5
      %v375 = vsel %vm249, %v370, %v374
      %v377 = vshrl.u32 %v216, 16
      %v379 = vrot.slane %v377, 4
      %v380 = vshll.u32 %v216, 16
      %v382 = vrot.slane %v380, 5
      %v383 = vor.u32 %v379, %v382
      %v384 = vrot.slane %v383, 4
      %v386 = vshll.u32 %v240, 16
      %v388 = vrot.slane %v386, 5
      %v389 = vsel %vm249, %v384, %v388
      %v391 = vshrl.u32 %v217, 16
      %v393 = vrot.slane %v391, 4
      %v394 = vshll.u32 %v217, 16
      %v396 = vrot.slane %v394, 5
      %v397 = vor.u32 %v393, %v396
      %v398 = vrot.slane %v397, 4
      %v400 = vshll.u32 %v241, 16
      %v402 = vrot.slane %v400, 5
      %v403 = vsel %vm249, %v398, %v402
      %v405 = vshrl.u32 %v218, 16
      %v407 = vrot.slane %v405, 4
      %v408 = vshll.u32 %v218, 16
      %v410 = vrot.slane %v408, 5
      %v411 = vor.u32 %v407, %v410
      %v412 = vrot.slane %v411, 4
      %v414 = vshll.u32 %v242, 16
      %v416 = vrot.slane %v414, 5
      %v417 = vsel %vm249, %v412, %v416
      %v419 = vshrl.u32 %v219, 16
      %v421 = vrot.slane %v419, 4
      %v422 = vshll.u32 %v219, 16
      %v424 = vrot.slane %v422, 5
      %v425 = vor.u32 %v421, %v424
      %v426 = vrot.slane %v425, 4
      %v428 = vshll.u32 %v243, 16
      %v430 = vrot.slane %v428, 5
      %v431 = vsel %vm249, %v426, %v430
      %v433 = vshrl.u32 %v220, 16
      %v435 = vrot.slane %v433, 4
      %v436 = vshll.u32 %v220, 16
      %v438 = vrot.slane %v436, 5
      %v439 = vor.u32 %v435, %v438
      %v440 = vrot.slane %v439, 4
      %v442 = vshll.u32 %v244, 16
      %v444 = vrot.slane %v442, 5
      %v445 = vsel %vm249, %v440, %v444
      %v447 = vshrl.u32 %v221, 16
      %v449 = vrot.slane %v447, 4
      %v450 = vshll.u32 %v221, 16
      %v452 = vrot.slane %v450, 5
      %v453 = vor.u32 %v449, %v452
      %v454 = vrot.slane %v453, 4
      %v456 = vshll.u32 %v245, 16
      %v458 = vrot.slane %v456, 5
      %v459 = vsel %vm249, %v454, %v458
      %v461 = vshrl.u32 %v222, 16
      %v463 = vrot.slane %v461, 4
      %v464 = vshll.u32 %v222, 16
      %v466 = vrot.slane %v464, 5
      %v467 = vor.u32 %v463, %v466
      %v468 = vrot.slane %v467, 4
      %v470 = vshll.u32 %v246, 16
      %v472 = vrot.slane %v470, 5
      %v473 = vsel %vm249, %v468, %v472
      %s474 = scalar_lea.vmem %s1, 32
      %v475 = vld [vmem:[%s474] sm:$0xf]
      %v476 = vld [vmem:[%s474 + $0x4] sm:$0xf]
      %v477 = vld [vmem:[%s474 + $0x8] sm:$0xf]
      %v478 = vld [vmem:[%s474 + $0xc] sm:$0xf]
      %v479 = vld [vmem:[%s474 + $0x10] sm:$0xf]
      %v480 = vld [vmem:[%s474 + $0x14] sm:$0xf]
      %v481 = vld [vmem:[%s474 + $0x18] sm:$0xf]
      %v482 = vld [vmem:[%s474 + $0x1c] sm:$0xf]
      %v483 = vunpack.c.l.b16 %v263
      %v484 = vunpack.c.l.b16 %v277
      %v485 = vunpack.c.l.b16 %v291
      %v486 = vunpack.c.l.b16 %v305
      %v487 = vunpack.c.l.b16 %v319
      %v488 = vunpack.c.l.b16 %v333
      %v489 = vunpack.c.l.b16 %v347
      %v490 = vunpack.c.l.b16 %v361
      %v491 = vunpack.c.l.b16 %v375
      %v492 = vunpack.c.l.b16 %v389
      %v493 = vunpack.c.l.b16 %v403
      %v494 = vunpack.c.l.b16 %v417
      %v495 = vunpack.c.l.b16 %v431
      %v496 = vunpack.c.l.b16 %v445
      %v497 = vunpack.c.l.b16 %v459
      %v498 = vunpack.c.l.b16 %v473
      %v499 = vpack.c.b16 %v484, %v483
      %v500 = vpack.c.b16 %v486, %v485
      %v501 = vpack.c.b16 %v488, %v487
      %v502 = vpack.c.b16 %v490, %v489
      %v503 = vpack.c.b16 %v492, %v491
      %v504 = vpack.c.b16 %v494, %v493
      %v505 = vpack.c.b16 %v496, %v495
      %v506 = vpack.c.b16 %v498, %v497
      %v515 = vunpack.c.l.b16 %v475
      %v516 = vunpack.c.l.b16 %v476
      %v517 = vunpack.c.l.b16 %v477
      %v518 = vunpack.c.l.b16 %v478
      %v519 = vunpack.c.l.b16 %v479
      %v520 = vunpack.c.l.b16 %v480
      %v521 = vunpack.c.l.b16 %v481
      %v522 = vunpack.c.l.b16 %v482
      %v523 = vpack.c.b16 %v516, %v515
      %v524 = vpack.c.b16 %v518, %v517
      %v525 = vpack.c.b16 %v520, %v519
      %v526 = vpack.c.b16 %v522, %v521
      %vm531 = vcmask 523264
      %v533 = vsel %vm531, %v499, 0
      %v536 = vsel %vm531, %v500, 0
      %v539 = vsel %vm531, %v501, 0
      %v542 = vsel %vm531, %v502, 0
      %v545 = vsel %vm531, %v503, 0
      %v548 = vsel %vm531, %v504, 0
      %v551 = vsel %vm531, %v505, 0
      %v554 = vsel %vm531, %v506, 0
      %556 = vmatprep.subr.bf16.mxu0 0
      %557 = vmatpush1.bf16.msra.mxu0 0
      %558 = vmatprep.subr.bf16.mxu0 0
      %559 = vmatpush1.bf16.msra.mxu0 0
      %560 = vmatprep.subr.bf16.mxu0 0
      %561 = vmatpush1.bf16.msra.mxu0 0
      %562 = vmatprep.subr.bf16.mxu0 0
      %563 = vmatpush1.bf16.msra.mxu0 0
      %564 = vmatprep.subr.bf16.mxu0 0
      %565 = vmatpush1.bf16.msra.mxu0 %v526
      %566 = vmatprep.subr.bf16.mxu0 0
      %567 = vmatpush1.bf16.msra.mxu0 %v525
      %568 = vmatprep.subr.bf16.mxu0 0
      %569 = vmatpush1.bf16.msra.mxu0 %v524
      %570 = vmatprep.subr.bf16.mxu0 0
      %571 = vmatpush1.bf16.msra.mxu0 %v523
      %572 = vmatprep.subr.bf16.mxu0 0
      %573 = vmatpush2.bf16.msra.mxu0 0
      %574 = vmatprep.subr.bf16.mxu0 0
      %575 = vmatpush2.bf16.msra.mxu0 0
      %576 = vmatprep.subr.bf16.mxu0 0
      %577 = vmatpush2.bf16.msra.mxu0 0
      %578 = vmatprep.subr.bf16.mxu0 0
      %579 = vmatpush2.bf16.msra.mxu0 0
      %580 = vmatprep.subr.bf16.mxu0 0
      %581 = vmatpush2.bf16.msra.mxu0 0
      %582 = vmatprep.subr.bf16.mxu0 0
      %583 = vmatpush2.bf16.msra.mxu0 0
      %584 = vmatprep.subr.bf16.mxu0 0
      %585 = vmatpush2.bf16.msra.mxu0 0
      %586 = vmatprep.subr.bf16.mxu0 0
      %587 = vmatpush2.bf16.msra.mxu0 0
      %588 = vmatprep.mubr.bf16.mxu0 0
      %589 = vmatmul.mubr.bf16.gmra.mxu0 %v533
      %v590 = vpop.f32.mrf.mxu0
      %v591 = vadd.f32 0.0, %v590
      %v592 = vpop.f32.mrf.mxu0
      %v593 = vpop.f32.mrf.mxu0
      %v594 = vadd.f32 0.0, %v593
      %v595 = vpop.f32.mrf.mxu0
      %596 = vmatprep.mubr.bf16.mxu0 0
      %597 = vmatmul.mubr.bf16.gmra.mxu0 %v536
      %v598 = vpop.f32.mrf.mxu0
      %v599 = vadd.f32 0.0, %v598
      %v600 = vpop.f32.mrf.mxu0
      %v601 = vpop.f32.mrf.mxu0
      %v602 = vadd.f32 0.0, %v601
      %v603 = vpop.f32.mrf.mxu0
      %604 = vmatprep.mubr.bf16.mxu0 0
      %605 = vmatmul.mubr.bf16.gmra.mxu0 %v539
      %v606 = vpop.f32.mrf.mxu0
      %v607 = vadd.f32 0.0, %v606
      %v608 = vpop.f32.mrf.mxu0
      %v609 = vpop.f32.mrf.mxu0
      %v610 = vadd.f32 0.0, %v609
      %v611 = vpop.f32.mrf.mxu0
      %612 = vmatprep.mubr.bf16.mxu0 0
      %613 = vmatmul.mubr.bf16.gmra.mxu0 %v542
      %v614 = vpop.f32.mrf.mxu0
      %v615 = vadd.f32 0.0, %v614
      %v616 = vpop.f32.mrf.mxu0
      %v617 = vpop.f32.mrf.mxu0
      %v618 = vadd.f32 0.0, %v617
      %v619 = vpop.f32.mrf.mxu0
      %620 = vmatprep.mubr.bf16.mxu0 0
      %621 = vmatmul.mubr.bf16.gmra.mxu0 %v545
      %v622 = vpop.f32.mrf.mxu0
      %v623 = vadd.f32 0.0, %v622
      %v624 = vpop.f32.mrf.mxu0
      %v625 = vpop.f32.mrf.mxu0
      %v626 = vadd.f32 0.0, %v625
      %v627 = vpop.f32.mrf.mxu0
      %628 = vmatprep.mubr.bf16.mxu0 0
      %629 = vmatmul.mubr.bf16.gmra.mxu0 %v548
      %v630 = vpop.f32.mrf.mxu0
      %v631 = vadd.f32 0.0, %v630
      %v632 = vpop.f32.mrf.mxu0
      %v633 = vpop.f32.mrf.mxu0
      %v634 = vadd.f32 0.0, %v633
      %v635 = vpop.f32.mrf.mxu0
      %636 = vmatprep.mubr.bf16.mxu0 0
      %637 = vmatmul.mubr.bf16.gmra.mxu0 %v551
      %v638 = vpop.f32.mrf.mxu0
      %v639 = vadd.f32 0.0, %v638
      %v640 = vpop.f32.mrf.mxu0
      %v641 = vpop.f32.mrf.mxu0
      %v642 = vadd.f32 0.0, %v641
      %v643 = vpop.f32.mrf.mxu0
      %644 = vmatprep.mubr.bf16.mxu0 0
      %645 = vmatmul.mubr.bf16.gmra.mxu0 %v554
      %v646 = vpop.f32.mrf.mxu0
      %v647 = vadd.f32 0.0, %v646
      %v648 = vpop.f32.mrf.mxu0
      %v649 = vpop.f32.mrf.mxu0
      %v650 = vadd.f32 0.0, %v649
      %v651 = vpop.f32.mrf.mxu0
      %652 = vdwg.mxu0
      %v669 = vunpack.c.l.b16 %v207
      %v670 = vunpack.c.l.b16 %v208
      %v671 = vunpack.c.l.b16 %v209
      %v672 = vunpack.c.l.b16 %v210
      %v673 = vunpack.c.l.b16 %v211
      %v674 = vunpack.c.l.b16 %v212
      %v675 = vunpack.c.l.b16 %v213
      %v676 = vunpack.c.l.b16 %v214
      %v677 = vunpack.c.l.b16 %v215
      %v678 = vunpack.c.l.b16 %v216
      %v679 = vunpack.c.l.b16 %v217
      %v680 = vunpack.c.l.b16 %v218
      %v681 = vunpack.c.l.b16 %v219
      %v682 = vunpack.c.l.b16 %v220
      %v683 = vunpack.c.l.b16 %v221
      %v684 = vunpack.c.l.b16 %v222
      %v685 = vpack.c.b16 %v670, %v669
      %v686 = vpack.c.b16 %v672, %v671
      %v687 = vpack.c.b16 %v674, %v673
      %v688 = vpack.c.b16 %v676, %v675
      %v689 = vpack.c.b16 %v678, %v677
      %v690 = vpack.c.b16 %v680, %v679
      %v691 = vpack.c.b16 %v682, %v681
      %v692 = vpack.c.b16 %v684, %v683
      %v701 = vunpack.c.l.b16 %v223
      %v702 = vunpack.c.l.b16 %v224
      %v703 = vunpack.c.l.b16 %v225
      %v704 = vunpack.c.l.b16 %v226
      %v705 = vunpack.c.l.b16 %v227
      %v706 = vunpack.c.l.b16 %v228
      %v707 = vunpack.c.l.b16 %v229
      %v708 = vunpack.c.l.b16 %v230
      %v709 = vpack.c.b16 %v702, %v701
      %v710 = vpack.c.b16 %v704, %v703
      %v711 = vpack.c.b16 %v706, %v705
      %v712 = vpack.c.b16 %v708, %v707
      %v718 = vsel %vm531, %v685, 0
      %v721 = vsel %vm531, %v686, 0
      %v724 = vsel %vm531, %v687, 0
      %v727 = vsel %vm531, %v688, 0
      %v730 = vsel %vm531, %v689, 0
      %v733 = vsel %vm531, %v690, 0
      %v736 = vsel %vm531, %v691, 0
      %v739 = vsel %vm531, %v692, 0
      %741 = vmatprep.subr.bf16.mxu0 0
      %742 = vmatpush1.bf16.msra.mxu0 0
      %743 = vmatprep.subr.bf16.mxu0 0
      %744 = vmatpush1.bf16.msra.mxu0 0
      %745 = vmatprep.subr.bf16.mxu0 0
      %746 = vmatpush1.bf16.msra.mxu0 0
      %747 = vmatprep.subr.bf16.mxu0 0
      %748 = vmatpush1.bf16.msra.mxu0 0
      %749 = vmatprep.subr.bf16.mxu0 0
      %750 = vmatpush1.bf16.msra.mxu0 %v712
      %751 = vmatprep.subr.bf16.mxu0 0
      %752 = vmatpush1.bf16.msra.mxu0 %v711
      %753 = vmatprep.subr.bf16.mxu0 0
      %754 = vmatpush1.bf16.msra.mxu0 %v710
      %755 = vmatprep.subr.bf16.mxu0 0
      %756 = vmatpush1.bf16.msra.mxu0 %v709
      %757 = vmatprep.subr.bf16.mxu0 0
      %758 = vmatpush2.bf16.msra.mxu0 0
      %759 = vmatprep.subr.bf16.mxu0 0
      %760 = vmatpush2.bf16.msra.mxu0 0
      %761 = vmatprep.subr.bf16.mxu0 0
      %762 = vmatpush2.bf16.msra.mxu0 0
      %763 = vmatprep.subr.bf16.mxu0 0
      %764 = vmatpush2.bf16.msra.mxu0 0
      %765 = vmatprep.subr.bf16.mxu0 0
      %766 = vmatpush2.bf16.msra.mxu0 0
      %767 = vmatprep.subr.bf16.mxu0 0
      %768 = vmatpush2.bf16.msra.mxu0 0
      %769 = vmatprep.subr.bf16.mxu0 0
      %770 = vmatpush2.bf16.msra.mxu0 0
      %771 = vmatprep.subr.bf16.mxu0 0
      %772 = vmatpush2.bf16.msra.mxu0 0
      %773 = vmatprep.mubr.bf16.mxu0 0
      %774 = vmatmul.mubr.bf16.gmra.mxu0 %v718
      %v775 = vpop.f32.mrf.mxu0
      %v776 = vadd.f32 %v591, %v775
      %v777 = vpop.f32.mrf.mxu0
      %v778 = vpop.f32.mrf.mxu0
      %v779 = vadd.f32 %v594, %v778
      %v780 = vpop.f32.mrf.mxu0
      %781 = vmatprep.mubr.bf16.mxu0 0
      %782 = vmatmul.mubr.bf16.gmra.mxu0 %v721
      %v783 = vpop.f32.mrf.mxu0
      %v784 = vadd.f32 %v599, %v783
      %v785 = vpop.f32.mrf.mxu0
      %v786 = vpop.f32.mrf.mxu0
      %v787 = vadd.f32 %v602, %v786
      %v788 = vpop.f32.mrf.mxu0
      %789 = vmatprep.mubr.bf16.mxu0 0
      %790 = vmatmul.mubr.bf16.gmra.mxu0 %v724
      %v791 = vpop.f32.mrf.mxu0
      %v792 = vadd.f32 %v607, %v791
      %v793 = vpop.f32.mrf.mxu0
      %v794 = vpop.f32.mrf.mxu0
      %v795 = vadd.f32 %v610, %v794
      %v796 = vpop.f32.mrf.mxu0
      %797 = vmatprep.mubr.bf16.mxu0 0
      %798 = vmatmul.mubr.bf16.gmra.mxu0 %v727
      %v799 = vpop.f32.mrf.mxu0
      %v800 = vadd.f32 %v615, %v799
      %v801 = vpop.f32.mrf.mxu0
      %v802 = vpop.f32.mrf.mxu0
      %v803 = vadd.f32 %v618, %v802
      %v804 = vpop.f32.mrf.mxu0
      %805 = vmatprep.mubr.bf16.mxu0 0
      %806 = vmatmul.mubr.bf16.gmra.mxu0 %v730
      %v807 = vpop.f32.mrf.mxu0
      %v808 = vadd.f32 %v623, %v807
      %v809 = vpop.f32.mrf.mxu0
      %v810 = vpop.f32.mrf.mxu0
      %v811 = vadd.f32 %v626, %v810
      %v812 = vpop.f32.mrf.mxu0
      %813 = vmatprep.mubr.bf16.mxu0 0
      %814 = vmatmul.mubr.bf16.gmra.mxu0 %v733
      %v815 = vpop.f32.mrf.mxu0
      %v816 = vadd.f32 %v631, %v815
      %v817 = vpop.f32.mrf.mxu0
      %v818 = vpop.f32.mrf.mxu0
      %v819 = vadd.f32 %v634, %v818
      %v820 = vpop.f32.mrf.mxu0
      %821 = vmatprep.mubr.bf16.mxu0 0
      %822 = vmatmul.mubr.bf16.gmra.mxu0 %v736
      %v823 = vpop.f32.mrf.mxu0
      %v824 = vadd.f32 %v639, %v823
      %v825 = vpop.f32.mrf.mxu0
      %v826 = vpop.f32.mrf.mxu0
      %v827 = vadd.f32 %v642, %v826
      %v828 = vpop.f32.mrf.mxu0
      %829 = vmatprep.mubr.bf16.mxu0 0
      %830 = vmatmul.mubr.bf16.gmra.mxu0 %v739
      %v831 = vpop.f32.mrf.mxu0
      %v832 = vadd.f32 %v647, %v831
      %v833 = vpop.f32.mrf.mxu0
      %v834 = vpop.f32.mrf.mxu0
      %v835 = vadd.f32 %v650, %v834
      %v836 = vpop.f32.mrf.mxu0
      %837 = vdwg.mxu0
      %s838 = scalar_lea.vmem %s197, 8
      %v839 = vld [vmem:[%s838] sm:$0xf]
      %v840 = vld [vmem:[%s838 + $0x8] sm:$0xf]
      %v841 = vld [vmem:[%s838 + $0x10] sm:$0xf]
      %v842 = vld [vmem:[%s838 + $0x18] sm:$0xf]
      %v843 = vld [vmem:[%s838 + $0x20] sm:$0xf]
      %v844 = vld [vmem:[%s838 + $0x28] sm:$0xf]
      %v845 = vld [vmem:[%s838 + $0x30] sm:$0xf]
      %v846 = vld [vmem:[%s838 + $0x38] sm:$0xf]
      %v847 = vld [vmem:[%s838 + $0x48] sm:$0xf]
      %v848 = vld [vmem:[%s838 + $0x50] sm:$0xf]
      %v849 = vld [vmem:[%s838 + $0x58] sm:$0xf]
      %v850 = vld [vmem:[%s838 + $0x60] sm:$0xf]
      %v851 = vld [vmem:[%s838 + $0x68] sm:$0xf]
      %v852 = vld [vmem:[%s838 + $0x70] sm:$0xf]
      %v853 = vld [vmem:[%s838 + $0x78] sm:$0xf]
      %v854 = vld [vmem:[%s838 + $0x80] sm:$0xf]
      %s855 = scalar_lea.vmem %s1, 64
      %v856 = vld [vmem:[%s855] sm:$0xf]
      %v857 = vld [vmem:[%s855 + $0x4] sm:$0xf]
      %v858 = vld [vmem:[%s855 + $0x8] sm:$0xf]
      %v859 = vld [vmem:[%s855 + $0xc] sm:$0xf]
      %v860 = vld [vmem:[%s855 + $0x10] sm:$0xf]
      %v861 = vld [vmem:[%s855 + $0x14] sm:$0xf]
      %v862 = vld [vmem:[%s855 + $0x18] sm:$0xf]
      %v863 = vld [vmem:[%s855 + $0x1c] sm:$0xf]
      %v880 = vunpack.c.l.b16 %v839
      %v881 = vunpack.c.l.b16 %v840
      %v882 = vunpack.c.l.b16 %v841
      %v883 = vunpack.c.l.b16 %v842
      %v884 = vunpack.c.l.b16 %v843
      %v885 = vunpack.c.l.b16 %v844
      %v886 = vunpack.c.l.b16 %v845
      %v887 = vunpack.c.l.b16 %v846
      %v888 = vunpack.c.l.b16 %v847
      %v889 = vunpack.c.l.b16 %v848
      %v890 = vunpack.c.l.b16 %v849
      %v891 = vunpack.c.l.b16 %v850
      %v892 = vunpack.c.l.b16 %v851
      %v893 = vunpack.c.l.b16 %v852
      %v894 = vunpack.c.l.b16 %v853
      %v895 = vunpack.c.l.b16 %v854
      %v896 = vpack.c.b16 %v881, %v880
      %v897 = vpack.c.b16 %v883, %v882
      %v898 = vpack.c.b16 %v885, %v884
      %v899 = vpack.c.b16 %v887, %v886
      %v900 = vpack.c.b16 %v889, %v888
      %v901 = vpack.c.b16 %v891, %v890
      %v902 = vpack.c.b16 %v893, %v892
      %v903 = vpack.c.b16 %v895, %v894
      %v912 = vunpack.c.l.b16 %v856
      %v913 = vunpack.c.l.b16 %v857
      %v914 = vunpack.c.l.b16 %v858
      %v915 = vunpack.c.l.b16 %v859
      %v916 = vunpack.c.l.b16 %v860
      %v917 = vunpack.c.l.b16 %v861
      %v918 = vunpack.c.l.b16 %v862
      %v919 = vunpack.c.l.b16 %v863
      %v920 = vpack.c.b16 %v913, %v912
      %v921 = vpack.c.b16 %v915, %v914
      %v922 = vpack.c.b16 %v917, %v916
      %v923 = vpack.c.b16 %v919, %v918
      %v929 = vsel %vm531, %v896, 0
      %v932 = vsel %vm531, %v897, 0
      %v935 = vsel %vm531, %v898, 0
      %v938 = vsel %vm531, %v899, 0
      %v941 = vsel %vm531, %v900, 0
      %v944 = vsel %vm531, %v901, 0
      %v947 = vsel %vm531, %v902, 0
      %v950 = vsel %vm531, %v903, 0
      %952 = vmatprep.subr.bf16.mxu0 0
      %953 = vmatpush1.bf16.msra.mxu0 0
      %954 = vmatprep.subr.bf16.mxu0 0
      %955 = vmatpush1.bf16.msra.mxu0 0
      %956 = vmatprep.subr.bf16.mxu0 0
      %957 = vmatpush1.bf16.msra.mxu0 0
      %958 = vmatprep.subr.bf16.mxu0 0
      %959 = vmatpush1.bf16.msra.mxu0 0
      %960 = vmatprep.subr.bf16.mxu0 0
      %961 = vmatpush1.bf16.msra.mxu0 %v923
      %962 = vmatprep.subr.bf16.mxu0 0
      %963 = vmatpush1.bf16.msra.mxu0 %v922
      %964 = vmatprep.subr.bf16.mxu0 0
      %965 = vmatpush1.bf16.msra.mxu0 %v921
      %966 = vmatprep.subr.bf16.mxu0 0
      %967 = vmatpush1.bf16.msra.mxu0 %v920
      %968 = vmatprep.subr.bf16.mxu0 0
      %969 = vmatpush2.bf16.msra.mxu0 0
      %970 = vmatprep.subr.bf16.mxu0 0
      %971 = vmatpush2.bf16.msra.mxu0 0
      %972 = vmatprep.subr.bf16.mxu0 0
      %973 = vmatpush2.bf16.msra.mxu0 0
      %974 = vmatprep.subr.bf16.mxu0 0
      %975 = vmatpush2.bf16.msra.mxu0 0
      %976 = vmatprep.subr.bf16.mxu0 0
      %977 = vmatpush2.bf16.msra.mxu0 0
      %978 = vmatprep.subr.bf16.mxu0 0
      %979 = vmatpush2.bf16.msra.mxu0 0
      %980 = vmatprep.subr.bf16.mxu0 0
      %981 = vmatpush2.bf16.msra.mxu0 0
      %982 = vmatprep.subr.bf16.mxu0 0
      %983 = vmatpush2.bf16.msra.mxu0 0
      %984 = vmatprep.mubr.bf16.mxu0 0
      %985 = vmatmul.mubr.bf16.gmra.mxu0 %v929
      %v986 = vpop.f32.mrf.mxu0
      %v987 = vadd.f32 0.0, %v986
      %v988 = vpop.f32.mrf.mxu0
      %v989 = vpop.f32.mrf.mxu0
      %v990 = vadd.f32 0.0, %v989
      %v991 = vpop.f32.mrf.mxu0
      %992 = vmatprep.mubr.bf16.mxu0 0
      %993 = vmatmul.mubr.bf16.gmra.mxu0 %v932
      %v994 = vpop.f32.mrf.mxu0
      %v995 = vadd.f32 0.0, %v994
      %v996 = vpop.f32.mrf.mxu0
      %v997 = vpop.f32.mrf.mxu0
      %v998 = vadd.f32 0.0, %v997
      %v999 = vpop.f32.mrf.mxu0
      %1000 = vmatprep.mubr.bf16.mxu0 0
      %1001 = vmatmul.mubr.bf16.gmra.mxu0 %v935
      %v1002 = vpop.f32.mrf.mxu0
      %v1003 = vadd.f32 0.0, %v1002
      %v1004 = vpop.f32.mrf.mxu0
      %v1005 = vpop.f32.mrf.mxu0
      %v1006 = vadd.f32 0.0, %v1005
      %v1007 = vpop.f32.mrf.mxu0
      %1008 = vmatprep.mubr.bf16.mxu0 0
      %1009 = vmatmul.mubr.bf16.gmra.mxu0 %v938
      %v1010 = vpop.f32.mrf.mxu0
      %v1011 = vadd.f32 0.0, %v1010
      %v1012 = vpop.f32.mrf.mxu0
      %v1013 = vpop.f32.mrf.mxu0
      %v1014 = vadd.f32 0.0, %v1013
      %v1015 = vpop.f32.mrf.mxu0
      %1016 = vmatprep.mubr.bf16.mxu0 0
      %1017 = vmatmul.mubr.bf16.gmra.mxu0 %v941
      %v1018 = vpop.f32.mrf.mxu0
      %v1019 = vadd.f32 0.0, %v1018
      %v1020 = vpop.f32.mrf.mxu0
      %v1021 = vpop.f32.mrf.mxu0
      %v1022 = vadd.f32 0.0, %v1021
      %v1023 = vpop.f32.mrf.mxu0
      %1024 = vmatprep.mubr.bf16.mxu0 0
      %1025 = vmatmul.mubr.bf16.gmra.mxu0 %v944
      %v1026 = vpop.f32.mrf.mxu0
      %v1027 = vadd.f32 0.0, %v1026
      %v1028 = vpop.f32.mrf.mxu0
      %v1029 = vpop.f32.mrf.mxu0
      %v1030 = vadd.f32 0.0, %v1029
      %v1031 = vpop.f32.mrf.mxu0
      %1032 = vmatprep.mubr.bf16.mxu0 0
      %1033 = vmatmul.mubr.bf16.gmra.mxu0 %v947
      %v1034 = vpop.f32.mrf.mxu0
      %v1035 = vadd.f32 0.0, %v1034
      %v1036 = vpop.f32.mrf.mxu0
      %v1037 = vpop.f32.mrf.mxu0
      %v1038 = vadd.f32 0.0, %v1037
      %v1039 = vpop.f32.mrf.mxu0
      %1040 = vmatprep.mubr.bf16.mxu0 0
      %1041 = vmatmul.mubr.bf16.gmra.mxu0 %v950
      %v1042 = vpop.f32.mrf.mxu0
      %v1043 = vadd.f32 0.0, %v1042
      %v1044 = vpop.f32.mrf.mxu0
      %v1045 = vpop.f32.mrf.mxu0
      %v1046 = vadd.f32 0.0, %v1045
      %v1047 = vpop.f32.mrf.mxu0
      %1048 = vdwg.mxu0
      %v1049 = vadd.f32 %v776, %v987
      %v1050 = vadd.f32 %v779, %v990
      %v1051 = vadd.f32 %v784, %v995
      %v1052 = vadd.f32 %v787, %v998
      %v1053 = vadd.f32 %v792, %v1003
      %v1054 = vadd.f32 %v795, %v1006
      %v1055 = vadd.f32 %v800, %v1011
      %v1056 = vadd.f32 %v803, %v1014
      %v1057 = vadd.f32 %v808, %v1019
      %v1058 = vadd.f32 %v811, %v1022
      %v1059 = vadd.f32 %v816, %v1027
      %v1060 = vadd.f32 %v819, %v1030
      %v1061 = vadd.f32 %v824, %v1035
      %v1062 = vadd.f32 %v827, %v1038
      %v1063 = vadd.f32 %v832, %v1043
      %v1064 = vadd.f32 %v835, %v1046
      %v1065 = vld [vmem:[%s838] sm:$0xf]
      %v1066 = vld [vmem:[%s838 + $0x4] sm:$0x1]
      %v1067 = vld [vmem:[%s838 + $0x8] sm:$0xf]
      %v1068 = vld [vmem:[%s838 + $0xc] sm:$0x1]
      %v1069 = vld [vmem:[%s838 + $0x10] sm:$0xf]
      %v1070 = vld [vmem:[%s838 + $0x14] sm:$0x1]
      %v1071 = vld [vmem:[%s838 + $0x18] sm:$0xf]
      %v1072 = vld [vmem:[%s838 + $0x1c] sm:$0x1]
      %v1073 = vld [vmem:[%s838 + $0x20] sm:$0xf]
      %v1074 = vld [vmem:[%s838 + $0x24] sm:$0x1]
      %v1075 = vld [vmem:[%s838 + $0x28] sm:$0xf]
      %v1076 = vld [vmem:[%s838 + $0x2c] sm:$0x1]
      %v1077 = vld [vmem:[%s838 + $0x30] sm:$0xf]
      %v1078 = vld [vmem:[%s838 + $0x34] sm:$0x1]
      %v1079 = vld [vmem:[%s838 + $0x38] sm:$0xf]
      %v1080 = vld [vmem:[%s838 + $0x3c] sm:$0x1]
      %v1081 = vld [vmem:[%s838 + $0x48] sm:$0xf]
      %v1082 = vld [vmem:[%s838 + $0x4c] sm:$0x1]
      %v1083 = vld [vmem:[%s838 + $0x50] sm:$0xf]
      %v1084 = vld [vmem:[%s838 + $0x54] sm:$0x1]
      %v1085 = vld [vmem:[%s838 + $0x58] sm:$0xf]
      %v1086 = vld [vmem:[%s838 + $0x5c] sm:$0x1]
      %v1087 = vld [vmem:[%s838 + $0x60] sm:$0xf]
      %v1088 = vld [vmem:[%s838 + $0x64] sm:$0x1]
      %v1089 = vld [vmem:[%s838 + $0x68] sm:$0xf]
      %v1090 = vld [vmem:[%s838 + $0x6c] sm:$0x1]
      %v1091 = vld [vmem:[%s838 + $0x70] sm:$0xf]
      %v1092 = vld [vmem:[%s838 + $0x74] sm:$0x1]
      %v1093 = vld [vmem:[%s838 + $0x78] sm:$0xf]
      %v1094 = vld [vmem:[%s838 + $0x7c] sm:$0x1]
      %v1095 = vld [vmem:[%s838 + $0x80] sm:$0xf]
      %v1096 = vld [vmem:[%s838 + $0x84] sm:$0x1]
      %v1098 = vshrl.u32 %v1065, 16
      %v1100 = vrot.slane %v1098, 4
      %v1101 = vshll.u32 %v1065, 16
      %v1103 = vrot.slane %v1101, 5
      %v1104 = vor.u32 %v1100, %v1103
      %v1105 = vrot.slane %v1104, 4
      %v1107 = vshll.u32 %v1066, 16
      %v1109 = vrot.slane %v1107, 5
      %v1110 = vsel %vm249, %v1105, %v1109
      %v1112 = vshrl.u32 %v1067, 16
      %v1114 = vrot.slane %v1112, 4
      %v1115 = vshll.u32 %v1067, 16
      %v1117 = vrot.slane %v1115, 5
      %v1118 = vor.u32 %v1114, %v1117
      %v1119 = vrot.slane %v1118, 4
      %v1121 = vshll.u32 %v1068, 16
      %v1123 = vrot.slane %v1121, 5
      %v1124 = vsel %vm249, %v1119, %v1123
      %v1126 = vshrl.u32 %v1069, 16
      %v1128 = vrot.slane %v1126, 4
      %v1129 = vshll.u32 %v1069, 16
      %v1131 = vrot.slane %v1129, 5
      %v1132 = vor.u32 %v1128, %v1131
      %v1133 = vrot.slane %v1132, 4
      %v1135 = vshll.u32 %v1070, 16
      %v1137 = vrot.slane %v1135, 5
      %v1138 = vsel %vm249, %v1133, %v1137
      %v1140 = vshrl.u32 %v1071, 16
      %v1142 = vrot.slane %v1140, 4
      %v1143 = vshll.u32 %v1071, 16
      %v1145 = vrot.slane %v1143, 5
      %v1146 = vor.u32 %v1142, %v1145
      %v1147 = vrot.slane %v1146, 4
      %v1149 = vshll.u32 %v1072, 16
      %v1151 = vrot.slane %v1149, 5
      %v1152 = vsel %vm249, %v1147, %v1151
      %v1154 = vshrl.u32 %v1073, 16
      %v1156 = vrot.slane %v1154, 4
      %v1157 = vshll.u32 %v1073, 16
      %v1159 = vrot.slane %v1157, 5
      %v1160 = vor.u32 %v1156, %v1159
      %v1161 = vrot.slane %v1160, 4
      %v1163 = vshll.u32 %v1074, 16
      %v1165 = vrot.slane %v1163, 5
      %v1166 = vsel %vm249, %v1161, %v1165
      %v1168 = vshrl.u32 %v1075, 16
      %v1170 = vrot.slane %v1168, 4
      %v1171 = vshll.u32 %v1075, 16
      %v1173 = vrot.slane %v1171, 5
      %v1174 = vor.u32 %v1170, %v1173
      %v1175 = vrot.slane %v1174, 4
      %v1177 = vshll.u32 %v1076, 16
      %v1179 = vrot.slane %v1177, 5
      %v1180 = vsel %vm249, %v1175, %v1179
      %v1182 = vshrl.u32 %v1077, 16
      %v1184 = vrot.slane %v1182, 4
      %v1185 = vshll.u32 %v1077, 16
      %v1187 = vrot.slane %v1185, 5
      %v1188 = vor.u32 %v1184, %v1187
      %v1189 = vrot.slane %v1188, 4
      %v1191 = vshll.u32 %v1078, 16
      %v1193 = vrot.slane %v1191, 5
      %v1194 = vsel %vm249, %v1189, %v1193
      %v1196 = vshrl.u32 %v1079, 16
      %v1198 = vrot.slane %v1196, 4
      %v1199 = vshll.u32 %v1079, 16
      %v1201 = vrot.slane %v1199, 5
      %v1202 = vor.u32 %v1198, %v1201
      %v1203 = vrot.slane %v1202, 4
      %v1205 = vshll.u32 %v1080, 16
      %v1207 = vrot.slane %v1205, 5
      %v1208 = vsel %vm249, %v1203, %v1207
      %v1210 = vshrl.u32 %v1081, 16
      %v1212 = vrot.slane %v1210, 4
      %v1213 = vshll.u32 %v1081, 16
      %v1215 = vrot.slane %v1213, 5
      %v1216 = vor.u32 %v1212, %v1215
      %v1217 = vrot.slane %v1216, 4
      %v1219 = vshll.u32 %v1082, 16
      %v1221 = vrot.slane %v1219, 5
      %v1222 = vsel %vm249, %v1217, %v1221
      %v1224 = vshrl.u32 %v1083, 16
      %v1226 = vrot.slane %v1224, 4
      %v1227 = vshll.u32 %v1083, 16
      %v1229 = vrot.slane %v1227, 5
      %v1230 = vor.u32 %v1226, %v1229
      %v1231 = vrot.slane %v1230, 4
      %v1233 = vshll.u32 %v1084, 16
      %v1235 = vrot.slane %v1233, 5
      %v1236 = vsel %vm249, %v1231, %v1235
      %v1238 = vshrl.u32 %v1085, 16
      %v1240 = vrot.slane %v1238, 4
      %v1241 = vshll.u32 %v1085, 16
      %v1243 = vrot.slane %v1241, 5
      %v1244 = vor.u32 %v1240, %v1243
      %v1245 = vrot.slane %v1244, 4
      %v1247 = vshll.u32 %v1086, 16
      %v1249 = vrot.slane %v1247, 5
      %v1250 = vsel %vm249, %v1245, %v1249
      %v1252 = vshrl.u32 %v1087, 16
      %v1254 = vrot.slane %v1252, 4
      %v1255 = vshll.u32 %v1087, 16
      %v1257 = vrot.slane %v1255, 5
      %v1258 = vor.u32 %v1254, %v1257
      %v1259 = vrot.slane %v1258, 4
      %v1261 = vshll.u32 %v1088, 16
      %v1263 = vrot.slane %v1261, 5
      %v1264 = vsel %vm249, %v1259, %v1263
      %v1266 = vshrl.u32 %v1089, 16
      %v1268 = vrot.slane %v1266, 4
      %v1269 = vshll.u32 %v1089, 16
      %v1271 = vrot.slane %v1269, 5
      %v1272 = vor.u32 %v1268, %v1271
      %v1273 = vrot.slane %v1272, 4
      %v1275 = vshll.u32 %v1090, 16
      %v1277 = vrot.slane %v1275, 5
      %v1278 = vsel %vm249, %v1273, %v1277
      %v1280 = vshrl.u32 %v1091, 16
      %v1282 = vrot.slane %v1280, 4
      %v1283 = vshll.u32 %v1091, 16
      %v1285 = vrot.slane %v1283, 5
      %v1286 = vor.u32 %v1282, %v1285
      %v1287 = vrot.slane %v1286, 4
      %v1289 = vshll.u32 %v1092, 16
      %v1291 = vrot.slane %v1289, 5
      %v1292 = vsel %vm249, %v1287, %v1291
      %v1294 = vshrl.u32 %v1093, 16
      %v1296 = vrot.slane %v1294, 4
      %v1297 = vshll.u32 %v1093, 16
      %v1299 = vrot.slane %v1297, 5
      %v1300 = vor.u32 %v1296, %v1299
      %v1301 = vrot.slane %v1300, 4
      %v1303 = vshll.u32 %v1094, 16
      %v1305 = vrot.slane %v1303, 5
      %v1306 = vsel %vm249, %v1301, %v1305
      %v1308 = vshrl.u32 %v1095, 16
      %v1310 = vrot.slane %v1308, 4
      %v1311 = vshll.u32 %v1095, 16
      %v1313 = vrot.slane %v1311, 5
      %v1314 = vor.u32 %v1310, %v1313
      %v1315 = vrot.slane %v1314, 4
      %v1317 = vshll.u32 %v1096, 16
      %v1319 = vrot.slane %v1317, 5
      %v1320 = vsel %vm249, %v1315, %v1319
      %s1321 = scalar_lea.vmem %s1, 96
      %v1322 = vld [vmem:[%s1321] sm:$0xf]
      %v1323 = vld [vmem:[%s1321 + $0x4] sm:$0xf]
      %v1324 = vld [vmem:[%s1321 + $0x8] sm:$0xf]
      %v1325 = vld [vmem:[%s1321 + $0xc] sm:$0xf]
      %v1326 = vld [vmem:[%s1321 + $0x10] sm:$0xf]
      %v1327 = vld [vmem:[%s1321 + $0x14] sm:$0xf]
      %v1328 = vld [vmem:[%s1321 + $0x18] sm:$0xf]
      %v1329 = vld [vmem:[%s1321 + $0x1c] sm:$0xf]
      %v1330 = vunpack.c.l.b16 %v1110
      %v1331 = vunpack.c.l.b16 %v1124
      %v1332 = vunpack.c.l.b16 %v1138
      %v1333 = vunpack.c.l.b16 %v1152
      %v1334 = vunpack.c.l.b16 %v1166
      %v1335 = vunpack.c.l.b16 %v1180
      %v1336 = vunpack.c.l.b16 %v1194
      %v1337 = vunpack.c.l.b16 %v1208
      %v1338 = vunpack.c.l.b16 %v1222
      %v1339 = vunpack.c.l.b16 %v1236
      %v1340 = vunpack.c.l.b16 %v1250
      %v1341 = vunpack.c.l.b16 %v1264
      %v1342 = vunpack.c.l.b16 %v1278
      %v1343 = vunpack.c.l.b16 %v1292
      %v1344 = vunpack.c.l.b16 %v1306
      %v1345 = vunpack.c.l.b16 %v1320
      %v1346 = vpack.c.b16 %v1331, %v1330
      %v1347 = vpack.c.b16 %v1333, %v1332
      %v1348 = vpack.c.b16 %v1335, %v1334
      %v1349 = vpack.c.b16 %v1337, %v1336
      %v1350 = vpack.c.b16 %v1339, %v1338
      %v1351 = vpack.c.b16 %v1341, %v1340
      %v1352 = vpack.c.b16 %v1343, %v1342
      %v1353 = vpack.c.b16 %v1345, %v1344
      %v1362 = vunpack.c.l.b16 %v1322
      %v1363 = vunpack.c.l.b16 %v1323
      %v1364 = vunpack.c.l.b16 %v1324
      %v1365 = vunpack.c.l.b16 %v1325
      %v1366 = vunpack.c.l.b16 %v1326
      %v1367 = vunpack.c.l.b16 %v1327
      %v1368 = vunpack.c.l.b16 %v1328
      %v1369 = vunpack.c.l.b16 %v1329
      %v1370 = vpack.c.b16 %v1363, %v1362
      %v1371 = vpack.c.b16 %v1365, %v1364
      %v1372 = vpack.c.b16 %v1367, %v1366
      %v1373 = vpack.c.b16 %v1369, %v1368
      %v1379 = vsel %vm531, %v1346, 0
      %v1382 = vsel %vm531, %v1347, 0
      %v1385 = vsel %vm531, %v1348, 0
      %v1388 = vsel %vm531, %v1349, 0
      %v1391 = vsel %vm531, %v1350, 0
      %v1394 = vsel %vm531, %v1351, 0
      %v1397 = vsel %vm531, %v1352, 0
      %v1400 = vsel %vm531, %v1353, 0
      %1402 = vmatprep.subr.bf16.mxu0 0
      %1403 = vmatpush1.bf16.msra.mxu0 0
      %1404 = vmatprep.subr.bf16.mxu0 0
      %1405 = vmatpush1.bf16.msra.mxu0 0
      %1406 = vmatprep.subr.bf16.mxu0 0
      %1407 = vmatpush1.bf16.msra.mxu0 0
      %1408 = vmatprep.subr.bf16.mxu0 0
      %1409 = vmatpush1.bf16.msra.mxu0 0
      %1410 = vmatprep.subr.bf16.mxu0 0
      %1411 = vmatpush1.bf16.msra.mxu0 %v1373
      %1412 = vmatprep.subr.bf16.mxu0 0
      %1413 = vmatpush1.bf16.msra.mxu0 %v1372
      %1414 = vmatprep.subr.bf16.mxu0 0
      %1415 = vmatpush1.bf16.msra.mxu0 %v1371
      %1416 = vmatprep.subr.bf16.mxu0 0
      %1417 = vmatpush1.bf16.msra.mxu0 %v1370
      %1418 = vmatprep.subr.bf16.mxu0 0
      %1419 = vmatpush2.bf16.msra.mxu0 0
      %1420 = vmatprep.subr.bf16.mxu0 0
      %1421 = vmatpush2.bf16.msra.mxu0 0
      %1422 = vmatprep.subr.bf16.mxu0 0
      %1423 = vmatpush2.bf16.msra.mxu0 0
      %1424 = vmatprep.subr.bf16.mxu0 0
      %1425 = vmatpush2.bf16.msra.mxu0 0
      %1426 = vmatprep.subr.bf16.mxu0 0
      %1427 = vmatpush2.bf16.msra.mxu0 0
      %1428 = vmatprep.subr.bf16.mxu0 0
      %1429 = vmatpush2.bf16.msra.mxu0 0
      %1430 = vmatprep.subr.bf16.mxu0 0
      %1431 = vmatpush2.bf16.msra.mxu0 0
      %1432 = vmatprep.subr.bf16.mxu0 0
      %1433 = vmatpush2.bf16.msra.mxu0 0
      %1434 = vmatprep.mubr.bf16.mxu0 0
      %1435 = vmatmul.mubr.bf16.gmra.mxu0 %v1379
      %v1436 = vpop.f32.mrf.mxu0
      %v1437 = vadd.f32 0.0, %v1436
      %v1438 = vpop.f32.mrf.mxu0
      %v1439 = vpop.f32.mrf.mxu0
      %v1440 = vadd.f32 0.0, %v1439
      %v1441 = vpop.f32.mrf.mxu0
      %1442 = vmatprep.mubr.bf16.mxu0 0
      %1443 = vmatmul.mubr.bf16.gmra.mxu0 %v1382
      %v1444 = vpop.f32.mrf.mxu0
      %v1445 = vadd.f32 0.0, %v1444
      %v1446 = vpop.f32.mrf.mxu0
      %v1447 = vpop.f32.mrf.mxu0
      %v1448 = vadd.f32 0.0, %v1447
      %v1449 = vpop.f32.mrf.mxu0
      %1450 = vmatprep.mubr.bf16.mxu0 0
      %1451 = vmatmul.mubr.bf16.gmra.mxu0 %v1385
      %v1452 = vpop.f32.mrf.mxu0
      %v1453 = vadd.f32 0.0, %v1452
      %v1454 = vpop.f32.mrf.mxu0
      %v1455 = vpop.f32.mrf.mxu0
      %v1456 = vadd.f32 0.0, %v1455
      %v1457 = vpop.f32.mrf.mxu0
      %1458 = vmatprep.mubr.bf16.mxu0 0
      %1459 = vmatmul.mubr.bf16.gmra.mxu0 %v1388
      %v1460 = vpop.f32.mrf.mxu0
      %v1461 = vadd.f32 0.0, %v1460
      %v1462 = vpop.f32.mrf.mxu0
      %v1463 = vpop.f32.mrf.mxu0
      %v1464 = vadd.f32 0.0, %v1463
      %v1465 = vpop.f32.mrf.mxu0
      %1466 = vmatprep.mubr.bf16.mxu0 0
      %1467 = vmatmul.mubr.bf16.gmra.mxu0 %v1391
      %v1468 = vpop.f32.mrf.mxu0
      %v1469 = vadd.f32 0.0, %v1468
      %v1470 = vpop.f32.mrf.mxu0
      %v1471 = vpop.f32.mrf.mxu0
      %v1472 = vadd.f32 0.0, %v1471
      %v1473 = vpop.f32.mrf.mxu0
      %1474 = vmatprep.mubr.bf16.mxu0 0
      %1475 = vmatmul.mubr.bf16.gmra.mxu0 %v1394
      %v1476 = vpop.f32.mrf.mxu0
      %v1477 = vadd.f32 0.0, %v1476
      %v1478 = vpop.f32.mrf.mxu0
      %v1479 = vpop.f32.mrf.mxu0
      %v1480 = vadd.f32 0.0, %v1479
      %v1481 = vpop.f32.mrf.mxu0
      %1482 = vmatprep.mubr.bf16.mxu0 0
      %1483 = vmatmul.mubr.bf16.gmra.mxu0 %v1397
      %v1484 = vpop.f32.mrf.mxu0
      %v1485 = vadd.f32 0.0, %v1484
      %v1486 = vpop.f32.mrf.mxu0
      %v1487 = vpop.f32.mrf.mxu0
      %v1488 = vadd.f32 0.0, %v1487
      %v1489 = vpop.f32.mrf.mxu0
      %1490 = vmatprep.mubr.bf16.mxu0 0
      %1491 = vmatmul.mubr.bf16.gmra.mxu0 %v1400
      %v1492 = vpop.f32.mrf.mxu0
      %v1493 = vadd.f32 0.0, %v1492
      %v1494 = vpop.f32.mrf.mxu0
      %v1495 = vpop.f32.mrf.mxu0
      %v1496 = vadd.f32 0.0, %v1495
      %v1497 = vpop.f32.mrf.mxu0
      %1498 = vdwg.mxu0
      %v1499 = vadd.f32 %v1049, %v1437
      %v1500 = vadd.f32 %v1050, %v1440
      %v1501 = vadd.f32 %v1051, %v1445
      %v1502 = vadd.f32 %v1052, %v1448
      %v1503 = vadd.f32 %v1053, %v1453
      %v1504 = vadd.f32 %v1054, %v1456
      %v1505 = vadd.f32 %v1055, %v1461
      %v1506 = vadd.f32 %v1056, %v1464
      %v1507 = vadd.f32 %v1057, %v1469
      %v1508 = vadd.f32 %v1058, %v1472
      %v1509 = vadd.f32 %v1059, %v1477
      %v1510 = vadd.f32 %v1060, %v1480
      %v1511 = vadd.f32 %v1061, %v1485
      %v1512 = vadd.f32 %v1062, %v1488
      %v1513 = vadd.f32 %v1063, %v1493
      %v1514 = vadd.f32 %v1064, %v1496
      %v1515 = vld [vmem:[%s2] sm:$0x1]
      %v1516 = vld [vmem:[%s3] sm:$0x1]
      %vm1517 = vcmask 261120
      %v1518 = vsel %vm1517, %v1499, 0.0
      %v1519 = vsel %vm1517, %v1500, 0.0
      %v1520 = vadd.f32 %v1518, %v1519
      %v1521 = vsel %vm1517, %v1501, 0.0
      %v1522 = vadd.f32 %v1520, %v1521
      %v1523 = vsel %vm1517, %v1502, 0.0
      %v1524 = vadd.f32 %v1522, %v1523
      %v1525 = vsel %vm1517, %v1503, 0.0
      %v1526 = vadd.f32 %v1524, %v1525
      %v1527 = vsel %vm1517, %v1504, 0.0
      %v1528 = vadd.f32 %v1526, %v1527
      %v1529 = vsel %vm1517, %v1505, 0.0
      %v1530 = vadd.f32 %v1528, %v1529
      %v1531 = vsel %vm1517, %v1506, 0.0
      %v1532 = vadd.f32 %v1530, %v1531
      %v1533 = vrot.slane %v1532, 4
      %v1534 = vadd.f32 %v1532, %v1533
      %v1535 = vrot.slane %v1534, 2
      %v1536 = vadd.f32 %v1534, %v1535
      %v1537 = vrot.slane %v1536, 1
      %v1538 = vadd.f32 %v1536, %v1537
      %v1539 = vsel %vm1517, %v1507, 0.0
      %v1540 = vsel %vm1517, %v1508, 0.0
      %v1541 = vadd.f32 %v1539, %v1540
      %v1542 = vsel %vm1517, %v1509, 0.0
      %v1543 = vadd.f32 %v1541, %v1542
      %v1544 = vsel %vm1517, %v1510, 0.0
      %v1545 = vadd.f32 %v1543, %v1544
      %v1546 = vsel %vm1517, %v1511, 0.0
      %v1547 = vadd.f32 %v1545, %v1546
      %v1548 = vsel %vm1517, %v1512, 0.0
      %v1549 = vadd.f32 %v1547, %v1548
      %v1550 = vsel %vm1517, %v1513, 0.0
      %v1551 = vadd.f32 %v1549, %v1550
      %v1552 = vsel %vm1517, %v1514, 0.0
      %v1553 = vadd.f32 %v1551, %v1552
      %v1554 = vrot.slane %v1553, 4
      %v1555 = vadd.f32 %v1553, %v1554
      %v1556 = vrot.slane %v1555, 2
      %v1557 = vadd.f32 %v1555, %v1556
      %v1558 = vrot.slane %v1557, 1
      %v1559 = vadd.f32 %v1557, %v1558
      %v1560 = vmul.f32 %v1538, 0.015625
      %v1561 = vmul.f32 %v1559, 0.015625
      %v1562 = vmul.f32 %v1499, %v1499
      %v1563 = vmul.f32 %v1500, %v1500
      %v1564 = vmul.f32 %v1501, %v1501
      %v1565 = vmul.f32 %v1502, %v1502
      %v1566 = vmul.f32 %v1503, %v1503
      %v1567 = vmul.f32 %v1504, %v1504
      %v1568 = vmul.f32 %v1505, %v1505
      %v1569 = vmul.f32 %v1506, %v1506
      %v1570 = vmul.f32 %v1507, %v1507
      %v1571 = vmul.f32 %v1508, %v1508
      %v1572 = vmul.f32 %v1509, %v1509
      %v1573 = vmul.f32 %v1510, %v1510
      %v1574 = vmul.f32 %v1511, %v1511
      %v1575 = vmul.f32 %v1512, %v1512
      %v1576 = vmul.f32 %v1513, %v1513
      %v1577 = vmul.f32 %v1514, %v1514
      %v1578 = vsel %vm1517, %v1562, 0.0
      %v1579 = vsel %vm1517, %v1563, 0.0
      %v1580 = vadd.f32 %v1578, %v1579
      %v1581 = vsel %vm1517, %v1564, 0.0
      %v1582 = vadd.f32 %v1580, %v1581
      %v1583 = vsel %vm1517, %v1565, 0.0
      %v1584 = vadd.f32 %v1582, %v1583
      %v1585 = vsel %vm1517, %v1566, 0.0
      %v1586 = vadd.f32 %v1584, %v1585
      %v1587 = vsel %vm1517, %v1567, 0.0
      %v1588 = vadd.f32 %v1586, %v1587
      %v1589 = vsel %vm1517, %v1568, 0.0
      %v1590 = vadd.f32 %v1588, %v1589
      %v1591 = vsel %vm1517, %v1569, 0.0
      %v1592 = vadd.f32 %v1590, %v1591
      %v1593 = vrot.slane %v1592, 4
      %v1594 = vadd.f32 %v1592, %v1593
      %v1595 = vrot.slane %v1594, 2
      %v1596 = vadd.f32 %v1594, %v1595
      %v1597 = vrot.slane %v1596, 1
      %v1598 = vadd.f32 %v1596, %v1597
      %v1599 = vsel %vm1517, %v1570, 0.0
      %v1600 = vsel %vm1517, %v1571, 0.0
      %v1601 = vadd.f32 %v1599, %v1600
      %v1602 = vsel %vm1517, %v1572, 0.0
      %v1603 = vadd.f32 %v1601, %v1602
      %v1604 = vsel %vm1517, %v1573, 0.0
      %v1605 = vadd.f32 %v1603, %v1604
      %v1606 = vsel %vm1517, %v1574, 0.0
      %v1607 = vadd.f32 %v1605, %v1606
      %v1608 = vsel %vm1517, %v1575, 0.0
      %v1609 = vadd.f32 %v1607, %v1608
      %v1610 = vsel %vm1517, %v1576, 0.0
      %v1611 = vadd.f32 %v1609, %v1610
      %v1612 = vsel %vm1517, %v1577, 0.0
      %v1613 = vadd.f32 %v1611, %v1612
      %v1614 = vrot.slane %v1613, 4
      %v1615 = vadd.f32 %v1613, %v1614
      %v1616 = vrot.slane %v1615, 2
      %v1617 = vadd.f32 %v1615, %v1616
      %v1618 = vrot.slane %v1617, 1
      %v1619 = vadd.f32 %v1617, %v1618
      %v1620 = vmul.f32 %v1598, 0.015625
      %v1621 = vmul.f32 %v1619, 0.015625
      %v1622 = vmul.f32 %v1560, %v1560
      %v1623 = vmul.f32 %v1561, %v1561
      %v1624 = vsub.f32 %v1620, %v1622
      %v1625 = vsub.f32 %v1621, %v1623
      %v1626 = vmax.f32 %v1624, 0.0
      %v1627 = vmax.f32 %v1625, 0.0
      %v1628 = vsub.f32 %v1499, %v1560
      %v1629 = vsub.f32 %v1500, %v1560
      %v1630 = vsub.f32 %v1501, %v1560
      %v1631 = vsub.f32 %v1502, %v1560
      %v1632 = vsub.f32 %v1503, %v1560
      %v1633 = vsub.f32 %v1504, %v1560
      %v1634 = vsub.f32 %v1505, %v1560
      %v1635 = vsub.f32 %v1506, %v1560
      %v1636 = vsub.f32 %v1507, %v1561
      %v1637 = vsub.f32 %v1508, %v1561
      %v1638 = vsub.f32 %v1509, %v1561
      %v1639 = vsub.f32 %v1510, %v1561
      %v1640 = vsub.f32 %v1511, %v1561
      %v1641 = vsub.f32 %v1512, %v1561
      %v1642 = vsub.f32 %v1513, %v1561
      %v1643 = vsub.f32 %v1514, %v1561
      %v1644 = vadd.f32 %v1626, 1e-05
      %v1645 = vadd.f32 %v1627, 1e-05
      %v1646 = vrsqrt.pop %v1644
      %v1647 = vrsqrt.pop %v1645
      %v1648 = vmul.f32 %v1628, %v1646
      %v1649 = vmul.f32 %v1629, %v1646
      %v1650 = vmul.f32 %v1630, %v1646
      %v1651 = vmul.f32 %v1631, %v1646
      %v1652 = vmul.f32 %v1632, %v1646
      %v1653 = vmul.f32 %v1633, %v1646
      %v1654 = vmul.f32 %v1634, %v1646
      %v1655 = vmul.f32 %v1635, %v1646
      %v1656 = vmul.f32 %v1636, %v1647
      %v1657 = vmul.f32 %v1637, %v1647
      %v1658 = vmul.f32 %v1638, %v1647
      %v1659 = vmul.f32 %v1639, %v1647
      %v1660 = vmul.f32 %v1640, %v1647
      %v1661 = vmul.f32 %v1641, %v1647
      %v1662 = vmul.f32 %v1642, %v1647
      %v1663 = vmul.f32 %v1643, %v1647
      %v1665 = vlaneseq
      %v1666 = vshrl.u32 %v1665, 7
      %v1667 = vsub.s32 0, %v1666
      %v1668 = vrot.slane %v1515, %v1667
      %v1670 = vmul.f32 %v1648, %v1668
      %v1671 = vmul.f32 %v1649, %v1668
      %v1672 = vmul.f32 %v1650, %v1668
      %v1673 = vmul.f32 %v1651, %v1668
      %v1674 = vmul.f32 %v1652, %v1668
      %v1675 = vmul.f32 %v1653, %v1668
      %v1676 = vmul.f32 %v1654, %v1668
      %v1677 = vmul.f32 %v1655, %v1668
      %v1678 = vmul.f32 %v1656, %v1668
      %v1679 = vmul.f32 %v1657, %v1668
      %v1680 = vmul.f32 %v1658, %v1668
      %v1681 = vmul.f32 %v1659, %v1668
      %v1682 = vmul.f32 %v1660, %v1668
      %v1683 = vmul.f32 %v1661, %v1668
      %v1684 = vmul.f32 %v1662, %v1668
      %v1685 = vmul.f32 %v1663, %v1668
      %v1687 = vlaneseq
      %v1688 = vshrl.u32 %v1687, 7
      %v1689 = vsub.s32 0, %v1688
      %v1690 = vrot.slane %v1516, %v1689
      %v1692 = vadd.f32 %v1670, %v1690
      %v1693 = vadd.f32 %v1671, %v1690
      %v1694 = vadd.f32 %v1672, %v1690
      %v1695 = vadd.f32 %v1673, %v1690
      %v1696 = vadd.f32 %v1674, %v1690
      %v1697 = vadd.f32 %v1675, %v1690
      %v1698 = vadd.f32 %v1676, %v1690
      %v1699 = vadd.f32 %v1677, %v1690
      %v1700 = vadd.f32 %v1678, %v1690
      %v1701 = vadd.f32 %v1679, %v1690
      %v1702 = vadd.f32 %v1680, %v1690
      %v1703 = vadd.f32 %v1681, %v1690
      %v1704 = vadd.f32 %v1682, %v1690
      %v1705 = vadd.f32 %v1683, %v1690
      %v1706 = vadd.f32 %v1684, %v1690
      %v1707 = vadd.f32 %v1685, %v1690
      %v1708 = vmul.f32 %v1692, 0.2
      %v1709 = vmul.f32 %v1693, 0.2
      %v1710 = vmul.f32 %v1694, 0.2
      %v1711 = vmul.f32 %v1695, 0.2
      %v1712 = vmul.f32 %v1696, 0.2
      %v1713 = vmul.f32 %v1697, 0.2
      %v1714 = vmul.f32 %v1698, 0.2
      %v1715 = vmul.f32 %v1699, 0.2
      %v1716 = vmul.f32 %v1700, 0.2
      %v1717 = vmul.f32 %v1701, 0.2
      %v1718 = vmul.f32 %v1702, 0.2
      %v1719 = vmul.f32 %v1703, 0.2
      %v1720 = vmul.f32 %v1704, 0.2
      %v1721 = vmul.f32 %v1705, 0.2
      %v1722 = vmul.f32 %v1706, 0.2
      %v1723 = vmul.f32 %v1707, 0.2
      %v1724 = vmax.f32 %v1692, %v1708
      %v1725 = vmax.f32 %v1693, %v1709
      %v1726 = vmax.f32 %v1694, %v1710
      %v1727 = vmax.f32 %v1695, %v1711
      %v1728 = vmax.f32 %v1696, %v1712
      %v1729 = vmax.f32 %v1697, %v1713
      %v1730 = vmax.f32 %v1698, %v1714
      %v1731 = vmax.f32 %v1699, %v1715
      %v1732 = vmax.f32 %v1700, %v1716
      %v1733 = vmax.f32 %v1701, %v1717
      %v1734 = vmax.f32 %v1702, %v1718
      %v1735 = vmax.f32 %v1703, %v1719
      %v1736 = vmax.f32 %v1704, %v1720
      %v1737 = vmax.f32 %v1705, %v1721
      %v1738 = vmax.f32 %v1706, %v1722
      %v1739 = vmax.f32 %v1707, %v1723
      %v1740 = vpack.c.bf16 %v1724, %v1724
      %v1741 = vpack.c.bf16 %v1725, %v1725
      %v1742 = vpack.c.bf16 %v1726, %v1726
      %v1743 = vpack.c.bf16 %v1727, %v1727
      %v1744 = vpack.c.bf16 %v1728, %v1728
      %v1745 = vpack.c.bf16 %v1729, %v1729
      %v1746 = vpack.c.bf16 %v1730, %v1730
      %v1747 = vpack.c.bf16 %v1731, %v1731
      %v1748 = vpack.c.bf16 %v1732, %v1732
      %v1749 = vpack.c.bf16 %v1733, %v1733
      %v1750 = vpack.c.bf16 %v1734, %v1734
      %v1751 = vpack.c.bf16 %v1735, %v1735
      %v1752 = vpack.c.bf16 %v1736, %v1736
      %v1753 = vpack.c.bf16 %v1737, %v1737
      %v1754 = vpack.c.bf16 %v1738, %v1738
      %v1755 = vpack.c.bf16 %v1739, %v1739
      %vm1756 = vcmask 257024
      %1757 = vst.msk [vmem:[%s204] sm:$0xf] %vm1756, %v1740
      %1758 = vst.msk [vmem:[%s204 + $0x4] sm:$0xf] %vm1756, %v1741
      %1759 = vst.msk [vmem:[%s204 + $0x8] sm:$0xf] %vm1756, %v1742
      %1760 = vst.msk [vmem:[%s204 + $0xc] sm:$0xf] %vm1756, %v1743
      %1761 = vst.msk [vmem:[%s204 + $0x10] sm:$0xf] %vm1756, %v1744
      %1762 = vst.msk [vmem:[%s204 + $0x14] sm:$0xf] %vm1756, %v1745
      %1763 = vst.msk [vmem:[%s204 + $0x18] sm:$0xf] %vm1756, %v1746
      %1764 = vst.msk [vmem:[%s204 + $0x1c] sm:$0xf] %vm1756, %v1747
      %1765 = vst.msk [vmem:[%s204 + $0x20] sm:$0xf] %vm1756, %v1748
      %1766 = vst.msk [vmem:[%s204 + $0x24] sm:$0xf] %vm1756, %v1749
      %1767 = vst.msk [vmem:[%s204 + $0x28] sm:$0xf] %vm1756, %v1750
      %1768 = vst.msk [vmem:[%s204 + $0x2c] sm:$0xf] %vm1756, %v1751
      %1769 = vst.msk [vmem:[%s204 + $0x30] sm:$0xf] %vm1756, %v1752
      %1770 = vst.msk [vmem:[%s204 + $0x34] sm:$0xf] %vm1756, %v1753
      %1771 = vst.msk [vmem:[%s204 + $0x38] sm:$0xf] %vm1756, %v1754
      %1772 = vst.msk [vmem:[%s204 + $0x3c] sm:$0xf] %vm1756, %v1755
      %s1773 = smul.u32 2, %s15
      %p1774 = scmp.lt.s32.totalorder %s1773, 3
      %s1775 = scalar_select %p1774, %s1773, 3
      %s1776 = smul.addr %s1775, 8
      %s1777 = smul.addr %s1776, 4
      %s1778 = scalar_lea.vmem %s4, %s1777
      // Predicated region
      $region37: #{encoder_forward.4} parent=35 // pred_check
        %p1779 = pneg %p122
      $region38: #{encoder_forward.4} parent=35 // pred_check_branch
        %1781 = sbr.rel (%p1779) target = $region40
      $region39: #{encoder_forward.4} parent=35 // pred_region
        %s1782 = smul.u32 2, %s15
      $region40: #{encoder_forward.4} parent=35 // pred_fallthru
        _
    $region36: #{encoder_forward.4} parent=5 // pred_fallthru
      _
    %p1783 = scmp.le.s32.totalorder 2, %s10
    // Predicated region
    $region41: #{encoder_forward.4} parent=5 // pred_check
      %p1784 = pneg %p1783
    $region42: #{encoder_forward.4} parent=5 // pred_check_branch
      %1786 = sbr.rel (%p1784) target = $region44
    $region43: #{encoder_forward.4} parent=5 // pred_region
      %s1787 = ssub.s32 %s10, 2
      // Predicated region
      $region45: #{encoder_forward.4} parent=43 // pred_check
        %p1788 = pneg %p128
      $region46: #{encoder_forward.4} parent=43 // pred_check_branch
        %1790 = sbr.rel (%p1788) target = $region48
      $region47: #{encoder_forward.4} parent=43 // pred_region
        %s1791 = smul.u32 2, %s16
        %p1792 = scmp.lt.s32.totalorder %s1791, 3
        %s1793 = scalar_select %p1792, %s1791, 3
        %s1794 = smul.addr %s1793, 8
        %s1795 = smul.addr %s1794, 4
        %s1796 = scalar_lea.vmem %s4, %s1795
      $region48: #{encoder_forward.4} parent=43 // pred_fallthru
        _
    $region44: #{encoder_forward.4} parent=5 // pred_fallthru
      _
  $region6: #{encoder_forward.4} parent=0 // loop_footer
    %s14 = sadd.s32 1, %s10
  $region7: #{encoder_forward.4} parent=0 // loop_footer_branch
    %9 = sbr.rel target = $region3
  $region8: #{encoder_forward.4} parent=0 // loop_exit
    _

// kernel: encoder_forward.5
$region0: #{encoder_forward.5}
  #allocation0 [shape = 'u32[]', space=smem, size = 0x4, offset = 0x4, fixed_abs, tag = 'smem constant byte address 0x4 - core index']
  #allocation1 [shape = 'u32[144,128]{1,0:T(1,128)}', space=vmem, size = 0x12000, scoped, tag = 'internal scratch']
  %s0 = inlined_call_operand.vmem [shape: bf16[4,16,512], index: 0, kind: input, shape index: {}]
  %s1 = inlined_call_operand.vmem [shape: bf16[512,64], index: 1, kind: input, shape index: {}]
  %s2 = inlined_call_operand.vmem [shape: f32[1,1,64], index: 2, kind: input, shape index: {}]
  %s3 = inlined_call_operand.vmem [shape: f32[1,1,64], index: 3, kind: input, shape index: {}]
  %s4 = inlined_call_operand.vmem [shape: bf16[16,64,8], index: 4, kind: input, shape index: {}]
  %s5 = inlined_call_operand.hbm [shape: f32[4,1,8], index: 5, kind: output, shape index: {}]
  %s6 = sld [smem:[#allocation0]]
  $region53: #{encoder_forward.5} parent=0
    _
  %s8 = ssub.s32 1, %s6
  %s9 = scalar_select 0, %s8, %s6
  $region1: #{encoder_forward.5} parent=0
    #allocation2 [shape = 'u8[2048]{0}', space=vmem, size = 0x800, scoped, tag = 'output window, operand 0']
    #allocation3 [shape = 's32[2]{0}', space=sflag, size = 0x8, scoped, tag = 'scoped memory for encoder_forward.5']
    %10 = vsyncpa [#allocation3], 0
    %s11 = scalar_lea.sflag [#allocation3], 1
    %12 = vsyncpa %s11, 0
    loop: start=0, step=1, limit=4
    $region2: #{encoder_forward.5} parent=1 // loop_pre_header
      _
    $region3: #{encoder_forward.5} parent=1 // loop_header
      %s14 = sphi 0, %s18
      %p15 = scmp.ge.s32.totalorder %s14, 4
      %s24 = sphi 0, %s26
      %s27 = sphi 0, %s24
      %s28 = sphi 0, %s27
      %s44 = sphi 0, %s28
      %s48 = sphi 0, %s48
      %s50 = sphi 0, %s48
      %s51 = sphi 0, %s50
      %s65 = sphi 0, %s51
      %s69 = sphi 0, %s69
      %s71 = sphi 0, %s69
      %s72 = sphi 0, %s71
      %s86 = sphi 0, %s72
      %s90 = sphi 0, %s90
      %s92 = sphi 0, %s90
      %s93 = sphi 0, %s92
      %s107 = sphi 0, %s93
      %s111 = sphi 0, %s111
      %s113 = sphi 0, %s111
      %s114 = sphi 0, %s113
      %s128 = sphi 0, %s114
      %s134 = sphi 0, %s136
      %s137 = sphi 0, %s134
      %s138 = sphi 0, %s137
      %s154 = sphi 0, %s138
    $region4: #{encoder_forward.5} parent=1 // loop_header_branch
      %17 = sbr.rel (%p15) target = $region8
    $region5: #{encoder_forward.5} parent=1 // loop_body
      %s19 = ssub.s32 %s14, 1
      %s20 = ssub.s32 %s14, 2
      %s21 = sadd.s32 %s14, 1
      %s22 = ssub.s32 %s14, %s21
      %p23 = scmp.eq.s32.totalorder %s22, 0
      %s25 = sadd.s32 %s24, 1
      %s26 = scalar_select %p23, %s24, %s25
      %p29 = pneg %p23
      %p30 = scmp.eq.s32.totalorder %s14, 1
      %p31 = por %p29, %p30
      %p32 = scmp.ne.s32.totalorder %s24, %s27
      %p33 = scmp.eq.s32.totalorder %s14, 0
      %p34 = por %p32, %p33
      %p35 = scmp.ne.s32.totalorder %s24, %s27
      %p36 = scmp.eq.s32.totalorder %s19, 1
      %p37 = por %p35, %p36
      %p38 = scmp.ne.s32.totalorder %s27, %s28
      %p39 = scmp.eq.s32.totalorder %s19, 0
      %p40 = por %p38, %p39
      %p41 = scmp.ne.s32.totalorder %s27, %s28
      %p42 = scmp.eq.s32.totalorder %s20, 1
      %p43 = por %p41, %p42
      %p45 = scmp.ne.s32.totalorder %s28, %s44
      %p46 = scmp.eq.s32.totalorder %s20, 0
      %p47 = por %p45, %p46
      %s49 = sadd.s32 %s48, 1
      %p52 = scmp.eq.s32.totalorder %s14, 1
      %p53 = scmp.ne.s32.totalorder %s48, %s50
      %p54 = scmp.eq.s32.totalorder %s14, 0
      %p55 = por %p53, %p54
      %p56 = scmp.ne.s32.totalorder %s48, %s50
      %p57 = scmp.eq.s32.totalorder %s19, 1
      %p58 = por %p56, %p57
      %p59 = scmp.ne.s32.totalorder %s50, %s51
      %p60 = scmp.eq.s32.totalorder %s19, 0
      %p61 = por %p59, %p60
      %p62 = scmp.ne.s32.totalorder %s50, %s51
      %p63 = scmp.eq.s32.totalorder %s20, 1
      %p64 = por %p62, %p63
      %p66 = scmp.ne.s32.totalorder %s51, %s65
      %p67 = scmp.eq.s32.totalorder %s20, 0
      %p68 = por %p66, %p67
      %s70 = sadd.s32 %s69, 1
      %p73 = scmp.eq.s32.totalorder %s14, 1
      %p74 = scmp.ne.s32.totalorder %s69, %s71
      %p75 = scmp.eq.s32.totalorder %s14, 0
      %p76 = por %p74, %p75
      %p77 = scmp.ne.s32.totalorder %s69, %s71
      %p78 = scmp.eq.s32.totalorder %s19, 1
      %p79 = por %p77, %p78
      %p80 = scmp.ne.s32.totalorder %s71, %s72
      %p81 = scmp.eq.s32.totalorder %s19, 0
      %p82 = por %p80, %p81
      %p83 = scmp.ne.s32.totalorder %s71, %s72
      %p84 = scmp.eq.s32.totalorder %s20, 1
      %p85 = por %p83, %p84
      %p87 = scmp.ne.s32.totalorder %s72, %s86
      %p88 = scmp.eq.s32.totalorder %s20, 0
      %p89 = por %p87, %p88
      %s91 = sadd.s32 %s90, 1
      %p94 = scmp.eq.s32.totalorder %s14, 1
      %p95 = scmp.ne.s32.totalorder %s90, %s92
      %p96 = scmp.eq.s32.totalorder %s14, 0
      %p97 = por %p95, %p96
      %p98 = scmp.ne.s32.totalorder %s90, %s92
      %p99 = scmp.eq.s32.totalorder %s19, 1
      %p100 = por %p98, %p99
      %p101 = scmp.ne.s32.totalorder %s92, %s93
      %p102 = scmp.eq.s32.totalorder %s19, 0
      %p103 = por %p101, %p102
      %p104 = scmp.ne.s32.totalorder %s92, %s93
      %p105 = scmp.eq.s32.totalorder %s20, 1
      %p106 = por %p104, %p105
      %p108 = scmp.ne.s32.totalorder %s93, %s107
      %p109 = scmp.eq.s32.totalorder %s20, 0
      %p110 = por %p108, %p109
      %s112 = sadd.s32 %s111, 1
      %p115 = scmp.eq.s32.totalorder %s14, 1
      %p116 = scmp.ne.s32.totalorder %s111, %s113
      %p117 = scmp.eq.s32.totalorder %s14, 0
      %p118 = por %p116, %p117
      %p119 = scmp.ne.s32.totalorder %s111, %s113
      %p120 = scmp.eq.s32.totalorder %s19, 1
      %p121 = por %p119, %p120
      %p122 = scmp.ne.s32.totalorder %s113, %s114
      %p123 = scmp.eq.s32.totalorder %s19, 0
      %p124 = por %p122, %p123
      %p125 = scmp.ne.s32.totalorder %s113, %s114
      %p126 = scmp.eq.s32.totalorder %s20, 1
      %p127 = por %p125, %p126
      %p129 = scmp.ne.s32.totalorder %s114, %s128
      %p130 = scmp.eq.s32.totalorder %s20, 0
      %p131 = por %p129, %p130
      %s132 = ssub.s32 %s14, %s21
      %p133 = scmp.eq.s32.totalorder %s132, 0
      %s135 = sadd.s32 %s134, 1
      %s136 = scalar_select %p133, %s134, %s135
      %p139 = pneg %p133
      %p140 = scmp.eq.s32.totalorder %s14, 1
      %p141 = por %p139, %p140
      %p142 = scmp.ne.s32.totalorder %s134, %s137
      %p143 = scmp.eq.s32.totalorder %s14, 0
      %p144 = por %p142, %p143
      %p145 = scmp.ne.s32.totalorder %s134, %s137
      %p146 = scmp.eq.s32.totalorder %s19, 1
      %p147 = por %p145, %p146
      %p148 = scmp.ne.s32.totalorder %s137, %s138
      %p149 = scmp.eq.s32.totalorder %s19, 0
      %p150 = por %p148, %p149
      %p151 = scmp.ne.s32.totalorder %s137, %s138
      %p152 = scmp.eq.s32.totalorder %s20, 1
      %p153 = por %p151, %p152
      %p155 = scmp.ne.s32.totalorder %s138, %s154
      %p156 = scmp.eq.s32.totalorder %s20, 0
      %p157 = por %p155, %p156
      %p158 = scmp.le.s32.totalorder 1, %s14
      %p159 = scmp.lt.s32.totalorder %s14, 3
      %p160 = pnand %p158, %p159
      %p161 = pneg %p160
      // Predicated region
      $region9: #{encoder_forward.5} parent=5 // pred_check
        _
      $region10: #{encoder_forward.5} parent=5 // pred_check_branch
        %163 = sbr.rel (%p160) target = $region12
      $region11: #{encoder_forward.5} parent=5 // pred_region
        %s164 = ssub.s32 %s14, 1
        // Predicated region
        $region13: #{encoder_forward.5} parent=11 // pred_check
          %p165 = pneg %p61
        $region14: #{encoder_forward.5} parent=11 // pred_check_branch
          %167 = sbr.rel (%p165) target = $region16
        $region15: #{encoder_forward.5} parent=11 // pred_region
          _
        $region16: #{encoder_forward.5} parent=11 // pred_fallthru
          _
        // Predicated region
        $region17: #{encoder_forward.5} parent=11 // pred_check
          %p168 = pneg %p82
        $region18: #{encoder_forward.5} parent=11 // pred_check_branch
          %170 = sbr.rel (%p168) target = $region20
        $region19: #{encoder_forward.5} parent=11 // pred_region
          _
        $region20: #{encoder_forward.5} parent=11 // pred_fallthru
          _
        // Predicated region
        $region21: #{encoder_forward.5} parent=11 // pred_check
          %p171 = pneg %p103
        $region22: #{encoder_forward.5} parent=11 // pred_check_branch
          %173 = sbr.rel (%p171) target = $region24
        $region23: #{encoder_forward.5} parent=11 // pred_region
          _
        $region24: #{encoder_forward.5} parent=11 // pred_fallthru
          _
        // Predicated region
        $region25: #{encoder_forward.5} parent=11 // pred_check
          %p174 = pneg %p124
        $region26: #{encoder_forward.5} parent=11 // pred_check_branch
          %176 = sbr.rel (%p174) target = $region28
        $region27: #{encoder_forward.5} parent=11 // pred_region
          _
        $region28: #{encoder_forward.5} parent=11 // pred_fallthru
          _
      $region12: #{encoder_forward.5} parent=5 // pred_fallthru
        _
      %p177 = scmp.lt.s32.totalorder %s14, 2
      // Predicated region
      $region29: #{encoder_forward.5} parent=5 // pred_check
        %p178 = pneg %p177
      $region30: #{encoder_forward.5} parent=5 // pred_check_branch
        %180 = sbr.rel (%p178) target = $region32
      $region31: #{encoder_forward.5} parent=5 // pred_region
        // Predicated region
        $region33: #{encoder_forward.5} parent=31 // pred_check
          %p181 = pneg %p34
        $region34: #{encoder_forward.5} parent=31 // pred_check_branch
          %183 = sbr.rel (%p181) target = $region36
        $region35: #{encoder_forward.5} parent=31 // pred_region
          %s184 = smul.u32 2, %s14
          %p185 = scmp.lt.s32.totalorder %s184, 3
          %s186 = scalar_select %p185, %s184, 3
          %s187 = smul.addr %s186, 8
          %s188 = smul.addr %s187, 4
          %s189 = scalar_lea.vmem %s0, %s188
          %s190 = smul.u32 2, %s14
        $region36: #{encoder_forward.5} parent=31 // pred_fallthru
          _
      $region32: #{encoder_forward.5} parent=5 // pred_fallthru
        _
      %p191 = scmp.le.s32.totalorder 1, %s14
      %p192 = scmp.lt.s32.totalorder %s14, 3
      %p193 = pnand %p191, %p192
      %p194 = pneg %p193
      // Predicated region
      $region37: #{encoder_forward.5} parent=5 // pred_check
        _
      $region38: #{encoder_forward.5} parent=5 // pred_check_branch
        %196 = sbr.rel (%p193) target = $region40
      $region39: #{encoder_forward.5} parent=5 // pred_region
        %s197 = ssub.s32 %s14, 1
        %s198 = smul.u32 2, %s19
        %p199 = scmp.lt.s32.totalorder %s198, 3
        %s200 = scalar_select %p199, %s198, 3
        %s201 = smul.addr %s200, 8
        %s202 = smul.addr %s201, 4
        %s203 = scalar_lea.vmem %s0, %s202
        %p204 = pneg %p40
        %p205 = pneg %p37
        %p206 = pneg %p61
        %p207 = pneg %p58
        %p208 = pneg %p82
        %p209 = pneg %p79
        %p210 = pneg %p103
        %p211 = pneg %p100
        %p212 = pneg %p124
        %p213 = pneg %p121
        %p214 = pneg %p150
        %p215 = pneg %p147
        %s216 = sand.u32 %s137, 1
        %s217 = scalar_lea.sflag [#allocation3], %s216
        %s218 = sand.u32 %s137, 1
        %s219 = smul.addr %s218, 2
        %s220 = scalar_lea.vmem [#allocation2], %s219
        %s221 = smul.u32 2, %s19
        %p222 = scmp.lt.s32.totalorder %s221, 3
        %s223 = scalar_select %p222, %s221, 3
        %s224 = smul.addr %s223, 8
        %s225 = smul.addr %s224, 4
        %s226 = scalar_lea.vmem %s0, %s225
        %s227 = smul.u32 2, %s19
        %s228 = smul.u32 2, %s19
        %v230 = vld [vmem:[%s226] sm:$0xff]
        %v231 = vld [vmem:[%s226 + $0x8] sm:$0xff]
        %v232 = vld [vmem:[%s226 + $0x10] sm:$0xff]
        %v233 = vld [vmem:[%s226 + $0x18] sm:$0xff]
        %v234 = vld [vmem:[%s226 + $0x20] sm:$0xff]
        %v235 = vld [vmem:[%s226 + $0x28] sm:$0xff]
        %v236 = vld [vmem:[%s226 + $0x30] sm:$0xff]
        %v237 = vld [vmem:[%s226 + $0x38] sm:$0xff]
        %v238 = vld [vmem:[%s1] sm:$0xf]
        %v239 = vld [vmem:[%s1 + $0x4] sm:$0xf]
        %v240 = vld [vmem:[%s1 + $0x8] sm:$0xf]
        %v241 = vld [vmem:[%s1 + $0xc] sm:$0xf]
        %v242 = vld [vmem:[%s1 + $0x10] sm:$0xf]
        %v243 = vld [vmem:[%s1 + $0x14] sm:$0xf]
        %v244 = vld [vmem:[%s1 + $0x18] sm:$0xf]
        %v245 = vld [vmem:[%s1 + $0x1c] sm:$0xf]
        %v246 = vld [vmem:[%s1 + $0x20] sm:$0xf]
        %v247 = vld [vmem:[%s1 + $0x24] sm:$0xf]
        %v248 = vld [vmem:[%s1 + $0x28] sm:$0xf]
        %v249 = vld [vmem:[%s1 + $0x2c] sm:$0xf]
        %v250 = vld [vmem:[%s1 + $0x30] sm:$0xf]
        %v251 = vld [vmem:[%s1 + $0x34] sm:$0xf]
        %v252 = vld [vmem:[%s1 + $0x38] sm:$0xf]
        %v253 = vld [vmem:[%s1 + $0x3c] sm:$0xf]
        %v254 = vld [vmem:[%s1 + $0x40] sm:$0xf]
        %v255 = vld [vmem:[%s1 + $0x44] sm:$0xf]
        %v256 = vld [vmem:[%s1 + $0x48] sm:$0xf]
        %v257 = vld [vmem:[%s1 + $0x4c] sm:$0xf]
        %v258 = vld [vmem:[%s1 + $0x50] sm:$0xf]
        %v259 = vld [vmem:[%s1 + $0x54] sm:$0xf]
        %v260 = vld [vmem:[%s1 + $0x58] sm:$0xf]
        %v261 = vld [vmem:[%s1 + $0x5c] sm:$0xf]
        %v262 = vld [vmem:[%s1 + $0x60] sm:$0xf]
        %v263 = vld [vmem:[%s1 + $0x64] sm:$0xf]
        %v264 = vld [vmem:[%s1 + $0x68] sm:$0xf]
        %v265 = vld [vmem:[%s1 + $0x6c] sm:$0xf]
        %v266 = vld [vmem:[%s1 + $0x70] sm:$0xf]
        %v267 = vld [vmem:[%s1 + $0x74] sm:$0xf]
        %v268 = vld [vmem:[%s1 + $0x78] sm:$0xf]
        %v269 = vld [vmem:[%s1 + $0x7c] sm:$0xf]
        %v270 = vld [vmem:[%s1 + $0x80] sm:$0xf]
        %v271 = vld [vmem:[%s1 + $0x84] sm:$0xf]
        %v272 = vld [vmem:[%s1 + $0x88] sm:$0xf]
        %v273 = vld [vmem:[%s1 + $0x8c] sm:$0xf]
        %v274 = vld [vmem:[%s1 + $0x90] sm:$0xf]
        %v275 = vld [vmem:[%s1 + $0x94] sm:$0xf]
        %v276 = vld [vmem:[%s1 + $0x98] sm:$0xf]
        %v277 = vld [vmem:[%s1 + $0x9c] sm:$0xf]
        %v278 = vld [vmem:[%s1 + $0xa0] sm:$0xf]
        %v279 = vld [vmem:[%s1 + $0xa4] sm:$0xf]
        %v280 = vld [vmem:[%s1 + $0xa8] sm:$0xf]
        %v281 = vld [vmem:[%s1 + $0xac] sm:$0xf]
        %v282 = vld [vmem:[%s1 + $0xb0] sm:$0xf]
        %v283 = vld [vmem:[%s1 + $0xb4] sm:$0xf]
        %v284 = vld [vmem:[%s1 + $0xb8] sm:$0xf]
        %v285 = vld [vmem:[%s1 + $0xbc] sm:$0xf]
        %v286 = vld [vmem:[%s1 + $0xc0] sm:$0xf]
        %v287 = vld [vmem:[%s1 + $0xc4] sm:$0xf]
        %v288 = vld [vmem:[%s1 + $0xc8] sm:$0xf]
        %v289 = vld [vmem:[%s1 + $0xcc] sm:$0xf]
        %v290 = vld [vmem:[%s1 + $0xd0] sm:$0xf]
        %v291 = vld [vmem:[%s1 + $0xd4] sm:$0xf]
        %v292 = vld [vmem:[%s1 + $0xd8] sm:$0xf]
        %v293 = vld [vmem:[%s1 + $0xdc] sm:$0xf]
        %v294 = vld [vmem:[%s1 + $0xe0] sm:$0xf]
        %v295 = vld [vmem:[%s1 + $0xe4] sm:$0xf]
        %v296 = vld [vmem:[%s1 + $0xe8] sm:$0xf]
        %v297 = vld [vmem:[%s1 + $0xec] sm:$0xf]
        %v298 = vld [vmem:[%s1 + $0xf0] sm:$0xf]
        %v299 = vld [vmem:[%s1 + $0xf4] sm:$0xf]
        %v300 = vld [vmem:[%s1 + $0xf8] sm:$0xf]
        %v301 = vld [vmem:[%s1 + $0xfc] sm:$0xf]
        %v310 = vunpack.c.l.b16 %v230
        %v311 = vunpack.c.h.b16 %v230
        %v312 = vunpack.c.l.b16 %v231
        %v313 = vunpack.c.h.b16 %v231
        %v314 = vunpack.c.l.b16 %v232
        %v315 = vunpack.c.h.b16 %v232
        %v316 = vunpack.c.l.b16 %v233
        %v317 = vunpack.c.h.b16 %v233
        %v318 = vunpack.c.l.b16 %v234
        %v319 = vunpack.c.h.b16 %v234
        %v320 = vunpack.c.l.b16 %v235
        %v321 = vunpack.c.h.b16 %v235
        %v322 = vunpack.c.l.b16 %v236
        %v323 = vunpack.c.h.b16 %v236
        %v324 = vunpack.c.l.b16 %v237
        %v325 = vunpack.c.h.b16 %v237
        %v326 = vpack.c.b16 %v314, %v310
        %v327 = vpack.c.b16 %v315, %v311
        %v328 = vpack.c.b16 %v316, %v312
        %v329 = vpack.c.b16 %v317, %v313
        %v330 = vpack.c.b16 %v322, %v318
        %v331 = vpack.c.b16 %v323, %v319
        %v332 = vpack.c.b16 %v324, %v320
        %v333 = vpack.c.b16 %v325, %v321
        %v406 = vunpack.c.l.b16 %v238
        %v407 = vunpack.c.l.b16 %v239
        %v408 = vunpack.c.l.b16 %v240
        %v409 = vunpack.c.l.b16 %v241
        %v410 = vunpack.c.l.b16 %v242
        %v411 = vunpack.c.l.b16 %v243
        %v412 = vunpack.c.l.b16 %v244
        %v413 = vunpack.c.l.b16 %v245
        %v414 = vunpack.c.l.b16 %v246
        %v415 = vunpack.c.l.b16 %v247
        %v416 = vunpack.c.l.b16 %v248
        %v417 = vunpack.c.l.b16 %v249
        %v418 = vunpack.c.l.b16 %v250
        %v419 = vunpack.c.l.b16 %v251
        %v420 = vunpack.c.l.b16 %v252
        %v421 = vunpack.c.l.b16 %v253
        %v422 = vunpack.c.l.b16 %v254
        %v423 = vunpack.c.l.b16 %v255
        %v424 = vunpack.c.l.b16 %v256
        %v425 = vunpack.c.l.b16 %v257
        %v426 = vunpack.c.l.b16 %v258
        %v427 = vunpack.c.l.b16 %v259
        %v428 = vunpack.c.l.b16 %v260
        %v429 = vunpack.c.l.b16 %v261
        %v430 = vunpack.c.l.b16 %v262
        %v431 = vunpack.c.l.b16 %v263
        %v432 = vunpack.c.l.b16 %v264
        %v433 = vunpack.c.l.b16 %v265
        %v434 = vunpack.c.l.b16 %v266
        %v435 = vunpack.c.l.b16 %v267
        %v436 = vunpack.c.l.b16 %v268
        %v437 = vunpack.c.l.b16 %v269
        %v438 = vunpack.c.l.b16 %v270
        %v439 = vunpack.c.l.b16 %v271
        %v440 = vunpack.c.l.b16 %v272
        %v441 = vunpack.c.l.b16 %v273
        %v442 = vunpack.c.l.b16 %v274
        %v443 = vunpack.c.l.b16 %v275
        %v444 = vunpack.c.l.b16 %v276
        %v445 = vunpack.c.l.b16 %v277
        %v446 = vunpack.c.l.b16 %v278
        %v447 = vunpack.c.l.b16 %v279
        %v448 = vunpack.c.l.b16 %v280
        %v449 = vunpack.c.l.b16 %v281
        %v450 = vunpack.c.l.b16 %v282
        %v451 = vunpack.c.l.b16 %v283
        %v452 = vunpack.c.l.b16 %v284
        %v453 = vunpack.c.l.b16 %v285
        %v454 = vunpack.c.l.b16 %v286
        %v455 = vunpack.c.l.b16 %v287
        %v456 = vunpack.c.l.b16 %v288
        %v457 = vunpack.c.l.b16 %v289
        %v458 = vunpack.c.l.b16 %v290
        %v459 = vunpack.c.l.b16 %v291
        %v460 = vunpack.c.l.b16 %v292
        %v461 = vunpack.c.l.b16 %v293
        %v462 = vunpack.c.l.b16 %v294
        %v463 = vunpack.c.l.b16 %v295
        %v464 = vunpack.c.l.b16 %v296
        %v465 = vunpack.c.l.b16 %v297
        %v466 = vunpack.c.l.b16 %v298
        %v467 = vunpack.c.l.b16 %v299
        %v468 = vunpack.c.l.b16 %v300
        %v469 = vunpack.c.l.b16 %v301
        %v470 = vpack.c.b16 %v407, %v406
        %v471 = vpack.c.b16 %v409, %v408
        %v472 = vpack.c.b16 %v411, %v410
        %v473 = vpack.c.b16 %v413, %v412
        %v474 = vpack.c.b16 %v415, %v414
        %v475 = vpack.c.b16 %v417, %v416
        %v476 = vpack.c.b16 %v419, %v418
        %v477 = vpack.c.b16 %v421, %v420
        %v478 = vpack.c.b16 %v423, %v422
        %v479 = vpack.c.b16 %v425, %v424
        %v480 = vpack.c.b16 %v427, %v426
        %v481 = vpack.c.b16 %v429, %v428
        %v482 = vpack.c.b16 %v431, %v430
        %v483 = vpack.c.b16 %v433, %v432
        %v484 = vpack.c.b16 %v435, %v434
        %v485 = vpack.c.b16 %v437, %v436
        %v486 = vpack.c.b16 %v439, %v438
        %v487 = vpack.c.b16 %v441, %v440
        %v488 = vpack.c.b16 %v443, %v442
        %v489 = vpack.c.b16 %v445, %v444
        %v490 = vpack.c.b16 %v447, %v446
        %v491 = vpack.c.b16 %v449, %v448
        %v492 = vpack.c.b16 %v451, %v450
        %v493 = vpack.c.b16 %v453, %v452
        %v494 = vpack.c.b16 %v455, %v454
        %v495 = vpack.c.b16 %v457, %v456
        %v496 = vpack.c.b16 %v459, %v458
        %v497 = vpack.c.b16 %v461, %v460
        %v498 = vpack.c.b16 %v463, %v462
        %v499 = vpack.c.b16 %v465, %v464
        %v500 = vpack.c.b16 %v467, %v466
        %v501 = vpack.c.b16 %v469, %v468
        %534 = vmatprep.subr.bf16.mxu0 0
        %535 = vmatpush1.bf16.msra.mxu0 %v477
        %536 = vmatprep.subr.bf16.mxu0 0
        %537 = vmatpush1.bf16.msra.mxu0 %v476
        %538 = vmatprep.subr.bf16.mxu0 0
        %539 = vmatpush1.bf16.msra.mxu0 %v475
        %540 = vmatprep.subr.bf16.mxu0 0
        %541 = vmatpush1.bf16.msra.mxu0 %v474
        %542 = vmatprep.subr.bf16.mxu0 0
        %543 = vmatpush1.bf16.msra.mxu0 %v473
        %544 = vmatprep.subr.bf16.mxu0 0
        %545 = vmatpush1.bf16.msra.mxu0 %v472
        %546 = vmatprep.subr.bf16.mxu0 0
        %547 = vmatpush1.bf16.msra.mxu0 %v471
        %548 = vmatprep.subr.bf16.mxu0 0
        %549 = vmatpush1.bf16.msra.mxu0 %v470
        %550 = vmatprep.subr.bf16.mxu0 0
        %551 = vmatpush2.bf16.msra.mxu0 %v485
        %552 = vmatprep.subr.bf16.mxu0 0
        %553 = vmatpush2.bf16.msra.mxu0 %v484
        %554 = vmatprep.subr.bf16.mxu0 0
        %555 = vmatpush2.bf16.msra.mxu0 %v483
        %556 = vmatprep.subr.bf16.mxu0 0
        %557 = vmatpush2.bf16.msra.mxu0 %v482
        %558 = vmatprep.subr.bf16.mxu0 0
        %559 = vmatpush2.bf16.msra.mxu0 %v481
        %560 = vmatprep.subr.bf16.mxu0 0
        %561 = vmatpush2.bf16.msra.mxu0 %v480
        %562 = vmatprep.subr.bf16.mxu0 0
        %563 = vmatpush2.bf16.msra.mxu0 %v479
        %564 = vmatprep.subr.bf16.mxu0 0
        %565 = vmatpush2.bf16.msra.mxu0 %v478
        %566 = vmatprep.mubr.bf16.mxu0 %v327
        %567 = vmatmul.mubr.bf16.gmra.mxu0 %v326
        %v568 = vpop.f32.mrf.mxu0
        %v569 = vadd.f32 0.0, %v568
        %v570 = vpop.f32.mrf.mxu0
        %v571 = vpop.f32.mrf.mxu0
        %v572 = vadd.f32 0.0, %v571
        %v573 = vpop.f32.mrf.mxu0
        %574 = vmatprep.mubr.bf16.mxu0 %v331
        %575 = vmatmul.mubr.bf16.gmra.mxu0 %v330
        %v576 = vpop.f32.mrf.mxu0
        %v577 = vadd.f32 0.0, %v576
        %v578 = vpop.f32.mrf.mxu0
        %v579 = vpop.f32.mrf.mxu0
        %v580 = vadd.f32 0.0, %v579
        %v581 = vpop.f32.mrf.mxu0
        %582 = vdwg.mxu0
        %583 = vmatprep.subr.bf16.mxu0 0
        %584 = vmatpush1.bf16.msra.mxu0 %v493
        %585 = vmatprep.subr.bf16.mxu0 0
        %586 = vmatpush1.bf16.msra.mxu0 %v492
        %587 = vmatprep.subr.bf16.mxu0 0
        %588 = vmatpush1.bf16.msra.mxu0 %v491
        %589 = vmatprep.subr.bf16.mxu0 0
        %590 = vmatpush1.bf16.msra.mxu0 %v490
        %591 = vmatprep.subr.bf16.mxu0 0
        %592 = vmatpush1.bf16.msra.mxu0 %v489
        %593 = vmatprep.subr.bf16.mxu0 0
        %594 = vmatpush1.bf16.msra.mxu0 %v488
        %595 = vmatprep.subr.bf16.mxu0 0
        %596 = vmatpush1.bf16.msra.mxu0 %v487
        %597 = vmatprep.subr.bf16.mxu0 0
        %598 = vmatpush1.bf16.msra.mxu0 %v486
        %599 = vmatprep.subr.bf16.mxu0 0
        %600 = vmatpush2.bf16.msra.mxu0 %v501
        %601 = vmatprep.subr.bf16.mxu0 0
        %602 = vmatpush2.bf16.msra.mxu0 %v500
        %603 = vmatprep.subr.bf16.mxu0 0
        %604 = vmatpush2.bf16.msra.mxu0 %v499
        %605 = vmatprep.subr.bf16.mxu0 0
        %606 = vmatpush2.bf16.msra.mxu0 %v498
        %607 = vmatprep.subr.bf16.mxu0 0
        %608 = vmatpush2.bf16.msra.mxu0 %v497
        %609 = vmatprep.subr.bf16.mxu0 0
        %610 = vmatpush2.bf16.msra.mxu0 %v496
        %611 = vmatprep.subr.bf16.mxu0 0
        %612 = vmatpush2.bf16.msra.mxu0 %v495
        %613 = vmatprep.subr.bf16.mxu0 0
        %614 = vmatpush2.bf16.msra.mxu0 %v494
        %615 = vmatprep.mubr.bf16.mxu0 %v329
        %616 = vmatmul.mubr.bf16.gmra.mxu0 %v328
        %v617 = vpop.f32.mrf.mxu0
        %v618 = vadd.f32 %v569, %v617
        %v619 = vpop.f32.mrf.mxu0
        %v620 = vpop.f32.mrf.mxu0
        %v621 = vadd.f32 %v572, %v620
        %v622 = vpop.f32.mrf.mxu0
        %623 = vmatprep.mubr.bf16.mxu0 %v333
        %624 = vmatmul.mubr.bf16.gmra.mxu0 %v332
        %v625 = vpop.f32.mrf.mxu0
        %v626 = vadd.f32 %v577, %v625
        %v627 = vpop.f32.mrf.mxu0
        %v628 = vpop.f32.mrf.mxu0
        %v629 = vadd.f32 %v580, %v628
        %v630 = vpop.f32.mrf.mxu0
        %631 = vdwg.mxu0
        %v632 = vld [vmem:[%s2] sm:$0x1]
        %v633 = vld [vmem:[%s3] sm:$0x1]
        %vm634 = vcmask 523264
        %v635 = vsel %vm634, %v618, 0.0
        %v636 = vsel %vm634, %v621, 0.0
        %v637 = vadd.f32 %v635, %v636
        %v638 = vrot.slane %v637, 4
        %v639 = vadd.f32 %v637, %v638
        %v640 = vrot.slane %v639, 2
        %v641 = vadd.f32 %v639, %v640
        %v642 = vrot.slane %v641, 1
        %v643 = vadd.f32 %v641, %v642
        %v644 = vsel %vm634, %v626, 0.0
        %v645 = vsel %vm634, %v629, 0.0
        %v646 = vadd.f32 %v644, %v645
        %v647 = vrot.slane %v646, 4
        %v648 = vadd.f32 %v646, %v647
        %v649 = vrot.slane %v648, 2
        %v650 = vadd.f32 %v648, %v649
        %v651 = vrot.slane %v650, 1
        %v652 = vadd.f32 %v650, %v651
        %v653 = vmul.f32 %v643, 0.0625
        %v654 = vmul.f32 %v652, 0.0625
        %v655 = vmul.f32 %v618, %v618
        %v656 = vmul.f32 %v621, %v621
        %v657 = vmul.f32 %v626, %v626
        %v658 = vmul.f32 %v629, %v629
        %v659 = vsel %vm634, %v655, 0.0
        %v660 = vsel %vm634, %v656, 0.0
        %v661 = vadd.f32 %v659, %v660
        %v662 = vrot.slane %v661, 4
        %v663 = vadd.f32 %v661, %v662
        %v664 = vrot.slane %v663, 2
        %v665 = vadd.f32 %v663, %v664
        %v666 = vrot.slane %v665, 1
        %v667 = vadd.f32 %v665, %v666
        %v668 = vsel %vm634, %v657, 0.0
        %v669 = vsel %vm634, %v658, 0.0
        %v670 = vadd.f32 %v668, %v669
        %v671 = vrot.slane %v670, 4
        %v672 = vadd.f32 %v670, %v671
        %v673 = vrot.slane %v672, 2
        %v674 = vadd.f32 %v672, %v673
        %v675 = vrot.slane %v674, 1
        %v676 = vadd.f32 %v674, %v675
        %v677 = vmul.f32 %v667, 0.0625
        %v678 = vmul.f32 %v676, 0.0625
        %v679 = vmul.f32 %v653, %v653
        %v680 = vmul.f32 %v654, %v654
        %v681 = vsub.f32 %v677, %v679
        %v682 = vsub.f32 %v678, %v680
        %v683 = vmax.f32 %v681, 0.0
        %v684 = vmax.f32 %v682, 0.0
        %v685 = vsub.f32 %v618, %v653
        %v686 = vsub.f32 %v621, %v653
        %v687 = vsub.f32 %v626, %v654
        %v688 = vsub.f32 %v629, %v654
        %v689 = vadd.f32 %v683, 1e-05
        %v690 = vadd.f32 %v684, 1e-05
        %v691 = vrsqrt.pop %v689
        %v692 = vrsqrt.pop %v690
        %v693 = vmul.f32 %v685, %v691
        %v694 = vmul.f32 %v686, %v691
        %v695 = vmul.f32 %v687, %v692
        %v696 = vmul.f32 %v688, %v692
        %v698 = vlaneseq
        %v699 = vshrl.u32 %v698, 7
        %v700 = vsub.s32 0, %v699
        %v701 = vrot.slane %v632, %v700
        %v703 = vmul.f32 %v693, %v701
        %v704 = vmul.f32 %v694, %v701
        %v705 = vmul.f32 %v695, %v701
        %v706 = vmul.f32 %v696, %v701
        %v708 = vlaneseq
        %v709 = vshrl.u32 %v708, 7
        %v710 = vsub.s32 0, %v709
        %v711 = vrot.slane %v633, %v710
        %v713 = vadd.f32 %v703, %v711
        %v714 = vadd.f32 %v704, %v711
        %v715 = vadd.f32 %v705, %v711
        %v716 = vadd.f32 %v706, %v711
        %v717 = vmul.f32 %v713, 0.2
        %v718 = vmul.f32 %v714, 0.2
        %v719 = vmul.f32 %v715, 0.2
        %v720 = vmul.f32 %v716, 0.2
        %v721 = vmax.f32 %v713, %v717
        %v722 = vmax.f32 %v714, %v718
        %v723 = vmax.f32 %v715, %v719
        %v724 = vmax.f32 %v716, %v720
        %v725 = vpack.c.bf16 %v722, %v721
        %v726 = vpack.c.bf16 %v724, %v723
        %v727 = vld [vmem:[%s4] sm:$0xf]
        %v728 = vld [vmem:[%s4 + $0x4] sm:$0xf]
        %v729 = vld [vmem:[%s4 + $0x8] sm:$0xf]
        %v730 = vld [vmem:[%s4 + $0xc] sm:$0xf]
        %v731 = vld [vmem:[%s4 + $0x10] sm:$0xf]
        %v732 = vld [vmem:[%s4 + $0x14] sm:$0xf]
        %v733 = vld [vmem:[%s4 + $0x18] sm:$0xf]
        %v734 = vld [vmem:[%s4 + $0x1c] sm:$0xf]
        %s735 = scalar_lea.vmem %s4, 32
        %v736 = vld [vmem:[%s735] sm:$0xf]
        %v737 = vld [vmem:[%s735 + $0x4] sm:$0xf]
        %v738 = vld [vmem:[%s735 + $0x8] sm:$0xf]
        %v739 = vld [vmem:[%s735 + $0xc] sm:$0xf]
        %v740 = vld [vmem:[%s735 + $0x10] sm:$0xf]
        %v741 = vld [vmem:[%s735 + $0x14] sm:$0xf]
        %v742 = vld [vmem:[%s735 + $0x18] sm:$0xf]
        %v743 = vld [vmem:[%s735 + $0x1c] sm:$0xf]
        %v746 = vunpack.c.l.b16 %v725
        %v747 = vunpack.c.l.b16 %v726
        %v748 = vrot.slane %v746, 1
        %vm749 = vcmask 1041409
        %v750 = vsel %vm749, %v747, %v748
        %v751 = vpack.c.b16 %v750, %v750
        %v760 = vunpack.c.l.b16 %v736
        %v761 = vunpack.c.l.b16 %v737
        %v762 = vunpack.c.l.b16 %v738
        %v763 = vunpack.c.l.b16 %v739
        %v764 = vunpack.c.l.b16 %v740
        %v765 = vunpack.c.l.b16 %v741
        %v766 = vunpack.c.l.b16 %v742
        %v767 = vunpack.c.l.b16 %v743
        %v768 = vpack.c.b16 %v761, %v760
        %v769 = vpack.c.b16 %v763, %v762
        %v770 = vpack.c.b16 %v765, %v764
        %v771 = vpack.c.b16 %v767, %v766
        %v777 = vsel %vm634, %v751, 0
        %779 = vmatprep.subr.bf16.mxu0 0
        %780 = vmatpush1.bf16.msra.mxu0 0
        %781 = vmatprep.subr.bf16.mxu0 0
        %782 = vmatpush1.bf16.msra.mxu0 0
        %783 = vmatprep.subr.bf16.mxu0 0
        %784 = vmatpush1.bf16.msra.mxu0 0
        %785 = vmatprep.subr.bf16.mxu0 0
        %786 = vmatpush1.bf16.msra.mxu0 0
        %787 = vmatprep.subr.bf16.mxu0 0
        %788 = vmatpush1.bf16.msra.mxu0 %v771
        %789 = vmatprep.subr.bf16.mxu0 0
        %790 = vmatpush1.bf16.msra.mxu0 %v770
        %791 = vmatprep.subr.bf16.mxu0 0
        %792 = vmatpush1.bf16.msra.mxu0 %v769
        %793 = vmatprep.subr.bf16.mxu0 0
        %794 = vmatpush1.bf16.msra.mxu0 %v768
        %795 = vmatprep.subr.bf16.mxu0 0
        %796 = vmatpush2.bf16.msra.mxu0 0
        %797 = vmatprep.subr.bf16.mxu0 0
        %798 = vmatpush2.bf16.msra.mxu0 0
        %799 = vmatprep.subr.bf16.mxu0 0
        %800 = vmatpush2.bf16.msra.mxu0 0
        %801 = vmatprep.subr.bf16.mxu0 0
        %802 = vmatpush2.bf16.msra.mxu0 0
        %803 = vmatprep.subr.bf16.mxu0 0
        %804 = vmatpush2.bf16.msra.mxu0 0
        %805 = vmatprep.subr.bf16.mxu0 0
        %806 = vmatpush2.bf16.msra.mxu0 0
        %807 = vmatprep.subr.bf16.mxu0 0
        %808 = vmatpush2.bf16.msra.mxu0 0
        %809 = vmatprep.subr.bf16.mxu0 0
        %810 = vmatpush2.bf16.msra.mxu0 0
        %811 = vmatprep.mubr.bf16.mxu0 0
        %812 = vmatmul.mubr.bf16.gmra.mxu0 %v777
        %v813 = vpop.f32.mrf.mxu0
        %v814 = vadd.f32 0.0, %v813
        %v815 = vpop.f32.mrf.mxu0
        %v816 = vpop.f32.mrf.mxu0
        %v817 = vpop.f32.mrf.mxu0
        %818 = vdwg.mxu0
        %v819 = vrot.slane %v747, 7
        %v820 = vsel %vm749, %v819, %v746
        %v821 = vpack.c.b16 %v820, %v820
        %v830 = vunpack.c.l.b16 %v727
        %v831 = vunpack.c.l.b16 %v728
        %v832 = vunpack.c.l.b16 %v729
        %v833 = vunpack.c.l.b16 %v730
        %v834 = vunpack.c.l.b16 %v731
        %v835 = vunpack.c.l.b16 %v732
        %v836 = vunpack.c.l.b16 %v733
        %v837 = vunpack.c.l.b16 %v734
        %v838 = vpack.c.b16 %v831, %v830
        %v839 = vpack.c.b16 %v833, %v832
        %v840 = vpack.c.b16 %v835, %v834
        %v841 = vpack.c.b16 %v837, %v836
        %v847 = vsel %vm634, %v821, 0
        %849 = vmatprep.subr.bf16.mxu0 0
        %850 = vmatpush1.bf16.msra.mxu0 0
        %851 = vmatprep.subr.bf16.mxu0 0
        %852 = vmatpush1.bf16.msra.mxu0 0
        %853 = vmatprep.subr.bf16.mxu0 0
        %854 = vmatpush1.bf16.msra.mxu0 0
        %855 = vmatprep.subr.bf16.mxu0 0
        %856 = vmatpush1.bf16.msra.mxu0 0
        %857 = vmatprep.subr.bf16.mxu0 0
        %858 = vmatpush1.bf16.msra.mxu0 %v841
        %859 = vmatprep.subr.bf16.mxu0 0
        %860 = vmatpush1.bf16.msra.mxu0 %v840
        %861 = vmatprep.subr.bf16.mxu0 0
        %862 = vmatpush1.bf16.msra.mxu0 %v839
        %863 = vmatprep.subr.bf16.mxu0 0
        %864 = vmatpush1.bf16.msra.mxu0 %v838
        %865 = vmatprep.subr.bf16.mxu0 0
        %866 = vmatpush2.bf16.msra.mxu0 0
        %867 = vmatprep.subr.bf16.mxu0 0
        %868 = vmatpush2.bf16.msra.mxu0 0
        %869 = vmatprep.subr.bf16.mxu0 0
        %870 = vmatpush2.bf16.msra.mxu0 0
        %871 = vmatprep.subr.bf16.mxu0 0
        %872 = vmatpush2.bf16.msra.mxu0 0
        %873 = vmatprep.subr.bf16.mxu0 0
        %874 = vmatpush2.bf16.msra.mxu0 0
        %875 = vmatprep.subr.bf16.mxu0 0
        %876 = vmatpush2.bf16.msra.mxu0 0
        %877 = vmatprep.subr.bf16.mxu0 0
        %878 = vmatpush2.bf16.msra.mxu0 0
        %879 = vmatprep.subr.bf16.mxu0 0
        %880 = vmatpush2.bf16.msra.mxu0 0
        %881 = vmatprep.mubr.bf16.mxu0 0
        %882 = vmatmul.mubr.bf16.gmra.mxu0 %v847
        %v883 = vpop.f32.mrf.mxu0
        %v884 = vadd.f32 %v814, %v883
        %v885 = vpop.f32.mrf.mxu0
        %v886 = vpop.f32.mrf.mxu0
        %v887 = vpop.f32.mrf.mxu0
        %888 = vdwg.mxu0
        %s889 = scalar_lea.vmem %s4, 64
        %v890 = vld [vmem:[%s889] sm:$0xf]
        %v891 = vld [vmem:[%s889 + $0x4] sm:$0xf]
        %v892 = vld [vmem:[%s889 + $0x8] sm:$0xf]
        %v893 = vld [vmem:[%s889 + $0xc] sm:$0xf]
        %v894 = vld [vmem:[%s889 + $0x10] sm:$0xf]
        %v895 = vld [vmem:[%s889 + $0x14] sm:$0xf]
        %v896 = vld [vmem:[%s889 + $0x18] sm:$0xf]
        %v897 = vld [vmem:[%s889 + $0x1c] sm:$0xf]
        %v898 = vrot.slane %v746, 2
        %v899 = vrot.slane %v747, 1
        %v900 = vsel %vm749, %v899, %v898
        %v901 = vpack.c.b16 %v900, %v900
        %v910 = vunpack.c.l.b16 %v890
        %v911 = vunpack.c.l.b16 %v891
        %v912 = vunpack.c.l.b16 %v892
        %v913 = vunpack.c.l.b16 %v893
        %v914 = vunpack.c.l.b16 %v894
        %v915 = vunpack.c.l.b16 %v895
        %v916 = vunpack.c.l.b16 %v896
        %v917 = vunpack.c.l.b16 %v897
        %v918 = vpack.c.b16 %v911, %v910
        %v919 = vpack.c.b16 %v913, %v912
        %v920 = vpack.c.b16 %v915, %v914
        %v921 = vpack.c.b16 %v917, %v916
        %v927 = vsel %vm634, %v901, 0
        %929 = vmatprep.subr.bf16.mxu0 0
        %930 = vmatpush1.bf16.msra.mxu0 0
        %931 = vmatprep.subr.bf16.mxu0 0
        %932 = vmatpush1.bf16.msra.mxu0 0
        %933 = vmatprep.subr.bf16.mxu0 0
        %934 = vmatpush1.bf16.msra.mxu0 0
        %935 = vmatprep.subr.bf16.mxu0 0
        %936 = vmatpush1.bf16.msra.mxu0 0
        %937 = vmatprep.subr.bf16.mxu0 0
        %938 = vmatpush1.bf16.msra.mxu0 %v921
        %939 = vmatprep.subr.bf16.mxu0 0
        %940 = vmatpush1.bf16.msra.mxu0 %v920
        %941 = vmatprep.subr.bf16.mxu0 0
        %942 = vmatpush1.bf16.msra.mxu0 %v919
        %943 = vmatprep.subr.bf16.mxu0 0
        %944 = vmatpush1.bf16.msra.mxu0 %v918
        %945 = vmatprep.subr.bf16.mxu0 0
        %946 = vmatpush2.bf16.msra.mxu0 0
        %947 = vmatprep.subr.bf16.mxu0 0
        %948 = vmatpush2.bf16.msra.mxu0 0
        %949 = vmatprep.subr.bf16.mxu0 0
        %950 = vmatpush2.bf16.msra.mxu0 0
        %951 = vmatprep.subr.bf16.mxu0 0
        %952 = vmatpush2.bf16.msra.mxu0 0
        %953 = vmatprep.subr.bf16.mxu0 0
        %954 = vmatpush2.bf16.msra.mxu0 0
        %955 = vmatprep.subr.bf16.mxu0 0
        %956 = vmatpush2.bf16.msra.mxu0 0
        %957 = vmatprep.subr.bf16.mxu0 0
        %958 = vmatpush2.bf16.msra.mxu0 0
        %959 = vmatprep.subr.bf16.mxu0 0
        %960 = vmatpush2.bf16.msra.mxu0 0
        %961 = vmatprep.mubr.bf16.mxu0 0
        %962 = vmatmul.mubr.bf16.gmra.mxu0 %v927
        %v963 = vpop.f32.mrf.mxu0
        %v964 = vadd.f32 0.0, %v963
        %v965 = vpop.f32.mrf.mxu0
        %v966 = vpop.f32.mrf.mxu0
        %v967 = vpop.f32.mrf.mxu0
        %968 = vdwg.mxu0
        %v969 = vadd.f32 %v884, %v964
        %s970 = scalar_lea.vmem %s4, 96
        %v971 = vld [vmem:[%s970] sm:$0xf]
        %v972 = vld [vmem:[%s970 + $0x4] sm:$0xf]
        %v973 = vld [vmem:[%s970 + $0x8] sm:$0xf]
        %v974 = vld [vmem:[%s970 + $0xc] sm:$0xf]
        %v975 = vld [vmem:[%s970 + $0x10] sm:$0xf]
        %v976 = vld [vmem:[%s970 + $0x14] sm:$0xf]
        %v977 = vld [vmem:[%s970 + $0x18] sm:$0xf]
        %v978 = vld [vmem:[%s970 + $0x1c] sm:$0xf]
        %v979 = vrot.slane %v746, 3
        %v980 = vrot.slane %v747, 2
        %v981 = vsel %vm749, %v980, %v979
        %v982 = vpack.c.b16 %v981, %v981
        %v991 = vunpack.c.l.b16 %v971
        %v992 = vunpack.c.l.b16 %v972
        %v993 = vunpack.c.l.b16 %v973
        %v994 = vunpack.c.l.b16 %v974
        %v995 = vunpack.c.l.b16 %v975
        %v996 = vunpack.c.l.b16 %v976
        %v997 = vunpack.c.l.b16 %v977
        %v998 = vunpack.c.l.b16 %v978
        %v999 = vpack.c.b16 %v992, %v991
        %v1000 = vpack.c.b16 %v994, %v993
        %v1001 = vpack.c.b16 %v996, %v995
        %v1002 = vpack.c.b16 %v998, %v997
        %v1008 = vsel %vm634, %v982, 0
        %1010 = vmatprep.subr.bf16.mxu0 0
        %1011 = vmatpush1.bf16.msra.mxu0 0
        %1012 = vmatprep.subr.bf16.mxu0 0
        %1013 = vmatpush1.bf16.msra.mxu0 0
        %1014 = vmatprep.subr.bf16.mxu0 0
        %1015 = vmatpush1.bf16.msra.mxu0 0
        %1016 = vmatprep.subr.bf16.mxu0 0
        %1017 = vmatpush1.bf16.msra.mxu0 0
        %1018 = vmatprep.subr.bf16.mxu0 0
        %1019 = vmatpush1.bf16.msra.mxu0 %v1002
        %1020 = vmatprep.subr.bf16.mxu0 0
        %1021 = vmatpush1.bf16.msra.mxu0 %v1001
        %1022 = vmatprep.subr.bf16.mxu0 0
        %1023 = vmatpush1.bf16.msra.mxu0 %v1000
        %1024 = vmatprep.subr.bf16.mxu0 0
        %1025 = vmatpush1.bf16.msra.mxu0 %v999
        %1026 = vmatprep.subr.bf16.mxu0 0
        %1027 = vmatpush2.bf16.msra.mxu0 0
        %1028 = vmatprep.subr.bf16.mxu0 0
        %1029 = vmatpush2.bf16.msra.mxu0 0
        %1030 = vmatprep.subr.bf16.mxu0 0
        %1031 = vmatpush2.bf16.msra.mxu0 0
        %1032 = vmatprep.subr.bf16.mxu0 0
        %1033 = vmatpush2.bf16.msra.mxu0 0
        %1034 = vmatprep.subr.bf16.mxu0 0
        %1035 = vmatpush2.bf16.msra.mxu0 0
        %1036 = vmatprep.subr.bf16.mxu0 0
        %1037 = vmatpush2.bf16.msra.mxu0 0
        %1038 = vmatprep.subr.bf16.mxu0 0
        %1039 = vmatpush2.bf16.msra.mxu0 0
        %1040 = vmatprep.subr.bf16.mxu0 0
        %1041 = vmatpush2.bf16.msra.mxu0 0
        %1042 = vmatprep.mubr.bf16.mxu0 0
        %1043 = vmatmul.mubr.bf16.gmra.mxu0 %v1008
        %v1044 = vpop.f32.mrf.mxu0
        %v1045 = vadd.f32 0.0, %v1044
        %v1046 = vpop.f32.mrf.mxu0
        %v1047 = vpop.f32.mrf.mxu0
        %v1048 = vpop.f32.mrf.mxu0
        %1049 = vdwg.mxu0
        %v1050 = vadd.f32 %v969, %v1045
        %s1051 = scalar_lea.vmem %s4, 128
        %v1052 = vld [vmem:[%s1051] sm:$0xf]
        %v1053 = vld [vmem:[%s1051 + $0x4] sm:$0xf]
        %v1054 = vld [vmem:[%s1051 + $0x8] sm:$0xf]
        %v1055 = vld [vmem:[%s1051 + $0xc] sm:$0xf]
        %v1056 = vld [vmem:[%s1051 + $0x10] sm:$0xf]
        %v1057 = vld [vmem:[%s1051 + $0x14] sm:$0xf]
        %v1058 = vld [vmem:[%s1051 + $0x18] sm:$0xf]
        %v1059 = vld [vmem:[%s1051 + $0x1c] sm:$0xf]
        %v1060 = vrot.slane %v746, 4
        %v1061 = vrot.slane %v747, 3
        %v1062 = vsel %vm749, %v1061, %v1060
        %v1063 = vpack.c.b16 %v1062, %v1062
        %v1072 = vunpack.c.l.b16 %v1052
        %v1073 = vunpack.c.l.b16 %v1053
        %v1074 = vunpack.c.l.b16 %v1054
        %v1075 = vunpack.c.l.b16 %v1055
        %v1076 = vunpack.c.l.b16 %v1056
        %v1077 = vunpack.c.l.b16 %v1057
        %v1078 = vunpack.c.l.b16 %v1058
        %v1079 = vunpack.c.l.b16 %v1059
        %v1080 = vpack.c.b16 %v1073, %v1072
        %v1081 = vpack.c.b16 %v1075, %v1074
        %v1082 = vpack.c.b16 %v1077, %v1076
        %v1083 = vpack.c.b16 %v1079, %v1078
        %v1089 = vsel %vm634, %v1063, 0
        %1091 = vmatprep.subr.bf16.mxu0 0
        %1092 = vmatpush1.bf16.msra.mxu0 0
        %1093 = vmatprep.subr.bf16.mxu0 0
        %1094 = vmatpush1.bf16.msra.mxu0 0
        %1095 = vmatprep.subr.bf16.mxu0 0
        %1096 = vmatpush1.bf16.msra.mxu0 0
        %1097 = vmatprep.subr.bf16.mxu0 0
        %1098 = vmatpush1.bf16.msra.mxu0 0
        %1099 = vmatprep.subr.bf16.mxu0 0
        %1100 = vmatpush1.bf16.msra.mxu0 %v1083
        %1101 = vmatprep.subr.bf16.mxu0 0
        %1102 = vmatpush1.bf16.msra.mxu0 %v1082
        %1103 = vmatprep.subr.bf16.mxu0 0
        %1104 = vmatpush1.bf16.msra.mxu0 %v1081
        %1105 = vmatprep.subr.bf16.mxu0 0
        %1106 = vmatpush1.bf16.msra.mxu0 %v1080
        %1107 = vmatprep.subr.bf16.mxu0 0
        %1108 = vmatpush2.bf16.msra.mxu0 0
        %1109 = vmatprep.subr.bf16.mxu0 0
        %1110 = vmatpush2.bf16.msra.mxu0 0
        %1111 = vmatprep.subr.bf16.mxu0 0
        %1112 = vmatpush2.bf16.msra.mxu0 0
        %1113 = vmatprep.subr.bf16.mxu0 0
        %1114 = vmatpush2.bf16.msra.mxu0 0
        %1115 = vmatprep.subr.bf16.mxu0 0
        %1116 = vmatpush2.bf16.msra.mxu0 0
        %1117 = vmatprep.subr.bf16.mxu0 0
        %1118 = vmatpush2.bf16.msra.mxu0 0
        %1119 = vmatprep.subr.bf16.mxu0 0
        %1120 = vmatpush2.bf16.msra.mxu0 0
        %1121 = vmatprep.subr.bf16.mxu0 0
        %1122 = vmatpush2.bf16.msra.mxu0 0
        %1123 = vmatprep.mubr.bf16.mxu0 0
        %1124 = vmatmul.mubr.bf16.gmra.mxu0 %v1089
        %v1125 = vpop.f32.mrf.mxu0
        %v1126 = vadd.f32 0.0, %v1125
        %v1127 = vpop.f32.mrf.mxu0
        %v1128 = vpop.f32.mrf.mxu0
        %v1129 = vpop.f32.mrf.mxu0
        %1130 = vdwg.mxu0
        %v1131 = vadd.f32 %v1050, %v1126
        %s1132 = scalar_lea.vmem %s4, 160
        %v1133 = vld [vmem:[%s1132] sm:$0xf]
        %v1134 = vld [vmem:[%s1132 + $0x4] sm:$0xf]
        %v1135 = vld [vmem:[%s1132 + $0x8] sm:$0xf]
        %v1136 = vld [vmem:[%s1132 + $0xc] sm:$0xf]
        %v1137 = vld [vmem:[%s1132 + $0x10] sm:$0xf]
        %v1138 = vld [vmem:[%s1132 + $0x14] sm:$0xf]
        %v1139 = vld [vmem:[%s1132 + $0x18] sm:$0xf]
        %v1140 = vld [vmem:[%s1132 + $0x1c] sm:$0xf]
        %v1141 = vrot.slane %v746, 5
        %v1142 = vrot.slane %v747, 4
        %v1143 = vsel %vm749, %v1142, %v1141
        %v1144 = vpack.c.b16 %v1143, %v1143
        %v1153 = vunpack.c.l.b16 %v1133
        %v1154 = vunpack.c.l.b16 %v1134
        %v1155 = vunpack.c.l.b16 %v1135
        %v1156 = vunpack.c.l.b16 %v1136
        %v1157 = vunpack.c.l.b16 %v1137
        %v1158 = vunpack.c.l.b16 %v1138
        %v1159 = vunpack.c.l.b16 %v1139
        %v1160 = vunpack.c.l.b16 %v1140
        %v1161 = vpack.c.b16 %v1154, %v1153
        %v1162 = vpack.c.b16 %v1156, %v1155
        %v1163 = vpack.c.b16 %v1158, %v1157
        %v1164 = vpack.c.b16 %v1160, %v1159
        %v1170 = vsel %vm634, %v1144, 0
        %1172 = vmatprep.subr.bf16.mxu0 0
        %1173 = vmatpush1.bf16.msra.mxu0 0
        %1174 = vmatprep.subr.bf16.mxu0 0
        %1175 = vmatpush1.bf16.msra.mxu0 0
        %1176 = vmatprep.subr.bf16.mxu0 0
        %1177 = vmatpush1.bf16.msra.mxu0 0
        %1178 = vmatprep.subr.bf16.mxu0 0
        %1179 = vmatpush1.bf16.msra.mxu0 0
        %1180 = vmatprep.subr.bf16.mxu0 0
        %1181 = vmatpush1.bf16.msra.mxu0 %v1164
        %1182 = vmatprep.subr.bf16.mxu0 0
        %1183 = vmatpush1.bf16.msra.mxu0 %v1163
        %1184 = vmatprep.subr.bf16.mxu0 0
        %1185 = vmatpush1.bf16.msra.mxu0 %v1162
        %1186 = vmatprep.subr.bf16.mxu0 0
        %1187 = vmatpush1.bf16.msra.mxu0 %v1161
        %1188 = vmatprep.subr.bf16.mxu0 0
        %1189 = vmatpush2.bf16.msra.mxu0 0
        %1190 = vmatprep.subr.bf16.mxu0 0
        %1191 = vmatpush2.bf16.msra.mxu0 0
        %1192 = vmatprep.subr.bf16.mxu0 0
        %1193 = vmatpush2.bf16.msra.mxu0 0
        %1194 = vmatprep.subr.bf16.mxu0 0
        %1195 = vmatpush2.bf16.msra.mxu0 0
        %1196 = vmatprep.subr.bf16.mxu0 0
        %1197 = vmatpush2.bf16.msra.mxu0 0
        %1198 = vmatprep.subr.bf16.mxu0 0
        %1199 = vmatpush2.bf16.msra.mxu0 0
        %1200 = vmatprep.subr.bf16.mxu0 0
        %1201 = vmatpush2.bf16.msra.mxu0 0
        %1202 = vmatprep.subr.bf16.mxu0 0
        %1203 = vmatpush2.bf16.msra.mxu0 0
        %1204 = vmatprep.mubr.bf16.mxu0 0
        %1205 = vmatmul.mubr.bf16.gmra.mxu0 %v1170
        %v1206 = vpop.f32.mrf.mxu0
        %v1207 = vadd.f32 0.0, %v1206
        %v1208 = vpop.f32.mrf.mxu0
        %v1209 = vpop.f32.mrf.mxu0
        %v1210 = vpop.f32.mrf.mxu0
        %1211 = vdwg.mxu0
        %v1212 = vadd.f32 %v1131, %v1207
        %s1213 = scalar_lea.vmem %s4, 192
        %v1214 = vld [vmem:[%s1213] sm:$0xf]
        %v1215 = vld [vmem:[%s1213 + $0x4] sm:$0xf]
        %v1216 = vld [vmem:[%s1213 + $0x8] sm:$0xf]
        %v1217 = vld [vmem:[%s1213 + $0xc] sm:$0xf]
        %v1218 = vld [vmem:[%s1213 + $0x10] sm:$0xf]
        %v1219 = vld [vmem:[%s1213 + $0x14] sm:$0xf]
        %v1220 = vld [vmem:[%s1213 + $0x18] sm:$0xf]
        %v1221 = vld [vmem:[%s1213 + $0x1c] sm:$0xf]
        %v1222 = vrot.slane %v746, 6
        %v1223 = vrot.slane %v747, 5
        %v1224 = vsel %vm749, %v1223, %v1222
        %v1225 = vpack.c.b16 %v1224, %v1224
        %v1234 = vunpack.c.l.b16 %v1214
        %v1235 = vunpack.c.l.b16 %v1215
        %v1236 = vunpack.c.l.b16 %v1216
        %v1237 = vunpack.c.l.b16 %v1217
        %v1238 = vunpack.c.l.b16 %v1218
        %v1239 = vunpack.c.l.b16 %v1219
        %v1240 = vunpack.c.l.b16 %v1220
        %v1241 = vunpack.c.l.b16 %v1221
        %v1242 = vpack.c.b16 %v1235, %v1234
        %v1243 = vpack.c.b16 %v1237, %v1236
        %v1244 = vpack.c.b16 %v1239, %v1238
        %v1245 = vpack.c.b16 %v1241, %v1240
        %v1251 = vsel %vm634, %v1225, 0
        %1253 = vmatprep.subr.bf16.mxu0 0
        %1254 = vmatpush1.bf16.msra.mxu0 0
        %1255 = vmatprep.subr.bf16.mxu0 0
        %1256 = vmatpush1.bf16.msra.mxu0 0
        %1257 = vmatprep.subr.bf16.mxu0 0
        %1258 = vmatpush1.bf16.msra.mxu0 0
        %1259 = vmatprep.subr.bf16.mxu0 0
        %1260 = vmatpush1.bf16.msra.mxu0 0
        %1261 = vmatprep.subr.bf16.mxu0 0
        %1262 = vmatpush1.bf16.msra.mxu0 %v1245
        %1263 = vmatprep.subr.bf16.mxu0 0
        %1264 = vmatpush1.bf16.msra.mxu0 %v1244
        %1265 = vmatprep.subr.bf16.mxu0 0
        %1266 = vmatpush1.bf16.msra.mxu0 %v1243
        %1267 = vmatprep.subr.bf16.mxu0 0
        %1268 = vmatpush1.bf16.msra.mxu0 %v1242
        %1269 = vmatprep.subr.bf16.mxu0 0
        %1270 = vmatpush2.bf16.msra.mxu0 0
        %1271 = vmatprep.subr.bf16.mxu0 0
        %1272 = vmatpush2.bf16.msra.mxu0 0
        %1273 = vmatprep.subr.bf16.mxu0 0
        %1274 = vmatpush2.bf16.msra.mxu0 0
        %1275 = vmatprep.subr.bf16.mxu0 0
        %1276 = vmatpush2.bf16.msra.mxu0 0
        %1277 = vmatprep.subr.bf16.mxu0 0
        %1278 = vmatpush2.bf16.msra.mxu0 0
        %1279 = vmatprep.subr.bf16.mxu0 0
        %1280 = vmatpush2.bf16.msra.mxu0 0
        %1281 = vmatprep.subr.bf16.mxu0 0
        %1282 = vmatpush2.bf16.msra.mxu0 0
        %1283 = vmatprep.subr.bf16.mxu0 0
        %1284 = vmatpush2.bf16.msra.mxu0 0
        %1285 = vmatprep.mubr.bf16.mxu0 0
        %1286 = vmatmul.mubr.bf16.gmra.mxu0 %v1251
        %v1287 = vpop.f32.mrf.mxu0
        %v1288 = vadd.f32 0.0, %v1287
        %v1289 = vpop.f32.mrf.mxu0
        %v1290 = vpop.f32.mrf.mxu0
        %v1291 = vpop.f32.mrf.mxu0
        %1292 = vdwg.mxu0
        %v1293 = vadd.f32 %v1212, %v1288
        %s1294 = scalar_lea.vmem %s4, 224
        %v1295 = vld [vmem:[%s1294] sm:$0xf]
        %v1296 = vld [vmem:[%s1294 + $0x4] sm:$0xf]
        %v1297 = vld [vmem:[%s1294 + $0x8] sm:$0xf]
        %v1298 = vld [vmem:[%s1294 + $0xc] sm:$0xf]
        %v1299 = vld [vmem:[%s1294 + $0x10] sm:$0xf]
        %v1300 = vld [vmem:[%s1294 + $0x14] sm:$0xf]
        %v1301 = vld [vmem:[%s1294 + $0x18] sm:$0xf]
        %v1302 = vld [vmem:[%s1294 + $0x1c] sm:$0xf]
        %v1303 = vrot.slane %v746, 7
        %v1304 = vrot.slane %v747, 6
        %v1305 = vsel %vm749, %v1304, %v1303
        %v1306 = vpack.c.b16 %v1305, %v1305
        %v1315 = vunpack.c.l.b16 %v1295
        %v1316 = vunpack.c.l.b16 %v1296
        %v1317 = vunpack.c.l.b16 %v1297
        %v1318 = vunpack.c.l.b16 %v1298
        %v1319 = vunpack.c.l.b16 %v1299
        %v1320 = vunpack.c.l.b16 %v1300
        %v1321 = vunpack.c.l.b16 %v1301
        %v1322 = vunpack.c.l.b16 %v1302
        %v1323 = vpack.c.b16 %v1316, %v1315
        %v1324 = vpack.c.b16 %v1318, %v1317
        %v1325 = vpack.c.b16 %v1320, %v1319
        %v1326 = vpack.c.b16 %v1322, %v1321
        %v1332 = vsel %vm634, %v1306, 0
        %1334 = vmatprep.subr.bf16.mxu0 0
        %1335 = vmatpush1.bf16.msra.mxu0 0
        %1336 = vmatprep.subr.bf16.mxu0 0
        %1337 = vmatpush1.bf16.msra.mxu0 0
        %1338 = vmatprep.subr.bf16.mxu0 0
        %1339 = vmatpush1.bf16.msra.mxu0 0
        %1340 = vmatprep.subr.bf16.mxu0 0
        %1341 = vmatpush1.bf16.msra.mxu0 0
        %1342 = vmatprep.subr.bf16.mxu0 0
        %1343 = vmatpush1.bf16.msra.mxu0 %v1326
        %1344 = vmatprep.subr.bf16.mxu0 0
        %1345 = vmatpush1.bf16.msra.mxu0 %v1325
        %1346 = vmatprep.subr.bf16.mxu0 0
        %1347 = vmatpush1.bf16.msra.mxu0 %v1324
        %1348 = vmatprep.subr.bf16.mxu0 0
        %1349 = vmatpush1.bf16.msra.mxu0 %v1323
        %1350 = vmatprep.subr.bf16.mxu0 0
        %1351 = vmatpush2.bf16.msra.mxu0 0
        %1352 = vmatprep.subr.bf16.mxu0 0
        %1353 = vmatpush2.bf16.msra.mxu0 0
        %1354 = vmatprep.subr.bf16.mxu0 0
        %1355 = vmatpush2.bf16.msra.mxu0 0
        %1356 = vmatprep.subr.bf16.mxu0 0
        %1357 = vmatpush2.bf16.msra.mxu0 0
        %1358 = vmatprep.subr.bf16.mxu0 0
        %1359 = vmatpush2.bf16.msra.mxu0 0
        %1360 = vmatprep.subr.bf16.mxu0 0
        %1361 = vmatpush2.bf16.msra.mxu0 0
        %1362 = vmatprep.subr.bf16.mxu0 0
        %1363 = vmatpush2.bf16.msra.mxu0 0
        %1364 = vmatprep.subr.bf16.mxu0 0
        %1365 = vmatpush2.bf16.msra.mxu0 0
        %1366 = vmatprep.mubr.bf16.mxu0 0
        %1367 = vmatmul.mubr.bf16.gmra.mxu0 %v1332
        %v1368 = vpop.f32.mrf.mxu0
        %v1369 = vadd.f32 0.0, %v1368
        %v1370 = vpop.f32.mrf.mxu0
        %v1371 = vpop.f32.mrf.mxu0
        %v1372 = vpop.f32.mrf.mxu0
        %1373 = vdwg.mxu0
        %v1374 = vadd.f32 %v1293, %v1369
        %s1375 = scalar_lea.vmem %s4, 256
        %v1376 = vld [vmem:[%s1375] sm:$0xf]
        %v1377 = vld [vmem:[%s1375 + $0x4] sm:$0xf]
        %v1378 = vld [vmem:[%s1375 + $0x8] sm:$0xf]
        %v1379 = vld [vmem:[%s1375 + $0xc] sm:$0xf]
        %v1380 = vld [vmem:[%s1375 + $0x10] sm:$0xf]
        %v1381 = vld [vmem:[%s1375 + $0x14] sm:$0xf]
        %v1382 = vld [vmem:[%s1375 + $0x18] sm:$0xf]
        %v1383 = vld [vmem:[%s1375 + $0x1c] sm:$0xf]
        %v1384 = vunpack.c.h.b16 %v725
        %v1385 = vunpack.c.h.b16 %v726
        %v1386 = vrot.slane %v1385, 7
        %v1387 = vsel %vm749, %v1386, %v1384
        %v1388 = vpack.c.b16 %v1387, %v1387
        %v1397 = vunpack.c.l.b16 %v1376
        %v1398 = vunpack.c.l.b16 %v1377
        %v1399 = vunpack.c.l.b16 %v1378
        %v1400 = vunpack.c.l.b16 %v1379
        %v1401 = vunpack.c.l.b16 %v1380
        %v1402 = vunpack.c.l.b16 %v1381
        %v1403 = vunpack.c.l.b16 %v1382
        %v1404 = vunpack.c.l.b16 %v1383
        %v1405 = vpack.c.b16 %v1398, %v1397
        %v1406 = vpack.c.b16 %v1400, %v1399
        %v1407 = vpack.c.b16 %v1402, %v1401
        %v1408 = vpack.c.b16 %v1404, %v1403
        %v1414 = vsel %vm634, %v1388, 0
        %1416 = vmatprep.subr.bf16.mxu0 0
        %1417 = vmatpush1.bf16.msra.mxu0 0
        %1418 = vmatprep.subr.bf16.mxu0 0
        %1419 = vmatpush1.bf16.msra.mxu0 0
        %1420 = vmatprep.subr.bf16.mxu0 0
        %1421 = vmatpush1.bf16.msra.mxu0 0
        %1422 = vmatprep.subr.bf16.mxu0 0
        %1423 = vmatpush1.bf16.msra.mxu0 0
        %1424 = vmatprep.subr.bf16.mxu0 0
        %1425 = vmatpush1.bf16.msra.mxu0 %v1408
        %1426 = vmatprep.subr.bf16.mxu0 0
        %1427 = vmatpush1.bf16.msra.mxu0 %v1407
        %1428 = vmatprep.subr.bf16.mxu0 0
        %1429 = vmatpush1.bf16.msra.mxu0 %v1406
        %1430 = vmatprep.subr.bf16.mxu0 0
        %1431 = vmatpush1.bf16.msra.mxu0 %v1405
        %1432 = vmatprep.subr.bf16.mxu0 0
        %1433 = vmatpush2.bf16.msra.mxu0 0
        %1434 = vmatprep.subr.bf16.mxu0 0
        %1435 = vmatpush2.bf16.msra.mxu0 0
        %1436 = vmatprep.subr.bf16.mxu0 0
        %1437 = vmatpush2.bf16.msra.mxu0 0
        %1438 = vmatprep.subr.bf16.mxu0 0
        %1439 = vmatpush2.bf16.msra.mxu0 0
        %1440 = vmatprep.subr.bf16.mxu0 0
        %1441 = vmatpush2.bf16.msra.mxu0 0
        %1442 = vmatprep.subr.bf16.mxu0 0
        %1443 = vmatpush2.bf16.msra.mxu0 0
        %1444 = vmatprep.subr.bf16.mxu0 0
        %1445 = vmatpush2.bf16.msra.mxu0 0
        %1446 = vmatprep.subr.bf16.mxu0 0
        %1447 = vmatpush2.bf16.msra.mxu0 0
        %1448 = vmatprep.mubr.bf16.mxu0 0
        %1449 = vmatmul.mubr.bf16.gmra.mxu0 %v1414
        %v1450 = vpop.f32.mrf.mxu0
        %v1451 = vadd.f32 0.0, %v1450
        %v1452 = vpop.f32.mrf.mxu0
        %v1453 = vpop.f32.mrf.mxu0
        %v1454 = vpop.f32.mrf.mxu0
        %1455 = vdwg.mxu0
        %v1456 = vadd.f32 %v1374, %v1451
        %s1457 = scalar_lea.vmem %s4, 288
        %v1458 = vld [vmem:[%s1457] sm:$0xf]
        %v1459 = vld [vmem:[%s1457 + $0x4] sm:$0xf]
        %v1460 = vld [vmem:[%s1457 + $0x8] sm:$0xf]
        %v1461 = vld [vmem:[%s1457 + $0xc] sm:$0xf]
        %v1462 = vld [vmem:[%s1457 + $0x10] sm:$0xf]
        %v1463 = vld [vmem:[%s1457 + $0x14] sm:$0xf]
        %v1464 = vld [vmem:[%s1457 + $0x18] sm:$0xf]
        %v1465 = vld [vmem:[%s1457 + $0x1c] sm:$0xf]
        %v1466 = vrot.slane %v1384, 1
        %v1467 = vsel %vm749, %v1385, %v1466
        %v1468 = vpack.c.b16 %v1467, %v1467
        %v1477 = vunpack.c.l.b16 %v1458
        %v1478 = vunpack.c.l.b16 %v1459
        %v1479 = vunpack.c.l.b16 %v1460
        %v1480 = vunpack.c.l.b16 %v1461
        %v1481 = vunpack.c.l.b16 %v1462
        %v1482 = vunpack.c.l.b16 %v1463
        %v1483 = vunpack.c.l.b16 %v1464
        %v1484 = vunpack.c.l.b16 %v1465
        %v1485 = vpack.c.b16 %v1478, %v1477
        %v1486 = vpack.c.b16 %v1480, %v1479
        %v1487 = vpack.c.b16 %v1482, %v1481
        %v1488 = vpack.c.b16 %v1484, %v1483
        %v1494 = vsel %vm634, %v1468, 0
        %1496 = vmatprep.subr.bf16.mxu0 0
        %1497 = vmatpush1.bf16.msra.mxu0 0
        %1498 = vmatprep.subr.bf16.mxu0 0
        %1499 = vmatpush1.bf16.msra.mxu0 0
        %1500 = vmatprep.subr.bf16.mxu0 0
        %1501 = vmatpush1.bf16.msra.mxu0 0
        %1502 = vmatprep.subr.bf16.mxu0 0
        %1503 = vmatpush1.bf16.msra.mxu0 0
        %1504 = vmatprep.subr.bf16.mxu0 0
        %1505 = vmatpush1.bf16.msra.mxu0 %v1488
        %1506 = vmatprep.subr.bf16.mxu0 0
        %1507 = vmatpush1.bf16.msra.mxu0 %v1487
        %1508 = vmatprep.subr.bf16.mxu0 0
        %1509 = vmatpush1.bf16.msra.mxu0 %v1486
        %1510 = vmatprep.subr.bf16.mxu0 0
        %1511 = vmatpush1.bf16.msra.mxu0 %v1485
        %1512 = vmatprep.subr.bf16.mxu0 0
        %1513 = vmatpush2.bf16.msra.mxu0 0
        %1514 = vmatprep.subr.bf16.mxu0 0
        %1515 = vmatpush2.bf16.msra.mxu0 0
        %1516 = vmatprep.subr.bf16.mxu0 0
        %1517 = vmatpush2.bf16.msra.mxu0 0
        %1518 = vmatprep.subr.bf16.mxu0 0
        %1519 = vmatpush2.bf16.msra.mxu0 0
        %1520 = vmatprep.subr.bf16.mxu0 0
        %1521 = vmatpush2.bf16.msra.mxu0 0
        %1522 = vmatprep.subr.bf16.mxu0 0
        %1523 = vmatpush2.bf16.msra.mxu0 0
        %1524 = vmatprep.subr.bf16.mxu0 0
        %1525 = vmatpush2.bf16.msra.mxu0 0
        %1526 = vmatprep.subr.bf16.mxu0 0
        %1527 = vmatpush2.bf16.msra.mxu0 0
        %1528 = vmatprep.mubr.bf16.mxu0 0
        %1529 = vmatmul.mubr.bf16.gmra.mxu0 %v1494
        %v1530 = vpop.f32.mrf.mxu0
        %v1531 = vadd.f32 0.0, %v1530
        %v1532 = vpop.f32.mrf.mxu0
        %v1533 = vpop.f32.mrf.mxu0
        %v1534 = vpop.f32.mrf.mxu0
        %1535 = vdwg.mxu0
        %v1536 = vadd.f32 %v1456, %v1531
        %s1537 = scalar_lea.vmem %s4, 320
        %v1538 = vld [vmem:[%s1537] sm:$0xf]
        %v1539 = vld [vmem:[%s1537 + $0x4] sm:$0xf]
        %v1540 = vld [vmem:[%s1537 + $0x8] sm:$0xf]
        %v1541 = vld [vmem:[%s1537 + $0xc] sm:$0xf]
        %v1542 = vld [vmem:[%s1537 + $0x10] sm:$0xf]
        %v1543 = vld [vmem:[%s1537 + $0x14] sm:$0xf]
        %v1544 = vld [vmem:[%s1537 + $0x18] sm:$0xf]
        %v1545 = vld [vmem:[%s1537 + $0x1c] sm:$0xf]
        %v1546 = vrot.slane %v1384, 2
        %v1547 = vrot.slane %v1385, 1
        %v1548 = vsel %vm749, %v1547, %v1546
        %v1549 = vpack.c.b16 %v1548, %v1548
        %v1558 = vunpack.c.l.b16 %v1538
        %v1559 = vunpack.c.l.b16 %v1539
        %v1560 = vunpack.c.l.b16 %v1540
        %v1561 = vunpack.c.l.b16 %v1541
        %v1562 = vunpack.c.l.b16 %v1542
        %v1563 = vunpack.c.l.b16 %v1543
        %v1564 = vunpack.c.l.b16 %v1544
        %v1565 = vunpack.c.l.b16 %v1545
        %v1566 = vpack.c.b16 %v1559, %v1558
        %v1567 = vpack.c.b16 %v1561, %v1560
        %v1568 = vpack.c.b16 %v1563, %v1562
        %v1569 = vpack.c.b16 %v1565, %v1564
        %v1575 = vsel %vm634, %v1549, 0
        %1577 = vmatprep.subr.bf16.mxu0 0
        %1578 = vmatpush1.bf16.msra.mxu0 0
        %1579 = vmatprep.subr.bf16.mxu0 0
        %1580 = vmatpush1.bf16.msra.mxu0 0
        %1581 = vmatprep.subr.bf16.mxu0 0
        %1582 = vmatpush1.bf16.msra.mxu0 0
        %1583 = vmatprep.subr.bf16.mxu0 0
        %1584 = vmatpush1.bf16.msra.mxu0 0
        %1585 = vmatprep.subr.bf16.mxu0 0
        %1586 = vmatpush1.bf16.msra.mxu0 %v1569
        %1587 = vmatprep.subr.bf16.mxu0 0
        %1588 = vmatpush1.bf16.msra.mxu0 %v1568
        %1589 = vmatprep.subr.bf16.mxu0 0
        %1590 = vmatpush1.bf16.msra.mxu0 %v1567
        %1591 = vmatprep.subr.bf16.mxu0 0
        %1592 = vmatpush1.bf16.msra.mxu0 %v1566
        %1593 = vmatprep.subr.bf16.mxu0 0
        %1594 = vmatpush2.bf16.msra.mxu0 0
        %1595 = vmatprep.subr.bf16.mxu0 0
        %1596 = vmatpush2.bf16.msra.mxu0 0
        %1597 = vmatprep.subr.bf16.mxu0 0
        %1598 = vmatpush2.bf16.msra.mxu0 0
        %1599 = vmatprep.subr.bf16.mxu0 0
        %1600 = vmatpush2.bf16.msra.mxu0 0
        %1601 = vmatprep.subr.bf16.mxu0 0
        %1602 = vmatpush2.bf16.msra.mxu0 0
        %1603 = vmatprep.subr.bf16.mxu0 0
        %1604 = vmatpush2.bf16.msra.mxu0 0
        %1605 = vmatprep.subr.bf16.mxu0 0
        %1606 = vmatpush2.bf16.msra.mxu0 0
        %1607 = vmatprep.subr.bf16.mxu0 0
        %1608 = vmatpush2.bf16.msra.mxu0 0
        %1609 = vmatprep.mubr.bf16.mxu0 0
        %1610 = vmatmul.mubr.bf16.gmra.mxu0 %v1575
        %v1611 = vpop.f32.mrf.mxu0
        %v1612 = vadd.f32 0.0, %v1611
        %v1613 = vpop.f32.mrf.mxu0
        %v1614 = vpop.f32.mrf.mxu0
        %v1615 = vpop.f32.mrf.mxu0
        %1616 = vdwg.mxu0
        %v1617 = vadd.f32 %v1536, %v1612
        %s1618 = scalar_lea.vmem %s4, 352
        %v1619 = vld [vmem:[%s1618] sm:$0xf]
        %v1620 = vld [vmem:[%s1618 + $0x4] sm:$0xf]
        %v1621 = vld [vmem:[%s1618 + $0x8] sm:$0xf]
        %v1622 = vld [vmem:[%s1618 + $0xc] sm:$0xf]
        %v1623 = vld [vmem:[%s1618 + $0x10] sm:$0xf]
        %v1624 = vld [vmem:[%s1618 + $0x14] sm:$0xf]
        %v1625 = vld [vmem:[%s1618 + $0x18] sm:$0xf]
        %v1626 = vld [vmem:[%s1618 + $0x1c] sm:$0xf]
        %v1627 = vrot.slane %v1384, 3
        %v1628 = vrot.slane %v1385, 2
        %v1629 = vsel %vm749, %v1628, %v1627
        %v1630 = vpack.c.b16 %v1629, %v1629
        %v1639 = vunpack.c.l.b16 %v1619
        %v1640 = vunpack.c.l.b16 %v1620
        %v1641 = vunpack.c.l.b16 %v1621
        %v1642 = vunpack.c.l.b16 %v1622
        %v1643 = vunpack.c.l.b16 %v1623
        %v1644 = vunpack.c.l.b16 %v1624
        %v1645 = vunpack.c.l.b16 %v1625
        %v1646 = vunpack.c.l.b16 %v1626
        %v1647 = vpack.c.b16 %v1640, %v1639
        %v1648 = vpack.c.b16 %v1642, %v1641
        %v1649 = vpack.c.b16 %v1644, %v1643
        %v1650 = vpack.c.b16 %v1646, %v1645
        %v1656 = vsel %vm634, %v1630, 0
        %1658 = vmatprep.subr.bf16.mxu0 0
        %1659 = vmatpush1.bf16.msra.mxu0 0
        %1660 = vmatprep.subr.bf16.mxu0 0
        %1661 = vmatpush1.bf16.msra.mxu0 0
        %1662 = vmatprep.subr.bf16.mxu0 0
        %1663 = vmatpush1.bf16.msra.mxu0 0
        %1664 = vmatprep.subr.bf16.mxu0 0
        %1665 = vmatpush1.bf16.msra.mxu0 0
        %1666 = vmatprep.subr.bf16.mxu0 0
        %1667 = vmatpush1.bf16.msra.mxu0 %v1650
        %1668 = vmatprep.subr.bf16.mxu0 0
        %1669 = vmatpush1.bf16.msra.mxu0 %v1649
        %1670 = vmatprep.subr.bf16.mxu0 0
        %1671 = vmatpush1.bf16.msra.mxu0 %v1648
        %1672 = vmatprep.subr.bf16.mxu0 0
        %1673 = vmatpush1.bf16.msra.mxu0 %v1647
        %1674 = vmatprep.subr.bf16.mxu0 0
        %1675 = vmatpush2.bf16.msra.mxu0 0
        %1676 = vmatprep.subr.bf16.mxu0 0
        %1677 = vmatpush2.bf16.msra.mxu0 0
        %1678 = vmatprep.subr.bf16.mxu0 0
        %1679 = vmatpush2.bf16.msra.mxu0 0
        %1680 = vmatprep.subr.bf16.mxu0 0
        %1681 = vmatpush2.bf16.msra.mxu0 0
        %1682 = vmatprep.subr.bf16.mxu0 0
        %1683 = vmatpush2.bf16.msra.mxu0 0
        %1684 = vmatprep.subr.bf16.mxu0 0
        %1685 = vmatpush2.bf16.msra.mxu0 0
        %1686 = vmatprep.subr.bf16.mxu0 0
        %1687 = vmatpush2.bf16.msra.mxu0 0
        %1688 = vmatprep.subr.bf16.mxu0 0
        %1689 = vmatpush2.bf16.msra.mxu0 0
        %1690 = vmatprep.mubr.bf16.mxu0 0
        %1691 = vmatmul.mubr.bf16.gmra.mxu0 %v1656
        %v1692 = vpop.f32.mrf.mxu0
        %v1693 = vadd.f32 0.0, %v1692
        %v1694 = vpop.f32.mrf.mxu0
        %v1695 = vpop.f32.mrf.mxu0
        %v1696 = vpop.f32.mrf.mxu0
        %1697 = vdwg.mxu0
        %v1698 = vadd.f32 %v1617, %v1693
        %s1699 = scalar_lea.vmem %s4, 384
        %v1700 = vld [vmem:[%s1699] sm:$0xf]
        %v1701 = vld [vmem:[%s1699 + $0x4] sm:$0xf]
        %v1702 = vld [vmem:[%s1699 + $0x8] sm:$0xf]
        %v1703 = vld [vmem:[%s1699 + $0xc] sm:$0xf]
        %v1704 = vld [vmem:[%s1699 + $0x10] sm:$0xf]
        %v1705 = vld [vmem:[%s1699 + $0x14] sm:$0xf]
        %v1706 = vld [vmem:[%s1699 + $0x18] sm:$0xf]
        %v1707 = vld [vmem:[%s1699 + $0x1c] sm:$0xf]
        %v1708 = vrot.slane %v1384, 4
        %v1709 = vrot.slane %v1385, 3
        %v1710 = vsel %vm749, %v1709, %v1708
        %v1711 = vpack.c.b16 %v1710, %v1710
        %v1720 = vunpack.c.l.b16 %v1700
        %v1721 = vunpack.c.l.b16 %v1701
        %v1722 = vunpack.c.l.b16 %v1702
        %v1723 = vunpack.c.l.b16 %v1703
        %v1724 = vunpack.c.l.b16 %v1704
        %v1725 = vunpack.c.l.b16 %v1705
        %v1726 = vunpack.c.l.b16 %v1706
        %v1727 = vunpack.c.l.b16 %v1707
        %v1728 = vpack.c.b16 %v1721, %v1720
        %v1729 = vpack.c.b16 %v1723, %v1722
        %v1730 = vpack.c.b16 %v1725, %v1724
        %v1731 = vpack.c.b16 %v1727, %v1726
        %v1737 = vsel %vm634, %v1711, 0
        %1739 = vmatprep.subr.bf16.mxu0 0
        %1740 = vmatpush1.bf16.msra.mxu0 0
        %1741 = vmatprep.subr.bf16.mxu0 0
        %1742 = vmatpush1.bf16.msra.mxu0 0
        %1743 = vmatprep.subr.bf16.mxu0 0
        %1744 = vmatpush1.bf16.msra.mxu0 0
        %1745 = vmatprep.subr.bf16.mxu0 0
        %1746 = vmatpush1.bf16.msra.mxu0 0
        %1747 = vmatprep.subr.bf16.mxu0 0
        %1748 = vmatpush1.bf16.msra.mxu0 %v1731
        %1749 = vmatprep.subr.bf16.mxu0 0
        %1750 = vmatpush1.bf16.msra.mxu0 %v1730
        %1751 = vmatprep.subr.bf16.mxu0 0
        %1752 = vmatpush1.bf16.msra.mxu0 %v1729
        %1753 = vmatprep.subr.bf16.mxu0 0
        %1754 = vmatpush1.bf16.msra.mxu0 %v1728
        %1755 = vmatprep.subr.bf16.mxu0 0
        %1756 = vmatpush2.bf16.msra.mxu0 0
        %1757 = vmatprep.subr.bf16.mxu0 0
        %1758 = vmatpush2.bf16.msra.mxu0 0
        %1759 = vmatprep.subr.bf16.mxu0 0
        %1760 = vmatpush2.bf16.msra.mxu0 0
        %1761 = vmatprep.subr.bf16.mxu0 0
        %1762 = vmatpush2.bf16.msra.mxu0 0
        %1763 = vmatprep.subr.bf16.mxu0 0
        %1764 = vmatpush2.bf16.msra.mxu0 0
        %1765 = vmatprep.subr.bf16.mxu0 0
        %1766 = vmatpush2.bf16.msra.mxu0 0
        %1767 = vmatprep.subr.bf16.mxu0 0
        %1768 = vmatpush2.bf16.msra.mxu0 0
        %1769 = vmatprep.subr.bf16.mxu0 0
        %1770 = vmatpush2.bf16.msra.mxu0 0
        %1771 = vmatprep.mubr.bf16.mxu0 0
        %1772 = vmatmul.mubr.bf16.gmra.mxu0 %v1737
        %v1773 = vpop.f32.mrf.mxu0
        %v1774 = vadd.f32 0.0, %v1773
        %v1775 = vpop.f32.mrf.mxu0
        %v1776 = vpop.f32.mrf.mxu0
        %v1777 = vpop.f32.mrf.mxu0
        %1778 = vdwg.mxu0
        %v1779 = vadd.f32 %v1698, %v1774
        %s1780 = scalar_lea.vmem %s4, 416
        %v1781 = vld [vmem:[%s1780] sm:$0xf]
        %v1782 = vld [vmem:[%s1780 + $0x4] sm:$0xf]
        %v1783 = vld [vmem:[%s1780 + $0x8] sm:$0xf]
        %v1784 = vld [vmem:[%s1780 + $0xc] sm:$0xf]
        %v1785 = vld [vmem:[%s1780 + $0x10] sm:$0xf]
        %v1786 = vld [vmem:[%s1780 + $0x14] sm:$0xf]
        %v1787 = vld [vmem:[%s1780 + $0x18] sm:$0xf]
        %v1788 = vld [vmem:[%s1780 + $0x1c] sm:$0xf]
        %v1789 = vrot.slane %v1384, 5
        %v1790 = vrot.slane %v1385, 4
        %v1791 = vsel %vm749, %v1790, %v1789
        %v1792 = vpack.c.b16 %v1791, %v1791
        %v1801 = vunpack.c.l.b16 %v1781
        %v1802 = vunpack.c.l.b16 %v1782
        %v1803 = vunpack.c.l.b16 %v1783
        %v1804 = vunpack.c.l.b16 %v1784
        %v1805 = vunpack.c.l.b16 %v1785
        %v1806 = vunpack.c.l.b16 %v1786
        %v1807 = vunpack.c.l.b16 %v1787
        %v1808 = vunpack.c.l.b16 %v1788
        %v1809 = vpack.c.b16 %v1802, %v1801
        %v1810 = vpack.c.b16 %v1804, %v1803
        %v1811 = vpack.c.b16 %v1806, %v1805
        %v1812 = vpack.c.b16 %v1808, %v1807
        %v1818 = vsel %vm634, %v1792, 0
        %1820 = vmatprep.subr.bf16.mxu0 0
        %1821 = vmatpush1.bf16.msra.mxu0 0
        %1822 = vmatprep.subr.bf16.mxu0 0
        %1823 = vmatpush1.bf16.msra.mxu0 0
        %1824 = vmatprep.subr.bf16.mxu0 0
        %1825 = vmatpush1.bf16.msra.mxu0 0
        %1826 = vmatprep.subr.bf16.mxu0 0
        %1827 = vmatpush1.bf16.msra.mxu0 0
        %1828 = vmatprep.subr.bf16.mxu0 0
        %1829 = vmatpush1.bf16.msra.mxu0 %v1812
        %1830 = vmatprep.subr.bf16.mxu0 0
        %1831 = vmatpush1.bf16.msra.mxu0 %v1811
        %1832 = vmatprep.subr.bf16.mxu0 0
        %1833 = vmatpush1.bf16.msra.mxu0 %v1810
        %1834 = vmatprep.subr.bf16.mxu0 0
        %1835 = vmatpush1.bf16.msra.mxu0 %v1809
        %1836 = vmatprep.subr.bf16.mxu0 0
        %1837 = vmatpush2.bf16.msra.mxu0 0
        %1838 = vmatprep.subr.bf16.mxu0 0
        %1839 = vmatpush2.bf16.msra.mxu0 0
        %1840 = vmatprep.subr.bf16.mxu0 0
        %1841 = vmatpush2.bf16.msra.mxu0 0
        %1842 = vmatprep.subr.bf16.mxu0 0
        %1843 = vmatpush2.bf16.msra.mxu0 0
        %1844 = vmatprep.subr.bf16.mxu0 0
        %1845 = vmatpush2.bf16.msra.mxu0 0
        %1846 = vmatprep.subr.bf16.mxu0 0
        %1847 = vmatpush2.bf16.msra.mxu0 0
        %1848 = vmatprep.subr.bf16.mxu0 0
        %1849 = vmatpush2.bf16.msra.mxu0 0
        %1850 = vmatprep.subr.bf16.mxu0 0
        %1851 = vmatpush2.bf16.msra.mxu0 0
        %1852 = vmatprep.mubr.bf16.mxu0 0
        %1853 = vmatmul.mubr.bf16.gmra.mxu0 %v1818
        %v1854 = vpop.f32.mrf.mxu0
        %v1855 = vadd.f32 0.0, %v1854
        %v1856 = vpop.f32.mrf.mxu0
        %v1857 = vpop.f32.mrf.mxu0
        %v1858 = vpop.f32.mrf.mxu0
        %1859 = vdwg.mxu0
        %v1860 = vadd.f32 %v1779, %v1855
        %s1861 = scalar_lea.vmem %s4, 448
        %v1862 = vld [vmem:[%s1861] sm:$0xf]
        %v1863 = vld [vmem:[%s1861 + $0x4] sm:$0xf]
        %v1864 = vld [vmem:[%s1861 + $0x8] sm:$0xf]
        %v1865 = vld [vmem:[%s1861 + $0xc] sm:$0xf]
        %v1866 = vld [vmem:[%s1861 + $0x10] sm:$0xf]
        %v1867 = vld [vmem:[%s1861 + $0x14] sm:$0xf]
        %v1868 = vld [vmem:[%s1861 + $0x18] sm:$0xf]
        %v1869 = vld [vmem:[%s1861 + $0x1c] sm:$0xf]
        %v1870 = vrot.slane %v1384, 6
        %v1871 = vrot.slane %v1385, 5
        %v1872 = vsel %vm749, %v1871, %v1870
        %v1873 = vpack.c.b16 %v1872, %v1872
        %v1882 = vunpack.c.l.b16 %v1862
        %v1883 = vunpack.c.l.b16 %v1863
        %v1884 = vunpack.c.l.b16 %v1864
        %v1885 = vunpack.c.l.b16 %v1865
        %v1886 = vunpack.c.l.b16 %v1866
        %v1887 = vunpack.c.l.b16 %v1867
        %v1888 = vunpack.c.l.b16 %v1868
        %v1889 = vunpack.c.l.b16 %v1869
        %v1890 = vpack.c.b16 %v1883, %v1882
        %v1891 = vpack.c.b16 %v1885, %v1884
        %v1892 = vpack.c.b16 %v1887, %v1886
        %v1893 = vpack.c.b16 %v1889, %v1888
        %v1899 = vsel %vm634, %v1873, 0
        %1901 = vmatprep.subr.bf16.mxu0 0
        %1902 = vmatpush1.bf16.msra.mxu0 0
        %1903 = vmatprep.subr.bf16.mxu0 0
        %1904 = vmatpush1.bf16.msra.mxu0 0
        %1905 = vmatprep.subr.bf16.mxu0 0
        %1906 = vmatpush1.bf16.msra.mxu0 0
        %1907 = vmatprep.subr.bf16.mxu0 0
        %1908 = vmatpush1.bf16.msra.mxu0 0
        %1909 = vmatprep.subr.bf16.mxu0 0
        %1910 = vmatpush1.bf16.msra.mxu0 %v1893
        %1911 = vmatprep.subr.bf16.mxu0 0
        %1912 = vmatpush1.bf16.msra.mxu0 %v1892
        %1913 = vmatprep.subr.bf16.mxu0 0
        %1914 = vmatpush1.bf16.msra.mxu0 %v1891
        %1915 = vmatprep.subr.bf16.mxu0 0
        %1916 = vmatpush1.bf16.msra.mxu0 %v1890
        %1917 = vmatprep.subr.bf16.mxu0 0
        %1918 = vmatpush2.bf16.msra.mxu0 0
        %1919 = vmatprep.subr.bf16.mxu0 0
        %1920 = vmatpush2.bf16.msra.mxu0 0
        %1921 = vmatprep.subr.bf16.mxu0 0
        %1922 = vmatpush2.bf16.msra.mxu0 0
        %1923 = vmatprep.subr.bf16.mxu0 0
        %1924 = vmatpush2.bf16.msra.mxu0 0
        %1925 = vmatprep.subr.bf16.mxu0 0
        %1926 = vmatpush2.bf16.msra.mxu0 0
        %1927 = vmatprep.subr.bf16.mxu0 0
        %1928 = vmatpush2.bf16.msra.mxu0 0
        %1929 = vmatprep.subr.bf16.mxu0 0
        %1930 = vmatpush2.bf16.msra.mxu0 0
        %1931 = vmatprep.subr.bf16.mxu0 0
        %1932 = vmatpush2.bf16.msra.mxu0 0
        %1933 = vmatprep.mubr.bf16.mxu0 0
        %1934 = vmatmul.mubr.bf16.gmra.mxu0 %v1899
        %v1935 = vpop.f32.mrf.mxu0
        %v1936 = vadd.f32 0.0, %v1935
        %v1937 = vpop.f32.mrf.mxu0
        %v1938 = vpop.f32.mrf.mxu0
        %v1939 = vpop.f32.mrf.mxu0
        %1940 = vdwg.mxu0
        %v1941 = vadd.f32 %v1860, %v1936
        %s1942 = scalar_lea.vmem %s4, 480
        %v1943 = vld [vmem:[%s1942] sm:$0xf]
        %v1944 = vld [vmem:[%s1942 + $0x4] sm:$0xf]
        %v1945 = vld [vmem:[%s1942 + $0x8] sm:$0xf]
        %v1946 = vld [vmem:[%s1942 + $0xc] sm:$0xf]
        %v1947 = vld [vmem:[%s1942 + $0x10] sm:$0xf]
        %v1948 = vld [vmem:[%s1942 + $0x14] sm:$0xf]
        %v1949 = vld [vmem:[%s1942 + $0x18] sm:$0xf]
        %v1950 = vld [vmem:[%s1942 + $0x1c] sm:$0xf]
        %v1951 = vrot.slane %v1384, 7
        %v1952 = vrot.slane %v1385, 6
        %v1953 = vsel %vm749, %v1952, %v1951
        %v1954 = vpack.c.b16 %v1953, %v1953
        %v1963 = vunpack.c.l.b16 %v1943
        %v1964 = vunpack.c.l.b16 %v1944
        %v1965 = vunpack.c.l.b16 %v1945
        %v1966 = vunpack.c.l.b16 %v1946
        %v1967 = vunpack.c.l.b16 %v1947
        %v1968 = vunpack.c.l.b16 %v1948
        %v1969 = vunpack.c.l.b16 %v1949
        %v1970 = vunpack.c.l.b16 %v1950
        %v1971 = vpack.c.b16 %v1964, %v1963
        %v1972 = vpack.c.b16 %v1966, %v1965
        %v1973 = vpack.c.b16 %v1968, %v1967
        %v1974 = vpack.c.b16 %v1970, %v1969
        %v1980 = vsel %vm634, %v1954, 0
        %1982 = vmatprep.subr.bf16.mxu0 0
        %1983 = vmatpush1.bf16.msra.mxu0 0
        %1984 = vmatprep.subr.bf16.mxu0 0
        %1985 = vmatpush1.bf16.msra.mxu0 0
        %1986 = vmatprep.subr.bf16.mxu0 0
        %1987 = vmatpush1.bf16.msra.mxu0 0
        %1988 = vmatprep.subr.bf16.mxu0 0
        %1989 = vmatpush1.bf16.msra.mxu0 0
        %1990 = vmatprep.subr.bf16.mxu0 0
        %1991 = vmatpush1.bf16.msra.mxu0 %v1974
        %1992 = vmatprep.subr.bf16.mxu0 0
        %1993 = vmatpush1.bf16.msra.mxu0 %v1973
        %1994 = vmatprep.subr.bf16.mxu0 0
        %1995 = vmatpush1.bf16.msra.mxu0 %v1972
        %1996 = vmatprep.subr.bf16.mxu0 0
        %1997 = vmatpush1.bf16.msra.mxu0 %v1971
        %1998 = vmatprep.subr.bf16.mxu0 0
        %1999 = vmatpush2.bf16.msra.mxu0 0
        %2000 = vmatprep.subr.bf16.mxu0 0
        %2001 = vmatpush2.bf16.msra.mxu0 0
        %2002 = vmatprep.subr.bf16.mxu0 0
        %2003 = vmatpush2.bf16.msra.mxu0 0
        %2004 = vmatprep.subr.bf16.mxu0 0
        %2005 = vmatpush2.bf16.msra.mxu0 0
        %2006 = vmatprep.subr.bf16.mxu0 0
        %2007 = vmatpush2.bf16.msra.mxu0 0
        %2008 = vmatprep.subr.bf16.mxu0 0
        %2009 = vmatpush2.bf16.msra.mxu0 0
        %2010 = vmatprep.subr.bf16.mxu0 0
        %2011 = vmatpush2.bf16.msra.mxu0 0
        %2012 = vmatprep.subr.bf16.mxu0 0
        %2013 = vmatpush2.bf16.msra.mxu0 0
        %2014 = vmatprep.mubr.bf16.mxu0 0
        %2015 = vmatmul.mubr.bf16.gmra.mxu0 %v1980
        %v2016 = vpop.f32.mrf.mxu0
        %v2017 = vadd.f32 0.0, %v2016
        %v2018 = vpop.f32.mrf.mxu0
        %v2019 = vpop.f32.mrf.mxu0
        %v2020 = vpop.f32.mrf.mxu0
        %2021 = vdwg.mxu0
        %v2022 = vadd.f32 %v1941, %v2017
        %v2025 = vunpack.c.l.s4 1966171168
        %v2026 = vunpack.c.0.s8 %v2025
        %v2027 = vlaneseq
        %v2028 = vshrl.u32 %v2027, 7
        %v2029 = vsub.s32 %v2026, %v2028
        %v2030 = vrot.slane %v2022, %v2029
        %v2031 = vcombine.high %v2030, %v2030
        %v2033 = vunpack.c.l.s4 1966171168
        %v2034 = vunpack.c.0.s8 %v2033
        %v2035 = vlaneseq
        %v2036 = vshrl.u32 %v2035, 7
        %v2037 = vsub.s32 %v2034, %v2036
        %v2038 = vrot.slane %v2030, %v2037
        %v2040 = vunpack.c.l.s4 1966171168
        %v2041 = vunpack.c.0.s8 %v2040
        %v2042 = vlaneseq
        %v2043 = vshrl.u32 %v2042, 7
        %v2044 = vsub.s32 %v2041, %v2043
        %v2045 = vrot.slane %v2031, %v2044
        %vm2048 = vcmask 57344
        %2049 = vst.msk [vmem:[%s220] sm:$0x1] %vm2048, %v2038
        %2050 = vst.msk [vmem:[%s220 + $0x1] sm:$0x1] %vm2048, %v2045
        %s2051 = sand.u32 %s137, 1
        %s2052 = scalar_lea.sflag [#allocation3], %s2051
        %s2053 = sand.u32 %s137, 1
        %s2054 = smul.addr %s2053, 2
        %s2055 = scalar_lea.vmem [#allocation2], %s2054
        // Predicated region
        $region41: #{encoder_forward.5} parent=39 // pred_check
          %p2056 = pneg %p147
        $region42: #{encoder_forward.5} parent=39 // pred_check_branch
          %2058 = sbr.rel (%p2056) target = $region44
        $region43: #{encoder_forward.5} parent=39 // pred_region
          %s2059 = smul.u32 2, %s19
          %s2061 = ssub.s32 32, 32
          %2062 = vsyncadd %s2052, %s2061
          %s2063 = smul.addr %s2059, 16
          %s2064 = scalar_lea.hbm %s5, %s2063
          %s2065 = sshll.u32 %s2055, 4
          %s2066 = int_to_ptr.vmem [resolvable:$true] %s2065
          %2071 = dma.vmem_to_hbm [thread:$0]  %s2066, 32, %s2064, %s2052, 16, 16, 1
        $region44: #{encoder_forward.5} parent=39 // pred_fallthru
          _
      $region40: #{encoder_forward.5} parent=5 // pred_fallthru
        _
      %p2072 = scmp.le.s32.totalorder 2, %s14
      // Predicated region
      $region45: #{encoder_forward.5} parent=5 // pred_check
        %p2073 = pneg %p2072
      $region46: #{encoder_forward.5} parent=5 // pred_check_branch
        %2075 = sbr.rel (%p2073) target = $region48
      $region47: #{encoder_forward.5} parent=5 // pred_region
        %s2076 = ssub.s32 %s14, 2
        // Predicated region
        $region49: #{encoder_forward.5} parent=47 // pred_check
          %p2077 = pneg %p153
        $region50: #{encoder_forward.5} parent=47 // pred_check_branch
          %2079 = sbr.rel (%p2077) target = $region52
        $region51: #{encoder_forward.5} parent=47 // pred_region
          %s2080 = sand.u32 %s138, 1
          %s2081 = scalar_lea.sflag [#allocation3], %s2080
          %s2082 = sand.u32 %s138, 1
          %s2083 = smul.addr %s2082, 2
          %s2084 = scalar_lea.vmem [#allocation2], %s2083
          %2085 = dma.done %s2081, 32
        $region52: #{encoder_forward.5} parent=47 // pred_fallthru
          _
      $region48: #{encoder_forward.5} parent=5 // pred_fallthru
        _
    $region6: #{encoder_forward.5} parent=1 // loop_footer
      %s18 = sadd.s32 1, %s14
    $region7: #{encoder_forward.5} parent=1 // loop_footer_branch
      %13 = sbr.rel target = $region3
    $region8: #{encoder_forward.5} parent=1 // loop_exit
      _
    %2086 = vsyncpa [#allocation3], 1
    %s2087 = scalar_lea.sflag [#allocation3], 1
    %2088 = vsyncpa %s2087, 1

</llo_original>
